<compile_context>
chip_gen: v6e
topology: v6e:2x2x1
jax: 0.10.0
libtpu: 0.0.40
codegen_flags: <defaults>
</compile_context>

<pallas_src>
import functools

import jax
import jax.numpy as jnp
from jax.experimental import pallas as pl
from jax.experimental.pallas import tpu as pltpu

# ----------------------------------------------------------------------------
# Model hyper-parameters (small, consistent with the module's __init__)
# ----------------------------------------------------------------------------
BS = 4        # batch size
D = 8         # input_size  (feature dim)
K = 8         # input_hf_K  (high-frequency steps per day)
T = 4         # input_day
HIDDEN = 32   # hidden_size
NEG = 5       # negative_sample_num


# ----------------------------------------------------------------------------
# Fused forward kernel
# ----------------------------------------------------------------------------
def _cm_forward_kernel(
    # inputs (t-major rows: r = t*bs + b ; HF sequence is time-major in K)
    x_daily_ref,            # (bs*T, D)
    x_hf_ref,               # (K*bs*T, D)
    w_hf12_ref, b_hf12_ref,          # (D, 2H), (1, 2H)   [net_hf_1 | net_hf_2]
    w_daily12_ref, b_daily12_ref,    # (D, 2H), (1, 2H)   [net_daily_1 | net_daily_2]
    w_hf_ih0_blk_ref, b_hf_ih0_ref,  # (2H, 8H) blockdiag(Wih0_1, Wih0_2), (1, 8H)
    hf1_whh0_ref, hf2_whh0_ref,      # (H, 4H) each
    hf1_w1cat_ref, hf1_b1_ref,       # (2H, 4H) = [Wih1; Whh1], (1, 4H)
    hf2_w1cat_ref, hf2_b1_ref,       # (2H, 4H), (1, 4H)
    d_wih0_ref, d_b0_ref,            # (2H, 4H), (1, 4H)
    d_whh0_ref,                      # (H, 4H)
    d_w1cat_ref, d_b1_ref,           # (2H, 4H), (1, 4H)
    fc_pred_w_ref, fc_pred_b_ref,    # (1, H), (1, 1)
    fc_point_w_ref, fc_point_b_ref,  # (H, H), (1, H)
    fc_trend_w_ref, fc_trend_b_ref,  # (H, 2H), (1, 2H)
    # outputs
    loss_ref,               # (1, 1)
    pred_ref,               # (bs, 1)
    # scratch
    gx_hf_ref,              # (K*bs*T, 8H) hoisted HF layer-0 gate contributions
    *, bs, t_days, k_hf, h, neg,
):
    f32 = jnp.float32
    H = h
    BT = bs * t_days

    def dot(a, b):
        return jnp.dot(a, b, preferred_element_type=f32)

    def lstm_gates(gates, c_prev):
        # PyTorch gate order (i, f, g, o); gates: (rows, 4H)
        i_g = jax.nn.sigmoid(gates[:, 0 * H:1 * H])
        f_g = jax.nn.sigmoid(gates[:, 1 * H:2 * H])
        g_g = jnp.tanh(gates[:, 2 * H:3 * H])
        o_g = jax.nn.sigmoid(gates[:, 3 * H:4 * H])
        c_new = f_g * c_prev + i_g * g_g
        h_new = o_g * jnp.tanh(c_new)
        return h_new, c_new

    # ---------------- high-frequency branch ----------------
    # Merged pre-linear (net_hf_1 | net_hf_2) and hoisted layer-0 input
    # projection of BOTH HF LSTMs (block-diagonal weight, bias folded in).
    hf12 = jnp.tanh(dot(x_hf_ref[...], w_hf12_ref[...]) + b_hf12_ref[...])      # (K*BT, 2H)
    gx_hf_ref[...] = dot(hf12, w_hf_ih0_blk_ref[...]) + b_hf_ih0_ref[...]       # (K*BT, 8H)

    zbt = jnp.zeros((BT, H), f32)
    h0_1 = c0_1 = h1_1 = c1_1 = zbt
    h0_2 = c0_2 = h1_2 = c1_2 = zbt

    # Two independent 2-layer recurrences interleaved in the same statically
    # unrolled loop; only the final top-layer hidden state is kept.
    for k in range(k_hf):
        gx = gx_hf_ref[k * BT:(k + 1) * BT, :]                                  # (BT, 8H)
        g0_1 = gx[:, 0:4 * H] + dot(h0_1, hf1_whh0_ref[...])
        g0_2 = gx[:, 4 * H:8 * H] + dot(h0_2, hf2_whh0_ref[...])
        h0_1, c0_1 = lstm_gates(g0_1, c0_1)
        h0_2, c0_2 = lstm_gates(g0_2, c0_2)
        # layer 1: one fused dot on concat([x_t, h]) per chain
        g1_1 = dot(jnp.concatenate([h0_1, h1_1], axis=1), hf1_w1cat_ref[...]) + hf1_b1_ref[...]
        g1_2 = dot(jnp.concatenate([h0_2, h1_2], axis=1), hf2_w1cat_ref[...]) + hf2_b1_ref[...]
        h1_1, c1_1 = lstm_gates(g1_1, c1_1)
        h1_2, c1_2 = lstm_gates(g1_2, c1_2)

    reps_1 = h1_1            # x_hf_day_reps_1, (BT, H), rows = t*bs + b
    reps_2 = h1_2            # x_hf_day_reps_2

    # ---------------- daily branch ----------------
    d12 = jnp.tanh(dot(x_daily_ref[...], w_daily12_ref[...]) + b_daily12_ref[...])  # (BT, 2H)
    x_daily_1 = d12[:, 0:H]
    x_daily_2 = d12[:, H:2 * H]
    # NOTE: both halves use x_hf_day_reps_2 — exactly as in the PyTorch reference.
    cat_rep = jnp.concatenate([x_daily_2 + reps_2, x_daily_1 + reps_2], axis=1)     # (BT, 2H)

    # hoisted layer-0 input projection of rnn_daily
    gx_d = dot(cat_rep, d_wih0_ref[...]) + d_b0_ref[...]                            # (BT, 4H)

    zb = jnp.zeros((bs, H), f32)
    h0_d = c0_d = h1_d = c1_d = zb
    h1_penult = zb
    for t in range(t_days):
        gx = gx_d[t * bs:(t + 1) * bs, :]                                           # (bs, 4H)
        g0 = gx + dot(h0_d, d_whh0_ref[...])
        h0_d, c0_d = lstm_gates(g0, c0_d)
        g1 = dot(jnp.concatenate([h0_d, h1_d], axis=1), d_w1cat_ref[...]) + d_b1_ref[...]
        h1_d, c1_d = lstm_gates(g1, c1_d)
        if t == t_days - 2:
            h1_penult = h1_d      # pred_1[:, -2, :]
    h1_last = h1_d                # pred_1[:, -1, :]

    # prediction head: VPU broadcast-multiply + lane reduce (no 1-column matmul)
    pred_ref[...] = (jnp.sum(h1_last * fc_pred_w_ref[...], axis=1, keepdims=True)
                     + fc_pred_b_ref[...])

    # ---------------- contrastive losses (entirely in-kernel) ----------------
    shifts = [(j % (bs - 1)) + 1 for j in range(neg)]
    # TODO(synk): torch.randperm-based negative sampling replaced by a
    # deterministic fixed-point-free batch roll (same "other element of the
    # mini-batch" semantics, different sample statistics).

    def log_pos_prob(samples, ctx):
        # log_softmax(mean(sample * ctx, -1), sample axis)[..., 0]
        dp = jnp.concatenate(
            [jnp.mean(s * ctx, axis=-1, keepdims=True) for s in samples], axis=-1)
        m = jnp.max(dp, axis=-1, keepdims=True)
        lse = jnp.log(jnp.sum(jnp.exp(dp - m), axis=-1, keepdims=True)) + m
        return dp[..., 0:1] - lse

    # ---- point contrastive loss: context = fc_point(x_daily_1), positives = reps_1
    context = dot(x_daily_1, fc_point_w_ref[...]) + fc_point_b_ref[...]             # (BT, H)

    def roll_within_day(x, s):
        # roll the batch dimension by s inside every contiguous day block
        blocks = []
        for t in range(t_days):
            blk = x[t * bs:(t + 1) * bs, :]
            blocks.append(jnp.concatenate([blk[s:, :], blk[:s, :]], axis=0))
        return jnp.concatenate(blocks, axis=0)

    rolled_pos = {}
    for s in shifts:
        if s not in rolled_pos:
            rolled_pos[s] = roll_within_day(reps_1, s)
    pn = [reps_1] + [rolled_pos[s] for s in shifts]
    log_l1 = log_pos_prob(pn, context)                                              # (BT, 1)

    # ---- trend contrastive loss: positive = last day's cat_rep
    last_rep = cat_rep[(t_days - 1) * bs:t_days * bs, :]                            # (bs, 2H)

    rolled_last = {}
    for s in shifts:
        if s not in rolled_last:
            rolled_last[s] = jnp.concatenate([last_rep[s:, :], last_rep[:s, :]], axis=0)
    nxt = [last_rep] + [rolled_last[s] for s in shifts]
    context_trend = dot(h1_penult, fc_trend_w_ref[...]) + fc_trend_b_ref[...]       # (bs, 2H)
    log_l2 = log_pos_prob(nxt, context_trend)                                       # (bs, 1)

    # point_loss = sum_t(-mean_b log_l1) = -sum(log_l1)/bs ;  trend = -mean_b(log_l2)
    p_sum = jnp.sum(log_l1, axis=0, keepdims=True)                                  # (1, 1)
    t_sum = jnp.sum(log_l2, axis=0, keepdims=True)                                  # (1, 1)
    loss_ref[...] = -(0.05 * p_sum + t_sum) / bs


# ----------------------------------------------------------------------------
# Parameters (deterministic synthetic initialization, PyTorch-like structure)
# ----------------------------------------------------------------------------
def init_params(key, d, h):
    keys = jax.random.split(key, 40)
    it = iter(range(40))

    def w(shape):
        return jax.random.normal(keys[next(it)], shape, jnp.float32) * 0.1

    def lstm_p(din, hh):
        return dict(wih0=w((din, 4 * hh)), whh0=w((hh, 4 * hh)), b0=w((1, 4 * hh)),
                    wih1=w((hh, 4 * hh)), whh1=w((hh, 4 * hh)), b1=w((1, 4 * hh)))

    return dict(
        net_daily_1_w=w((d, h)), net_daily_1_b=w((1, h)),
        net_daily_2_w=w((d, h)), net_daily_2_b=w((1, h)),
        net_hf_1_w=w((d, h)), net_hf_1_b=w((1, h)),
        net_hf_2_w=w((d, h)), net_hf_2_b=w((1, h)),
        rnn_hf_1=lstm_p(h, h), rnn_hf_2=lstm_p(h, h), rnn_daily=lstm_p(2 * h, h),
        fc_pred_w=w((h, 1)), fc_pred_b=w((1, 1)),
        fc_point_w=w((h, h)), fc_point_b=w((1, h)),
        fc_trend_w=w((h, 2 * h)), fc_trend_b=w((1, 2 * h)),
    )


def pack_params(p):
    """One-time packing into the fused-kernel weight layout."""
    def blockdiag(a, b):
        top = jnp.concatenate([a, jnp.zeros((a.shape[0], b.shape[1]), a.dtype)], axis=1)
        bot = jnp.concatenate([jnp.zeros((b.shape[0], a.shape[1]), b.dtype), b], axis=1)
        return jnp.concatenate([top, bot], axis=0)

    hf1, hf2, dly = p["rnn_hf_1"], p["rnn_hf_2"], p["rnn_daily"]
    return dict(
        w_hf12=jnp.concatenate([p["net_hf_1_w"], p["net_hf_2_w"]], axis=1),
        b_hf12=jnp.concatenate([p["net_hf_1_b"], p["net_hf_2_b"]], axis=1),
        w_daily12=jnp.concatenate([p["net_daily_1_w"], p["net_daily_2_w"]], axis=1),
        b_daily12=jnp.concatenate([p["net_daily_1_b"], p["net_daily_2_b"]], axis=1),
        w_hf_ih0_blk=blockdiag(hf1["wih0"], hf2["wih0"]),
        b_hf_ih0=jnp.concatenate([hf1["b0"], hf2["b0"]], axis=1),
        hf1_whh0=hf1["whh0"], hf2_whh0=hf2["whh0"],
        hf1_w1cat=jnp.concatenate([hf1["wih1"], hf1["whh1"]], axis=0), hf1_b1=hf1["b1"],
        hf2_w1cat=jnp.concatenate([hf2["wih1"], hf2["whh1"]], axis=0), hf2_b1=hf2["b1"],
        d_wih0=dly["wih0"], d_b0=dly["b0"], d_whh0=dly["whh0"],
        d_w1cat=jnp.concatenate([dly["wih1"], dly["whh1"]], axis=0), d_b1=dly["b1"],
        fc_pred_w=p["fc_pred_w"].T, fc_pred_b=p["fc_pred_b"],
        fc_point_w=p["fc_point_w"], fc_point_b=p["fc_point_b"],
        fc_trend_w=p["fc_trend_w"], fc_trend_b=p["fc_trend_b"],
    )


# ----------------------------------------------------------------------------
# Forward pass: one fused pallas_call
# ----------------------------------------------------------------------------
@jax.jit
def cm_model_forward(packed, x_daily, x_hf):
    bs, d, _, t_days = x_daily.shape
    k_hf = x_hf.shape[2]
    h = HIDDEN
    bt = bs * t_days

    # Layout plumbing (tiny; fused by XLA into one copy right before the kernel):
    # rows are t-major (r = t*bs + b) and the HF sequence is time-major in K.
    x_daily_2d = jnp.transpose(x_daily.reshape(bs, d, t_days), (2, 0, 1)).reshape(bt, d)
    x_hf_2d = jnp.transpose(x_hf, (2, 3, 0, 1)).reshape(k_hf * bt, d)

    kernel = functools.partial(_cm_forward_kernel, bs=bs, t_days=t_days,
                               k_hf=k_hf, h=h, neg=NEG)
    vmem = pl.BlockSpec(memory_space=pltpu.MemorySpace.VMEM)
    loss2d, pred2d = pl.pallas_call(
        kernel,
        out_shape=(jax.ShapeDtypeStruct((1, 1), jnp.float32),
                   jax.ShapeDtypeStruct((bs, 1), jnp.float32)),
        in_specs=[vmem] * 25,
        out_specs=(vmem, vmem),
        scratch_shapes=[pltpu.VMEM((k_hf * bt, 8 * h), jnp.float32)],
    )(
        x_daily_2d, x_hf_2d,
        packed["w_hf12"], packed["b_hf12"], packed["w_daily12"], packed["b_daily12"],
        packed["w_hf_ih0_blk"], packed["b_hf_ih0"],
        packed["hf1_whh0"], packed["hf2_whh0"],
        packed["hf1_w1cat"], packed["hf1_b1"], packed["hf2_w1cat"], packed["hf2_b1"],
        packed["d_wih0"], packed["d_b0"], packed["d_whh0"], packed["d_w1cat"], packed["d_b1"],
        packed["fc_pred_w"], packed["fc_pred_b"], packed["fc_point_w"], packed["fc_point_b"],
        packed["fc_trend_w"], packed["fc_trend_b"],
    )
    return loss2d[0, 0], pred2d[:, 0]


# ----------------------------------------------------------------------------
# Main
# ----------------------------------------------------------------------------
if __name__ == "__main__":
    key = jax.random.PRNGKey(0)
    k_params, k_daily, k_xhf = jax.random.split(key, 3)

    params = init_params(k_params, D, HIDDEN)
    packed = pack_params(params)

    x_daily = jax.random.normal(k_daily, (BS, D, 1, T), jnp.float32)
    x_hf = jax.random.normal(k_xhf, (BS, D, K, T), jnp.float32)

    loss, pred = cm_model_forward(packed, x_daily, x_hf)
    loss = jax.block_until_ready(loss)
    pred = jax.block_until_ready(pred)

    assert pred.shape == (BS,)
    assert loss.shape == ()
    assert bool(jnp.isfinite(loss)) and bool(jnp.all(jnp.isfinite(pred)))
    print("KERNEL_OK")
</pallas_src>

<mosaic_0001>
module attributes {stable_mosaic.version = 11 : i64} {
  func.func @_cm_forward_kernel(%arg0: memref<16x8xf32, #tpu.memory_space<vmem>>, %arg1: memref<128x8xf32, #tpu.memory_space<vmem>>, %arg2: memref<8x64xf32, #tpu.memory_space<vmem>>, %arg3: memref<1x64xf32, #tpu.memory_space<vmem>>, %arg4: memref<8x64xf32, #tpu.memory_space<vmem>>, %arg5: memref<1x64xf32, #tpu.memory_space<vmem>>, %arg6: memref<64x256xf32, #tpu.memory_space<vmem>>, %arg7: memref<1x256xf32, #tpu.memory_space<vmem>>, %arg8: memref<32x128xf32, #tpu.memory_space<vmem>>, %arg9: memref<32x128xf32, #tpu.memory_space<vmem>>, %arg10: memref<64x128xf32, #tpu.memory_space<vmem>>, %arg11: memref<1x128xf32, #tpu.memory_space<vmem>>, %arg12: memref<64x128xf32, #tpu.memory_space<vmem>>, %arg13: memref<1x128xf32, #tpu.memory_space<vmem>>, %arg14: memref<64x128xf32, #tpu.memory_space<vmem>>, %arg15: memref<1x128xf32, #tpu.memory_space<vmem>>, %arg16: memref<32x128xf32, #tpu.memory_space<vmem>>, %arg17: memref<64x128xf32, #tpu.memory_space<vmem>>, %arg18: memref<1x128xf32, #tpu.memory_space<vmem>>, %arg19: memref<1x32xf32, #tpu.memory_space<vmem>>, %arg20: memref<1x1xf32, #tpu.memory_space<vmem>>, %arg21: memref<32x32xf32, #tpu.memory_space<vmem>>, %arg22: memref<1x32xf32, #tpu.memory_space<vmem>>, %arg23: memref<32x64xf32, #tpu.memory_space<vmem>>, %arg24: memref<1x64xf32, #tpu.memory_space<vmem>>, %arg25: memref<1x1xf32, #tpu.memory_space<vmem>>, %arg26: memref<4x1xf32, #tpu.memory_space<vmem>>, %arg27: memref<128x256xf32, #tpu.memory_space<vmem>>) attributes {dimension_semantics = [], scalar_prefetch = 0 : i64, scratch_operands = 1 : i64, tpu.core_type = #tpu.core_type<tc>} {
    %c0 = arith.constant 0 : index
    %c0_0 = arith.constant 0 : index
    %0 = vector.load %arg1[%c0, %c0_0] : memref<128x8xf32, #tpu.memory_space<vmem>>, vector<128x8xf32>
    %c0_1 = arith.constant 0 : index
    %c0_2 = arith.constant 0 : index
    %1 = vector.load %arg2[%c0_1, %c0_2] : memref<8x64xf32, #tpu.memory_space<vmem>>, vector<8x64xf32>
    %cst = arith.constant dense<0.000000e+00> : vector<128x64xf32>
    %2 = tpu.matmul %0, %1, %cst {dimension_numbers = #tpu.dot_dimension_numbers<[1], [0], [0], [1], [0, 0, 1, 1], [], []>} : vector<128x8xf32>, vector<8x64xf32>, vector<128x64xf32> -> vector<128x64xf32>
    %c0_3 = arith.constant 0 : index
    %c0_4 = arith.constant 0 : index
    %3 = vector.load %arg3[%c0_3, %c0_4] : memref<1x64xf32, #tpu.memory_space<vmem>>, vector<1x64xf32>
    %4 = vector.broadcast %3 : vector<1x64xf32> to vector<128x64xf32>
    %5 = arith.addf %2, %4 : vector<128x64xf32>
    %6 = math.tanh %5 : vector<128x64xf32>
    %c0_5 = arith.constant 0 : index
    %c0_6 = arith.constant 0 : index
    %7 = vector.load %arg6[%c0_5, %c0_6] : memref<64x256xf32, #tpu.memory_space<vmem>>, vector<64x256xf32>
    %cst_7 = arith.constant dense<0.000000e+00> : vector<128x256xf32>
    %8 = tpu.matmul %6, %7, %cst_7 {dimension_numbers = #tpu.dot_dimension_numbers<[1], [0], [0], [1], [0, 0, 1, 1], [], []>} : vector<128x64xf32>, vector<64x256xf32>, vector<128x256xf32> -> vector<128x256xf32>
    %c0_8 = arith.constant 0 : index
    %c0_9 = arith.constant 0 : index
    %9 = vector.load %arg7[%c0_8, %c0_9] : memref<1x256xf32, #tpu.memory_space<vmem>>, vector<1x256xf32>
    %10 = vector.broadcast %9 : vector<1x256xf32> to vector<128x256xf32>
    %11 = arith.addf %8, %10 : vector<128x256xf32>
    %c0_10 = arith.constant 0 : index
    %c0_11 = arith.constant 0 : index
    %12 = vector.load %arg27[%c0_10, %c0_11] : memref<128x256xf32, #tpu.memory_space<vmem>>, vector<128x256xf32>
    tpu.vector_store %arg27[%c0_10, %c0_11], %11 {strides = array<i32>} : memref<128x256xf32, #tpu.memory_space<vmem>>, vector<128x256xf32>,
    %cst_12 = arith.constant 0.000000e+00 : f32
    %13 = vector.broadcast %cst_12 : f32 to vector<16x32xf32>
    %c0_13 = arith.constant 0 : index
    %c0_14 = arith.constant 0 : index
    %14 = vector.load %arg27[%c0_13, %c0_14] : memref<128x256xf32, #tpu.memory_space<vmem>>, vector<16x256xf32>
    %15 = vector.extract_strided_slice %14 {offsets = [0, 0], sizes = [16, 128], strides = [1, 1]} : vector<16x256xf32> to vector<16x128xf32>
    %c0_15 = arith.constant 0 : index
    %c0_16 = arith.constant 0 : index
    %16 = vector.load %arg8[%c0_15, %c0_16] : memref<32x128xf32, #tpu.memory_space<vmem>>, vector<32x128xf32>
    %cst_17 = arith.constant dense<0.000000e+00> : vector<16x128xf32>
    %17 = tpu.matmul %13, %16, %cst_17 {dimension_numbers = #tpu.dot_dimension_numbers<[1], [0], [0], [1], [0, 0, 1, 1], [], []>} : vector<16x32xf32>, vector<32x128xf32>, vector<16x128xf32> -> vector<16x128xf32>
    %18 = arith.addf %15, %17 : vector<16x128xf32>
    %19 = vector.extract_strided_slice %14 {offsets = [0, 128], sizes = [16, 128], strides = [1, 1]} : vector<16x256xf32> to vector<16x128xf32>
    %c0_18 = arith.constant 0 : index
    %c0_19 = arith.constant 0 : index
    %20 = vector.load %arg9[%c0_18, %c0_19] : memref<32x128xf32, #tpu.memory_space<vmem>>, vector<32x128xf32>
    %cst_20 = arith.constant dense<0.000000e+00> : vector<16x128xf32>
    %21 = tpu.matmul %13, %20, %cst_20 {dimension_numbers = #tpu.dot_dimension_numbers<[1], [0], [0], [1], [0, 0, 1, 1], [], []>} : vector<16x32xf32>, vector<32x128xf32>, vector<16x128xf32> -> vector<16x128xf32>
    %22 = arith.addf %19, %21 : vector<16x128xf32>
    %23 = vector.extract_strided_slice %18 {offsets = [0, 0], sizes = [16, 32], strides = [1, 1]} : vector<16x128xf32> to vector<16x32xf32>
    %24 = arith.negf %23 : vector<16x32xf32>
    %25 = math.exp %24 : vector<16x32xf32>
    %cst_21 = arith.constant 1.000000e+00 : f32
    %26 = vector.broadcast %cst_21 : f32 to vector<16x32xf32>
    %27 = arith.addf %26, %25 : vector<16x32xf32>
    %28 = arith.divf %26, %27 : vector<16x32xf32>
    %29 = vector.extract_strided_slice %18 {offsets = [0, 32], sizes = [16, 32], strides = [1, 1]} : vector<16x128xf32> to vector<16x32xf32>
    %30 = arith.negf %29 : vector<16x32xf32>
    %31 = math.exp %30 : vector<16x32xf32>
    %cst_22 = arith.constant 1.000000e+00 : f32
    %32 = vector.broadcast %cst_22 : f32 to vector<16x32xf32>
    %33 = arith.addf %32, %31 : vector<16x32xf32>
    %34 = arith.divf %32, %33 : vector<16x32xf32>
    %35 = vector.extract_strided_slice %18 {offsets = [0, 64], sizes = [16, 32], strides = [1, 1]} : vector<16x128xf32> to vector<16x32xf32>
    %36 = math.tanh %35 : vector<16x32xf32>
    %37 = vector.extract_strided_slice %18 {offsets = [0, 96], sizes = [16, 32], strides = [1, 1]} : vector<16x128xf32> to vector<16x32xf32>
    %38 = arith.negf %37 : vector<16x32xf32>
    %39 = math.exp %38 : vector<16x32xf32>
    %cst_23 = arith.constant 1.000000e+00 : f32
    %40 = vector.broadcast %cst_23 : f32 to vector<16x32xf32>
    %41 = arith.addf %40, %39 : vector<16x32xf32>
    %42 = arith.divf %40, %41 : vector<16x32xf32>
    %43 = arith.mulf %34, %13 : vector<16x32xf32>
    %44 = arith.mulf %28, %36 : vector<16x32xf32>
    %45 = arith.addf %43, %44 : vector<16x32xf32>
    %46 = math.tanh %45 : vector<16x32xf32>
    %47 = arith.mulf %42, %46 : vector<16x32xf32>
    %48 = vector.extract_strided_slice %22 {offsets = [0, 0], sizes = [16, 32], strides = [1, 1]} : vector<16x128xf32> to vector<16x32xf32>
    %49 = arith.negf %48 : vector<16x32xf32>
    %50 = math.exp %49 : vector<16x32xf32>
    %cst_24 = arith.constant 1.000000e+00 : f32
    %51 = vector.broadcast %cst_24 : f32 to vector<16x32xf32>
    %52 = arith.addf %51, %50 : vector<16x32xf32>
    %53 = arith.divf %51, %52 : vector<16x32xf32>
    %54 = vector.extract_strided_slice %22 {offsets = [0, 32], sizes = [16, 32], strides = [1, 1]} : vector<16x128xf32> to vector<16x32xf32>
    %55 = arith.negf %54 : vector<16x32xf32>
    %56 = math.exp %55 : vector<16x32xf32>
    %cst_25 = arith.constant 1.000000e+00 : f32
    %57 = vector.broadcast %cst_25 : f32 to vector<16x32xf32>
    %58 = arith.addf %57, %56 : vector<16x32xf32>
    %59 = arith.divf %57, %58 : vector<16x32xf32>
    %60 = vector.extract_strided_slice %22 {offsets = [0, 64], sizes = [16, 32], strides = [1, 1]} : vector<16x128xf32> to vector<16x32xf32>
    %61 = math.tanh %60 : vector<16x32xf32>
    %62 = vector.extract_strided_slice %22 {offsets = [0, 96], sizes = [16, 32], strides = [1, 1]} : vector<16x128xf32> to vector<16x32xf32>
    %63 = arith.negf %62 : vector<16x32xf32>
    %64 = math.exp %63 : vector<16x32xf32>
    %cst_26 = arith.constant 1.000000e+00 : f32
    %65 = vector.broadcast %cst_26 : f32 to vector<16x32xf32>
    %66 = arith.addf %65, %64 : vector<16x32xf32>
    %67 = arith.divf %65, %66 : vector<16x32xf32>
    %68 = arith.mulf %59, %13 : vector<16x32xf32>
    %69 = arith.mulf %53, %61 : vector<16x32xf32>
    %70 = arith.addf %68, %69 : vector<16x32xf32>
    %71 = math.tanh %70 : vector<16x32xf32>
    %72 = arith.mulf %67, %71 : vector<16x32xf32>
    %73 = tpu.concatenate %47, %13 in 1 : vector<16x32xf32>, vector<16x32xf32> -> vector<16x64xf32>
    %c0_27 = arith.constant 0 : index
    %c0_28 = arith.constant 0 : index
    %74 = vector.load %arg10[%c0_27, %c0_28] : memref<64x128xf32, #tpu.memory_space<vmem>>, vector<64x128xf32>
    %cst_29 = arith.constant dense<0.000000e+00> : vector<16x128xf32>
    %75 = tpu.matmul %73, %74, %cst_29 {dimension_numbers = #tpu.dot_dimension_numbers<[1], [0], [0], [1], [0, 0, 1, 1], [], []>} : vector<16x64xf32>, vector<64x128xf32>, vector<16x128xf32> -> vector<16x128xf32>
    %c0_30 = arith.constant 0 : index
    %c0_31 = arith.constant 0 : index
    %76 = vector.load %arg11[%c0_30, %c0_31] : memref<1x128xf32, #tpu.memory_space<vmem>>, vector<1x128xf32>
    %77 = vector.broadcast %76 : vector<1x128xf32> to vector<16x128xf32>
    %78 = arith.addf %75, %77 : vector<16x128xf32>
    %79 = tpu.concatenate %72, %13 in 1 : vector<16x32xf32>, vector<16x32xf32> -> vector<16x64xf32>
    %c0_32 = arith.constant 0 : index
    %c0_33 = arith.constant 0 : index
    %80 = vector.load %arg12[%c0_32, %c0_33] : memref<64x128xf32, #tpu.memory_space<vmem>>, vector<64x128xf32>
    %cst_34 = arith.constant dense<0.000000e+00> : vector<16x128xf32>
    %81 = tpu.matmul %79, %80, %cst_34 {dimension_numbers = #tpu.dot_dimension_numbers<[1], [0], [0], [1], [0, 0, 1, 1], [], []>} : vector<16x64xf32>, vector<64x128xf32>, vector<16x128xf32> -> vector<16x128xf32>
    %c0_35 = arith.constant 0 : index
    %c0_36 = arith.constant 0 : index
    %82 = vector.load %arg13[%c0_35, %c0_36] : memref<1x128xf32, #tpu.memory_space<vmem>>, vector<1x128xf32>
    %83 = vector.broadcast %82 : vector<1x128xf32> to vector<16x128xf32>
    %84 = arith.addf %81, %83 : vector<16x128xf32>
    %85 = vector.extract_strided_slice %78 {offsets = [0, 0], sizes = [16, 32], strides = [1, 1]} : vector<16x128xf32> to vector<16x32xf32>
    %86 = arith.negf %85 : vector<16x32xf32>
    %87 = math.exp %86 : vector<16x32xf32>
    %cst_37 = arith.constant 1.000000e+00 : f32
    %88 = vector.broadcast %cst_37 : f32 to vector<16x32xf32>
    %89 = arith.addf %88, %87 : vector<16x32xf32>
    %90 = arith.divf %88, %89 : vector<16x32xf32>
    %91 = vector.extract_strided_slice %78 {offsets = [0, 32], sizes = [16, 32], strides = [1, 1]} : vector<16x128xf32> to vector<16x32xf32>
    %92 = arith.negf %91 : vector<16x32xf32>
    %93 = math.exp %92 : vector<16x32xf32>
    %cst_38 = arith.constant 1.000000e+00 : f32
    %94 = vector.broadcast %cst_38 : f32 to vector<16x32xf32>
    %95 = arith.addf %94, %93 : vector<16x32xf32>
    %96 = arith.divf %94, %95 : vector<16x32xf32>
    %97 = vector.extract_strided_slice %78 {offsets = [0, 64], sizes = [16, 32], strides = [1, 1]} : vector<16x128xf32> to vector<16x32xf32>
    %98 = math.tanh %97 : vector<16x32xf32>
    %99 = vector.extract_strided_slice %78 {offsets = [0, 96], sizes = [16, 32], strides = [1, 1]} : vector<16x128xf32> to vector<16x32xf32>
    %100 = arith.negf %99 : vector<16x32xf32>
    %101 = math.exp %100 : vector<16x32xf32>
    %cst_39 = arith.constant 1.000000e+00 : f32
    %102 = vector.broadcast %cst_39 : f32 to vector<16x32xf32>
    %103 = arith.addf %102, %101 : vector<16x32xf32>
    %104 = arith.divf %102, %103 : vector<16x32xf32>
    %105 = arith.mulf %96, %13 : vector<16x32xf32>
    %106 = arith.mulf %90, %98 : vector<16x32xf32>
    %107 = arith.addf %105, %106 : vector<16x32xf32>
    %108 = math.tanh %107 : vector<16x32xf32>
    %109 = arith.mulf %104, %108 : vector<16x32xf32>
    %110 = vector.extract_strided_slice %84 {offsets = [0, 0], sizes = [16, 32], strides = [1, 1]} : vector<16x128xf32> to vector<16x32xf32>
    %111 = arith.negf %110 : vector<16x32xf32>
    %112 = math.exp %111 : vector<16x32xf32>
    %cst_40 = arith.constant 1.000000e+00 : f32
    %113 = vector.broadcast %cst_40 : f32 to vector<16x32xf32>
    %114 = arith.addf %113, %112 : vector<16x32xf32>
    %115 = arith.divf %113, %114 : vector<16x32xf32>
    %116 = vector.extract_strided_slice %84 {offsets = [0, 32], sizes = [16, 32], strides = [1, 1]} : vector<16x128xf32> to vector<16x32xf32>
    %117 = arith.negf %116 : vector<16x32xf32>
    %118 = math.exp %117 : vector<16x32xf32>
    %cst_41 = arith.constant 1.000000e+00 : f32
    %119 = vector.broadcast %cst_41 : f32 to vector<16x32xf32>
    %120 = arith.addf %119, %118 : vector<16x32xf32>
    %121 = arith.divf %119, %120 : vector<16x32xf32>
    %122 = vector.extract_strided_slice %84 {offsets = [0, 64], sizes = [16, 32], strides = [1, 1]} : vector<16x128xf32> to vector<16x32xf32>
    %123 = math.tanh %122 : vector<16x32xf32>
    %124 = vector.extract_strided_slice %84 {offsets = [0, 96], sizes = [16, 32], strides = [1, 1]} : vector<16x128xf32> to vector<16x32xf32>
    %125 = arith.negf %124 : vector<16x32xf32>
    %126 = math.exp %125 : vector<16x32xf32>
    %cst_42 = arith.constant 1.000000e+00 : f32
    %127 = vector.broadcast %cst_42 : f32 to vector<16x32xf32>
    %128 = arith.addf %127, %126 : vector<16x32xf32>
    %129 = arith.divf %127, %128 : vector<16x32xf32>
    %130 = arith.mulf %121, %13 : vector<16x32xf32>
    %131 = arith.mulf %115, %123 : vector<16x32xf32>
    %132 = arith.addf %130, %131 : vector<16x32xf32>
    %133 = math.tanh %132 : vector<16x32xf32>
    %134 = arith.mulf %129, %133 : vector<16x32xf32>
    %c16 = arith.constant 16 : index
    %c0_43 = arith.constant 0 : index
    %135 = vector.load %arg27[%c16, %c0_43] : memref<128x256xf32, #tpu.memory_space<vmem>>, vector<16x256xf32>
    %136 = vector.extract_strided_slice %135 {offsets = [0, 0], sizes = [16, 128], strides = [1, 1]} : vector<16x256xf32> to vector<16x128xf32>
    %c0_44 = arith.constant 0 : index
    %c0_45 = arith.constant 0 : index
    %137 = vector.load %arg8[%c0_44, %c0_45] : memref<32x128xf32, #tpu.memory_space<vmem>>, vector<32x128xf32>
    %cst_46 = arith.constant dense<0.000000e+00> : vector<16x128xf32>
    %138 = tpu.matmul %47, %137, %cst_46 {dimension_numbers = #tpu.dot_dimension_numbers<[1], [0], [0], [1], [0, 0, 1, 1], [], []>} : vector<16x32xf32>, vector<32x128xf32>, vector<16x128xf32> -> vector<16x128xf32>
    %139 = arith.addf %136, %138 : vector<16x128xf32>
    %140 = vector.extract_strided_slice %135 {offsets = [0, 128], sizes = [16, 128], strides = [1, 1]} : vector<16x256xf32> to vector<16x128xf32>
    %c0_47 = arith.constant 0 : index
    %c0_48 = arith.constant 0 : index
    %141 = vector.load %arg9[%c0_47, %c0_48] : memref<32x128xf32, #tpu.memory_space<vmem>>, vector<32x128xf32>
    %cst_49 = arith.constant dense<0.000000e+00> : vector<16x128xf32>
    %142 = tpu.matmul %72, %141, %cst_49 {dimension_numbers = #tpu.dot_dimension_numbers<[1], [0], [0], [1], [0, 0, 1, 1], [], []>} : vector<16x32xf32>, vector<32x128xf32>, vector<16x128xf32> -> vector<16x128xf32>
    %143 = arith.addf %140, %142 : vector<16x128xf32>
    %144 = vector.extract_strided_slice %139 {offsets = [0, 0], sizes = [16, 32], strides = [1, 1]} : vector<16x128xf32> to vector<16x32xf32>
    %145 = arith.negf %144 : vector<16x32xf32>
    %146 = math.exp %145 : vector<16x32xf32>
    %cst_50 = arith.constant 1.000000e+00 : f32
    %147 = vector.broadcast %cst_50 : f32 to vector<16x32xf32>
    %148 = arith.addf %147, %146 : vector<16x32xf32>
    %149 = arith.divf %147, %148 : vector<16x32xf32>
    %150 = vector.extract_strided_slice %139 {offsets = [0, 32], sizes = [16, 32], strides = [1, 1]} : vector<16x128xf32> to vector<16x32xf32>
    %151 = arith.negf %150 : vector<16x32xf32>
    %152 = math.exp %151 : vector<16x32xf32>
    %cst_51 = arith.constant 1.000000e+00 : f32
    %153 = vector.broadcast %cst_51 : f32 to vector<16x32xf32>
    %154 = arith.addf %153, %152 : vector<16x32xf32>
    %155 = arith.divf %153, %154 : vector<16x32xf32>
    %156 = vector.extract_strided_slice %139 {offsets = [0, 64], sizes = [16, 32], strides = [1, 1]} : vector<16x128xf32> to vector<16x32xf32>
    %157 = math.tanh %156 : vector<16x32xf32>
    %158 = vector.extract_strided_slice %139 {offsets = [0, 96], sizes = [16, 32], strides = [1, 1]} : vector<16x128xf32> to vector<16x32xf32>
    %159 = arith.negf %158 : vector<16x32xf32>
    %160 = math.exp %159 : vector<16x32xf32>
    %cst_52 = arith.constant 1.000000e+00 : f32
    %161 = vector.broadcast %cst_52 : f32 to vector<16x32xf32>
    %162 = arith.addf %161, %160 : vector<16x32xf32>
    %163 = arith.divf %161, %162 : vector<16x32xf32>
    %164 = arith.mulf %155, %45 : vector<16x32xf32>
    %165 = arith.mulf %149, %157 : vector<16x32xf32>
    %166 = arith.addf %164, %165 : vector<16x32xf32>
    %167 = math.tanh %166 : vector<16x32xf32>
    %168 = arith.mulf %163, %167 : vector<16x32xf32>
    %169 = vector.extract_strided_slice %143 {offsets = [0, 0], sizes = [16, 32], strides = [1, 1]} : vector<16x128xf32> to vector<16x32xf32>
    %170 = arith.negf %169 : vector<16x32xf32>
    %171 = math.exp %170 : vector<16x32xf32>
    %cst_53 = arith.constant 1.000000e+00 : f32
    %172 = vector.broadcast %cst_53 : f32 to vector<16x32xf32>
    %173 = arith.addf %172, %171 : vector<16x32xf32>
    %174 = arith.divf %172, %173 : vector<16x32xf32>
    %175 = vector.extract_strided_slice %143 {offsets = [0, 32], sizes = [16, 32], strides = [1, 1]} : vector<16x128xf32> to vector<16x32xf32>
    %176 = arith.negf %175 : vector<16x32xf32>
    %177 = math.exp %176 : vector<16x32xf32>
    %cst_54 = arith.constant 1.000000e+00 : f32
    %178 = vector.broadcast %cst_54 : f32 to vector<16x32xf32>
    %179 = arith.addf %178, %177 : vector<16x32xf32>
    %180 = arith.divf %178, %179 : vector<16x32xf32>
    %181 = vector.extract_strided_slice %143 {offsets = [0, 64], sizes = [16, 32], strides = [1, 1]} : vector<16x128xf32> to vector<16x32xf32>
    %182 = math.tanh %181 : vector<16x32xf32>
    %183 = vector.extract_strided_slice %143 {offsets = [0, 96], sizes = [16, 32], strides = [1, 1]} : vector<16x128xf32> to vector<16x32xf32>
    %184 = arith.negf %183 : vector<16x32xf32>
    %185 = math.exp %184 : vector<16x32xf32>
    %cst_55 = arith.constant 1.000000e+00 : f32
    %186 = vector.broadcast %cst_55 : f32 to vector<16x32xf32>
    %187 = arith.addf %186, %185 : vector<16x32xf32>
    %188 = arith.divf %186, %187 : vector<16x32xf32>
    %189 = arith.mulf %180, %70 : vector<16x32xf32>
    %190 = arith.mulf %174, %182 : vector<16x32xf32>
    %191 = arith.addf %189, %190 : vector<16x32xf32>
    %192 = math.tanh %191 : vector<16x32xf32>
    %193 = arith.mulf %188, %192 : vector<16x32xf32>
    %194 = tpu.concatenate %168, %109 in 1 : vector<16x32xf32>, vector<16x32xf32> -> vector<16x64xf32>
    %c0_56 = arith.constant 0 : index
    %c0_57 = arith.constant 0 : index
    %195 = vector.load %arg10[%c0_56, %c0_57] : memref<64x128xf32, #tpu.memory_space<vmem>>, vector<64x128xf32>
    %cst_58 = arith.constant dense<0.000000e+00> : vector<16x128xf32>
    %196 = tpu.matmul %194, %195, %cst_58 {dimension_numbers = #tpu.dot_dimension_numbers<[1], [0], [0], [1], [0, 0, 1, 1], [], []>} : vector<16x64xf32>, vector<64x128xf32>, vector<16x128xf32> -> vector<16x128xf32>
    %c0_59 = arith.constant 0 : index
    %c0_60 = arith.constant 0 : index
    %197 = vector.load %arg11[%c0_59, %c0_60] : memref<1x128xf32, #tpu.memory_space<vmem>>, vector<1x128xf32>
    %198 = vector.broadcast %197 : vector<1x128xf32> to vector<16x128xf32>
    %199 = arith.addf %196, %198 : vector<16x128xf32>
    %200 = tpu.concatenate %193, %134 in 1 : vector<16x32xf32>, vector<16x32xf32> -> vector<16x64xf32>
    %c0_61 = arith.constant 0 : index
    %c0_62 = arith.constant 0 : index
    %201 = vector.load %arg12[%c0_61, %c0_62] : memref<64x128xf32, #tpu.memory_space<vmem>>, vector<64x128xf32>
    %cst_63 = arith.constant dense<0.000000e+00> : vector<16x128xf32>
    %202 = tpu.matmul %200, %201, %cst_63 {dimension_numbers = #tpu.dot_dimension_numbers<[1], [0], [0], [1], [0, 0, 1, 1], [], []>} : vector<16x64xf32>, vector<64x128xf32>, vector<16x128xf32> -> vector<16x128xf32>
    %c0_64 = arith.constant 0 : index
    %c0_65 = arith.constant 0 : index
    %203 = vector.load %arg13[%c0_64, %c0_65] : memref<1x128xf32, #tpu.memory_space<vmem>>, vector<1x128xf32>
    %204 = vector.broadcast %203 : vector<1x128xf32> to vector<16x128xf32>
    %205 = arith.addf %202, %204 : vector<16x128xf32>
    %206 = vector.extract_strided_slice %199 {offsets = [0, 0], sizes = [16, 32], strides = [1, 1]} : vector<16x128xf32> to vector<16x32xf32>
    %207 = arith.negf %206 : vector<16x32xf32>
    %208 = math.exp %207 : vector<16x32xf32>
    %cst_66 = arith.constant 1.000000e+00 : f32
    %209 = vector.broadcast %cst_66 : f32 to vector<16x32xf32>
    %210 = arith.addf %209, %208 : vector<16x32xf32>
    %211 = arith.divf %209, %210 : vector<16x32xf32>
    %212 = vector.extract_strided_slice %199 {offsets = [0, 32], sizes = [16, 32], strides = [1, 1]} : vector<16x128xf32> to vector<16x32xf32>
    %213 = arith.negf %212 : vector<16x32xf32>
    %214 = math.exp %213 : vector<16x32xf32>
    %cst_67 = arith.constant 1.000000e+00 : f32
    %215 = vector.broadcast %cst_67 : f32 to vector<16x32xf32>
    %216 = arith.addf %215, %214 : vector<16x32xf32>
    %217 = arith.divf %215, %216 : vector<16x32xf32>
    %218 = vector.extract_strided_slice %199 {offsets = [0, 64], sizes = [16, 32], strides = [1, 1]} : vector<16x128xf32> to vector<16x32xf32>
    %219 = math.tanh %218 : vector<16x32xf32>
    %220 = vector.extract_strided_slice %199 {offsets = [0, 96], sizes = [16, 32], strides = [1, 1]} : vector<16x128xf32> to vector<16x32xf32>
    %221 = arith.negf %220 : vector<16x32xf32>
    %222 = math.exp %221 : vector<16x32xf32>
    %cst_68 = arith.constant 1.000000e+00 : f32
    %223 = vector.broadcast %cst_68 : f32 to vector<16x32xf32>
    %224 = arith.addf %223, %222 : vector<16x32xf32>
    %225 = arith.divf %223, %224 : vector<16x32xf32>
    %226 = arith.mulf %217, %107 : vector<16x32xf32>
    %227 = arith.mulf %211, %219 : vector<16x32xf32>
    %228 = arith.addf %226, %227 : vector<16x32xf32>
    %229 = math.tanh %228 : vector<16x32xf32>
    %230 = arith.mulf %225, %229 : vector<16x32xf32>
    %231 = vector.extract_strided_slice %205 {offsets = [0, 0], sizes = [16, 32], strides = [1, 1]} : vector<16x128xf32> to vector<16x32xf32>
    %232 = arith.negf %231 : vector<16x32xf32>
    %233 = math.exp %232 : vector<16x32xf32>
    %cst_69 = arith.constant 1.000000e+00 : f32
    %234 = vector.broadcast %cst_69 : f32 to vector<16x32xf32>
    %235 = arith.addf %234, %233 : vector<16x32xf32>
    %236 = arith.divf %234, %235 : vector<16x32xf32>
    %237 = vector.extract_strided_slice %205 {offsets = [0, 32], sizes = [16, 32], strides = [1, 1]} : vector<16x128xf32> to vector<16x32xf32>
    %238 = arith.negf %237 : vector<16x32xf32>
    %239 = math.exp %238 : vector<16x32xf32>
    %cst_70 = arith.constant 1.000000e+00 : f32
    %240 = vector.broadcast %cst_70 : f32 to vector<16x32xf32>
    %241 = arith.addf %240, %239 : vector<16x32xf32>
    %242 = arith.divf %240, %241 : vector<16x32xf32>
    %243 = vector.extract_strided_slice %205 {offsets = [0, 64], sizes = [16, 32], strides = [1, 1]} : vector<16x128xf32> to vector<16x32xf32>
    %244 = math.tanh %243 : vector<16x32xf32>
    %245 = vector.extract_strided_slice %205 {offsets = [0, 96], sizes = [16, 32], strides = [1, 1]} : vector<16x128xf32> to vector<16x32xf32>
    %246 = arith.negf %245 : vector<16x32xf32>
    %247 = math.exp %246 : vector<16x32xf32>
    %cst_71 = arith.constant 1.000000e+00 : f32
    %248 = vector.broadcast %cst_71 : f32 to vector<16x32xf32>
    %249 = arith.addf %248, %247 : vector<16x32xf32>
    %250 = arith.divf %248, %249 : vector<16x32xf32>
    %251 = arith.mulf %242, %132 : vector<16x32xf32>
    %252 = arith.mulf %236, %244 : vector<16x32xf32>
    %253 = arith.addf %251, %252 : vector<16x32xf32>
    %254 = math.tanh %253 : vector<16x32xf32>
    %255 = arith.mulf %250, %254 : vector<16x32xf32>
    %c32 = arith.constant 32 : index
    %c0_72 = arith.constant 0 : index
    %256 = vector.load %arg27[%c32, %c0_72] : memref<128x256xf32, #tpu.memory_space<vmem>>, vector<16x256xf32>
    %257 = vector.extract_strided_slice %256 {offsets = [0, 0], sizes = [16, 128], strides = [1, 1]} : vector<16x256xf32> to vector<16x128xf32>
    %c0_73 = arith.constant 0 : index
    %c0_74 = arith.constant 0 : index
    %258 = vector.load %arg8[%c0_73, %c0_74] : memref<32x128xf32, #tpu.memory_space<vmem>>, vector<32x128xf32>
    %cst_75 = arith.constant dense<0.000000e+00> : vector<16x128xf32>
    %259 = tpu.matmul %168, %258, %cst_75 {dimension_numbers = #tpu.dot_dimension_numbers<[1], [0], [0], [1], [0, 0, 1, 1], [], []>} : vector<16x32xf32>, vector<32x128xf32>, vector<16x128xf32> -> vector<16x128xf32>
    %260 = arith.addf %257, %259 : vector<16x128xf32>
    %261 = vector.extract_strided_slice %256 {offsets = [0, 128], sizes = [16, 128], strides = [1, 1]} : vector<16x256xf32> to vector<16x128xf32>
    %c0_76 = arith.constant 0 : index
    %c0_77 = arith.constant 0 : index
    %262 = vector.load %arg9[%c0_76, %c0_77] : memref<32x128xf32, #tpu.memory_space<vmem>>, vector<32x128xf32>
    %cst_78 = arith.constant dense<0.000000e+00> : vector<16x128xf32>
    %263 = tpu.matmul %193, %262, %cst_78 {dimension_numbers = #tpu.dot_dimension_numbers<[1], [0], [0], [1], [0, 0, 1, 1], [], []>} : vector<16x32xf32>, vector<32x128xf32>, vector<16x128xf32> -> vector<16x128xf32>
    %264 = arith.addf %261, %263 : vector<16x128xf32>
    %265 = vector.extract_strided_slice %260 {offsets = [0, 0], sizes = [16, 32], strides = [1, 1]} : vector<16x128xf32> to vector<16x32xf32>
    %266 = arith.negf %265 : vector<16x32xf32>
    %267 = math.exp %266 : vector<16x32xf32>
    %cst_79 = arith.constant 1.000000e+00 : f32
    %268 = vector.broadcast %cst_79 : f32 to vector<16x32xf32>
    %269 = arith.addf %268, %267 : vector<16x32xf32>
    %270 = arith.divf %268, %269 : vector<16x32xf32>
    %271 = vector.extract_strided_slice %260 {offsets = [0, 32], sizes = [16, 32], strides = [1, 1]} : vector<16x128xf32> to vector<16x32xf32>
    %272 = arith.negf %271 : vector<16x32xf32>
    %273 = math.exp %272 : vector<16x32xf32>
    %cst_80 = arith.constant 1.000000e+00 : f32
    %274 = vector.broadcast %cst_80 : f32 to vector<16x32xf32>
    %275 = arith.addf %274, %273 : vector<16x32xf32>
    %276 = arith.divf %274, %275 : vector<16x32xf32>
    %277 = vector.extract_strided_slice %260 {offsets = [0, 64], sizes = [16, 32], strides = [1, 1]} : vector<16x128xf32> to vector<16x32xf32>
    %278 = math.tanh %277 : vector<16x32xf32>
    %279 = vector.extract_strided_slice %260 {offsets = [0, 96], sizes = [16, 32], strides = [1, 1]} : vector<16x128xf32> to vector<16x32xf32>
    %280 = arith.negf %279 : vector<16x32xf32>
    %281 = math.exp %280 : vector<16x32xf32>
    %cst_81 = arith.constant 1.000000e+00 : f32
    %282 = vector.broadcast %cst_81 : f32 to vector<16x32xf32>
    %283 = arith.addf %282, %281 : vector<16x32xf32>
    %284 = arith.divf %282, %283 : vector<16x32xf32>
    %285 = arith.mulf %276, %166 : vector<16x32xf32>
    %286 = arith.mulf %270, %278 : vector<16x32xf32>
    %287 = arith.addf %285, %286 : vector<16x32xf32>
    %288 = math.tanh %287 : vector<16x32xf32>
    %289 = arith.mulf %284, %288 : vector<16x32xf32>
    %290 = vector.extract_strided_slice %264 {offsets = [0, 0], sizes = [16, 32], strides = [1, 1]} : vector<16x128xf32> to vector<16x32xf32>
    %291 = arith.negf %290 : vector<16x32xf32>
    %292 = math.exp %291 : vector<16x32xf32>
    %cst_82 = arith.constant 1.000000e+00 : f32
    %293 = vector.broadcast %cst_82 : f32 to vector<16x32xf32>
    %294 = arith.addf %293, %292 : vector<16x32xf32>
    %295 = arith.divf %293, %294 : vector<16x32xf32>
    %296 = vector.extract_strided_slice %264 {offsets = [0, 32], sizes = [16, 32], strides = [1, 1]} : vector<16x128xf32> to vector<16x32xf32>
    %297 = arith.negf %296 : vector<16x32xf32>
    %298 = math.exp %297 : vector<16x32xf32>
    %cst_83 = arith.constant 1.000000e+00 : f32
    %299 = vector.broadcast %cst_83 : f32 to vector<16x32xf32>
    %300 = arith.addf %299, %298 : vector<16x32xf32>
    %301 = arith.divf %299, %300 : vector<16x32xf32>
    %302 = vector.extract_strided_slice %264 {offsets = [0, 64], sizes = [16, 32], strides = [1, 1]} : vector<16x128xf32> to vector<16x32xf32>
    %303 = math.tanh %302 : vector<16x32xf32>
    %304 = vector.extract_strided_slice %264 {offsets = [0, 96], sizes = [16, 32], strides = [1, 1]} : vector<16x128xf32> to vector<16x32xf32>
    %305 = arith.negf %304 : vector<16x32xf32>
    %306 = math.exp %305 : vector<16x32xf32>
    %cst_84 = arith.constant 1.000000e+00 : f32
    %307 = vector.broadcast %cst_84 : f32 to vector<16x32xf32>
    %308 = arith.addf %307, %306 : vector<16x32xf32>
    %309 = arith.divf %307, %308 : vector<16x32xf32>
    %310 = arith.mulf %301, %191 : vector<16x32xf32>
    %311 = arith.mulf %295, %303 : vector<16x32xf32>
    %312 = arith.addf %310, %311 : vector<16x32xf32>
    %313 = math.tanh %312 : vector<16x32xf32>
    %314 = arith.mulf %309, %313 : vector<16x32xf32>
    %315 = tpu.concatenate %289, %230 in 1 : vector<16x32xf32>, vector<16x32xf32> -> vector<16x64xf32>
    %c0_85 = arith.constant 0 : index
    %c0_86 = arith.constant 0 : index
    %316 = vector.load %arg10[%c0_85, %c0_86] : memref<64x128xf32, #tpu.memory_space<vmem>>, vector<64x128xf32>
    %cst_87 = arith.constant dense<0.000000e+00> : vector<16x128xf32>
    %317 = tpu.matmul %315, %316, %cst_87 {dimension_numbers = #tpu.dot_dimension_numbers<[1], [0], [0], [1], [0, 0, 1, 1], [], []>} : vector<16x64xf32>, vector<64x128xf32>, vector<16x128xf32> -> vector<16x128xf32>
    %c0_88 = arith.constant 0 : index
    %c0_89 = arith.constant 0 : index
    %318 = vector.load %arg11[%c0_88, %c0_89] : memref<1x128xf32, #tpu.memory_space<vmem>>, vector<1x128xf32>
    %319 = vector.broadcast %318 : vector<1x128xf32> to vector<16x128xf32>
    %320 = arith.addf %317, %319 : vector<16x128xf32>
    %321 = tpu.concatenate %314, %255 in 1 : vector<16x32xf32>, vector<16x32xf32> -> vector<16x64xf32>
    %c0_90 = arith.constant 0 : index
    %c0_91 = arith.constant 0 : index
    %322 = vector.load %arg12[%c0_90, %c0_91] : memref<64x128xf32, #tpu.memory_space<vmem>>, vector<64x128xf32>
    %cst_92 = arith.constant dense<0.000000e+00> : vector<16x128xf32>
    %323 = tpu.matmul %321, %322, %cst_92 {dimension_numbers = #tpu.dot_dimension_numbers<[1], [0], [0], [1], [0, 0, 1, 1], [], []>} : vector<16x64xf32>, vector<64x128xf32>, vector<16x128xf32> -> vector<16x128xf32>
    %c0_93 = arith.constant 0 : index
    %c0_94 = arith.constant 0 : index
    %324 = vector.load %arg13[%c0_93, %c0_94] : memref<1x128xf32, #tpu.memory_space<vmem>>, vector<1x128xf32>
    %325 = vector.broadcast %324 : vector<1x128xf32> to vector<16x128xf32>
    %326 = arith.addf %323, %325 : vector<16x128xf32>
    %327 = vector.extract_strided_slice %320 {offsets = [0, 0], sizes = [16, 32], strides = [1, 1]} : vector<16x128xf32> to vector<16x32xf32>
    %328 = arith.negf %327 : vector<16x32xf32>
    %329 = math.exp %328 : vector<16x32xf32>
    %cst_95 = arith.constant 1.000000e+00 : f32
    %330 = vector.broadcast %cst_95 : f32 to vector<16x32xf32>
    %331 = arith.addf %330, %329 : vector<16x32xf32>
    %332 = arith.divf %330, %331 : vector<16x32xf32>
    %333 = vector.extract_strided_slice %320 {offsets = [0, 32], sizes = [16, 32], strides = [1, 1]} : vector<16x128xf32> to vector<16x32xf32>
    %334 = arith.negf %333 : vector<16x32xf32>
    %335 = math.exp %334 : vector<16x32xf32>
    %cst_96 = arith.constant 1.000000e+00 : f32
    %336 = vector.broadcast %cst_96 : f32 to vector<16x32xf32>
    %337 = arith.addf %336, %335 : vector<16x32xf32>
    %338 = arith.divf %336, %337 : vector<16x32xf32>
    %339 = vector.extract_strided_slice %320 {offsets = [0, 64], sizes = [16, 32], strides = [1, 1]} : vector<16x128xf32> to vector<16x32xf32>
    %340 = math.tanh %339 : vector<16x32xf32>
    %341 = vector.extract_strided_slice %320 {offsets = [0, 96], sizes = [16, 32], strides = [1, 1]} : vector<16x128xf32> to vector<16x32xf32>
    %342 = arith.negf %341 : vector<16x32xf32>
    %343 = math.exp %342 : vector<16x32xf32>
    %cst_97 = arith.constant 1.000000e+00 : f32
    %344 = vector.broadcast %cst_97 : f32 to vector<16x32xf32>
    %345 = arith.addf %344, %343 : vector<16x32xf32>
    %346 = arith.divf %344, %345 : vector<16x32xf32>
    %347 = arith.mulf %338, %228 : vector<16x32xf32>
    %348 = arith.mulf %332, %340 : vector<16x32xf32>
    %349 = arith.addf %347, %348 : vector<16x32xf32>
    %350 = math.tanh %349 : vector<16x32xf32>
    %351 = arith.mulf %346, %350 : vector<16x32xf32>
    %352 = vector.extract_strided_slice %326 {offsets = [0, 0], sizes = [16, 32], strides = [1, 1]} : vector<16x128xf32> to vector<16x32xf32>
    %353 = arith.negf %352 : vector<16x32xf32>
    %354 = math.exp %353 : vector<16x32xf32>
    %cst_98 = arith.constant 1.000000e+00 : f32
    %355 = vector.broadcast %cst_98 : f32 to vector<16x32xf32>
    %356 = arith.addf %355, %354 : vector<16x32xf32>
    %357 = arith.divf %355, %356 : vector<16x32xf32>
    %358 = vector.extract_strided_slice %326 {offsets = [0, 32], sizes = [16, 32], strides = [1, 1]} : vector<16x128xf32> to vector<16x32xf32>
    %359 = arith.negf %358 : vector<16x32xf32>
    %360 = math.exp %359 : vector<16x32xf32>
    %cst_99 = arith.constant 1.000000e+00 : f32
    %361 = vector.broadcast %cst_99 : f32 to vector<16x32xf32>
    %362 = arith.addf %361, %360 : vector<16x32xf32>
    %363 = arith.divf %361, %362 : vector<16x32xf32>
    %364 = vector.extract_strided_slice %326 {offsets = [0, 64], sizes = [16, 32], strides = [1, 1]} : vector<16x128xf32> to vector<16x32xf32>
    %365 = math.tanh %364 : vector<16x32xf32>
    %366 = vector.extract_strided_slice %326 {offsets = [0, 96], sizes = [16, 32], strides = [1, 1]} : vector<16x128xf32> to vector<16x32xf32>
    %367 = arith.negf %366 : vector<16x32xf32>
    %368 = math.exp %367 : vector<16x32xf32>
    %cst_100 = arith.constant 1.000000e+00 : f32
    %369 = vector.broadcast %cst_100 : f32 to vector<16x32xf32>
    %370 = arith.addf %369, %368 : vector<16x32xf32>
    %371 = arith.divf %369, %370 : vector<16x32xf32>
    %372 = arith.mulf %363, %253 : vector<16x32xf32>
    %373 = arith.mulf %357, %365 : vector<16x32xf32>
    %374 = arith.addf %372, %373 : vector<16x32xf32>
    %375 = math.tanh %374 : vector<16x32xf32>
    %376 = arith.mulf %371, %375 : vector<16x32xf32>
    %c48 = arith.constant 48 : index
    %c0_101 = arith.constant 0 : index
    %377 = vector.load %arg27[%c48, %c0_101] : memref<128x256xf32, #tpu.memory_space<vmem>>, vector<16x256xf32>
    %378 = vector.extract_strided_slice %377 {offsets = [0, 0], sizes = [16, 128], strides = [1, 1]} : vector<16x256xf32> to vector<16x128xf32>
    %c0_102 = arith.constant 0 : index
    %c0_103 = arith.constant 0 : index
    %379 = vector.load %arg8[%c0_102, %c0_103] : memref<32x128xf32, #tpu.memory_space<vmem>>, vector<32x128xf32>
    %cst_104 = arith.constant dense<0.000000e+00> : vector<16x128xf32>
    %380 = tpu.matmul %289, %379, %cst_104 {dimension_numbers = #tpu.dot_dimension_numbers<[1], [0], [0], [1], [0, 0, 1, 1], [], []>} : vector<16x32xf32>, vector<32x128xf32>, vector<16x128xf32> -> vector<16x128xf32>
    %381 = arith.addf %378, %380 : vector<16x128xf32>
    %382 = vector.extract_strided_slice %377 {offsets = [0, 128], sizes = [16, 128], strides = [1, 1]} : vector<16x256xf32> to vector<16x128xf32>
    %c0_105 = arith.constant 0 : index
    %c0_106 = arith.constant 0 : index
    %383 = vector.load %arg9[%c0_105, %c0_106] : memref<32x128xf32, #tpu.memory_space<vmem>>, vector<32x128xf32>
    %cst_107 = arith.constant dense<0.000000e+00> : vector<16x128xf32>
    %384 = tpu.matmul %314, %383, %cst_107 {dimension_numbers = #tpu.dot_dimension_numbers<[1], [0], [0], [1], [0, 0, 1, 1], [], []>} : vector<16x32xf32>, vector<32x128xf32>, vector<16x128xf32> -> vector<16x128xf32>
    %385 = arith.addf %382, %384 : vector<16x128xf32>
    %386 = vector.extract_strided_slice %381 {offsets = [0, 0], sizes = [16, 32], strides = [1, 1]} : vector<16x128xf32> to vector<16x32xf32>
    %387 = arith.negf %386 : vector<16x32xf32>
    %388 = math.exp %387 : vector<16x32xf32>
    %cst_108 = arith.constant 1.000000e+00 : f32
    %389 = vector.broadcast %cst_108 : f32 to vector<16x32xf32>
    %390 = arith.addf %389, %388 : vector<16x32xf32>
    %391 = arith.divf %389, %390 : vector<16x32xf32>
    %392 = vector.extract_strided_slice %381 {offsets = [0, 32], sizes = [16, 32], strides = [1, 1]} : vector<16x128xf32> to vector<16x32xf32>
    %393 = arith.negf %392 : vector<16x32xf32>
    %394 = math.exp %393 : vector<16x32xf32>
    %cst_109 = arith.constant 1.000000e+00 : f32
    %395 = vector.broadcast %cst_109 : f32 to vector<16x32xf32>
    %396 = arith.addf %395, %394 : vector<16x32xf32>
    %397 = arith.divf %395, %396 : vector<16x32xf32>
    %398 = vector.extract_strided_slice %381 {offsets = [0, 64], sizes = [16, 32], strides = [1, 1]} : vector<16x128xf32> to vector<16x32xf32>
    %399 = math.tanh %398 : vector<16x32xf32>
    %400 = vector.extract_strided_slice %381 {offsets = [0, 96], sizes = [16, 32], strides = [1, 1]} : vector<16x128xf32> to vector<16x32xf32>
    %401 = arith.negf %400 : vector<16x32xf32>
    %402 = math.exp %401 : vector<16x32xf32>
    %cst_110 = arith.constant 1.000000e+00 : f32
    %403 = vector.broadcast %cst_110 : f32 to vector<16x32xf32>
    %404 = arith.addf %403, %402 : vector<16x32xf32>
    %405 = arith.divf %403, %404 : vector<16x32xf32>
    %406 = arith.mulf %397, %287 : vector<16x32xf32>
    %407 = arith.mulf %391, %399 : vector<16x32xf32>
    %408 = arith.addf %406, %407 : vector<16x32xf32>
    %409 = math.tanh %408 : vector<16x32xf32>
    %410 = arith.mulf %405, %409 : vector<16x32xf32>
    %411 = vector.extract_strided_slice %385 {offsets = [0, 0], sizes = [16, 32], strides = [1, 1]} : vector<16x128xf32> to vector<16x32xf32>
    %412 = arith.negf %411 : vector<16x32xf32>
    %413 = math.exp %412 : vector<16x32xf32>
    %cst_111 = arith.constant 1.000000e+00 : f32
    %414 = vector.broadcast %cst_111 : f32 to vector<16x32xf32>
    %415 = arith.addf %414, %413 : vector<16x32xf32>
    %416 = arith.divf %414, %415 : vector<16x32xf32>
    %417 = vector.extract_strided_slice %385 {offsets = [0, 32], sizes = [16, 32], strides = [1, 1]} : vector<16x128xf32> to vector<16x32xf32>
    %418 = arith.negf %417 : vector<16x32xf32>
    %419 = math.exp %418 : vector<16x32xf32>
    %cst_112 = arith.constant 1.000000e+00 : f32
    %420 = vector.broadcast %cst_112 : f32 to vector<16x32xf32>
    %421 = arith.addf %420, %419 : vector<16x32xf32>
    %422 = arith.divf %420, %421 : vector<16x32xf32>
    %423 = vector.extract_strided_slice %385 {offsets = [0, 64], sizes = [16, 32], strides = [1, 1]} : vector<16x128xf32> to vector<16x32xf32>
    %424 = math.tanh %423 : vector<16x32xf32>
    %425 = vector.extract_strided_slice %385 {offsets = [0, 96], sizes = [16, 32], strides = [1, 1]} : vector<16x128xf32> to vector<16x32xf32>
    %426 = arith.negf %425 : vector<16x32xf32>
    %427 = math.exp %426 : vector<16x32xf32>
    %cst_113 = arith.constant 1.000000e+00 : f32
    %428 = vector.broadcast %cst_113 : f32 to vector<16x32xf32>
    %429 = arith.addf %428, %427 : vector<16x32xf32>
    %430 = arith.divf %428, %429 : vector<16x32xf32>
    %431 = arith.mulf %422, %312 : vector<16x32xf32>
    %432 = arith.mulf %416, %424 : vector<16x32xf32>
    %433 = arith.addf %431, %432 : vector<16x32xf32>
    %434 = math.tanh %433 : vector<16x32xf32>
    %435 = arith.mulf %430, %434 : vector<16x32xf32>
    %436 = tpu.concatenate %410, %351 in 1 : vector<16x32xf32>, vector<16x32xf32> -> vector<16x64xf32>
    %c0_114 = arith.constant 0 : index
    %c0_115 = arith.constant 0 : index
    %437 = vector.load %arg10[%c0_114, %c0_115] : memref<64x128xf32, #tpu.memory_space<vmem>>, vector<64x128xf32>
    %cst_116 = arith.constant dense<0.000000e+00> : vector<16x128xf32>
    %438 = tpu.matmul %436, %437, %cst_116 {dimension_numbers = #tpu.dot_dimension_numbers<[1], [0], [0], [1], [0, 0, 1, 1], [], []>} : vector<16x64xf32>, vector<64x128xf32>, vector<16x128xf32> -> vector<16x128xf32>
    %c0_117 = arith.constant 0 : index
    %c0_118 = arith.constant 0 : index
    %439 = vector.load %arg11[%c0_117, %c0_118] : memref<1x128xf32, #tpu.memory_space<vmem>>, vector<1x128xf32>
    %440 = vector.broadcast %439 : vector<1x128xf32> to vector<16x128xf32>
    %441 = arith.addf %438, %440 : vector<16x128xf32>
    %442 = tpu.concatenate %435, %376 in 1 : vector<16x32xf32>, vector<16x32xf32> -> vector<16x64xf32>
    %c0_119 = arith.constant 0 : index
    %c0_120 = arith.constant 0 : index
    %443 = vector.load %arg12[%c0_119, %c0_120] : memref<64x128xf32, #tpu.memory_space<vmem>>, vector<64x128xf32>
    %cst_121 = arith.constant dense<0.000000e+00> : vector<16x128xf32>
    %444 = tpu.matmul %442, %443, %cst_121 {dimension_numbers = #tpu.dot_dimension_numbers<[1], [0], [0], [1], [0, 0, 1, 1], [], []>} : vector<16x64xf32>, vector<64x128xf32>, vector<16x128xf32> -> vector<16x128xf32>
    %c0_122 = arith.constant 0 : index
    %c0_123 = arith.constant 0 : index
    %445 = vector.load %arg13[%c0_122, %c0_123] : memref<1x128xf32, #tpu.memory_space<vmem>>, vector<1x128xf32>
    %446 = vector.broadcast %445 : vector<1x128xf32> to vector<16x128xf32>
    %447 = arith.addf %444, %446 : vector<16x128xf32>
    %448 = vector.extract_strided_slice %441 {offsets = [0, 0], sizes = [16, 32], strides = [1, 1]} : vector<16x128xf32> to vector<16x32xf32>
    %449 = arith.negf %448 : vector<16x32xf32>
    %450 = math.exp %449 : vector<16x32xf32>
    %cst_124 = arith.constant 1.000000e+00 : f32
    %451 = vector.broadcast %cst_124 : f32 to vector<16x32xf32>
    %452 = arith.addf %451, %450 : vector<16x32xf32>
    %453 = arith.divf %451, %452 : vector<16x32xf32>
    %454 = vector.extract_strided_slice %441 {offsets = [0, 32], sizes = [16, 32], strides = [1, 1]} : vector<16x128xf32> to vector<16x32xf32>
    %455 = arith.negf %454 : vector<16x32xf32>
    %456 = math.exp %455 : vector<16x32xf32>
    %cst_125 = arith.constant 1.000000e+00 : f32
    %457 = vector.broadcast %cst_125 : f32 to vector<16x32xf32>
    %458 = arith.addf %457, %456 : vector<16x32xf32>
    %459 = arith.divf %457, %458 : vector<16x32xf32>
    %460 = vector.extract_strided_slice %441 {offsets = [0, 64], sizes = [16, 32], strides = [1, 1]} : vector<16x128xf32> to vector<16x32xf32>
    %461 = math.tanh %460 : vector<16x32xf32>
    %462 = vector.extract_strided_slice %441 {offsets = [0, 96], sizes = [16, 32], strides = [1, 1]} : vector<16x128xf32> to vector<16x32xf32>
    %463 = arith.negf %462 : vector<16x32xf32>
    %464 = math.exp %463 : vector<16x32xf32>
    %cst_126 = arith.constant 1.000000e+00 : f32
    %465 = vector.broadcast %cst_126 : f32 to vector<16x32xf32>
    %466 = arith.addf %465, %464 : vector<16x32xf32>
    %467 = arith.divf %465, %466 : vector<16x32xf32>
    %468 = arith.mulf %459, %349 : vector<16x32xf32>
    %469 = arith.mulf %453, %461 : vector<16x32xf32>
    %470 = arith.addf %468, %469 : vector<16x32xf32>
    %471 = math.tanh %470 : vector<16x32xf32>
    %472 = arith.mulf %467, %471 : vector<16x32xf32>
    %473 = vector.extract_strided_slice %447 {offsets = [0, 0], sizes = [16, 32], strides = [1, 1]} : vector<16x128xf32> to vector<16x32xf32>
    %474 = arith.negf %473 : vector<16x32xf32>
    %475 = math.exp %474 : vector<16x32xf32>
    %cst_127 = arith.constant 1.000000e+00 : f32
    %476 = vector.broadcast %cst_127 : f32 to vector<16x32xf32>
    %477 = arith.addf %476, %475 : vector<16x32xf32>
    %478 = arith.divf %476, %477 : vector<16x32xf32>
    %479 = vector.extract_strided_slice %447 {offsets = [0, 32], sizes = [16, 32], strides = [1, 1]} : vector<16x128xf32> to vector<16x32xf32>
    %480 = arith.negf %479 : vector<16x32xf32>
    %481 = math.exp %480 : vector<16x32xf32>
    %cst_128 = arith.constant 1.000000e+00 : f32
    %482 = vector.broadcast %cst_128 : f32 to vector<16x32xf32>
    %483 = arith.addf %482, %481 : vector<16x32xf32>
    %484 = arith.divf %482, %483 : vector<16x32xf32>
    %485 = vector.extract_strided_slice %447 {offsets = [0, 64], sizes = [16, 32], strides = [1, 1]} : vector<16x128xf32> to vector<16x32xf32>
    %486 = math.tanh %485 : vector<16x32xf32>
    %487 = vector.extract_strided_slice %447 {offsets = [0, 96], sizes = [16, 32], strides = [1, 1]} : vector<16x128xf32> to vector<16x32xf32>
    %488 = arith.negf %487 : vector<16x32xf32>
    %489 = math.exp %488 : vector<16x32xf32>
    %cst_129 = arith.constant 1.000000e+00 : f32
    %490 = vector.broadcast %cst_129 : f32 to vector<16x32xf32>
    %491 = arith.addf %490, %489 : vector<16x32xf32>
    %492 = arith.divf %490, %491 : vector<16x32xf32>
    %493 = arith.mulf %484, %374 : vector<16x32xf32>
    %494 = arith.mulf %478, %486 : vector<16x32xf32>
    %495 = arith.addf %493, %494 : vector<16x32xf32>
    %496 = math.tanh %495 : vector<16x32xf32>
    %497 = arith.mulf %492, %496 : vector<16x32xf32>
    %c64 = arith.constant 64 : index
    %c0_130 = arith.constant 0 : index
    %498 = vector.load %arg27[%c64, %c0_130] : memref<128x256xf32, #tpu.memory_space<vmem>>, vector<16x256xf32>
    %499 = vector.extract_strided_slice %498 {offsets = [0, 0], sizes = [16, 128], strides = [1, 1]} : vector<16x256xf32> to vector<16x128xf32>
    %c0_131 = arith.constant 0 : index
    %c0_132 = arith.constant 0 : index
    %500 = vector.load %arg8[%c0_131, %c0_132] : memref<32x128xf32, #tpu.memory_space<vmem>>, vector<32x128xf32>
    %cst_133 = arith.constant dense<0.000000e+00> : vector<16x128xf32>
    %501 = tpu.matmul %410, %500, %cst_133 {dimension_numbers = #tpu.dot_dimension_numbers<[1], [0], [0], [1], [0, 0, 1, 1], [], []>} : vector<16x32xf32>, vector<32x128xf32>, vector<16x128xf32> -> vector<16x128xf32>
    %502 = arith.addf %499, %501 : vector<16x128xf32>
    %503 = vector.extract_strided_slice %498 {offsets = [0, 128], sizes = [16, 128], strides = [1, 1]} : vector<16x256xf32> to vector<16x128xf32>
    %c0_134 = arith.constant 0 : index
    %c0_135 = arith.constant 0 : index
    %504 = vector.load %arg9[%c0_134, %c0_135] : memref<32x128xf32, #tpu.memory_space<vmem>>, vector<32x128xf32>
    %cst_136 = arith.constant dense<0.000000e+00> : vector<16x128xf32>
    %505 = tpu.matmul %435, %504, %cst_136 {dimension_numbers = #tpu.dot_dimension_numbers<[1], [0], [0], [1], [0, 0, 1, 1], [], []>} : vector<16x32xf32>, vector<32x128xf32>, vector<16x128xf32> -> vector<16x128xf32>
    %506 = arith.addf %503, %505 : vector<16x128xf32>
    %507 = vector.extract_strided_slice %502 {offsets = [0, 0], sizes = [16, 32], strides = [1, 1]} : vector<16x128xf32> to vector<16x32xf32>
    %508 = arith.negf %507 : vector<16x32xf32>
    %509 = math.exp %508 : vector<16x32xf32>
    %cst_137 = arith.constant 1.000000e+00 : f32
    %510 = vector.broadcast %cst_137 : f32 to vector<16x32xf32>
    %511 = arith.addf %510, %509 : vector<16x32xf32>
    %512 = arith.divf %510, %511 : vector<16x32xf32>
    %513 = vector.extract_strided_slice %502 {offsets = [0, 32], sizes = [16, 32], strides = [1, 1]} : vector<16x128xf32> to vector<16x32xf32>
    %514 = arith.negf %513 : vector<16x32xf32>
    %515 = math.exp %514 : vector<16x32xf32>
    %cst_138 = arith.constant 1.000000e+00 : f32
    %516 = vector.broadcast %cst_138 : f32 to vector<16x32xf32>
    %517 = arith.addf %516, %515 : vector<16x32xf32>
    %518 = arith.divf %516, %517 : vector<16x32xf32>
    %519 = vector.extract_strided_slice %502 {offsets = [0, 64], sizes = [16, 32], strides = [1, 1]} : vector<16x128xf32> to vector<16x32xf32>
    %520 = math.tanh %519 : vector<16x32xf32>
    %521 = vector.extract_strided_slice %502 {offsets = [0, 96], sizes = [16, 32], strides = [1, 1]} : vector<16x128xf32> to vector<16x32xf32>
    %522 = arith.negf %521 : vector<16x32xf32>
    %523 = math.exp %522 : vector<16x32xf32>
    %cst_139 = arith.constant 1.000000e+00 : f32
    %524 = vector.broadcast %cst_139 : f32 to vector<16x32xf32>
    %525 = arith.addf %524, %523 : vector<16x32xf32>
    %526 = arith.divf %524, %525 : vector<16x32xf32>
    %527 = arith.mulf %518, %408 : vector<16x32xf32>
    %528 = arith.mulf %512, %520 : vector<16x32xf32>
    %529 = arith.addf %527, %528 : vector<16x32xf32>
    %530 = math.tanh %529 : vector<16x32xf32>
    %531 = arith.mulf %526, %530 : vector<16x32xf32>
    %532 = vector.extract_strided_slice %506 {offsets = [0, 0], sizes = [16, 32], strides = [1, 1]} : vector<16x128xf32> to vector<16x32xf32>
    %533 = arith.negf %532 : vector<16x32xf32>
    %534 = math.exp %533 : vector<16x32xf32>
    %cst_140 = arith.constant 1.000000e+00 : f32
    %535 = vector.broadcast %cst_140 : f32 to vector<16x32xf32>
    %536 = arith.addf %535, %534 : vector<16x32xf32>
    %537 = arith.divf %535, %536 : vector<16x32xf32>
    %538 = vector.extract_strided_slice %506 {offsets = [0, 32], sizes = [16, 32], strides = [1, 1]} : vector<16x128xf32> to vector<16x32xf32>
    %539 = arith.negf %538 : vector<16x32xf32>
    %540 = math.exp %539 : vector<16x32xf32>
    %cst_141 = arith.constant 1.000000e+00 : f32
    %541 = vector.broadcast %cst_141 : f32 to vector<16x32xf32>
    %542 = arith.addf %541, %540 : vector<16x32xf32>
    %543 = arith.divf %541, %542 : vector<16x32xf32>
    %544 = vector.extract_strided_slice %506 {offsets = [0, 64], sizes = [16, 32], strides = [1, 1]} : vector<16x128xf32> to vector<16x32xf32>
    %545 = math.tanh %544 : vector<16x32xf32>
    %546 = vector.extract_strided_slice %506 {offsets = [0, 96], sizes = [16, 32], strides = [1, 1]} : vector<16x128xf32> to vector<16x32xf32>
    %547 = arith.negf %546 : vector<16x32xf32>
    %548 = math.exp %547 : vector<16x32xf32>
    %cst_142 = arith.constant 1.000000e+00 : f32
    %549 = vector.broadcast %cst_142 : f32 to vector<16x32xf32>
    %550 = arith.addf %549, %548 : vector<16x32xf32>
    %551 = arith.divf %549, %550 : vector<16x32xf32>
    %552 = arith.mulf %543, %433 : vector<16x32xf32>
    %553 = arith.mulf %537, %545 : vector<16x32xf32>
    %554 = arith.addf %552, %553 : vector<16x32xf32>
    %555 = math.tanh %554 : vector<16x32xf32>
    %556 = arith.mulf %551, %555 : vector<16x32xf32>
    %557 = tpu.concatenate %531, %472 in 1 : vector<16x32xf32>, vector<16x32xf32> -> vector<16x64xf32>
    %c0_143 = arith.constant 0 : index
    %c0_144 = arith.constant 0 : index
    %558 = vector.load %arg10[%c0_143, %c0_144] : memref<64x128xf32, #tpu.memory_space<vmem>>, vector<64x128xf32>
    %cst_145 = arith.constant dense<0.000000e+00> : vector<16x128xf32>
    %559 = tpu.matmul %557, %558, %cst_145 {dimension_numbers = #tpu.dot_dimension_numbers<[1], [0], [0], [1], [0, 0, 1, 1], [], []>} : vector<16x64xf32>, vector<64x128xf32>, vector<16x128xf32> -> vector<16x128xf32>
    %c0_146 = arith.constant 0 : index
    %c0_147 = arith.constant 0 : index
    %560 = vector.load %arg11[%c0_146, %c0_147] : memref<1x128xf32, #tpu.memory_space<vmem>>, vector<1x128xf32>
    %561 = vector.broadcast %560 : vector<1x128xf32> to vector<16x128xf32>
    %562 = arith.addf %559, %561 : vector<16x128xf32>
    %563 = tpu.concatenate %556, %497 in 1 : vector<16x32xf32>, vector<16x32xf32> -> vector<16x64xf32>
    %c0_148 = arith.constant 0 : index
    %c0_149 = arith.constant 0 : index
    %564 = vector.load %arg12[%c0_148, %c0_149] : memref<64x128xf32, #tpu.memory_space<vmem>>, vector<64x128xf32>
    %cst_150 = arith.constant dense<0.000000e+00> : vector<16x128xf32>
    %565 = tpu.matmul %563, %564, %cst_150 {dimension_numbers = #tpu.dot_dimension_numbers<[1], [0], [0], [1], [0, 0, 1, 1], [], []>} : vector<16x64xf32>, vector<64x128xf32>, vector<16x128xf32> -> vector<16x128xf32>
    %c0_151 = arith.constant 0 : index
    %c0_152 = arith.constant 0 : index
    %566 = vector.load %arg13[%c0_151, %c0_152] : memref<1x128xf32, #tpu.memory_space<vmem>>, vector<1x128xf32>
    %567 = vector.broadcast %566 : vector<1x128xf32> to vector<16x128xf32>
    %568 = arith.addf %565, %567 : vector<16x128xf32>
    %569 = vector.extract_strided_slice %562 {offsets = [0, 0], sizes = [16, 32], strides = [1, 1]} : vector<16x128xf32> to vector<16x32xf32>
    %570 = arith.negf %569 : vector<16x32xf32>
    %571 = math.exp %570 : vector<16x32xf32>
    %cst_153 = arith.constant 1.000000e+00 : f32
    %572 = vector.broadcast %cst_153 : f32 to vector<16x32xf32>
    %573 = arith.addf %572, %571 : vector<16x32xf32>
    %574 = arith.divf %572, %573 : vector<16x32xf32>
    %575 = vector.extract_strided_slice %562 {offsets = [0, 32], sizes = [16, 32], strides = [1, 1]} : vector<16x128xf32> to vector<16x32xf32>
    %576 = arith.negf %575 : vector<16x32xf32>
    %577 = math.exp %576 : vector<16x32xf32>
    %cst_154 = arith.constant 1.000000e+00 : f32
    %578 = vector.broadcast %cst_154 : f32 to vector<16x32xf32>
    %579 = arith.addf %578, %577 : vector<16x32xf32>
    %580 = arith.divf %578, %579 : vector<16x32xf32>
    %581 = vector.extract_strided_slice %562 {offsets = [0, 64], sizes = [16, 32], strides = [1, 1]} : vector<16x128xf32> to vector<16x32xf32>
    %582 = math.tanh %581 : vector<16x32xf32>
    %583 = vector.extract_strided_slice %562 {offsets = [0, 96], sizes = [16, 32], strides = [1, 1]} : vector<16x128xf32> to vector<16x32xf32>
    %584 = arith.negf %583 : vector<16x32xf32>
    %585 = math.exp %584 : vector<16x32xf32>
    %cst_155 = arith.constant 1.000000e+00 : f32
    %586 = vector.broadcast %cst_155 : f32 to vector<16x32xf32>
    %587 = arith.addf %586, %585 : vector<16x32xf32>
    %588 = arith.divf %586, %587 : vector<16x32xf32>
    %589 = arith.mulf %580, %470 : vector<16x32xf32>
    %590 = arith.mulf %574, %582 : vector<16x32xf32>
    %591 = arith.addf %589, %590 : vector<16x32xf32>
    %592 = math.tanh %591 : vector<16x32xf32>
    %593 = arith.mulf %588, %592 : vector<16x32xf32>
    %594 = vector.extract_strided_slice %568 {offsets = [0, 0], sizes = [16, 32], strides = [1, 1]} : vector<16x128xf32> to vector<16x32xf32>
    %595 = arith.negf %594 : vector<16x32xf32>
    %596 = math.exp %595 : vector<16x32xf32>
    %cst_156 = arith.constant 1.000000e+00 : f32
    %597 = vector.broadcast %cst_156 : f32 to vector<16x32xf32>
    %598 = arith.addf %597, %596 : vector<16x32xf32>
    %599 = arith.divf %597, %598 : vector<16x32xf32>
    %600 = vector.extract_strided_slice %568 {offsets = [0, 32], sizes = [16, 32], strides = [1, 1]} : vector<16x128xf32> to vector<16x32xf32>
    %601 = arith.negf %600 : vector<16x32xf32>
    %602 = math.exp %601 : vector<16x32xf32>
    %cst_157 = arith.constant 1.000000e+00 : f32
    %603 = vector.broadcast %cst_157 : f32 to vector<16x32xf32>
    %604 = arith.addf %603, %602 : vector<16x32xf32>
    %605 = arith.divf %603, %604 : vector<16x32xf32>
    %606 = vector.extract_strided_slice %568 {offsets = [0, 64], sizes = [16, 32], strides = [1, 1]} : vector<16x128xf32> to vector<16x32xf32>
    %607 = math.tanh %606 : vector<16x32xf32>
    %608 = vector.extract_strided_slice %568 {offsets = [0, 96], sizes = [16, 32], strides = [1, 1]} : vector<16x128xf32> to vector<16x32xf32>
    %609 = arith.negf %608 : vector<16x32xf32>
    %610 = math.exp %609 : vector<16x32xf32>
    %cst_158 = arith.constant 1.000000e+00 : f32
    %611 = vector.broadcast %cst_158 : f32 to vector<16x32xf32>
    %612 = arith.addf %611, %610 : vector<16x32xf32>
    %613 = arith.divf %611, %612 : vector<16x32xf32>
    %614 = arith.mulf %605, %495 : vector<16x32xf32>
    %615 = arith.mulf %599, %607 : vector<16x32xf32>
    %616 = arith.addf %614, %615 : vector<16x32xf32>
    %617 = math.tanh %616 : vector<16x32xf32>
    %618 = arith.mulf %613, %617 : vector<16x32xf32>
    %c80 = arith.constant 80 : index
    %c0_159 = arith.constant 0 : index
    %619 = vector.load %arg27[%c80, %c0_159] : memref<128x256xf32, #tpu.memory_space<vmem>>, vector<16x256xf32>
    %620 = vector.extract_strided_slice %619 {offsets = [0, 0], sizes = [16, 128], strides = [1, 1]} : vector<16x256xf32> to vector<16x128xf32>
    %c0_160 = arith.constant 0 : index
    %c0_161 = arith.constant 0 : index
    %621 = vector.load %arg8[%c0_160, %c0_161] : memref<32x128xf32, #tpu.memory_space<vmem>>, vector<32x128xf32>
    %cst_162 = arith.constant dense<0.000000e+00> : vector<16x128xf32>
    %622 = tpu.matmul %531, %621, %cst_162 {dimension_numbers = #tpu.dot_dimension_numbers<[1], [0], [0], [1], [0, 0, 1, 1], [], []>} : vector<16x32xf32>, vector<32x128xf32>, vector<16x128xf32> -> vector<16x128xf32>
    %623 = arith.addf %620, %622 : vector<16x128xf32>
    %624 = vector.extract_strided_slice %619 {offsets = [0, 128], sizes = [16, 128], strides = [1, 1]} : vector<16x256xf32> to vector<16x128xf32>
    %c0_163 = arith.constant 0 : index
    %c0_164 = arith.constant 0 : index
    %625 = vector.load %arg9[%c0_163, %c0_164] : memref<32x128xf32, #tpu.memory_space<vmem>>, vector<32x128xf32>
    %cst_165 = arith.constant dense<0.000000e+00> : vector<16x128xf32>
    %626 = tpu.matmul %556, %625, %cst_165 {dimension_numbers = #tpu.dot_dimension_numbers<[1], [0], [0], [1], [0, 0, 1, 1], [], []>} : vector<16x32xf32>, vector<32x128xf32>, vector<16x128xf32> -> vector<16x128xf32>
    %627 = arith.addf %624, %626 : vector<16x128xf32>
    %628 = vector.extract_strided_slice %623 {offsets = [0, 0], sizes = [16, 32], strides = [1, 1]} : vector<16x128xf32> to vector<16x32xf32>
    %629 = arith.negf %628 : vector<16x32xf32>
    %630 = math.exp %629 : vector<16x32xf32>
    %cst_166 = arith.constant 1.000000e+00 : f32
    %631 = vector.broadcast %cst_166 : f32 to vector<16x32xf32>
    %632 = arith.addf %631, %630 : vector<16x32xf32>
    %633 = arith.divf %631, %632 : vector<16x32xf32>
    %634 = vector.extract_strided_slice %623 {offsets = [0, 32], sizes = [16, 32], strides = [1, 1]} : vector<16x128xf32> to vector<16x32xf32>
    %635 = arith.negf %634 : vector<16x32xf32>
    %636 = math.exp %635 : vector<16x32xf32>
    %cst_167 = arith.constant 1.000000e+00 : f32
    %637 = vector.broadcast %cst_167 : f32 to vector<16x32xf32>
    %638 = arith.addf %637, %636 : vector<16x32xf32>
    %639 = arith.divf %637, %638 : vector<16x32xf32>
    %640 = vector.extract_strided_slice %623 {offsets = [0, 64], sizes = [16, 32], strides = [1, 1]} : vector<16x128xf32> to vector<16x32xf32>
    %641 = math.tanh %640 : vector<16x32xf32>
    %642 = vector.extract_strided_slice %623 {offsets = [0, 96], sizes = [16, 32], strides = [1, 1]} : vector<16x128xf32> to vector<16x32xf32>
    %643 = arith.negf %642 : vector<16x32xf32>
    %644 = math.exp %643 : vector<16x32xf32>
    %cst_168 = arith.constant 1.000000e+00 : f32
    %645 = vector.broadcast %cst_168 : f32 to vector<16x32xf32>
    %646 = arith.addf %645, %644 : vector<16x32xf32>
    %647 = arith.divf %645, %646 : vector<16x32xf32>
    %648 = arith.mulf %639, %529 : vector<16x32xf32>
    %649 = arith.mulf %633, %641 : vector<16x32xf32>
    %650 = arith.addf %648, %649 : vector<16x32xf32>
    %651 = math.tanh %650 : vector<16x32xf32>
    %652 = arith.mulf %647, %651 : vector<16x32xf32>
    %653 = vector.extract_strided_slice %627 {offsets = [0, 0], sizes = [16, 32], strides = [1, 1]} : vector<16x128xf32> to vector<16x32xf32>
    %654 = arith.negf %653 : vector<16x32xf32>
    %655 = math.exp %654 : vector<16x32xf32>
    %cst_169 = arith.constant 1.000000e+00 : f32
    %656 = vector.broadcast %cst_169 : f32 to vector<16x32xf32>
    %657 = arith.addf %656, %655 : vector<16x32xf32>
    %658 = arith.divf %656, %657 : vector<16x32xf32>
    %659 = vector.extract_strided_slice %627 {offsets = [0, 32], sizes = [16, 32], strides = [1, 1]} : vector<16x128xf32> to vector<16x32xf32>
    %660 = arith.negf %659 : vector<16x32xf32>
    %661 = math.exp %660 : vector<16x32xf32>
    %cst_170 = arith.constant 1.000000e+00 : f32
    %662 = vector.broadcast %cst_170 : f32 to vector<16x32xf32>
    %663 = arith.addf %662, %661 : vector<16x32xf32>
    %664 = arith.divf %662, %663 : vector<16x32xf32>
    %665 = vector.extract_strided_slice %627 {offsets = [0, 64], sizes = [16, 32], strides = [1, 1]} : vector<16x128xf32> to vector<16x32xf32>
    %666 = math.tanh %665 : vector<16x32xf32>
    %667 = vector.extract_strided_slice %627 {offsets = [0, 96], sizes = [16, 32], strides = [1, 1]} : vector<16x128xf32> to vector<16x32xf32>
    %668 = arith.negf %667 : vector<16x32xf32>
    %669 = math.exp %668 : vector<16x32xf32>
    %cst_171 = arith.constant 1.000000e+00 : f32
    %670 = vector.broadcast %cst_171 : f32 to vector<16x32xf32>
    %671 = arith.addf %670, %669 : vector<16x32xf32>
    %672 = arith.divf %670, %671 : vector<16x32xf32>
    %673 = arith.mulf %664, %554 : vector<16x32xf32>
    %674 = arith.mulf %658, %666 : vector<16x32xf32>
    %675 = arith.addf %673, %674 : vector<16x32xf32>
    %676 = math.tanh %675 : vector<16x32xf32>
    %677 = arith.mulf %672, %676 : vector<16x32xf32>
    %678 = tpu.concatenate %652, %593 in 1 : vector<16x32xf32>, vector<16x32xf32> -> vector<16x64xf32>
    %c0_172 = arith.constant 0 : index
    %c0_173 = arith.constant 0 : index
    %679 = vector.load %arg10[%c0_172, %c0_173] : memref<64x128xf32, #tpu.memory_space<vmem>>, vector<64x128xf32>
    %cst_174 = arith.constant dense<0.000000e+00> : vector<16x128xf32>
    %680 = tpu.matmul %678, %679, %cst_174 {dimension_numbers = #tpu.dot_dimension_numbers<[1], [0], [0], [1], [0, 0, 1, 1], [], []>} : vector<16x64xf32>, vector<64x128xf32>, vector<16x128xf32> -> vector<16x128xf32>
    %c0_175 = arith.constant 0 : index
    %c0_176 = arith.constant 0 : index
    %681 = vector.load %arg11[%c0_175, %c0_176] : memref<1x128xf32, #tpu.memory_space<vmem>>, vector<1x128xf32>
    %682 = vector.broadcast %681 : vector<1x128xf32> to vector<16x128xf32>
    %683 = arith.addf %680, %682 : vector<16x128xf32>
    %684 = tpu.concatenate %677, %618 in 1 : vector<16x32xf32>, vector<16x32xf32> -> vector<16x64xf32>
    %c0_177 = arith.constant 0 : index
    %c0_178 = arith.constant 0 : index
    %685 = vector.load %arg12[%c0_177, %c0_178] : memref<64x128xf32, #tpu.memory_space<vmem>>, vector<64x128xf32>
    %cst_179 = arith.constant dense<0.000000e+00> : vector<16x128xf32>
    %686 = tpu.matmul %684, %685, %cst_179 {dimension_numbers = #tpu.dot_dimension_numbers<[1], [0], [0], [1], [0, 0, 1, 1], [], []>} : vector<16x64xf32>, vector<64x128xf32>, vector<16x128xf32> -> vector<16x128xf32>
    %c0_180 = arith.constant 0 : index
    %c0_181 = arith.constant 0 : index
    %687 = vector.load %arg13[%c0_180, %c0_181] : memref<1x128xf32, #tpu.memory_space<vmem>>, vector<1x128xf32>
    %688 = vector.broadcast %687 : vector<1x128xf32> to vector<16x128xf32>
    %689 = arith.addf %686, %688 : vector<16x128xf32>
    %690 = vector.extract_strided_slice %683 {offsets = [0, 0], sizes = [16, 32], strides = [1, 1]} : vector<16x128xf32> to vector<16x32xf32>
    %691 = arith.negf %690 : vector<16x32xf32>
    %692 = math.exp %691 : vector<16x32xf32>
    %cst_182 = arith.constant 1.000000e+00 : f32
    %693 = vector.broadcast %cst_182 : f32 to vector<16x32xf32>
    %694 = arith.addf %693, %692 : vector<16x32xf32>
    %695 = arith.divf %693, %694 : vector<16x32xf32>
    %696 = vector.extract_strided_slice %683 {offsets = [0, 32], sizes = [16, 32], strides = [1, 1]} : vector<16x128xf32> to vector<16x32xf32>
    %697 = arith.negf %696 : vector<16x32xf32>
    %698 = math.exp %697 : vector<16x32xf32>
    %cst_183 = arith.constant 1.000000e+00 : f32
    %699 = vector.broadcast %cst_183 : f32 to vector<16x32xf32>
    %700 = arith.addf %699, %698 : vector<16x32xf32>
    %701 = arith.divf %699, %700 : vector<16x32xf32>
    %702 = vector.extract_strided_slice %683 {offsets = [0, 64], sizes = [16, 32], strides = [1, 1]} : vector<16x128xf32> to vector<16x32xf32>
    %703 = math.tanh %702 : vector<16x32xf32>
    %704 = vector.extract_strided_slice %683 {offsets = [0, 96], sizes = [16, 32], strides = [1, 1]} : vector<16x128xf32> to vector<16x32xf32>
    %705 = arith.negf %704 : vector<16x32xf32>
    %706 = math.exp %705 : vector<16x32xf32>
    %cst_184 = arith.constant 1.000000e+00 : f32
    %707 = vector.broadcast %cst_184 : f32 to vector<16x32xf32>
    %708 = arith.addf %707, %706 : vector<16x32xf32>
    %709 = arith.divf %707, %708 : vector<16x32xf32>
    %710 = arith.mulf %701, %591 : vector<16x32xf32>
    %711 = arith.mulf %695, %703 : vector<16x32xf32>
    %712 = arith.addf %710, %711 : vector<16x32xf32>
    %713 = math.tanh %712 : vector<16x32xf32>
    %714 = arith.mulf %709, %713 : vector<16x32xf32>
    %715 = vector.extract_strided_slice %689 {offsets = [0, 0], sizes = [16, 32], strides = [1, 1]} : vector<16x128xf32> to vector<16x32xf32>
    %716 = arith.negf %715 : vector<16x32xf32>
    %717 = math.exp %716 : vector<16x32xf32>
    %cst_185 = arith.constant 1.000000e+00 : f32
    %718 = vector.broadcast %cst_185 : f32 to vector<16x32xf32>
    %719 = arith.addf %718, %717 : vector<16x32xf32>
    %720 = arith.divf %718, %719 : vector<16x32xf32>
    %721 = vector.extract_strided_slice %689 {offsets = [0, 32], sizes = [16, 32], strides = [1, 1]} : vector<16x128xf32> to vector<16x32xf32>
    %722 = arith.negf %721 : vector<16x32xf32>
    %723 = math.exp %722 : vector<16x32xf32>
    %cst_186 = arith.constant 1.000000e+00 : f32
    %724 = vector.broadcast %cst_186 : f32 to vector<16x32xf32>
    %725 = arith.addf %724, %723 : vector<16x32xf32>
    %726 = arith.divf %724, %725 : vector<16x32xf32>
    %727 = vector.extract_strided_slice %689 {offsets = [0, 64], sizes = [16, 32], strides = [1, 1]} : vector<16x128xf32> to vector<16x32xf32>
    %728 = math.tanh %727 : vector<16x32xf32>
    %729 = vector.extract_strided_slice %689 {offsets = [0, 96], sizes = [16, 32], strides = [1, 1]} : vector<16x128xf32> to vector<16x32xf32>
    %730 = arith.negf %729 : vector<16x32xf32>
    %731 = math.exp %730 : vector<16x32xf32>
    %cst_187 = arith.constant 1.000000e+00 : f32
    %732 = vector.broadcast %cst_187 : f32 to vector<16x32xf32>
    %733 = arith.addf %732, %731 : vector<16x32xf32>
    %734 = arith.divf %732, %733 : vector<16x32xf32>
    %735 = arith.mulf %726, %616 : vector<16x32xf32>
    %736 = arith.mulf %720, %728 : vector<16x32xf32>
    %737 = arith.addf %735, %736 : vector<16x32xf32>
    %738 = math.tanh %737 : vector<16x32xf32>
    %739 = arith.mulf %734, %738 : vector<16x32xf32>
    %c96 = arith.constant 96 : index
    %c0_188 = arith.constant 0 : index
    %740 = vector.load %arg27[%c96, %c0_188] : memref<128x256xf32, #tpu.memory_space<vmem>>, vector<16x256xf32>
    %741 = vector.extract_strided_slice %740 {offsets = [0, 0], sizes = [16, 128], strides = [1, 1]} : vector<16x256xf32> to vector<16x128xf32>
    %c0_189 = arith.constant 0 : index
    %c0_190 = arith.constant 0 : index
    %742 = vector.load %arg8[%c0_189, %c0_190] : memref<32x128xf32, #tpu.memory_space<vmem>>, vector<32x128xf32>
    %cst_191 = arith.constant dense<0.000000e+00> : vector<16x128xf32>
    %743 = tpu.matmul %652, %742, %cst_191 {dimension_numbers = #tpu.dot_dimension_numbers<[1], [0], [0], [1], [0, 0, 1, 1], [], []>} : vector<16x32xf32>, vector<32x128xf32>, vector<16x128xf32> -> vector<16x128xf32>
    %744 = arith.addf %741, %743 : vector<16x128xf32>
    %745 = vector.extract_strided_slice %740 {offsets = [0, 128], sizes = [16, 128], strides = [1, 1]} : vector<16x256xf32> to vector<16x128xf32>
    %c0_192 = arith.constant 0 : index
    %c0_193 = arith.constant 0 : index
    %746 = vector.load %arg9[%c0_192, %c0_193] : memref<32x128xf32, #tpu.memory_space<vmem>>, vector<32x128xf32>
    %cst_194 = arith.constant dense<0.000000e+00> : vector<16x128xf32>
    %747 = tpu.matmul %677, %746, %cst_194 {dimension_numbers = #tpu.dot_dimension_numbers<[1], [0], [0], [1], [0, 0, 1, 1], [], []>} : vector<16x32xf32>, vector<32x128xf32>, vector<16x128xf32> -> vector<16x128xf32>
    %748 = arith.addf %745, %747 : vector<16x128xf32>
    %749 = vector.extract_strided_slice %744 {offsets = [0, 0], sizes = [16, 32], strides = [1, 1]} : vector<16x128xf32> to vector<16x32xf32>
    %750 = arith.negf %749 : vector<16x32xf32>
    %751 = math.exp %750 : vector<16x32xf32>
    %cst_195 = arith.constant 1.000000e+00 : f32
    %752 = vector.broadcast %cst_195 : f32 to vector<16x32xf32>
    %753 = arith.addf %752, %751 : vector<16x32xf32>
    %754 = arith.divf %752, %753 : vector<16x32xf32>
    %755 = vector.extract_strided_slice %744 {offsets = [0, 32], sizes = [16, 32], strides = [1, 1]} : vector<16x128xf32> to vector<16x32xf32>
    %756 = arith.negf %755 : vector<16x32xf32>
    %757 = math.exp %756 : vector<16x32xf32>
    %cst_196 = arith.constant 1.000000e+00 : f32
    %758 = vector.broadcast %cst_196 : f32 to vector<16x32xf32>
    %759 = arith.addf %758, %757 : vector<16x32xf32>
    %760 = arith.divf %758, %759 : vector<16x32xf32>
    %761 = vector.extract_strided_slice %744 {offsets = [0, 64], sizes = [16, 32], strides = [1, 1]} : vector<16x128xf32> to vector<16x32xf32>
    %762 = math.tanh %761 : vector<16x32xf32>
    %763 = vector.extract_strided_slice %744 {offsets = [0, 96], sizes = [16, 32], strides = [1, 1]} : vector<16x128xf32> to vector<16x32xf32>
    %764 = arith.negf %763 : vector<16x32xf32>
    %765 = math.exp %764 : vector<16x32xf32>
    %cst_197 = arith.constant 1.000000e+00 : f32
    %766 = vector.broadcast %cst_197 : f32 to vector<16x32xf32>
    %767 = arith.addf %766, %765 : vector<16x32xf32>
    %768 = arith.divf %766, %767 : vector<16x32xf32>
    %769 = arith.mulf %760, %650 : vector<16x32xf32>
    %770 = arith.mulf %754, %762 : vector<16x32xf32>
    %771 = arith.addf %769, %770 : vector<16x32xf32>
    %772 = math.tanh %771 : vector<16x32xf32>
    %773 = arith.mulf %768, %772 : vector<16x32xf32>
    %774 = vector.extract_strided_slice %748 {offsets = [0, 0], sizes = [16, 32], strides = [1, 1]} : vector<16x128xf32> to vector<16x32xf32>
    %775 = arith.negf %774 : vector<16x32xf32>
    %776 = math.exp %775 : vector<16x32xf32>
    %cst_198 = arith.constant 1.000000e+00 : f32
    %777 = vector.broadcast %cst_198 : f32 to vector<16x32xf32>
    %778 = arith.addf %777, %776 : vector<16x32xf32>
    %779 = arith.divf %777, %778 : vector<16x32xf32>
    %780 = vector.extract_strided_slice %748 {offsets = [0, 32], sizes = [16, 32], strides = [1, 1]} : vector<16x128xf32> to vector<16x32xf32>
    %781 = arith.negf %780 : vector<16x32xf32>
    %782 = math.exp %781 : vector<16x32xf32>
    %cst_199 = arith.constant 1.000000e+00 : f32
    %783 = vector.broadcast %cst_199 : f32 to vector<16x32xf32>
    %784 = arith.addf %783, %782 : vector<16x32xf32>
    %785 = arith.divf %783, %784 : vector<16x32xf32>
    %786 = vector.extract_strided_slice %748 {offsets = [0, 64], sizes = [16, 32], strides = [1, 1]} : vector<16x128xf32> to vector<16x32xf32>
    %787 = math.tanh %786 : vector<16x32xf32>
    %788 = vector.extract_strided_slice %748 {offsets = [0, 96], sizes = [16, 32], strides = [1, 1]} : vector<16x128xf32> to vector<16x32xf32>
    %789 = arith.negf %788 : vector<16x32xf32>
    %790 = math.exp %789 : vector<16x32xf32>
    %cst_200 = arith.constant 1.000000e+00 : f32
    %791 = vector.broadcast %cst_200 : f32 to vector<16x32xf32>
    %792 = arith.addf %791, %790 : vector<16x32xf32>
    %793 = arith.divf %791, %792 : vector<16x32xf32>
    %794 = arith.mulf %785, %675 : vector<16x32xf32>
    %795 = arith.mulf %779, %787 : vector<16x32xf32>
    %796 = arith.addf %794, %795 : vector<16x32xf32>
    %797 = math.tanh %796 : vector<16x32xf32>
    %798 = arith.mulf %793, %797 : vector<16x32xf32>
    %799 = tpu.concatenate %773, %714 in 1 : vector<16x32xf32>, vector<16x32xf32> -> vector<16x64xf32>
    %c0_201 = arith.constant 0 : index
    %c0_202 = arith.constant 0 : index
    %800 = vector.load %arg10[%c0_201, %c0_202] : memref<64x128xf32, #tpu.memory_space<vmem>>, vector<64x128xf32>
    %cst_203 = arith.constant dense<0.000000e+00> : vector<16x128xf32>
    %801 = tpu.matmul %799, %800, %cst_203 {dimension_numbers = #tpu.dot_dimension_numbers<[1], [0], [0], [1], [0, 0, 1, 1], [], []>} : vector<16x64xf32>, vector<64x128xf32>, vector<16x128xf32> -> vector<16x128xf32>
    %c0_204 = arith.constant 0 : index
    %c0_205 = arith.constant 0 : index
    %802 = vector.load %arg11[%c0_204, %c0_205] : memref<1x128xf32, #tpu.memory_space<vmem>>, vector<1x128xf32>
    %803 = vector.broadcast %802 : vector<1x128xf32> to vector<16x128xf32>
    %804 = arith.addf %801, %803 : vector<16x128xf32>
    %805 = tpu.concatenate %798, %739 in 1 : vector<16x32xf32>, vector<16x32xf32> -> vector<16x64xf32>
    %c0_206 = arith.constant 0 : index
    %c0_207 = arith.constant 0 : index
    %806 = vector.load %arg12[%c0_206, %c0_207] : memref<64x128xf32, #tpu.memory_space<vmem>>, vector<64x128xf32>
    %cst_208 = arith.constant dense<0.000000e+00> : vector<16x128xf32>
    %807 = tpu.matmul %805, %806, %cst_208 {dimension_numbers = #tpu.dot_dimension_numbers<[1], [0], [0], [1], [0, 0, 1, 1], [], []>} : vector<16x64xf32>, vector<64x128xf32>, vector<16x128xf32> -> vector<16x128xf32>
    %c0_209 = arith.constant 0 : index
    %c0_210 = arith.constant 0 : index
    %808 = vector.load %arg13[%c0_209, %c0_210] : memref<1x128xf32, #tpu.memory_space<vmem>>, vector<1x128xf32>
    %809 = vector.broadcast %808 : vector<1x128xf32> to vector<16x128xf32>
    %810 = arith.addf %807, %809 : vector<16x128xf32>
    %811 = vector.extract_strided_slice %804 {offsets = [0, 0], sizes = [16, 32], strides = [1, 1]} : vector<16x128xf32> to vector<16x32xf32>
    %812 = arith.negf %811 : vector<16x32xf32>
    %813 = math.exp %812 : vector<16x32xf32>
    %cst_211 = arith.constant 1.000000e+00 : f32
    %814 = vector.broadcast %cst_211 : f32 to vector<16x32xf32>
    %815 = arith.addf %814, %813 : vector<16x32xf32>
    %816 = arith.divf %814, %815 : vector<16x32xf32>
    %817 = vector.extract_strided_slice %804 {offsets = [0, 32], sizes = [16, 32], strides = [1, 1]} : vector<16x128xf32> to vector<16x32xf32>
    %818 = arith.negf %817 : vector<16x32xf32>
    %819 = math.exp %818 : vector<16x32xf32>
    %cst_212 = arith.constant 1.000000e+00 : f32
    %820 = vector.broadcast %cst_212 : f32 to vector<16x32xf32>
    %821 = arith.addf %820, %819 : vector<16x32xf32>
    %822 = arith.divf %820, %821 : vector<16x32xf32>
    %823 = vector.extract_strided_slice %804 {offsets = [0, 64], sizes = [16, 32], strides = [1, 1]} : vector<16x128xf32> to vector<16x32xf32>
    %824 = math.tanh %823 : vector<16x32xf32>
    %825 = vector.extract_strided_slice %804 {offsets = [0, 96], sizes = [16, 32], strides = [1, 1]} : vector<16x128xf32> to vector<16x32xf32>
    %826 = arith.negf %825 : vector<16x32xf32>
    %827 = math.exp %826 : vector<16x32xf32>
    %cst_213 = arith.constant 1.000000e+00 : f32
    %828 = vector.broadcast %cst_213 : f32 to vector<16x32xf32>
    %829 = arith.addf %828, %827 : vector<16x32xf32>
    %830 = arith.divf %828, %829 : vector<16x32xf32>
    %831 = arith.mulf %822, %712 : vector<16x32xf32>
    %832 = arith.mulf %816, %824 : vector<16x32xf32>
    %833 = arith.addf %831, %832 : vector<16x32xf32>
    %834 = math.tanh %833 : vector<16x32xf32>
    %835 = arith.mulf %830, %834 : vector<16x32xf32>
    %836 = vector.extract_strided_slice %810 {offsets = [0, 0], sizes = [16, 32], strides = [1, 1]} : vector<16x128xf32> to vector<16x32xf32>
    %837 = arith.negf %836 : vector<16x32xf32>
    %838 = math.exp %837 : vector<16x32xf32>
    %cst_214 = arith.constant 1.000000e+00 : f32
    %839 = vector.broadcast %cst_214 : f32 to vector<16x32xf32>
    %840 = arith.addf %839, %838 : vector<16x32xf32>
    %841 = arith.divf %839, %840 : vector<16x32xf32>
    %842 = vector.extract_strided_slice %810 {offsets = [0, 32], sizes = [16, 32], strides = [1, 1]} : vector<16x128xf32> to vector<16x32xf32>
    %843 = arith.negf %842 : vector<16x32xf32>
    %844 = math.exp %843 : vector<16x32xf32>
    %cst_215 = arith.constant 1.000000e+00 : f32
    %845 = vector.broadcast %cst_215 : f32 to vector<16x32xf32>
    %846 = arith.addf %845, %844 : vector<16x32xf32>
    %847 = arith.divf %845, %846 : vector<16x32xf32>
    %848 = vector.extract_strided_slice %810 {offsets = [0, 64], sizes = [16, 32], strides = [1, 1]} : vector<16x128xf32> to vector<16x32xf32>
    %849 = math.tanh %848 : vector<16x32xf32>
    %850 = vector.extract_strided_slice %810 {offsets = [0, 96], sizes = [16, 32], strides = [1, 1]} : vector<16x128xf32> to vector<16x32xf32>
    %851 = arith.negf %850 : vector<16x32xf32>
    %852 = math.exp %851 : vector<16x32xf32>
    %cst_216 = arith.constant 1.000000e+00 : f32
    %853 = vector.broadcast %cst_216 : f32 to vector<16x32xf32>
    %854 = arith.addf %853, %852 : vector<16x32xf32>
    %855 = arith.divf %853, %854 : vector<16x32xf32>
    %856 = arith.mulf %847, %737 : vector<16x32xf32>
    %857 = arith.mulf %841, %849 : vector<16x32xf32>
    %858 = arith.addf %856, %857 : vector<16x32xf32>
    %859 = math.tanh %858 : vector<16x32xf32>
    %860 = arith.mulf %855, %859 : vector<16x32xf32>
    %c112 = arith.constant 112 : index
    %c0_217 = arith.constant 0 : index
    %861 = vector.load %arg27[%c112, %c0_217] : memref<128x256xf32, #tpu.memory_space<vmem>>, vector<16x256xf32>
    %862 = vector.extract_strided_slice %861 {offsets = [0, 0], sizes = [16, 128], strides = [1, 1]} : vector<16x256xf32> to vector<16x128xf32>
    %c0_218 = arith.constant 0 : index
    %c0_219 = arith.constant 0 : index
    %863 = vector.load %arg8[%c0_218, %c0_219] : memref<32x128xf32, #tpu.memory_space<vmem>>, vector<32x128xf32>
    %cst_220 = arith.constant dense<0.000000e+00> : vector<16x128xf32>
    %864 = tpu.matmul %773, %863, %cst_220 {dimension_numbers = #tpu.dot_dimension_numbers<[1], [0], [0], [1], [0, 0, 1, 1], [], []>} : vector<16x32xf32>, vector<32x128xf32>, vector<16x128xf32> -> vector<16x128xf32>
    %865 = arith.addf %862, %864 : vector<16x128xf32>
    %866 = vector.extract_strided_slice %861 {offsets = [0, 128], sizes = [16, 128], strides = [1, 1]} : vector<16x256xf32> to vector<16x128xf32>
    %c0_221 = arith.constant 0 : index
    %c0_222 = arith.constant 0 : index
    %867 = vector.load %arg9[%c0_221, %c0_222] : memref<32x128xf32, #tpu.memory_space<vmem>>, vector<32x128xf32>
    %cst_223 = arith.constant dense<0.000000e+00> : vector<16x128xf32>
    %868 = tpu.matmul %798, %867, %cst_223 {dimension_numbers = #tpu.dot_dimension_numbers<[1], [0], [0], [1], [0, 0, 1, 1], [], []>} : vector<16x32xf32>, vector<32x128xf32>, vector<16x128xf32> -> vector<16x128xf32>
    %869 = arith.addf %866, %868 : vector<16x128xf32>
    %870 = vector.extract_strided_slice %865 {offsets = [0, 0], sizes = [16, 32], strides = [1, 1]} : vector<16x128xf32> to vector<16x32xf32>
    %871 = arith.negf %870 : vector<16x32xf32>
    %872 = math.exp %871 : vector<16x32xf32>
    %cst_224 = arith.constant 1.000000e+00 : f32
    %873 = vector.broadcast %cst_224 : f32 to vector<16x32xf32>
    %874 = arith.addf %873, %872 : vector<16x32xf32>
    %875 = arith.divf %873, %874 : vector<16x32xf32>
    %876 = vector.extract_strided_slice %865 {offsets = [0, 32], sizes = [16, 32], strides = [1, 1]} : vector<16x128xf32> to vector<16x32xf32>
    %877 = arith.negf %876 : vector<16x32xf32>
    %878 = math.exp %877 : vector<16x32xf32>
    %cst_225 = arith.constant 1.000000e+00 : f32
    %879 = vector.broadcast %cst_225 : f32 to vector<16x32xf32>
    %880 = arith.addf %879, %878 : vector<16x32xf32>
    %881 = arith.divf %879, %880 : vector<16x32xf32>
    %882 = vector.extract_strided_slice %865 {offsets = [0, 64], sizes = [16, 32], strides = [1, 1]} : vector<16x128xf32> to vector<16x32xf32>
    %883 = math.tanh %882 : vector<16x32xf32>
    %884 = vector.extract_strided_slice %865 {offsets = [0, 96], sizes = [16, 32], strides = [1, 1]} : vector<16x128xf32> to vector<16x32xf32>
    %885 = arith.negf %884 : vector<16x32xf32>
    %886 = math.exp %885 : vector<16x32xf32>
    %cst_226 = arith.constant 1.000000e+00 : f32
    %887 = vector.broadcast %cst_226 : f32 to vector<16x32xf32>
    %888 = arith.addf %887, %886 : vector<16x32xf32>
    %889 = arith.divf %887, %888 : vector<16x32xf32>
    %890 = arith.mulf %881, %771 : vector<16x32xf32>
    %891 = arith.mulf %875, %883 : vector<16x32xf32>
    %892 = arith.addf %890, %891 : vector<16x32xf32>
    %893 = math.tanh %892 : vector<16x32xf32>
    %894 = arith.mulf %889, %893 : vector<16x32xf32>
    %895 = vector.extract_strided_slice %869 {offsets = [0, 0], sizes = [16, 32], strides = [1, 1]} : vector<16x128xf32> to vector<16x32xf32>
    %896 = arith.negf %895 : vector<16x32xf32>
    %897 = math.exp %896 : vector<16x32xf32>
    %cst_227 = arith.constant 1.000000e+00 : f32
    %898 = vector.broadcast %cst_227 : f32 to vector<16x32xf32>
    %899 = arith.addf %898, %897 : vector<16x32xf32>
    %900 = arith.divf %898, %899 : vector<16x32xf32>
    %901 = vector.extract_strided_slice %869 {offsets = [0, 32], sizes = [16, 32], strides = [1, 1]} : vector<16x128xf32> to vector<16x32xf32>
    %902 = arith.negf %901 : vector<16x32xf32>
    %903 = math.exp %902 : vector<16x32xf32>
    %cst_228 = arith.constant 1.000000e+00 : f32
    %904 = vector.broadcast %cst_228 : f32 to vector<16x32xf32>
    %905 = arith.addf %904, %903 : vector<16x32xf32>
    %906 = arith.divf %904, %905 : vector<16x32xf32>
    %907 = vector.extract_strided_slice %869 {offsets = [0, 64], sizes = [16, 32], strides = [1, 1]} : vector<16x128xf32> to vector<16x32xf32>
    %908 = math.tanh %907 : vector<16x32xf32>
    %909 = vector.extract_strided_slice %869 {offsets = [0, 96], sizes = [16, 32], strides = [1, 1]} : vector<16x128xf32> to vector<16x32xf32>
    %910 = arith.negf %909 : vector<16x32xf32>
    %911 = math.exp %910 : vector<16x32xf32>
    %cst_229 = arith.constant 1.000000e+00 : f32
    %912 = vector.broadcast %cst_229 : f32 to vector<16x32xf32>
    %913 = arith.addf %912, %911 : vector<16x32xf32>
    %914 = arith.divf %912, %913 : vector<16x32xf32>
    %915 = arith.mulf %906, %796 : vector<16x32xf32>
    %916 = arith.mulf %900, %908 : vector<16x32xf32>
    %917 = arith.addf %915, %916 : vector<16x32xf32>
    %918 = math.tanh %917 : vector<16x32xf32>
    %919 = arith.mulf %914, %918 : vector<16x32xf32>
    %920 = tpu.concatenate %894, %835 in 1 : vector<16x32xf32>, vector<16x32xf32> -> vector<16x64xf32>
    %c0_230 = arith.constant 0 : index
    %c0_231 = arith.constant 0 : index
    %921 = vector.load %arg10[%c0_230, %c0_231] : memref<64x128xf32, #tpu.memory_space<vmem>>, vector<64x128xf32>
    %cst_232 = arith.constant dense<0.000000e+00> : vector<16x128xf32>
    %922 = tpu.matmul %920, %921, %cst_232 {dimension_numbers = #tpu.dot_dimension_numbers<[1], [0], [0], [1], [0, 0, 1, 1], [], []>} : vector<16x64xf32>, vector<64x128xf32>, vector<16x128xf32> -> vector<16x128xf32>
    %c0_233 = arith.constant 0 : index
    %c0_234 = arith.constant 0 : index
    %923 = vector.load %arg11[%c0_233, %c0_234] : memref<1x128xf32, #tpu.memory_space<vmem>>, vector<1x128xf32>
    %924 = vector.broadcast %923 : vector<1x128xf32> to vector<16x128xf32>
    %925 = arith.addf %922, %924 : vector<16x128xf32>
    %926 = tpu.concatenate %919, %860 in 1 : vector<16x32xf32>, vector<16x32xf32> -> vector<16x64xf32>
    %c0_235 = arith.constant 0 : index
    %c0_236 = arith.constant 0 : index
    %927 = vector.load %arg12[%c0_235, %c0_236] : memref<64x128xf32, #tpu.memory_space<vmem>>, vector<64x128xf32>
    %cst_237 = arith.constant dense<0.000000e+00> : vector<16x128xf32>
    %928 = tpu.matmul %926, %927, %cst_237 {dimension_numbers = #tpu.dot_dimension_numbers<[1], [0], [0], [1], [0, 0, 1, 1], [], []>} : vector<16x64xf32>, vector<64x128xf32>, vector<16x128xf32> -> vector<16x128xf32>
    %c0_238 = arith.constant 0 : index
    %c0_239 = arith.constant 0 : index
    %929 = vector.load %arg13[%c0_238, %c0_239] : memref<1x128xf32, #tpu.memory_space<vmem>>, vector<1x128xf32>
    %930 = vector.broadcast %929 : vector<1x128xf32> to vector<16x128xf32>
    %931 = arith.addf %928, %930 : vector<16x128xf32>
    %932 = vector.extract_strided_slice %925 {offsets = [0, 0], sizes = [16, 32], strides = [1, 1]} : vector<16x128xf32> to vector<16x32xf32>
    %933 = arith.negf %932 : vector<16x32xf32>
    %934 = math.exp %933 : vector<16x32xf32>
    %cst_240 = arith.constant 1.000000e+00 : f32
    %935 = vector.broadcast %cst_240 : f32 to vector<16x32xf32>
    %936 = arith.addf %935, %934 : vector<16x32xf32>
    %937 = arith.divf %935, %936 : vector<16x32xf32>
    %938 = vector.extract_strided_slice %925 {offsets = [0, 32], sizes = [16, 32], strides = [1, 1]} : vector<16x128xf32> to vector<16x32xf32>
    %939 = arith.negf %938 : vector<16x32xf32>
    %940 = math.exp %939 : vector<16x32xf32>
    %cst_241 = arith.constant 1.000000e+00 : f32
    %941 = vector.broadcast %cst_241 : f32 to vector<16x32xf32>
    %942 = arith.addf %941, %940 : vector<16x32xf32>
    %943 = arith.divf %941, %942 : vector<16x32xf32>
    %944 = vector.extract_strided_slice %925 {offsets = [0, 64], sizes = [16, 32], strides = [1, 1]} : vector<16x128xf32> to vector<16x32xf32>
    %945 = math.tanh %944 : vector<16x32xf32>
    %946 = vector.extract_strided_slice %925 {offsets = [0, 96], sizes = [16, 32], strides = [1, 1]} : vector<16x128xf32> to vector<16x32xf32>
    %947 = arith.negf %946 : vector<16x32xf32>
    %948 = math.exp %947 : vector<16x32xf32>
    %cst_242 = arith.constant 1.000000e+00 : f32
    %949 = vector.broadcast %cst_242 : f32 to vector<16x32xf32>
    %950 = arith.addf %949, %948 : vector<16x32xf32>
    %951 = arith.divf %949, %950 : vector<16x32xf32>
    %952 = arith.mulf %943, %833 : vector<16x32xf32>
    %953 = arith.mulf %937, %945 : vector<16x32xf32>
    %954 = arith.addf %952, %953 : vector<16x32xf32>
    %955 = math.tanh %954 : vector<16x32xf32>
    %956 = arith.mulf %951, %955 : vector<16x32xf32>
    %957 = vector.extract_strided_slice %931 {offsets = [0, 0], sizes = [16, 32], strides = [1, 1]} : vector<16x128xf32> to vector<16x32xf32>
    %958 = arith.negf %957 : vector<16x32xf32>
    %959 = math.exp %958 : vector<16x32xf32>
    %cst_243 = arith.constant 1.000000e+00 : f32
    %960 = vector.broadcast %cst_243 : f32 to vector<16x32xf32>
    %961 = arith.addf %960, %959 : vector<16x32xf32>
    %962 = arith.divf %960, %961 : vector<16x32xf32>
    %963 = vector.extract_strided_slice %931 {offsets = [0, 32], sizes = [16, 32], strides = [1, 1]} : vector<16x128xf32> to vector<16x32xf32>
    %964 = arith.negf %963 : vector<16x32xf32>
    %965 = math.exp %964 : vector<16x32xf32>
    %cst_244 = arith.constant 1.000000e+00 : f32
    %966 = vector.broadcast %cst_244 : f32 to vector<16x32xf32>
    %967 = arith.addf %966, %965 : vector<16x32xf32>
    %968 = arith.divf %966, %967 : vector<16x32xf32>
    %969 = vector.extract_strided_slice %931 {offsets = [0, 64], sizes = [16, 32], strides = [1, 1]} : vector<16x128xf32> to vector<16x32xf32>
    %970 = math.tanh %969 : vector<16x32xf32>
    %971 = vector.extract_strided_slice %931 {offsets = [0, 96], sizes = [16, 32], strides = [1, 1]} : vector<16x128xf32> to vector<16x32xf32>
    %972 = arith.negf %971 : vector<16x32xf32>
    %973 = math.exp %972 : vector<16x32xf32>
    %cst_245 = arith.constant 1.000000e+00 : f32
    %974 = vector.broadcast %cst_245 : f32 to vector<16x32xf32>
    %975 = arith.addf %974, %973 : vector<16x32xf32>
    %976 = arith.divf %974, %975 : vector<16x32xf32>
    %977 = arith.mulf %968, %858 : vector<16x32xf32>
    %978 = arith.mulf %962, %970 : vector<16x32xf32>
    %979 = arith.addf %977, %978 : vector<16x32xf32>
    %980 = math.tanh %979 : vector<16x32xf32>
    %981 = arith.mulf %976, %980 : vector<16x32xf32>
    %c0_246 = arith.constant 0 : index
    %c0_247 = arith.constant 0 : index
    %982 = vector.load %arg0[%c0_246, %c0_247] : memref<16x8xf32, #tpu.memory_space<vmem>>, vector<16x8xf32>
    %c0_248 = arith.constant 0 : index
    %c0_249 = arith.constant 0 : index
    %983 = vector.load %arg4[%c0_248, %c0_249] : memref<8x64xf32, #tpu.memory_space<vmem>>, vector<8x64xf32>
    %cst_250 = arith.constant dense<0.000000e+00> : vector<16x64xf32>
    %984 = tpu.matmul %982, %983, %cst_250 {dimension_numbers = #tpu.dot_dimension_numbers<[1], [0], [0], [1], [0, 0, 1, 1], [], []>} : vector<16x8xf32>, vector<8x64xf32>, vector<16x64xf32> -> vector<16x64xf32>
    %c0_251 = arith.constant 0 : index
    %c0_252 = arith.constant 0 : index
    %985 = vector.load %arg5[%c0_251, %c0_252] : memref<1x64xf32, #tpu.memory_space<vmem>>, vector<1x64xf32>
    %986 = vector.broadcast %985 : vector<1x64xf32> to vector<16x64xf32>
    %987 = arith.addf %984, %986 : vector<16x64xf32>
    %988 = math.tanh %987 : vector<16x64xf32>
    %989 = vector.extract_strided_slice %988 {offsets = [0, 0], sizes = [16, 32], strides = [1, 1]} : vector<16x64xf32> to vector<16x32xf32>
    %990 = vector.extract_strided_slice %988 {offsets = [0, 32], sizes = [16, 32], strides = [1, 1]} : vector<16x64xf32> to vector<16x32xf32>
    %991 = arith.addf %990, %981 : vector<16x32xf32>
    %992 = arith.addf %989, %981 : vector<16x32xf32>
    %993 = tpu.concatenate %991, %992 in 1 : vector<16x32xf32>, vector<16x32xf32> -> vector<16x64xf32>
    %c0_253 = arith.constant 0 : index
    %c0_254 = arith.constant 0 : index
    %994 = vector.load %arg14[%c0_253, %c0_254] : memref<64x128xf32, #tpu.memory_space<vmem>>, vector<64x128xf32>
    %cst_255 = arith.constant dense<0.000000e+00> : vector<16x128xf32>
    %995 = tpu.matmul %993, %994, %cst_255 {dimension_numbers = #tpu.dot_dimension_numbers<[1], [0], [0], [1], [0, 0, 1, 1], [], []>} : vector<16x64xf32>, vector<64x128xf32>, vector<16x128xf32> -> vector<16x128xf32>
    %c0_256 = arith.constant 0 : index
    %c0_257 = arith.constant 0 : index
    %996 = vector.load %arg15[%c0_256, %c0_257] : memref<1x128xf32, #tpu.memory_space<vmem>>, vector<1x128xf32>
    %997 = vector.broadcast %996 : vector<1x128xf32> to vector<16x128xf32>
    %998 = arith.addf %995, %997 : vector<16x128xf32>
    %cst_258 = arith.constant 0.000000e+00 : f32
    %999 = vector.broadcast %cst_258 : f32 to vector<4x32xf32>
    %1000 = vector.extract_strided_slice %998 {offsets = [0, 0], sizes = [4, 128], strides = [1, 1]} : vector<16x128xf32> to vector<4x128xf32>
    %c0_259 = arith.constant 0 : index
    %c0_260 = arith.constant 0 : index
    %1001 = vector.load %arg16[%c0_259, %c0_260] : memref<32x128xf32, #tpu.memory_space<vmem>>, vector<32x128xf32>
    %cst_261 = arith.constant dense<0.000000e+00> : vector<4x128xf32>
    %1002 = tpu.matmul %999, %1001, %cst_261 {dimension_numbers = #tpu.dot_dimension_numbers<[1], [0], [0], [1], [0, 0, 1, 1], [], []>} : vector<4x32xf32>, vector<32x128xf32>, vector<4x128xf32> -> vector<4x128xf32>
    %1003 = arith.addf %1000, %1002 : vector<4x128xf32>
    %1004 = vector.extract_strided_slice %1003 {offsets = [0, 0], sizes = [4, 32], strides = [1, 1]} : vector<4x128xf32> to vector<4x32xf32>
    %1005 = arith.negf %1004 : vector<4x32xf32>
    %1006 = math.exp %1005 : vector<4x32xf32>
    %cst_262 = arith.constant 1.000000e+00 : f32
    %1007 = vector.broadcast %cst_262 : f32 to vector<4x32xf32>
    %1008 = arith.addf %1007, %1006 : vector<4x32xf32>
    %1009 = arith.divf %1007, %1008 : vector<4x32xf32>
    %1010 = vector.extract_strided_slice %1003 {offsets = [0, 32], sizes = [4, 32], strides = [1, 1]} : vector<4x128xf32> to vector<4x32xf32>
    %1011 = arith.negf %1010 : vector<4x32xf32>
    %1012 = math.exp %1011 : vector<4x32xf32>
    %cst_263 = arith.constant 1.000000e+00 : f32
    %1013 = vector.broadcast %cst_263 : f32 to vector<4x32xf32>
    %1014 = arith.addf %1013, %1012 : vector<4x32xf32>
    %1015 = arith.divf %1013, %1014 : vector<4x32xf32>
    %1016 = vector.extract_strided_slice %1003 {offsets = [0, 64], sizes = [4, 32], strides = [1, 1]} : vector<4x128xf32> to vector<4x32xf32>
    %1017 = math.tanh %1016 : vector<4x32xf32>
    %1018 = vector.extract_strided_slice %1003 {offsets = [0, 96], sizes = [4, 32], strides = [1, 1]} : vector<4x128xf32> to vector<4x32xf32>
    %1019 = arith.negf %1018 : vector<4x32xf32>
    %1020 = math.exp %1019 : vector<4x32xf32>
    %cst_264 = arith.constant 1.000000e+00 : f32
    %1021 = vector.broadcast %cst_264 : f32 to vector<4x32xf32>
    %1022 = arith.addf %1021, %1020 : vector<4x32xf32>
    %1023 = arith.divf %1021, %1022 : vector<4x32xf32>
    %1024 = arith.mulf %1015, %999 : vector<4x32xf32>
    %1025 = arith.mulf %1009, %1017 : vector<4x32xf32>
    %1026 = arith.addf %1024, %1025 : vector<4x32xf32>
    %1027 = math.tanh %1026 : vector<4x32xf32>
    %1028 = arith.mulf %1023, %1027 : vector<4x32xf32>
    %1029 = tpu.concatenate %1028, %999 in 1 : vector<4x32xf32>, vector<4x32xf32> -> vector<4x64xf32>
    %c0_265 = arith.constant 0 : index
    %c0_266 = arith.constant 0 : index
    %1030 = vector.load %arg17[%c0_265, %c0_266] : memref<64x128xf32, #tpu.memory_space<vmem>>, vector<64x128xf32>
    %cst_267 = arith.constant dense<0.000000e+00> : vector<4x128xf32>
    %1031 = tpu.matmul %1029, %1030, %cst_267 {dimension_numbers = #tpu.dot_dimension_numbers<[1], [0], [0], [1], [0, 0, 1, 1], [], []>} : vector<4x64xf32>, vector<64x128xf32>, vector<4x128xf32> -> vector<4x128xf32>
    %c0_268 = arith.constant 0 : index
    %c0_269 = arith.constant 0 : index
    %1032 = vector.load %arg18[%c0_268, %c0_269] : memref<1x128xf32, #tpu.memory_space<vmem>>, vector<1x128xf32>
    %1033 = vector.broadcast %1032 : vector<1x128xf32> to vector<4x128xf32>
    %1034 = arith.addf %1031, %1033 : vector<4x128xf32>
    %1035 = vector.extract_strided_slice %1034 {offsets = [0, 0], sizes = [4, 32], strides = [1, 1]} : vector<4x128xf32> to vector<4x32xf32>
    %1036 = arith.negf %1035 : vector<4x32xf32>
    %1037 = math.exp %1036 : vector<4x32xf32>
    %cst_270 = arith.constant 1.000000e+00 : f32
    %1038 = vector.broadcast %cst_270 : f32 to vector<4x32xf32>
    %1039 = arith.addf %1038, %1037 : vector<4x32xf32>
    %1040 = arith.divf %1038, %1039 : vector<4x32xf32>
    %1041 = vector.extract_strided_slice %1034 {offsets = [0, 32], sizes = [4, 32], strides = [1, 1]} : vector<4x128xf32> to vector<4x32xf32>
    %1042 = arith.negf %1041 : vector<4x32xf32>
    %1043 = math.exp %1042 : vector<4x32xf32>
    %cst_271 = arith.constant 1.000000e+00 : f32
    %1044 = vector.broadcast %cst_271 : f32 to vector<4x32xf32>
    %1045 = arith.addf %1044, %1043 : vector<4x32xf32>
    %1046 = arith.divf %1044, %1045 : vector<4x32xf32>
    %1047 = vector.extract_strided_slice %1034 {offsets = [0, 64], sizes = [4, 32], strides = [1, 1]} : vector<4x128xf32> to vector<4x32xf32>
    %1048 = math.tanh %1047 : vector<4x32xf32>
    %1049 = vector.extract_strided_slice %1034 {offsets = [0, 96], sizes = [4, 32], strides = [1, 1]} : vector<4x128xf32> to vector<4x32xf32>
    %1050 = arith.negf %1049 : vector<4x32xf32>
    %1051 = math.exp %1050 : vector<4x32xf32>
    %cst_272 = arith.constant 1.000000e+00 : f32
    %1052 = vector.broadcast %cst_272 : f32 to vector<4x32xf32>
    %1053 = arith.addf %1052, %1051 : vector<4x32xf32>
    %1054 = arith.divf %1052, %1053 : vector<4x32xf32>
    %1055 = arith.mulf %1046, %999 : vector<4x32xf32>
    %1056 = arith.mulf %1040, %1048 : vector<4x32xf32>
    %1057 = arith.addf %1055, %1056 : vector<4x32xf32>
    %1058 = math.tanh %1057 : vector<4x32xf32>
    %1059 = arith.mulf %1054, %1058 : vector<4x32xf32>
    %1060 = vector.extract_strided_slice %998 {offsets = [4, 0], sizes = [4, 128], strides = [1, 1]} : vector<16x128xf32> to vector<4x128xf32>
    %c0_273 = arith.constant 0 : index
    %c0_274 = arith.constant 0 : index
    %1061 = vector.load %arg16[%c0_273, %c0_274] : memref<32x128xf32, #tpu.memory_space<vmem>>, vector<32x128xf32>
    %cst_275 = arith.constant dense<0.000000e+00> : vector<4x128xf32>
    %1062 = tpu.matmul %1028, %1061, %cst_275 {dimension_numbers = #tpu.dot_dimension_numbers<[1], [0], [0], [1], [0, 0, 1, 1], [], []>} : vector<4x32xf32>, vector<32x128xf32>, vector<4x128xf32> -> vector<4x128xf32>
    %1063 = arith.addf %1060, %1062 : vector<4x128xf32>
    %1064 = vector.extract_strided_slice %1063 {offsets = [0, 0], sizes = [4, 32], strides = [1, 1]} : vector<4x128xf32> to vector<4x32xf32>
    %1065 = arith.negf %1064 : vector<4x32xf32>
    %1066 = math.exp %1065 : vector<4x32xf32>
    %cst_276 = arith.constant 1.000000e+00 : f32
    %1067 = vector.broadcast %cst_276 : f32 to vector<4x32xf32>
    %1068 = arith.addf %1067, %1066 : vector<4x32xf32>
    %1069 = arith.divf %1067, %1068 : vector<4x32xf32>
    %1070 = vector.extract_strided_slice %1063 {offsets = [0, 32], sizes = [4, 32], strides = [1, 1]} : vector<4x128xf32> to vector<4x32xf32>
    %1071 = arith.negf %1070 : vector<4x32xf32>
    %1072 = math.exp %1071 : vector<4x32xf32>
    %cst_277 = arith.constant 1.000000e+00 : f32
    %1073 = vector.broadcast %cst_277 : f32 to vector<4x32xf32>
    %1074 = arith.addf %1073, %1072 : vector<4x32xf32>
    %1075 = arith.divf %1073, %1074 : vector<4x32xf32>
    %1076 = vector.extract_strided_slice %1063 {offsets = [0, 64], sizes = [4, 32], strides = [1, 1]} : vector<4x128xf32> to vector<4x32xf32>
    %1077 = math.tanh %1076 : vector<4x32xf32>
    %1078 = vector.extract_strided_slice %1063 {offsets = [0, 96], sizes = [4, 32], strides = [1, 1]} : vector<4x128xf32> to vector<4x32xf32>
    %1079 = arith.negf %1078 : vector<4x32xf32>
    %1080 = math.exp %1079 : vector<4x32xf32>
    %cst_278 = arith.constant 1.000000e+00 : f32
    %1081 = vector.broadcast %cst_278 : f32 to vector<4x32xf32>
    %1082 = arith.addf %1081, %1080 : vector<4x32xf32>
    %1083 = arith.divf %1081, %1082 : vector<4x32xf32>
    %1084 = arith.mulf %1075, %1026 : vector<4x32xf32>
    %1085 = arith.mulf %1069, %1077 : vector<4x32xf32>
    %1086 = arith.addf %1084, %1085 : vector<4x32xf32>
    %1087 = math.tanh %1086 : vector<4x32xf32>
    %1088 = arith.mulf %1083, %1087 : vector<4x32xf32>
    %1089 = tpu.concatenate %1088, %1059 in 1 : vector<4x32xf32>, vector<4x32xf32> -> vector<4x64xf32>
    %c0_279 = arith.constant 0 : index
    %c0_280 = arith.constant 0 : index
    %1090 = vector.load %arg17[%c0_279, %c0_280] : memref<64x128xf32, #tpu.memory_space<vmem>>, vector<64x128xf32>
    %cst_281 = arith.constant dense<0.000000e+00> : vector<4x128xf32>
    %1091 = tpu.matmul %1089, %1090, %cst_281 {dimension_numbers = #tpu.dot_dimension_numbers<[1], [0], [0], [1], [0, 0, 1, 1], [], []>} : vector<4x64xf32>, vector<64x128xf32>, vector<4x128xf32> -> vector<4x128xf32>
    %c0_282 = arith.constant 0 : index
    %c0_283 = arith.constant 0 : index
    %1092 = vector.load %arg18[%c0_282, %c0_283] : memref<1x128xf32, #tpu.memory_space<vmem>>, vector<1x128xf32>
    %1093 = vector.broadcast %1092 : vector<1x128xf32> to vector<4x128xf32>
    %1094 = arith.addf %1091, %1093 : vector<4x128xf32>
    %1095 = vector.extract_strided_slice %1094 {offsets = [0, 0], sizes = [4, 32], strides = [1, 1]} : vector<4x128xf32> to vector<4x32xf32>
    %1096 = arith.negf %1095 : vector<4x32xf32>
    %1097 = math.exp %1096 : vector<4x32xf32>
    %cst_284 = arith.constant 1.000000e+00 : f32
    %1098 = vector.broadcast %cst_284 : f32 to vector<4x32xf32>
    %1099 = arith.addf %1098, %1097 : vector<4x32xf32>
    %1100 = arith.divf %1098, %1099 : vector<4x32xf32>
    %1101 = vector.extract_strided_slice %1094 {offsets = [0, 32], sizes = [4, 32], strides = [1, 1]} : vector<4x128xf32> to vector<4x32xf32>
    %1102 = arith.negf %1101 : vector<4x32xf32>
    %1103 = math.exp %1102 : vector<4x32xf32>
    %cst_285 = arith.constant 1.000000e+00 : f32
    %1104 = vector.broadcast %cst_285 : f32 to vector<4x32xf32>
    %1105 = arith.addf %1104, %1103 : vector<4x32xf32>
    %1106 = arith.divf %1104, %1105 : vector<4x32xf32>
    %1107 = vector.extract_strided_slice %1094 {offsets = [0, 64], sizes = [4, 32], strides = [1, 1]} : vector<4x128xf32> to vector<4x32xf32>
    %1108 = math.tanh %1107 : vector<4x32xf32>
    %1109 = vector.extract_strided_slice %1094 {offsets = [0, 96], sizes = [4, 32], strides = [1, 1]} : vector<4x128xf32> to vector<4x32xf32>
    %1110 = arith.negf %1109 : vector<4x32xf32>
    %1111 = math.exp %1110 : vector<4x32xf32>
    %cst_286 = arith.constant 1.000000e+00 : f32
    %1112 = vector.broadcast %cst_286 : f32 to vector<4x32xf32>
    %1113 = arith.addf %1112, %1111 : vector<4x32xf32>
    %1114 = arith.divf %1112, %1113 : vector<4x32xf32>
    %1115 = arith.mulf %1106, %1057 : vector<4x32xf32>
    %1116 = arith.mulf %1100, %1108 : vector<4x32xf32>
    %1117 = arith.addf %1115, %1116 : vector<4x32xf32>
    %1118 = math.tanh %1117 : vector<4x32xf32>
    %1119 = arith.mulf %1114, %1118 : vector<4x32xf32>
    %1120 = vector.extract_strided_slice %998 {offsets = [8, 0], sizes = [4, 128], strides = [1, 1]} : vector<16x128xf32> to vector<4x128xf32>
    %c0_287 = arith.constant 0 : index
    %c0_288 = arith.constant 0 : index
    %1121 = vector.load %arg16[%c0_287, %c0_288] : memref<32x128xf32, #tpu.memory_space<vmem>>, vector<32x128xf32>
    %cst_289 = arith.constant dense<0.000000e+00> : vector<4x128xf32>
    %1122 = tpu.matmul %1088, %1121, %cst_289 {dimension_numbers = #tpu.dot_dimension_numbers<[1], [0], [0], [1], [0, 0, 1, 1], [], []>} : vector<4x32xf32>, vector<32x128xf32>, vector<4x128xf32> -> vector<4x128xf32>
    %1123 = arith.addf %1120, %1122 : vector<4x128xf32>
    %1124 = vector.extract_strided_slice %1123 {offsets = [0, 0], sizes = [4, 32], strides = [1, 1]} : vector<4x128xf32> to vector<4x32xf32>
    %1125 = arith.negf %1124 : vector<4x32xf32>
    %1126 = math.exp %1125 : vector<4x32xf32>
    %cst_290 = arith.constant 1.000000e+00 : f32
    %1127 = vector.broadcast %cst_290 : f32 to vector<4x32xf32>
    %1128 = arith.addf %1127, %1126 : vector<4x32xf32>
    %1129 = arith.divf %1127, %1128 : vector<4x32xf32>
    %1130 = vector.extract_strided_slice %1123 {offsets = [0, 32], sizes = [4, 32], strides = [1, 1]} : vector<4x128xf32> to vector<4x32xf32>
    %1131 = arith.negf %1130 : vector<4x32xf32>
    %1132 = math.exp %1131 : vector<4x32xf32>
    %cst_291 = arith.constant 1.000000e+00 : f32
    %1133 = vector.broadcast %cst_291 : f32 to vector<4x32xf32>
    %1134 = arith.addf %1133, %1132 : vector<4x32xf32>
    %1135 = arith.divf %1133, %1134 : vector<4x32xf32>
    %1136 = vector.extract_strided_slice %1123 {offsets = [0, 64], sizes = [4, 32], strides = [1, 1]} : vector<4x128xf32> to vector<4x32xf32>
    %1137 = math.tanh %1136 : vector<4x32xf32>
    %1138 = vector.extract_strided_slice %1123 {offsets = [0, 96], sizes = [4, 32], strides = [1, 1]} : vector<4x128xf32> to vector<4x32xf32>
    %1139 = arith.negf %1138 : vector<4x32xf32>
    %1140 = math.exp %1139 : vector<4x32xf32>
    %cst_292 = arith.constant 1.000000e+00 : f32
    %1141 = vector.broadcast %cst_292 : f32 to vector<4x32xf32>
    %1142 = arith.addf %1141, %1140 : vector<4x32xf32>
    %1143 = arith.divf %1141, %1142 : vector<4x32xf32>
    %1144 = arith.mulf %1135, %1086 : vector<4x32xf32>
    %1145 = arith.mulf %1129, %1137 : vector<4x32xf32>
    %1146 = arith.addf %1144, %1145 : vector<4x32xf32>
    %1147 = math.tanh %1146 : vector<4x32xf32>
    %1148 = arith.mulf %1143, %1147 : vector<4x32xf32>
    %1149 = tpu.concatenate %1148, %1119 in 1 : vector<4x32xf32>, vector<4x32xf32> -> vector<4x64xf32>
    %c0_293 = arith.constant 0 : index
    %c0_294 = arith.constant 0 : index
    %1150 = vector.load %arg17[%c0_293, %c0_294] : memref<64x128xf32, #tpu.memory_space<vmem>>, vector<64x128xf32>
    %cst_295 = arith.constant dense<0.000000e+00> : vector<4x128xf32>
    %1151 = tpu.matmul %1149, %1150, %cst_295 {dimension_numbers = #tpu.dot_dimension_numbers<[1], [0], [0], [1], [0, 0, 1, 1], [], []>} : vector<4x64xf32>, vector<64x128xf32>, vector<4x128xf32> -> vector<4x128xf32>
    %c0_296 = arith.constant 0 : index
    %c0_297 = arith.constant 0 : index
    %1152 = vector.load %arg18[%c0_296, %c0_297] : memref<1x128xf32, #tpu.memory_space<vmem>>, vector<1x128xf32>
    %1153 = vector.broadcast %1152 : vector<1x128xf32> to vector<4x128xf32>
    %1154 = arith.addf %1151, %1153 : vector<4x128xf32>
    %1155 = vector.extract_strided_slice %1154 {offsets = [0, 0], sizes = [4, 32], strides = [1, 1]} : vector<4x128xf32> to vector<4x32xf32>
    %1156 = arith.negf %1155 : vector<4x32xf32>
    %1157 = math.exp %1156 : vector<4x32xf32>
    %cst_298 = arith.constant 1.000000e+00 : f32
    %1158 = vector.broadcast %cst_298 : f32 to vector<4x32xf32>
    %1159 = arith.addf %1158, %1157 : vector<4x32xf32>
    %1160 = arith.divf %1158, %1159 : vector<4x32xf32>
    %1161 = vector.extract_strided_slice %1154 {offsets = [0, 32], sizes = [4, 32], strides = [1, 1]} : vector<4x128xf32> to vector<4x32xf32>
    %1162 = arith.negf %1161 : vector<4x32xf32>
    %1163 = math.exp %1162 : vector<4x32xf32>
    %cst_299 = arith.constant 1.000000e+00 : f32
    %1164 = vector.broadcast %cst_299 : f32 to vector<4x32xf32>
    %1165 = arith.addf %1164, %1163 : vector<4x32xf32>
    %1166 = arith.divf %1164, %1165 : vector<4x32xf32>
    %1167 = vector.extract_strided_slice %1154 {offsets = [0, 64], sizes = [4, 32], strides = [1, 1]} : vector<4x128xf32> to vector<4x32xf32>
    %1168 = math.tanh %1167 : vector<4x32xf32>
    %1169 = vector.extract_strided_slice %1154 {offsets = [0, 96], sizes = [4, 32], strides = [1, 1]} : vector<4x128xf32> to vector<4x32xf32>
    %1170 = arith.negf %1169 : vector<4x32xf32>
    %1171 = math.exp %1170 : vector<4x32xf32>
    %cst_300 = arith.constant 1.000000e+00 : f32
    %1172 = vector.broadcast %cst_300 : f32 to vector<4x32xf32>
    %1173 = arith.addf %1172, %1171 : vector<4x32xf32>
    %1174 = arith.divf %1172, %1173 : vector<4x32xf32>
    %1175 = arith.mulf %1166, %1117 : vector<4x32xf32>
    %1176 = arith.mulf %1160, %1168 : vector<4x32xf32>
    %1177 = arith.addf %1175, %1176 : vector<4x32xf32>
    %1178 = math.tanh %1177 : vector<4x32xf32>
    %1179 = arith.mulf %1174, %1178 : vector<4x32xf32>
    %1180 = vector.extract_strided_slice %998 {offsets = [12, 0], sizes = [4, 128], strides = [1, 1]} : vector<16x128xf32> to vector<4x128xf32>
    %c0_301 = arith.constant 0 : index
    %c0_302 = arith.constant 0 : index
    %1181 = vector.load %arg16[%c0_301, %c0_302] : memref<32x128xf32, #tpu.memory_space<vmem>>, vector<32x128xf32>
    %cst_303 = arith.constant dense<0.000000e+00> : vector<4x128xf32>
    %1182 = tpu.matmul %1148, %1181, %cst_303 {dimension_numbers = #tpu.dot_dimension_numbers<[1], [0], [0], [1], [0, 0, 1, 1], [], []>} : vector<4x32xf32>, vector<32x128xf32>, vector<4x128xf32> -> vector<4x128xf32>
    %1183 = arith.addf %1180, %1182 : vector<4x128xf32>
    %1184 = vector.extract_strided_slice %1183 {offsets = [0, 0], sizes = [4, 32], strides = [1, 1]} : vector<4x128xf32> to vector<4x32xf32>
    %1185 = arith.negf %1184 : vector<4x32xf32>
    %1186 = math.exp %1185 : vector<4x32xf32>
    %cst_304 = arith.constant 1.000000e+00 : f32
    %1187 = vector.broadcast %cst_304 : f32 to vector<4x32xf32>
    %1188 = arith.addf %1187, %1186 : vector<4x32xf32>
    %1189 = arith.divf %1187, %1188 : vector<4x32xf32>
    %1190 = vector.extract_strided_slice %1183 {offsets = [0, 32], sizes = [4, 32], strides = [1, 1]} : vector<4x128xf32> to vector<4x32xf32>
    %1191 = arith.negf %1190 : vector<4x32xf32>
    %1192 = math.exp %1191 : vector<4x32xf32>
    %cst_305 = arith.constant 1.000000e+00 : f32
    %1193 = vector.broadcast %cst_305 : f32 to vector<4x32xf32>
    %1194 = arith.addf %1193, %1192 : vector<4x32xf32>
    %1195 = arith.divf %1193, %1194 : vector<4x32xf32>
    %1196 = vector.extract_strided_slice %1183 {offsets = [0, 64], sizes = [4, 32], strides = [1, 1]} : vector<4x128xf32> to vector<4x32xf32>
    %1197 = math.tanh %1196 : vector<4x32xf32>
    %1198 = vector.extract_strided_slice %1183 {offsets = [0, 96], sizes = [4, 32], strides = [1, 1]} : vector<4x128xf32> to vector<4x32xf32>
    %1199 = arith.negf %1198 : vector<4x32xf32>
    %1200 = math.exp %1199 : vector<4x32xf32>
    %cst_306 = arith.constant 1.000000e+00 : f32
    %1201 = vector.broadcast %cst_306 : f32 to vector<4x32xf32>
    %1202 = arith.addf %1201, %1200 : vector<4x32xf32>
    %1203 = arith.divf %1201, %1202 : vector<4x32xf32>
    %1204 = arith.mulf %1195, %1146 : vector<4x32xf32>
    %1205 = arith.mulf %1189, %1197 : vector<4x32xf32>
    %1206 = arith.addf %1204, %1205 : vector<4x32xf32>
    %1207 = math.tanh %1206 : vector<4x32xf32>
    %1208 = arith.mulf %1203, %1207 : vector<4x32xf32>
    %1209 = tpu.concatenate %1208, %1179 in 1 : vector<4x32xf32>, vector<4x32xf32> -> vector<4x64xf32>
    %c0_307 = arith.constant 0 : index
    %c0_308 = arith.constant 0 : index
    %1210 = vector.load %arg17[%c0_307, %c0_308] : memref<64x128xf32, #tpu.memory_space<vmem>>, vector<64x128xf32>
    %cst_309 = arith.constant dense<0.000000e+00> : vector<4x128xf32>
    %1211 = tpu.matmul %1209, %1210, %cst_309 {dimension_numbers = #tpu.dot_dimension_numbers<[1], [0], [0], [1], [0, 0, 1, 1], [], []>} : vector<4x64xf32>, vector<64x128xf32>, vector<4x128xf32> -> vector<4x128xf32>
    %c0_310 = arith.constant 0 : index
    %c0_311 = arith.constant 0 : index
    %1212 = vector.load %arg18[%c0_310, %c0_311] : memref<1x128xf32, #tpu.memory_space<vmem>>, vector<1x128xf32>
    %1213 = vector.broadcast %1212 : vector<1x128xf32> to vector<4x128xf32>
    %1214 = arith.addf %1211, %1213 : vector<4x128xf32>
    %1215 = vector.extract_strided_slice %1214 {offsets = [0, 0], sizes = [4, 32], strides = [1, 1]} : vector<4x128xf32> to vector<4x32xf32>
    %1216 = arith.negf %1215 : vector<4x32xf32>
    %1217 = math.exp %1216 : vector<4x32xf32>
    %cst_312 = arith.constant 1.000000e+00 : f32
    %1218 = vector.broadcast %cst_312 : f32 to vector<4x32xf32>
    %1219 = arith.addf %1218, %1217 : vector<4x32xf32>
    %1220 = arith.divf %1218, %1219 : vector<4x32xf32>
    %1221 = vector.extract_strided_slice %1214 {offsets = [0, 32], sizes = [4, 32], strides = [1, 1]} : vector<4x128xf32> to vector<4x32xf32>
    %1222 = arith.negf %1221 : vector<4x32xf32>
    %1223 = math.exp %1222 : vector<4x32xf32>
    %cst_313 = arith.constant 1.000000e+00 : f32
    %1224 = vector.broadcast %cst_313 : f32 to vector<4x32xf32>
    %1225 = arith.addf %1224, %1223 : vector<4x32xf32>
    %1226 = arith.divf %1224, %1225 : vector<4x32xf32>
    %1227 = vector.extract_strided_slice %1214 {offsets = [0, 64], sizes = [4, 32], strides = [1, 1]} : vector<4x128xf32> to vector<4x32xf32>
    %1228 = math.tanh %1227 : vector<4x32xf32>
    %1229 = vector.extract_strided_slice %1214 {offsets = [0, 96], sizes = [4, 32], strides = [1, 1]} : vector<4x128xf32> to vector<4x32xf32>
    %1230 = arith.negf %1229 : vector<4x32xf32>
    %1231 = math.exp %1230 : vector<4x32xf32>
    %cst_314 = arith.constant 1.000000e+00 : f32
    %1232 = vector.broadcast %cst_314 : f32 to vector<4x32xf32>
    %1233 = arith.addf %1232, %1231 : vector<4x32xf32>
    %1234 = arith.divf %1232, %1233 : vector<4x32xf32>
    %1235 = arith.mulf %1226, %1177 : vector<4x32xf32>
    %1236 = arith.mulf %1220, %1228 : vector<4x32xf32>
    %1237 = arith.addf %1235, %1236 : vector<4x32xf32>
    %1238 = math.tanh %1237 : vector<4x32xf32>
    %1239 = arith.mulf %1234, %1238 : vector<4x32xf32>
    %c0_315 = arith.constant 0 : index
    %c0_316 = arith.constant 0 : index
    %1240 = vector.load %arg19[%c0_315, %c0_316] : memref<1x32xf32, #tpu.memory_space<vmem>>, vector<1x32xf32>
    %1241 = vector.broadcast %1240 : vector<1x32xf32> to vector<4x32xf32>
    %1242 = arith.mulf %1239, %1241 : vector<4x32xf32>
    %cst_317 = arith.constant dense<0.000000e+00> : vector<4xf32>
    %1243 = vector.multi_reduction <add>, %1242, %cst_317 [1] : vector<4x32xf32> to vector<4xf32>
    %1244 = vector.shape_cast %1243 : vector<4xf32> to vector<4x1xf32>
    %c0_318 = arith.constant 0 : index
    %c0_319 = arith.constant 0 : index
    %1245 = vector.load %arg20[%c0_318, %c0_319] : memref<1x1xf32, #tpu.memory_space<vmem>>, vector<1x1xf32>
    %1246 = vector.broadcast %1245 : vector<1x1xf32> to vector<4x1xf32>
    %1247 = arith.addf %1244, %1246 : vector<4x1xf32>
    %c0_320 = arith.constant 0 : index
    %c0_321 = arith.constant 0 : index
    %1248 = vector.load %arg26[%c0_320, %c0_321] : memref<4x1xf32, #tpu.memory_space<vmem>>, vector<4x1xf32>
    tpu.vector_store %arg26[%c0_320, %c0_321], %1247 {strides = array<i32>} : memref<4x1xf32, #tpu.memory_space<vmem>>, vector<4x1xf32>,
    %c0_322 = arith.constant 0 : index
    %c0_323 = arith.constant 0 : index
    %1249 = vector.load %arg21[%c0_322, %c0_323] : memref<32x32xf32, #tpu.memory_space<vmem>>, vector<32x32xf32>
    %cst_324 = arith.constant dense<0.000000e+00> : vector<16x32xf32>
    %1250 = tpu.matmul %989, %1249, %cst_324 {dimension_numbers = #tpu.dot_dimension_numbers<[1], [0], [0], [1], [0, 0, 1, 1], [], []>} : vector<16x32xf32>, vector<32x32xf32>, vector<16x32xf32> -> vector<16x32xf32>
    %c0_325 = arith.constant 0 : index
    %c0_326 = arith.constant 0 : index
    %1251 = vector.load %arg22[%c0_325, %c0_326] : memref<1x32xf32, #tpu.memory_space<vmem>>, vector<1x32xf32>
    %1252 = vector.broadcast %1251 : vector<1x32xf32> to vector<16x32xf32>
    %1253 = arith.addf %1250, %1252 : vector<16x32xf32>
    %1254 = vector.extract_strided_slice %956 {offsets = [0, 0], sizes = [4, 32], strides = [1, 1]} : vector<16x32xf32> to vector<4x32xf32>
    %1255 = vector.extract_strided_slice %1254 {offsets = [1, 0], sizes = [3, 32], strides = [1, 1]} : vector<4x32xf32> to vector<3x32xf32>
    %1256 = vector.extract_strided_slice %1254 {offsets = [0, 0], sizes = [1, 32], strides = [1, 1]} : vector<4x32xf32> to vector<1x32xf32>
    %1257 = tpu.concatenate %1255, %1256 in 0 : vector<3x32xf32>, vector<1x32xf32> -> vector<4x32xf32>
    %1258 = vector.extract_strided_slice %956 {offsets = [4, 0], sizes = [4, 32], strides = [1, 1]} : vector<16x32xf32> to vector<4x32xf32>
    %1259 = vector.extract_strided_slice %1258 {offsets = [1, 0], sizes = [3, 32], strides = [1, 1]} : vector<4x32xf32> to vector<3x32xf32>
    %1260 = vector.extract_strided_slice %1258 {offsets = [0, 0], sizes = [1, 32], strides = [1, 1]} : vector<4x32xf32> to vector<1x32xf32>
    %1261 = tpu.concatenate %1259, %1260 in 0 : vector<3x32xf32>, vector<1x32xf32> -> vector<4x32xf32>
    %1262 = vector.extract_strided_slice %956 {offsets = [8, 0], sizes = [4, 32], strides = [1, 1]} : vector<16x32xf32> to vector<4x32xf32>
    %1263 = vector.extract_strided_slice %1262 {offsets = [1, 0], sizes = [3, 32], strides = [1, 1]} : vector<4x32xf32> to vector<3x32xf32>
    %1264 = vector.extract_strided_slice %1262 {offsets = [0, 0], sizes = [1, 32], strides = [1, 1]} : vector<4x32xf32> to vector<1x32xf32>
    %1265 = tpu.concatenate %1263, %1264 in 0 : vector<3x32xf32>, vector<1x32xf32> -> vector<4x32xf32>
    %1266 = vector.extract_strided_slice %956 {offsets = [12, 0], sizes = [4, 32], strides = [1, 1]} : vector<16x32xf32> to vector<4x32xf32>
    %1267 = vector.extract_strided_slice %1266 {offsets = [1, 0], sizes = [3, 32], strides = [1, 1]} : vector<4x32xf32> to vector<3x32xf32>
    %1268 = vector.extract_strided_slice %1266 {offsets = [0, 0], sizes = [1, 32], strides = [1, 1]} : vector<4x32xf32> to vector<1x32xf32>
    %1269 = tpu.concatenate %1267, %1268 in 0 : vector<3x32xf32>, vector<1x32xf32> -> vector<4x32xf32>
    %1270 = tpu.concatenate %1257, %1261, %1265, %1269 in 0 : vector<4x32xf32>, vector<4x32xf32>, vector<4x32xf32>, vector<4x32xf32> -> vector<16x32xf32>
    %1271 = vector.extract_strided_slice %956 {offsets = [0, 0], sizes = [4, 32], strides = [1, 1]} : vector<16x32xf32> to vector<4x32xf32>
    %1272 = vector.extract_strided_slice %1271 {offsets = [2, 0], sizes = [2, 32], strides = [1, 1]} : vector<4x32xf32> to vector<2x32xf32>
    %1273 = vector.extract_strided_slice %1271 {offsets = [0, 0], sizes = [2, 32], strides = [1, 1]} : vector<4x32xf32> to vector<2x32xf32>
    %1274 = tpu.concatenate %1272, %1273 in 0 : vector<2x32xf32>, vector<2x32xf32> -> vector<4x32xf32>
    %1275 = vector.extract_strided_slice %956 {offsets = [4, 0], sizes = [4, 32], strides = [1, 1]} : vector<16x32xf32> to vector<4x32xf32>
    %1276 = vector.extract_strided_slice %1275 {offsets = [2, 0], sizes = [2, 32], strides = [1, 1]} : vector<4x32xf32> to vector<2x32xf32>
    %1277 = vector.extract_strided_slice %1275 {offsets = [0, 0], sizes = [2, 32], strides = [1, 1]} : vector<4x32xf32> to vector<2x32xf32>
    %1278 = tpu.concatenate %1276, %1277 in 0 : vector<2x32xf32>, vector<2x32xf32> -> vector<4x32xf32>
    %1279 = vector.extract_strided_slice %956 {offsets = [8, 0], sizes = [4, 32], strides = [1, 1]} : vector<16x32xf32> to vector<4x32xf32>
    %1280 = vector.extract_strided_slice %1279 {offsets = [2, 0], sizes = [2, 32], strides = [1, 1]} : vector<4x32xf32> to vector<2x32xf32>
    %1281 = vector.extract_strided_slice %1279 {offsets = [0, 0], sizes = [2, 32], strides = [1, 1]} : vector<4x32xf32> to vector<2x32xf32>
    %1282 = tpu.concatenate %1280, %1281 in 0 : vector<2x32xf32>, vector<2x32xf32> -> vector<4x32xf32>
    %1283 = vector.extract_strided_slice %956 {offsets = [12, 0], sizes = [4, 32], strides = [1, 1]} : vector<16x32xf32> to vector<4x32xf32>
    %1284 = vector.extract_strided_slice %1283 {offsets = [2, 0], sizes = [2, 32], strides = [1, 1]} : vector<4x32xf32> to vector<2x32xf32>
    %1285 = vector.extract_strided_slice %1283 {offsets = [0, 0], sizes = [2, 32], strides = [1, 1]} : vector<4x32xf32> to vector<2x32xf32>
    %1286 = tpu.concatenate %1284, %1285 in 0 : vector<2x32xf32>, vector<2x32xf32> -> vector<4x32xf32>
    %1287 = tpu.concatenate %1274, %1278, %1282, %1286 in 0 : vector<4x32xf32>, vector<4x32xf32>, vector<4x32xf32>, vector<4x32xf32> -> vector<16x32xf32>
    %1288 = vector.extract_strided_slice %956 {offsets = [0, 0], sizes = [4, 32], strides = [1, 1]} : vector<16x32xf32> to vector<4x32xf32>
    %1289 = vector.extract_strided_slice %1288 {offsets = [3, 0], sizes = [1, 32], strides = [1, 1]} : vector<4x32xf32> to vector<1x32xf32>
    %1290 = vector.extract_strided_slice %1288 {offsets = [0, 0], sizes = [3, 32], strides = [1, 1]} : vector<4x32xf32> to vector<3x32xf32>
    %1291 = tpu.concatenate %1289, %1290 in 0 : vector<1x32xf32>, vector<3x32xf32> -> vector<4x32xf32>
    %1292 = vector.extract_strided_slice %956 {offsets = [4, 0], sizes = [4, 32], strides = [1, 1]} : vector<16x32xf32> to vector<4x32xf32>
    %1293 = vector.extract_strided_slice %1292 {offsets = [3, 0], sizes = [1, 32], strides = [1, 1]} : vector<4x32xf32> to vector<1x32xf32>
    %1294 = vector.extract_strided_slice %1292 {offsets = [0, 0], sizes = [3, 32], strides = [1, 1]} : vector<4x32xf32> to vector<3x32xf32>
    %1295 = tpu.concatenate %1293, %1294 in 0 : vector<1x32xf32>, vector<3x32xf32> -> vector<4x32xf32>
    %1296 = vector.extract_strided_slice %956 {offsets = [8, 0], sizes = [4, 32], strides = [1, 1]} : vector<16x32xf32> to vector<4x32xf32>
    %1297 = vector.extract_strided_slice %1296 {offsets = [3, 0], sizes = [1, 32], strides = [1, 1]} : vector<4x32xf32> to vector<1x32xf32>
    %1298 = vector.extract_strided_slice %1296 {offsets = [0, 0], sizes = [3, 32], strides = [1, 1]} : vector<4x32xf32> to vector<3x32xf32>
    %1299 = tpu.concatenate %1297, %1298 in 0 : vector<1x32xf32>, vector<3x32xf32> -> vector<4x32xf32>
    %1300 = vector.extract_strided_slice %956 {offsets = [12, 0], sizes = [4, 32], strides = [1, 1]} : vector<16x32xf32> to vector<4x32xf32>
    %1301 = vector.extract_strided_slice %1300 {offsets = [3, 0], sizes = [1, 32], strides = [1, 1]} : vector<4x32xf32> to vector<1x32xf32>
    %1302 = vector.extract_strided_slice %1300 {offsets = [0, 0], sizes = [3, 32], strides = [1, 1]} : vector<4x32xf32> to vector<3x32xf32>
    %1303 = tpu.concatenate %1301, %1302 in 0 : vector<1x32xf32>, vector<3x32xf32> -> vector<4x32xf32>
    %1304 = tpu.concatenate %1291, %1295, %1299, %1303 in 0 : vector<4x32xf32>, vector<4x32xf32>, vector<4x32xf32>, vector<4x32xf32> -> vector<16x32xf32>
    %1305 = arith.mulf %956, %1253 : vector<16x32xf32>
    %cst_327 = arith.constant dense<0.000000e+00> : vector<16xf32>
    %1306 = vector.multi_reduction <add>, %1305, %cst_327 [1] : vector<16x32xf32> to vector<16xf32>
    %1307 = vector.shape_cast %1306 : vector<16xf32> to vector<16x1xf32>
    %cst_328 = arith.constant 3.200000e+01 : f32
    %1308 = vector.broadcast %cst_328 : f32 to vector<16x1xf32>
    %1309 = arith.divf %1307, %1308 : vector<16x1xf32>
    %1310 = arith.mulf %1270, %1253 : vector<16x32xf32>
    %cst_329 = arith.constant dense<0.000000e+00> : vector<16xf32>
    %1311 = vector.multi_reduction <add>, %1310, %cst_329 [1] : vector<16x32xf32> to vector<16xf32>
    %1312 = vector.shape_cast %1311 : vector<16xf32> to vector<16x1xf32>
    %cst_330 = arith.constant 3.200000e+01 : f32
    %1313 = vector.broadcast %cst_330 : f32 to vector<16x1xf32>
    %1314 = arith.divf %1312, %1313 : vector<16x1xf32>
    %1315 = arith.mulf %1287, %1253 : vector<16x32xf32>
    %cst_331 = arith.constant dense<0.000000e+00> : vector<16xf32>
    %1316 = vector.multi_reduction <add>, %1315, %cst_331 [1] : vector<16x32xf32> to vector<16xf32>
    %1317 = vector.shape_cast %1316 : vector<16xf32> to vector<16x1xf32>
    %cst_332 = arith.constant 3.200000e+01 : f32
    %1318 = vector.broadcast %cst_332 : f32 to vector<16x1xf32>
    %1319 = arith.divf %1317, %1318 : vector<16x1xf32>
    %1320 = arith.mulf %1304, %1253 : vector<16x32xf32>
    %cst_333 = arith.constant dense<0.000000e+00> : vector<16xf32>
    %1321 = vector.multi_reduction <add>, %1320, %cst_333 [1] : vector<16x32xf32> to vector<16xf32>
    %1322 = vector.shape_cast %1321 : vector<16xf32> to vector<16x1xf32>
    %cst_334 = arith.constant 3.200000e+01 : f32
    %1323 = vector.broadcast %cst_334 : f32 to vector<16x1xf32>
    %1324 = arith.divf %1322, %1323 : vector<16x1xf32>
    %1325 = arith.mulf %1270, %1253 : vector<16x32xf32>
    %cst_335 = arith.constant dense<0.000000e+00> : vector<16xf32>
    %1326 = vector.multi_reduction <add>, %1325, %cst_335 [1] : vector<16x32xf32> to vector<16xf32>
    %1327 = vector.shape_cast %1326 : vector<16xf32> to vector<16x1xf32>
    %cst_336 = arith.constant 3.200000e+01 : f32
    %1328 = vector.broadcast %cst_336 : f32 to vector<16x1xf32>
    %1329 = arith.divf %1327, %1328 : vector<16x1xf32>
    %1330 = arith.mulf %1287, %1253 : vector<16x32xf32>
    %cst_337 = arith.constant dense<0.000000e+00> : vector<16xf32>
    %1331 = vector.multi_reduction <add>, %1330, %cst_337 [1] : vector<16x32xf32> to vector<16xf32>
    %1332 = vector.shape_cast %1331 : vector<16xf32> to vector<16x1xf32>
    %cst_338 = arith.constant 3.200000e+01 : f32
    %1333 = vector.broadcast %cst_338 : f32 to vector<16x1xf32>
    %1334 = arith.divf %1332, %1333 : vector<16x1xf32>
    %1335 = tpu.concatenate %1309, %1314, %1319, %1324, %1329, %1334 in 1 : vector<16x1xf32>, vector<16x1xf32>, vector<16x1xf32>, vector<16x1xf32>, vector<16x1xf32>, vector<16x1xf32> -> vector<16x6xf32>
    %cst_339 = arith.constant dense<0xFF800000> : vector<16xf32>
    %1336 = vector.multi_reduction <maximumf>, %1335, %cst_339 [1] : vector<16x6xf32> to vector<16xf32>
    %1337 = vector.shape_cast %1336 : vector<16xf32> to vector<16x1xf32>
    %1338 = vector.broadcast %1337 : vector<16x1xf32> to vector<16x6xf32>
    %1339 = arith.subf %1335, %1338 : vector<16x6xf32>
    %1340 = math.exp %1339 : vector<16x6xf32>
    %cst_340 = arith.constant dense<0.000000e+00> : vector<16xf32>
    %1341 = vector.multi_reduction <add>, %1340, %cst_340 [1] : vector<16x6xf32> to vector<16xf32>
    %1342 = vector.shape_cast %1341 : vector<16xf32> to vector<16x1xf32>
    %1343 = math.log %1342 : vector<16x1xf32>
    %1344 = arith.addf %1343, %1337 : vector<16x1xf32>
    %1345 = vector.extract_strided_slice %1335 {offsets = [0, 0], sizes = [16, 1], strides = [1, 1]} : vector<16x6xf32> to vector<16x1xf32>
    %1346 = arith.subf %1345, %1344 : vector<16x1xf32>
    %1347 = vector.extract_strided_slice %993 {offsets = [12, 0], sizes = [4, 64], strides = [1, 1]} : vector<16x64xf32> to vector<4x64xf32>
    %1348 = vector.extract_strided_slice %1347 {offsets = [1, 0], sizes = [3, 64], strides = [1, 1]} : vector<4x64xf32> to vector<3x64xf32>
    %1349 = vector.extract_strided_slice %1347 {offsets = [0, 0], sizes = [1, 64], strides = [1, 1]} : vector<4x64xf32> to vector<1x64xf32>
    %1350 = tpu.concatenate %1348, %1349 in 0 : vector<3x64xf32>, vector<1x64xf32> -> vector<4x64xf32>
    %1351 = vector.extract_strided_slice %1347 {offsets = [2, 0], sizes = [2, 64], strides = [1, 1]} : vector<4x64xf32> to vector<2x64xf32>
    %1352 = vector.extract_strided_slice %1347 {offsets = [0, 0], sizes = [2, 64], strides = [1, 1]} : vector<4x64xf32> to vector<2x64xf32>
    %1353 = tpu.concatenate %1351, %1352 in 0 : vector<2x64xf32>, vector<2x64xf32> -> vector<4x64xf32>
    %1354 = vector.extract_strided_slice %1347 {offsets = [3, 0], sizes = [1, 64], strides = [1, 1]} : vector<4x64xf32> to vector<1x64xf32>
    %1355 = vector.extract_strided_slice %1347 {offsets = [0, 0], sizes = [3, 64], strides = [1, 1]} : vector<4x64xf32> to vector<3x64xf32>
    %1356 = tpu.concatenate %1354, %1355 in 0 : vector<1x64xf32>, vector<3x64xf32> -> vector<4x64xf32>
    %c0_341 = arith.constant 0 : index
    %c0_342 = arith.constant 0 : index
    %1357 = vector.load %arg23[%c0_341, %c0_342] : memref<32x64xf32, #tpu.memory_space<vmem>>, vector<32x64xf32>
    %cst_343 = arith.constant dense<0.000000e+00> : vector<4x64xf32>
    %1358 = tpu.matmul %1179, %1357, %cst_343 {dimension_numbers = #tpu.dot_dimension_numbers<[1], [0], [0], [1], [0, 0, 1, 1], [], []>} : vector<4x32xf32>, vector<32x64xf32>, vector<4x64xf32> -> vector<4x64xf32>
    %c0_344 = arith.constant 0 : index
    %c0_345 = arith.constant 0 : index
    %1359 = vector.load %arg24[%c0_344, %c0_345] : memref<1x64xf32, #tpu.memory_space<vmem>>, vector<1x64xf32>
    %1360 = vector.broadcast %1359 : vector<1x64xf32> to vector<4x64xf32>
    %1361 = arith.addf %1358, %1360 : vector<4x64xf32>
    %1362 = arith.mulf %1347, %1361 : vector<4x64xf32>
    %cst_346 = arith.constant dense<0.000000e+00> : vector<4xf32>
    %1363 = vector.multi_reduction <add>, %1362, %cst_346 [1] : vector<4x64xf32> to vector<4xf32>
    %1364 = vector.shape_cast %1363 : vector<4xf32> to vector<4x1xf32>
    %cst_347 = arith.constant 6.400000e+01 : f32
    %1365 = vector.broadcast %cst_347 : f32 to vector<4x1xf32>
    %1366 = arith.divf %1364, %1365 : vector<4x1xf32>
    %1367 = arith.mulf %1350, %1361 : vector<4x64xf32>
    %cst_348 = arith.constant dense<0.000000e+00> : vector<4xf32>
    %1368 = vector.multi_reduction <add>, %1367, %cst_348 [1] : vector<4x64xf32> to vector<4xf32>
    %1369 = vector.shape_cast %1368 : vector<4xf32> to vector<4x1xf32>
    %cst_349 = arith.constant 6.400000e+01 : f32
    %1370 = vector.broadcast %cst_349 : f32 to vector<4x1xf32>
    %1371 = arith.divf %1369, %1370 : vector<4x1xf32>
    %1372 = arith.mulf %1353, %1361 : vector<4x64xf32>
    %cst_350 = arith.constant dense<0.000000e+00> : vector<4xf32>
    %1373 = vector.multi_reduction <add>, %1372, %cst_350 [1] : vector<4x64xf32> to vector<4xf32>
    %1374 = vector.shape_cast %1373 : vector<4xf32> to vector<4x1xf32>
    %cst_351 = arith.constant 6.400000e+01 : f32
    %1375 = vector.broadcast %cst_351 : f32 to vector<4x1xf32>
    %1376 = arith.divf %1374, %1375 : vector<4x1xf32>
    %1377 = arith.mulf %1356, %1361 : vector<4x64xf32>
    %cst_352 = arith.constant dense<0.000000e+00> : vector<4xf32>
    %1378 = vector.multi_reduction <add>, %1377, %cst_352 [1] : vector<4x64xf32> to vector<4xf32>
    %1379 = vector.shape_cast %1378 : vector<4xf32> to vector<4x1xf32>
    %cst_353 = arith.constant 6.400000e+01 : f32
    %1380 = vector.broadcast %cst_353 : f32 to vector<4x1xf32>
    %1381 = arith.divf %1379, %1380 : vector<4x1xf32>
    %1382 = arith.mulf %1350, %1361 : vector<4x64xf32>
    %cst_354 = arith.constant dense<0.000000e+00> : vector<4xf32>
    %1383 = vector.multi_reduction <add>, %1382, %cst_354 [1] : vector<4x64xf32> to vector<4xf32>
    %1384 = vector.shape_cast %1383 : vector<4xf32> to vector<4x1xf32>
    %cst_355 = arith.constant 6.400000e+01 : f32
    %1385 = vector.broadcast %cst_355 : f32 to vector<4x1xf32>
    %1386 = arith.divf %1384, %1385 : vector<4x1xf32>
    %1387 = arith.mulf %1353, %1361 : vector<4x64xf32>
    %cst_356 = arith.constant dense<0.000000e+00> : vector<4xf32>
    %1388 = vector.multi_reduction <add>, %1387, %cst_356 [1] : vector<4x64xf32> to vector<4xf32>
    %1389 = vector.shape_cast %1388 : vector<4xf32> to vector<4x1xf32>
    %cst_357 = arith.constant 6.400000e+01 : f32
    %1390 = vector.broadcast %cst_357 : f32 to vector<4x1xf32>
    %1391 = arith.divf %1389, %1390 : vector<4x1xf32>
    %1392 = tpu.concatenate %1366, %1371, %1376, %1381, %1386, %1391 in 1 : vector<4x1xf32>, vector<4x1xf32>, vector<4x1xf32>, vector<4x1xf32>, vector<4x1xf32>, vector<4x1xf32> -> vector<4x6xf32>
    %cst_358 = arith.constant dense<0xFF800000> : vector<4xf32>
    %1393 = vector.multi_reduction <maximumf>, %1392, %cst_358 [1] : vector<4x6xf32> to vector<4xf32>
    %1394 = vector.shape_cast %1393 : vector<4xf32> to vector<4x1xf32>
    %1395 = vector.broadcast %1394 : vector<4x1xf32> to vector<4x6xf32>
    %1396 = arith.subf %1392, %1395 : vector<4x6xf32>
    %1397 = math.exp %1396 : vector<4x6xf32>
    %cst_359 = arith.constant dense<0.000000e+00> : vector<4xf32>
    %1398 = vector.multi_reduction <add>, %1397, %cst_359 [1] : vector<4x6xf32> to vector<4xf32>
    %1399 = vector.shape_cast %1398 : vector<4xf32> to vector<4x1xf32>
    %1400 = math.log %1399 : vector<4x1xf32>
    %1401 = arith.addf %1400, %1394 : vector<4x1xf32>
    %1402 = vector.extract_strided_slice %1392 {offsets = [0, 0], sizes = [4, 1], strides = [1, 1]} : vector<4x6xf32> to vector<4x1xf32>
    %1403 = arith.subf %1402, %1401 : vector<4x1xf32>
    %cst_360 = arith.constant dense<0.000000e+00> : vector<1xf32>
    %1404 = vector.multi_reduction <add>, %1346, %cst_360 [0] : vector<16x1xf32> to vector<1xf32>
    %1405 = vector.shape_cast %1404 : vector<1xf32> to vector<1x1xf32>
    %cst_361 = arith.constant dense<0.000000e+00> : vector<1xf32>
    %1406 = vector.multi_reduction <add>, %1403, %cst_361 [0] : vector<4x1xf32> to vector<1xf32>
    %1407 = vector.shape_cast %1406 : vector<1xf32> to vector<1x1xf32>
    %cst_362 = arith.constant 5.000000e-02 : f32
    %1408 = vector.broadcast %cst_362 : f32 to vector<1x1xf32>
    %1409 = arith.mulf %1408, %1405 : vector<1x1xf32>
    %1410 = arith.addf %1409, %1407 : vector<1x1xf32>
    %cst_363 = arith.constant 0.000000e+00 : f32
    %1411 = vector.broadcast %cst_363 : f32 to vector<1x1xf32>
    %1412 = arith.subf %1411, %1410 : vector<1x1xf32>
    %cst_364 = arith.constant 4.000000e+00 : f32
    %1413 = vector.broadcast %cst_364 : f32 to vector<1x1xf32>
    %1414 = arith.divf %1412, %1413 : vector<1x1xf32>
    %c0_365 = arith.constant 0 : index
    %c0_366 = arith.constant 0 : index
    %1415 = vector.load %arg25[%c0_365, %c0_366] : memref<1x1xf32, #tpu.memory_space<vmem>>, vector<1x1xf32>
    tpu.vector_store %arg25[%c0_365, %c0_366], %1414 {strides = array<i32>} : memref<1x1xf32, #tpu.memory_space<vmem>>, vector<1x1xf32>,
    return
  }
}

</mosaic_0001>

<llo_original>
// kernel: cm_model_forward.1
$region0: #{cm_model_forward.1}
  #allocation0 [shape = 'u32[]', space=smem, size = 0x4, offset = 0x4, fixed_abs, tag = 'smem constant byte address 0x4 - core index']
  #allocation1 [shape = 'u32[144,128]{1,0:T(1,128)}', space=vmem, size = 0x12000, scoped, tag = 'internal scratch']
  #allocation2 [shape = 'f32[128,256]{1,0:T(8,128)}', space=vmem, size = 0x20000, scoped, tag = 'scratch operand']
  #allocation3 [shape = 'f32[1,1]{1,0:T(1,128)S(1)}', space=vmem, size = 0x200, scoped, tag = 'scoped memory for cm_model_forward.1']
  %s0 = inlined_call_operand.vmem [shape: f32[16,8], index: 0, kind: input, shape index: {}]
  %s1 = inlined_call_operand.vmem [shape: f32[128,8], index: 1, kind: input, shape index: {}]
  %s2 = inlined_call_operand.hbm [shape: f32[8,64], index: 2, kind: input, shape index: {}]
  %s3 = inlined_call_operand.vmem [shape: f32[1,64], index: 3, kind: input, shape index: {}]
  %s4 = inlined_call_operand.hbm [shape: f32[8,64], index: 4, kind: input, shape index: {}]
  %s5 = inlined_call_operand.hbm [shape: f32[1,64], index: 5, kind: input, shape index: {}]
  %s6 = inlined_call_operand.vmem [shape: f32[64,256], index: 6, kind: input, shape index: {}]
  %s7 = inlined_call_operand.hbm [shape: f32[1,256], index: 7, kind: input, shape index: {}]
  %s8 = inlined_call_operand.vmem [shape: f32[32,128], index: 8, kind: input, shape index: {}]
  %s9 = inlined_call_operand.vmem [shape: f32[32,128], index: 9, kind: input, shape index: {}]
  %s10 = inlined_call_operand.vmem [shape: f32[64,128], index: 10, kind: input, shape index: {}]
  %s11 = inlined_call_operand.hbm [shape: f32[1,128], index: 11, kind: input, shape index: {}]
  %s12 = inlined_call_operand.vmem [shape: f32[64,128], index: 12, kind: input, shape index: {}]
  %s13 = inlined_call_operand.hbm [shape: f32[1,128], index: 13, kind: input, shape index: {}]
  %s14 = inlined_call_operand.hbm [shape: f32[64,128], index: 14, kind: input, shape index: {}]
  %s15 = inlined_call_operand.hbm [shape: f32[1,128], index: 15, kind: input, shape index: {}]
  %s16 = inlined_call_operand.hbm [shape: f32[32,128], index: 16, kind: input, shape index: {}]
  %s17 = inlined_call_operand.hbm [shape: f32[64,128], index: 17, kind: input, shape index: {}]
  %s18 = inlined_call_operand.hbm [shape: f32[1,128], index: 18, kind: input, shape index: {}]
  %s19 = inlined_call_operand.hbm [shape: f32[1,32], index: 19, kind: input, shape index: {}]
  %s20 = inlined_call_operand.<no memory space> [shape: f32[1,1], index: 20, kind: input, shape index: {}]
  %s21 = inlined_call_operand.hbm [shape: f32[32,32], index: 21, kind: input, shape index: {}]
  %s22 = inlined_call_operand.hbm [shape: f32[1,32], index: 22, kind: input, shape index: {}]
  %s23 = inlined_call_operand.hbm [shape: f32[32,64], index: 23, kind: input, shape index: {}]
  %s24 = inlined_call_operand.hbm [shape: f32[1,64], index: 24, kind: input, shape index: {}]
  %s25 = inlined_call_operand.hbm [shape: f32[1,1], index: 25, kind: output, shape index: {0}]
  %s26 = inlined_call_operand.vmem [shape: f32[4,1], index: 26, kind: output, shape index: {1}]
  %27 = xla_tuple %s25, %s26
  %s28 = sld [smem:[#allocation0]]
  $region182: #{cm_model_forward.1} parent=0
    _
  %s30 = ssub.s32 1, %s28
  %s31 = scalar_select 0, %s30, %s28
  %v32 = vstv %s20
  %33 = vst [vmem:[#allocation3] sm:$0x1] %v32
  $region1: #{cm_model_forward.1} parent=0
    #allocation4 [shape = 'u8[4096]{0}', space=vmem, size = 0x1000, scoped, tag = 'input window, operand 2, single buffered']
    #allocation5 [shape = 's32[1]{0}', space=sflag, size = 0x4, scoped, tag = 'scoped memory for cm_model_forward.1']
    #allocation6 [shape = 's32[1]{0}', space=sflag, size = 0x4, scoped, tag = 'scoped memory for cm_model_forward.1']
    #allocation7 [shape = 'u8[4096]{0}', space=vmem, size = 0x1000, scoped, tag = 'input window, operand 4, single buffered']
    #allocation8 [shape = 's32[1]{0}', space=sflag, size = 0x4, scoped, tag = 'scoped memory for cm_model_forward.1']
    #allocation9 [shape = 'u8[512]{0}', space=vmem, size = 0x400, scoped, tag = 'input window, operand 5, single buffered']
    #allocation10 [shape = 'u8[1024]{0}', space=vmem, size = 0x400, scoped, tag = 'input window, operand 7, single buffered']
    #allocation11 [shape = 's32[1]{0}', space=sflag, size = 0x4, scoped, tag = 'scoped memory for cm_model_forward.1']
    #allocation12 [shape = 'u8[512]{0}', space=vmem, size = 0x400, scoped, tag = 'input window, operand 11, single buffered']
    #allocation13 [shape = 'u8[512]{0}', space=vmem, size = 0x400, scoped, tag = 'input window, operand 13, single buffered']
    #allocation14 [shape = 's32[1]{0}', space=sflag, size = 0x4, scoped, tag = 'scoped memory for cm_model_forward.1']
    #allocation15 [shape = 'u8[32768]{0}', space=vmem, size = 0x8000, scoped, tag = 'input window, operand 14, single buffered']
    #allocation16 [shape = 'u8[512]{0}', space=vmem, size = 0x400, scoped, tag = 'input window, operand 15, single buffered']
    #allocation17 [shape = 's32[1]{0}', space=sflag, size = 0x4, scoped, tag = 'scoped memory for cm_model_forward.1']
    #allocation18 [shape = 'u8[16384]{0}', space=vmem, size = 0x4000, scoped, tag = 'input window, operand 16, single buffered']
    #allocation19 [shape = 'u8[32768]{0}', space=vmem, size = 0x8000, scoped, tag = 'input window, operand 17, single buffered']
    #allocation20 [shape = 's32[1]{0}', space=sflag, size = 0x4, scoped, tag = 'scoped memory for cm_model_forward.1']
    #allocation21 [shape = 'u8[512]{0}', space=vmem, size = 0x400, scoped, tag = 'input window, operand 18, single buffered']
    #allocation22 [shape = 'u8[512]{0}', space=vmem, size = 0x400, scoped, tag = 'input window, operand 19, single buffered']
    #allocation23 [shape = 's32[1]{0}', space=sflag, size = 0x4, scoped, tag = 'scoped memory for cm_model_forward.1']
    #allocation24 [shape = 'u8[16384]{0}', space=vmem, size = 0x4000, scoped, tag = 'input window, operand 21, single buffered']
    #allocation25 [shape = 'u8[512]{0}', space=vmem, size = 0x400, scoped, tag = 'input window, operand 22, single buffered']
    #allocation26 [shape = 's32[1]{0}', space=sflag, size = 0x4, scoped, tag = 'scoped memory for cm_model_forward.1']
    #allocation27 [shape = 'u8[16384]{0}', space=vmem, size = 0x4000, scoped, tag = 'input window, operand 23, single buffered']
    #allocation28 [shape = 'u8[512]{0}', space=vmem, size = 0x400, scoped, tag = 'input window, operand 24, single buffered']
    #allocation29 [shape = 's32[1]{0}', space=sflag, size = 0x4, scoped, tag = 'scoped memory for cm_model_forward.1']
    #allocation30 [shape = 'u8[512]{0}', space=vmem, size = 0x400, scoped, tag = 'output window, operand 0, single buffered']
    %34 = vsyncpa [#allocation5], 0
    %35 = vsyncpa [#allocation8], 0
    %36 = vsyncpa [#allocation11], 0
    %37 = vsyncpa [#allocation14], 0
    %38 = vsyncpa [#allocation17], 0
    %39 = vsyncpa [#allocation20], 0
    %40 = vsyncpa [#allocation23], 0
    %41 = vsyncpa [#allocation26], 0
    %42 = vsyncpa [#allocation29], 0
    %43 = vsyncpa [#allocation6], 0
    // Predicated region
    $region2: #{cm_model_forward.1} parent=1 // pred_check
      _
    $region3: #{cm_model_forward.1} parent=1 // pred_check_branch
      %45 = sbr.rel (0) target = $region5
    $region4: #{cm_model_forward.1} parent=1 // pred_region
      _
    $region5: #{cm_model_forward.1} parent=1 // pred_fallthru
      _
    // Predicated region
    $region6: #{cm_model_forward.1} parent=1 // pred_check
      _
    $region7: #{cm_model_forward.1} parent=1 // pred_check_branch
      %47 = sbr.rel (0) target = $region9
    $region8: #{cm_model_forward.1} parent=1 // pred_region
      _
    $region9: #{cm_model_forward.1} parent=1 // pred_fallthru
      _
    // Predicated region
    $region10: #{cm_model_forward.1} parent=1 // pred_check
      _
    $region11: #{cm_model_forward.1} parent=1 // pred_check_branch
      %49 = sbr.rel (0) target = $region13
    $region12: #{cm_model_forward.1} parent=1 // pred_region
      %s51 = ssub.s32 128, 128
      %52 = vsyncadd [#allocation5], %s51
      %s54 = sshll.u32 [#allocation4], 4
      %s55 = int_to_ptr.vmem [resolvable:$true] %s54
      %57 = dma.hbm_to_vmem [thread:$0]  %s2, 128, %s55, [#allocation5]
    $region13: #{cm_model_forward.1} parent=1 // pred_fallthru
      _
    // Predicated region
    $region14: #{cm_model_forward.1} parent=1 // pred_check
      _
    $region15: #{cm_model_forward.1} parent=1 // pred_check_branch
      %59 = sbr.rel (0) target = $region17
    $region16: #{cm_model_forward.1} parent=1 // pred_region
      _
    $region17: #{cm_model_forward.1} parent=1 // pred_fallthru
      _
    // Predicated region
    $region18: #{cm_model_forward.1} parent=1 // pred_check
      _
    $region19: #{cm_model_forward.1} parent=1 // pred_check_branch
      %61 = sbr.rel (0) target = $region21
    $region20: #{cm_model_forward.1} parent=1 // pred_region
      %s63 = ssub.s32 128, 128
      %64 = vsyncadd [#allocation8], %s63
      %s66 = sshll.u32 [#allocation7], 4
      %s67 = int_to_ptr.vmem [resolvable:$true] %s66
      %69 = dma.hbm_to_vmem [thread:$0]  %s4, 128, %s67, [#allocation8]
    $region21: #{cm_model_forward.1} parent=1 // pred_fallthru
      _
    // Predicated region
    $region22: #{cm_model_forward.1} parent=1 // pred_check
      _
    $region23: #{cm_model_forward.1} parent=1 // pred_check_branch
      %71 = sbr.rel (0) target = $region25
    $region24: #{cm_model_forward.1} parent=1 // pred_region
      %s73 = ssub.s32 16, 16
      %74 = vsyncadd [#allocation8], %s73
      %s76 = sshll.u32 [#allocation9], 4
      %s77 = int_to_ptr.vmem [resolvable:$true] %s76
      %79 = dma.hbm_to_vmem [thread:$0]  %s5, 16, %s77, [#allocation8]
    $region25: #{cm_model_forward.1} parent=1 // pred_fallthru
      _
    // Predicated region
    $region26: #{cm_model_forward.1} parent=1 // pred_check
      _
    $region27: #{cm_model_forward.1} parent=1 // pred_check_branch
      %81 = sbr.rel (0) target = $region29
    $region28: #{cm_model_forward.1} parent=1 // pred_region
      _
    $region29: #{cm_model_forward.1} parent=1 // pred_fallthru
      _
    // Predicated region
    $region30: #{cm_model_forward.1} parent=1 // pred_check
      _
    $region31: #{cm_model_forward.1} parent=1 // pred_check_branch
      %83 = sbr.rel (0) target = $region33
    $region32: #{cm_model_forward.1} parent=1 // pred_region
      %s85 = ssub.s32 32, 32
      %86 = vsyncadd [#allocation11], %s85
      %s88 = sshll.u32 [#allocation10], 4
      %s89 = int_to_ptr.vmem [resolvable:$true] %s88
      %91 = dma.hbm_to_vmem [thread:$0]  %s7, 32, %s89, [#allocation11]
    $region33: #{cm_model_forward.1} parent=1 // pred_fallthru
      _
    // Predicated region
    $region34: #{cm_model_forward.1} parent=1 // pred_check
      _
    $region35: #{cm_model_forward.1} parent=1 // pred_check_branch
      %93 = sbr.rel (0) target = $region37
    $region36: #{cm_model_forward.1} parent=1 // pred_region
      _
    $region37: #{cm_model_forward.1} parent=1 // pred_fallthru
      _
    // Predicated region
    $region38: #{cm_model_forward.1} parent=1 // pred_check
      _
    $region39: #{cm_model_forward.1} parent=1 // pred_check_branch
      %95 = sbr.rel (0) target = $region41
    $region40: #{cm_model_forward.1} parent=1 // pred_region
      _
    $region41: #{cm_model_forward.1} parent=1 // pred_fallthru
      _
    // Predicated region
    $region42: #{cm_model_forward.1} parent=1 // pred_check
      _
    $region43: #{cm_model_forward.1} parent=1 // pred_check_branch
      %97 = sbr.rel (0) target = $region45
    $region44: #{cm_model_forward.1} parent=1 // pred_region
      _
    $region45: #{cm_model_forward.1} parent=1 // pred_fallthru
      _
    // Predicated region
    $region46: #{cm_model_forward.1} parent=1 // pred_check
      _
    $region47: #{cm_model_forward.1} parent=1 // pred_check_branch
      %99 = sbr.rel (0) target = $region49
    $region48: #{cm_model_forward.1} parent=1 // pred_region
      %s101 = ssub.s32 16, 16
      %102 = vsyncadd [#allocation11], %s101
      %s104 = sshll.u32 [#allocation12], 4
      %s105 = int_to_ptr.vmem [resolvable:$true] %s104
      %107 = dma.hbm_to_vmem [thread:$0]  %s11, 16, %s105, [#allocation11]
    $region49: #{cm_model_forward.1} parent=1 // pred_fallthru
      _
    // Predicated region
    $region50: #{cm_model_forward.1} parent=1 // pred_check
      _
    $region51: #{cm_model_forward.1} parent=1 // pred_check_branch
      %109 = sbr.rel (0) target = $region53
    $region52: #{cm_model_forward.1} parent=1 // pred_region
      _
    $region53: #{cm_model_forward.1} parent=1 // pred_fallthru
      _
    // Predicated region
    $region54: #{cm_model_forward.1} parent=1 // pred_check
      _
    $region55: #{cm_model_forward.1} parent=1 // pred_check_branch
      %111 = sbr.rel (0) target = $region57
    $region56: #{cm_model_forward.1} parent=1 // pred_region
      %s113 = ssub.s32 16, 16
      %114 = vsyncadd [#allocation14], %s113
      %s116 = sshll.u32 [#allocation13], 4
      %s117 = int_to_ptr.vmem [resolvable:$true] %s116
      %119 = dma.hbm_to_vmem [thread:$0]  %s13, 16, %s117, [#allocation14]
    $region57: #{cm_model_forward.1} parent=1 // pred_fallthru
      _
    // Predicated region
    $region58: #{cm_model_forward.1} parent=1 // pred_check
      _
    $region59: #{cm_model_forward.1} parent=1 // pred_check_branch
      %121 = sbr.rel (0) target = $region61
    $region60: #{cm_model_forward.1} parent=1 // pred_region
      %s123 = ssub.s32 1024, 1024
      %124 = vsyncadd [#allocation14], %s123
      %s125 = sshll.u32 [#allocation15], 4
      %s126 = int_to_ptr.vmem [resolvable:$true] %s125
      %131 = dma.hbm_to_vmem [thread:$0]  %s14, 1024, %s126, [#allocation14], 128, 128, 8
    $region61: #{cm_model_forward.1} parent=1 // pred_fallthru
      _
    // Predicated region
    $region62: #{cm_model_forward.1} parent=1 // pred_check
      _
    $region63: #{cm_model_forward.1} parent=1 // pred_check_branch
      %133 = sbr.rel (0) target = $region65
    $region64: #{cm_model_forward.1} parent=1 // pred_region
      %s135 = ssub.s32 16, 16
      %136 = vsyncadd [#allocation17], %s135
      %s138 = sshll.u32 [#allocation16], 4
      %s139 = int_to_ptr.vmem [resolvable:$true] %s138
      %141 = dma.hbm_to_vmem [thread:$0]  %s15, 16, %s139, [#allocation17]
    $region65: #{cm_model_forward.1} parent=1 // pred_fallthru
      _
    // Predicated region
    $region66: #{cm_model_forward.1} parent=1 // pred_check
      _
    $region67: #{cm_model_forward.1} parent=1 // pred_check_branch
      %143 = sbr.rel (0) target = $region69
    $region68: #{cm_model_forward.1} parent=1 // pred_region
      %s145 = ssub.s32 512, 512
      %146 = vsyncadd [#allocation17], %s145
      %s147 = sshll.u32 [#allocation18], 4
      %s148 = int_to_ptr.vmem [resolvable:$true] %s147
      %153 = dma.hbm_to_vmem [thread:$0]  %s16, 512, %s148, [#allocation17], 128, 128, 8
    $region69: #{cm_model_forward.1} parent=1 // pred_fallthru
      _
    // Predicated region
    $region70: #{cm_model_forward.1} parent=1 // pred_check
      _
    $region71: #{cm_model_forward.1} parent=1 // pred_check_branch
      %155 = sbr.rel (0) target = $region73
    $region72: #{cm_model_forward.1} parent=1 // pred_region
      %s157 = ssub.s32 1024, 1024
      %158 = vsyncadd [#allocation20], %s157
      %s159 = sshll.u32 [#allocation19], 4
      %s160 = int_to_ptr.vmem [resolvable:$true] %s159
      %165 = dma.hbm_to_vmem [thread:$0]  %s17, 1024, %s160, [#allocation20], 128, 128, 8
    $region73: #{cm_model_forward.1} parent=1 // pred_fallthru
      _
    // Predicated region
    $region74: #{cm_model_forward.1} parent=1 // pred_check
      _
    $region75: #{cm_model_forward.1} parent=1 // pred_check_branch
      %167 = sbr.rel (0) target = $region77
    $region76: #{cm_model_forward.1} parent=1 // pred_region
      %s169 = ssub.s32 16, 16
      %170 = vsyncadd [#allocation20], %s169
      %s172 = sshll.u32 [#allocation21], 4
      %s173 = int_to_ptr.vmem [resolvable:$true] %s172
      %175 = dma.hbm_to_vmem [thread:$0]  %s18, 16, %s173, [#allocation20]
    $region77: #{cm_model_forward.1} parent=1 // pred_fallthru
      _
    // Predicated region
    $region78: #{cm_model_forward.1} parent=1 // pred_check
      _
    $region79: #{cm_model_forward.1} parent=1 // pred_check_branch
      %177 = sbr.rel (0) target = $region81
    $region80: #{cm_model_forward.1} parent=1 // pred_region
      %s179 = ssub.s32 16, 16
      %180 = vsyncadd [#allocation23], %s179
      %s182 = sshll.u32 [#allocation22], 4
      %s183 = int_to_ptr.vmem [resolvable:$true] %s182
      %185 = dma.hbm_to_vmem [thread:$0]  %s19, 16, %s183, [#allocation23]
    $region81: #{cm_model_forward.1} parent=1 // pred_fallthru
      _
    // Predicated region
    $region82: #{cm_model_forward.1} parent=1 // pred_check
      _
    $region83: #{cm_model_forward.1} parent=1 // pred_check_branch
      %187 = sbr.rel (0) target = $region85
    $region84: #{cm_model_forward.1} parent=1 // pred_region
      _
    $region85: #{cm_model_forward.1} parent=1 // pred_fallthru
      _
    // Predicated region
    $region86: #{cm_model_forward.1} parent=1 // pred_check
      _
    $region87: #{cm_model_forward.1} parent=1 // pred_check_branch
      %189 = sbr.rel (0) target = $region89
    $region88: #{cm_model_forward.1} parent=1 // pred_region
      %s191 = ssub.s32 512, 512
      %192 = vsyncadd [#allocation23], %s191
      %s193 = sshll.u32 [#allocation24], 4
      %s194 = int_to_ptr.vmem [resolvable:$true] %s193
      %199 = dma.hbm_to_vmem [thread:$0]  %s21, 512, %s194, [#allocation23], 128, 128, 8
    $region89: #{cm_model_forward.1} parent=1 // pred_fallthru
      _
    // Predicated region
    $region90: #{cm_model_forward.1} parent=1 // pred_check
      _
    $region91: #{cm_model_forward.1} parent=1 // pred_check_branch
      %201 = sbr.rel (0) target = $region93
    $region92: #{cm_model_forward.1} parent=1 // pred_region
      %s203 = ssub.s32 16, 16
      %204 = vsyncadd [#allocation26], %s203
      %s206 = sshll.u32 [#allocation25], 4
      %s207 = int_to_ptr.vmem [resolvable:$true] %s206
      %209 = dma.hbm_to_vmem [thread:$0]  %s22, 16, %s207, [#allocation26]
    $region93: #{cm_model_forward.1} parent=1 // pred_fallthru
      _
    // Predicated region
    $region94: #{cm_model_forward.1} parent=1 // pred_check
      _
    $region95: #{cm_model_forward.1} parent=1 // pred_check_branch
      %211 = sbr.rel (0) target = $region97
    $region96: #{cm_model_forward.1} parent=1 // pred_region
      %s213 = ssub.s32 512, 512
      %214 = vsyncadd [#allocation26], %s213
      %s215 = sshll.u32 [#allocation27], 4
      %s216 = int_to_ptr.vmem [resolvable:$true] %s215
      %221 = dma.hbm_to_vmem [thread:$0]  %s23, 512, %s216, [#allocation26], 128, 128, 8
    $region97: #{cm_model_forward.1} parent=1 // pred_fallthru
      _
    // Predicated region
    $region98: #{cm_model_forward.1} parent=1 // pred_check
      _
    $region99: #{cm_model_forward.1} parent=1 // pred_check_branch
      %223 = sbr.rel (0) target = $region101
    $region100: #{cm_model_forward.1} parent=1 // pred_region
      %s225 = ssub.s32 16, 16
      %226 = vsyncadd [#allocation29], %s225
      %s228 = sshll.u32 [#allocation28], 4
      %s229 = int_to_ptr.vmem [resolvable:$true] %s228
      %231 = dma.hbm_to_vmem [thread:$0]  %s24, 16, %s229, [#allocation29]
    $region101: #{cm_model_forward.1} parent=1 // pred_fallthru
      _
    // Predicated region
    $region102: #{cm_model_forward.1} parent=1 // pred_check
      _
    $region103: #{cm_model_forward.1} parent=1 // pred_check_branch
      %233 = sbr.rel (0) target = $region105
    $region104: #{cm_model_forward.1} parent=1 // pred_region
      %234 = dma.done [#allocation5], 128
    $region105: #{cm_model_forward.1} parent=1 // pred_fallthru
      _
    // Predicated region
    $region106: #{cm_model_forward.1} parent=1 // pred_check
      _
    $region107: #{cm_model_forward.1} parent=1 // pred_check_branch
      %236 = sbr.rel (0) target = $region109
    $region108: #{cm_model_forward.1} parent=1 // pred_region
      %237 = dma.done [#allocation8], 128
    $region109: #{cm_model_forward.1} parent=1 // pred_fallthru
      _
    // Predicated region
    $region110: #{cm_model_forward.1} parent=1 // pred_check
      _
    $region111: #{cm_model_forward.1} parent=1 // pred_check_branch
      %239 = sbr.rel (0) target = $region113
    $region112: #{cm_model_forward.1} parent=1 // pred_region
      %240 = dma.done [#allocation8], 16
    $region113: #{cm_model_forward.1} parent=1 // pred_fallthru
      _
    // Predicated region
    $region114: #{cm_model_forward.1} parent=1 // pred_check
      _
    $region115: #{cm_model_forward.1} parent=1 // pred_check_branch
      %242 = sbr.rel (0) target = $region117
    $region116: #{cm_model_forward.1} parent=1 // pred_region
      %243 = dma.done [#allocation11], 32
    $region117: #{cm_model_forward.1} parent=1 // pred_fallthru
      _
    // Predicated region
    $region118: #{cm_model_forward.1} parent=1 // pred_check
      _
    $region119: #{cm_model_forward.1} parent=1 // pred_check_branch
      %245 = sbr.rel (0) target = $region121
    $region120: #{cm_model_forward.1} parent=1 // pred_region
      %246 = dma.done [#allocation11], 16
    $region121: #{cm_model_forward.1} parent=1 // pred_fallthru
      _
    // Predicated region
    $region122: #{cm_model_forward.1} parent=1 // pred_check
      _
    $region123: #{cm_model_forward.1} parent=1 // pred_check_branch
      %248 = sbr.rel (0) target = $region125
    $region124: #{cm_model_forward.1} parent=1 // pred_region
      %249 = dma.done [#allocation14], 16
    $region125: #{cm_model_forward.1} parent=1 // pred_fallthru
      _
    // Predicated region
    $region126: #{cm_model_forward.1} parent=1 // pred_check
      _
    $region127: #{cm_model_forward.1} parent=1 // pred_check_branch
      %251 = sbr.rel (0) target = $region129
    $region128: #{cm_model_forward.1} parent=1 // pred_region
      %252 = dma.done [#allocation14], 1024
    $region129: #{cm_model_forward.1} parent=1 // pred_fallthru
      _
    // Predicated region
    $region130: #{cm_model_forward.1} parent=1 // pred_check
      _
    $region131: #{cm_model_forward.1} parent=1 // pred_check_branch
      %254 = sbr.rel (0) target = $region133
    $region132: #{cm_model_forward.1} parent=1 // pred_region
      %255 = dma.done [#allocation17], 16
    $region133: #{cm_model_forward.1} parent=1 // pred_fallthru
      _
    // Predicated region
    $region134: #{cm_model_forward.1} parent=1 // pred_check
      _
    $region135: #{cm_model_forward.1} parent=1 // pred_check_branch
      %257 = sbr.rel (0) target = $region137
    $region136: #{cm_model_forward.1} parent=1 // pred_region
      %258 = dma.done [#allocation17], 512
    $region137: #{cm_model_forward.1} parent=1 // pred_fallthru
      _
    // Predicated region
    $region138: #{cm_model_forward.1} parent=1 // pred_check
      _
    $region139: #{cm_model_forward.1} parent=1 // pred_check_branch
      %260 = sbr.rel (0) target = $region141
    $region140: #{cm_model_forward.1} parent=1 // pred_region
      %261 = dma.done [#allocation20], 1024
    $region141: #{cm_model_forward.1} parent=1 // pred_fallthru
      _
    // Predicated region
    $region142: #{cm_model_forward.1} parent=1 // pred_check
      _
    $region143: #{cm_model_forward.1} parent=1 // pred_check_branch
      %263 = sbr.rel (0) target = $region145
    $region144: #{cm_model_forward.1} parent=1 // pred_region
      %264 = dma.done [#allocation20], 16
    $region145: #{cm_model_forward.1} parent=1 // pred_fallthru
      _
    // Predicated region
    $region146: #{cm_model_forward.1} parent=1 // pred_check
      _
    $region147: #{cm_model_forward.1} parent=1 // pred_check_branch
      %266 = sbr.rel (0) target = $region149
    $region148: #{cm_model_forward.1} parent=1 // pred_region
      %267 = dma.done [#allocation23], 16
    $region149: #{cm_model_forward.1} parent=1 // pred_fallthru
      _
    // Predicated region
    $region150: #{cm_model_forward.1} parent=1 // pred_check
      _
    $region151: #{cm_model_forward.1} parent=1 // pred_check_branch
      %269 = sbr.rel (0) target = $region153
    $region152: #{cm_model_forward.1} parent=1 // pred_region
      %270 = dma.done [#allocation23], 512
    $region153: #{cm_model_forward.1} parent=1 // pred_fallthru
      _
    // Predicated region
    $region154: #{cm_model_forward.1} parent=1 // pred_check
      _
    $region155: #{cm_model_forward.1} parent=1 // pred_check_branch
      %272 = sbr.rel (0) target = $region157
    $region156: #{cm_model_forward.1} parent=1 // pred_region
      %273 = dma.done [#allocation26], 16
    $region157: #{cm_model_forward.1} parent=1 // pred_fallthru
      _
    // Predicated region
    $region158: #{cm_model_forward.1} parent=1 // pred_check
      _
    $region159: #{cm_model_forward.1} parent=1 // pred_check_branch
      %275 = sbr.rel (0) target = $region161
    $region160: #{cm_model_forward.1} parent=1 // pred_region
      %276 = dma.done [#allocation26], 512
    $region161: #{cm_model_forward.1} parent=1 // pred_fallthru
      _
    // Predicated region
    $region162: #{cm_model_forward.1} parent=1 // pred_check
      _
    $region163: #{cm_model_forward.1} parent=1 // pred_check_branch
      %278 = sbr.rel (0) target = $region165
    $region164: #{cm_model_forward.1} parent=1 // pred_region
      %279 = dma.done [#allocation29], 16
    $region165: #{cm_model_forward.1} parent=1 // pred_fallthru
      _
    %v280 = vld [vmem:[%s1] sm:$0xff]
    %v281 = vld [vmem:[%s1 + $0x8] sm:$0xff]
    %v282 = vld [vmem:[%s1 + $0x10] sm:$0xff]
    %v283 = vld [vmem:[%s1 + $0x18] sm:$0xff]
    %v284 = vld [vmem:[%s1 + $0x20] sm:$0xff]
    %v285 = vld [vmem:[%s1 + $0x28] sm:$0xff]
    %v286 = vld [vmem:[%s1 + $0x30] sm:$0xff]
    %v287 = vld [vmem:[%s1 + $0x38] sm:$0xff]
    %v288 = vld [vmem:[%s1 + $0x40] sm:$0xff]
    %v289 = vld [vmem:[%s1 + $0x48] sm:$0xff]
    %v290 = vld [vmem:[%s1 + $0x50] sm:$0xff]
    %v291 = vld [vmem:[%s1 + $0x58] sm:$0xff]
    %v292 = vld [vmem:[%s1 + $0x60] sm:$0xff]
    %v293 = vld [vmem:[%s1 + $0x68] sm:$0xff]
    %v294 = vld [vmem:[%s1 + $0x70] sm:$0xff]
    %v295 = vld [vmem:[%s1 + $0x78] sm:$0xff]
    %v296 = vld [vmem:[#allocation4] sm:$0xff]
    %v297 = vld [vmem:[%s3] sm:$0x1]
    %v299 = vlaneseq
    %v300 = vshrl.u32 %v299, 7
    %v301 = vsub.s32 0, %v300
    %v302 = vrot.slane %v297, %v301
    %vm304 = vcmask 64512
    %v306 = vsel %vm304, %v280, 0
    %v309 = vsel %vm304, %v281, 0
    %v312 = vsel %vm304, %v282, 0
    %v315 = vsel %vm304, %v283, 0
    %v318 = vsel %vm304, %v284, 0
    %v321 = vsel %vm304, %v285, 0
    %v324 = vsel %vm304, %v286, 0
    %v327 = vsel %vm304, %v287, 0
    %v330 = vsel %vm304, %v288, 0
    %v333 = vsel %vm304, %v289, 0
    %v336 = vsel %vm304, %v290, 0
    %v339 = vsel %vm304, %v291, 0
    %v342 = vsel %vm304, %v292, 0
    %v345 = vsel %vm304, %v293, 0
    %v348 = vsel %vm304, %v294, 0
    %v351 = vsel %vm304, %v295, 0
    %353 = vmatprep.subr.mxu0 0.0
    %354 = vmatpush1.msra.mxu0 0.0
    %355 = vmatprep.subr.mxu0 0.0
    %356 = vmatpush1.msra.mxu0 0.0
    %357 = vmatprep.subr.mxu0 0.0
    %358 = vmatpush1.msra.mxu0 0.0
    %359 = vmatprep.subr.mxu0 0.0
    %360 = vmatpush1.msra.mxu0 0.0
    %361 = vmatprep.subr.mxu0 0.0
    %362 = vmatpush1.msra.mxu0 0.0
    %363 = vmatprep.subr.mxu0 0.0
    %364 = vmatpush1.msra.mxu0 0.0
    %365 = vmatprep.subr.mxu0 0.0
    %366 = vmatpush1.msra.mxu0 0.0
    %367 = vmatprep.subr.mxu0 0.0
    %368 = vmatpush1.msra.mxu0 0.0
    %369 = vmatprep.subr.mxu0 0.0
    %370 = vmatpush1.msra.mxu0 0.0
    %371 = vmatprep.subr.mxu0 0.0
    %372 = vmatpush1.msra.mxu0 0.0
    %373 = vmatprep.subr.mxu0 0.0
    %374 = vmatpush1.msra.mxu0 0.0
    %375 = vmatprep.subr.mxu0 0.0
    %376 = vmatpush1.msra.mxu0 0.0
    %377 = vmatprep.subr.mxu0 0.0
    %378 = vmatpush1.msra.mxu0 0.0
    %379 = vmatprep.subr.mxu0 0.0
    %380 = vmatpush1.msra.mxu0 0.0
    %381 = vmatprep.subr.mxu0 0.0
    %382 = vmatpush1.msra.mxu0 0.0
    %383 = vmatprep.subr.mxu0 0.0
    %384 = vmatpush1.msra.mxu0 %v296
    %385 = vmatprep.subr.mxu0 0.0
    %386 = vmatpush2.msra.mxu0 0.0
    %387 = vmatprep.subr.mxu0 0.0
    %388 = vmatpush2.msra.mxu0 0.0
    %389 = vmatprep.subr.mxu0 0.0
    %390 = vmatpush2.msra.mxu0 0.0
    %391 = vmatprep.subr.mxu0 0.0
    %392 = vmatpush2.msra.mxu0 0.0
    %393 = vmatprep.subr.mxu0 0.0
    %394 = vmatpush2.msra.mxu0 0.0
    %395 = vmatprep.subr.mxu0 0.0
    %396 = vmatpush2.msra.mxu0 0.0
    %397 = vmatprep.subr.mxu0 0.0
    %398 = vmatpush2.msra.mxu0 0.0
    %399 = vmatprep.subr.mxu0 0.0
    %400 = vmatpush2.msra.mxu0 0.0
    %401 = vmatprep.subr.mxu0 0.0
    %402 = vmatpush2.msra.mxu0 0.0
    %403 = vmatprep.subr.mxu0 0.0
    %404 = vmatpush2.msra.mxu0 0.0
    %405 = vmatprep.subr.mxu0 0.0
    %406 = vmatpush2.msra.mxu0 0.0
    %407 = vmatprep.subr.mxu0 0.0
    %408 = vmatpush2.msra.mxu0 0.0
    %409 = vmatprep.subr.mxu0 0.0
    %410 = vmatpush2.msra.mxu0 0.0
    %411 = vmatprep.subr.mxu0 0.0
    %412 = vmatpush2.msra.mxu0 0.0
    %413 = vmatprep.subr.mxu0 0.0
    %414 = vmatpush2.msra.mxu0 0.0
    %415 = vmatprep.subr.mxu0 0.0
    %416 = vmatpush2.msra.mxu0 0.0
    %417 = vmatprep.mubr.f32.mxu0 0.0
    %418 = vmatmul.mubr.f32.gmra.mxu0 %v306
    %v419 = vpop.f32.mrf.mxu0
    %v420 = vadd.f32 %v302, %v419
    %v421 = vpop.f32.mrf.mxu0
    %422 = vmatprep.mubr.f32.mxu0 0.0
    %423 = vmatmul.mubr.f32.gmra.mxu0 %v309
    %v424 = vpop.f32.mrf.mxu0
    %v425 = vadd.f32 %v302, %v424
    %v426 = vpop.f32.mrf.mxu0
    %427 = vmatprep.mubr.f32.mxu0 0.0
    %428 = vmatmul.mubr.f32.gmra.mxu0 %v312
    %v429 = vpop.f32.mrf.mxu0
    %v430 = vadd.f32 %v302, %v429
    %v431 = vpop.f32.mrf.mxu0
    %432 = vmatprep.mubr.f32.mxu0 0.0
    %433 = vmatmul.mubr.f32.gmra.mxu0 %v315
    %v434 = vpop.f32.mrf.mxu0
    %v435 = vadd.f32 %v302, %v434
    %v436 = vpop.f32.mrf.mxu0
    %437 = vmatprep.mubr.f32.mxu0 0.0
    %438 = vmatmul.mubr.f32.gmra.mxu0 %v318
    %v439 = vpop.f32.mrf.mxu0
    %v440 = vadd.f32 %v302, %v439
    %v441 = vpop.f32.mrf.mxu0
    %442 = vmatprep.mubr.f32.mxu0 0.0
    %443 = vmatmul.mubr.f32.gmra.mxu0 %v321
    %v444 = vpop.f32.mrf.mxu0
    %v445 = vadd.f32 %v302, %v444
    %v446 = vpop.f32.mrf.mxu0
    %447 = vmatprep.mubr.f32.mxu0 0.0
    %448 = vmatmul.mubr.f32.gmra.mxu0 %v324
    %v449 = vpop.f32.mrf.mxu0
    %v450 = vadd.f32 %v302, %v449
    %v451 = vpop.f32.mrf.mxu0
    %452 = vmatprep.mubr.f32.mxu0 0.0
    %453 = vmatmul.mubr.f32.gmra.mxu0 %v327
    %v454 = vpop.f32.mrf.mxu0
    %v455 = vadd.f32 %v302, %v454
    %v456 = vpop.f32.mrf.mxu0
    %457 = vmatprep.mubr.f32.mxu0 0.0
    %458 = vmatmul.mubr.f32.gmra.mxu0 %v330
    %v459 = vpop.f32.mrf.mxu0
    %v460 = vadd.f32 %v302, %v459
    %v461 = vpop.f32.mrf.mxu0
    %462 = vmatprep.mubr.f32.mxu0 0.0
    %463 = vmatmul.mubr.f32.gmra.mxu0 %v333
    %v464 = vpop.f32.mrf.mxu0
    %v465 = vadd.f32 %v302, %v464
    %v466 = vpop.f32.mrf.mxu0
    %467 = vmatprep.mubr.f32.mxu0 0.0
    %468 = vmatmul.mubr.f32.gmra.mxu0 %v336
    %v469 = vpop.f32.mrf.mxu0
    %v470 = vadd.f32 %v302, %v469
    %v471 = vpop.f32.mrf.mxu0
    %472 = vmatprep.mubr.f32.mxu0 0.0
    %473 = vmatmul.mubr.f32.gmra.mxu0 %v339
    %v474 = vpop.f32.mrf.mxu0
    %v475 = vadd.f32 %v302, %v474
    %v476 = vpop.f32.mrf.mxu0
    %477 = vmatprep.mubr.f32.mxu0 0.0
    %478 = vmatmul.mubr.f32.gmra.mxu0 %v342
    %v479 = vpop.f32.mrf.mxu0
    %v480 = vadd.f32 %v302, %v479
    %v481 = vpop.f32.mrf.mxu0
    %482 = vmatprep.mubr.f32.mxu0 0.0
    %483 = vmatmul.mubr.f32.gmra.mxu0 %v345
    %v484 = vpop.f32.mrf.mxu0
    %v485 = vadd.f32 %v302, %v484
    %v486 = vpop.f32.mrf.mxu0
    %487 = vmatprep.mubr.f32.mxu0 0.0
    %488 = vmatmul.mubr.f32.gmra.mxu0 %v348
    %v489 = vpop.f32.mrf.mxu0
    %v490 = vadd.f32 %v302, %v489
    %v491 = vpop.f32.mrf.mxu0
    %492 = vmatprep.mubr.f32.mxu0 0.0
    %493 = vmatmul.mubr.f32.gmra.mxu0 %v351
    %v494 = vpop.f32.mrf.mxu0
    %v495 = vadd.f32 %v302, %v494
    %v496 = vpop.f32.mrf.mxu0
    %497 = vdwg.mxu0
    %v498 = vtanh.pop %v420
    %v499 = vtanh.pop %v425
    %v500 = vtanh.pop %v430
    %v501 = vtanh.pop %v435
    %v502 = vtanh.pop %v440
    %v503 = vtanh.pop %v445
    %v504 = vtanh.pop %v450
    %v505 = vtanh.pop %v455
    %v506 = vtanh.pop %v460
    %v507 = vtanh.pop %v465
    %v508 = vtanh.pop %v470
    %v509 = vtanh.pop %v475
    %v510 = vtanh.pop %v480
    %v511 = vtanh.pop %v485
    %v512 = vtanh.pop %v490
    %v513 = vtanh.pop %v495
    %v514 = vld [vmem:[%s6] sm:$0xff]
    %v515 = vld [vmem:[%s6 + $0x8] sm:$0xff]
    %v516 = vld [vmem:[%s6 + $0x10] sm:$0xff]
    %v517 = vld [vmem:[%s6 + $0x18] sm:$0xff]
    %v518 = vld [vmem:[%s6 + $0x20] sm:$0xff]
    %v519 = vld [vmem:[%s6 + $0x28] sm:$0xff]
    %v520 = vld [vmem:[%s6 + $0x30] sm:$0xff]
    %v521 = vld [vmem:[%s6 + $0x38] sm:$0xff]
    %v522 = vld [vmem:[%s6 + $0x40] sm:$0xff]
    %v523 = vld [vmem:[%s6 + $0x48] sm:$0xff]
    %v524 = vld [vmem:[%s6 + $0x50] sm:$0xff]
    %v525 = vld [vmem:[%s6 + $0x58] sm:$0xff]
    %v526 = vld [vmem:[%s6 + $0x60] sm:$0xff]
    %v527 = vld [vmem:[%s6 + $0x68] sm:$0xff]
    %v528 = vld [vmem:[%s6 + $0x70] sm:$0xff]
    %v529 = vld [vmem:[%s6 + $0x78] sm:$0xff]
    %v530 = vld [vmem:[#allocation10] sm:$0x3]
    %v532 = vlaneseq
    %v533 = vshrl.u32 %v532, 7
    %v534 = vsub.s32 0, %v533
    %v535 = vrot.slane %v530, %v534
    %v536 = vlaneseq
    %v537 = vshrl.u32 %v536, 7
    %v538 = vsub.s32 1, %v537
    %v539 = vrot.slane %v530, %v538
    %vm542 = vcmask 523264
    %v544 = vsel %vm542, %v498, 0
    %v547 = vsel %vm542, %v499, 0
    %v550 = vsel %vm542, %v500, 0
    %v553 = vsel %vm542, %v501, 0
    %v556 = vsel %vm542, %v502, 0
    %v559 = vsel %vm542, %v503, 0
    %v562 = vsel %vm542, %v504, 0
    %v565 = vsel %vm542, %v505, 0
    %v568 = vsel %vm542, %v506, 0
    %v571 = vsel %vm542, %v507, 0
    %v574 = vsel %vm542, %v508, 0
    %v577 = vsel %vm542, %v509, 0
    %v580 = vsel %vm542, %v510, 0
    %v583 = vsel %vm542, %v511, 0
    %v586 = vsel %vm542, %v512, 0
    %v589 = vsel %vm542, %v513, 0
    %591 = vmatprep.subr.mxu0 0.0
    %592 = vmatpush1.msra.mxu0 0.0
    %593 = vmatprep.subr.mxu0 0.0
    %594 = vmatpush1.msra.mxu0 0.0
    %595 = vmatprep.subr.mxu0 0.0
    %596 = vmatpush1.msra.mxu0 0.0
    %597 = vmatprep.subr.mxu0 0.0
    %598 = vmatpush1.msra.mxu0 0.0
    %599 = vmatprep.subr.mxu0 0.0
    %600 = vmatpush1.msra.mxu0 0.0
    %601 = vmatprep.subr.mxu0 0.0
    %602 = vmatpush1.msra.mxu0 0.0
    %603 = vmatprep.subr.mxu0 0.0
    %604 = vmatpush1.msra.mxu0 0.0
    %605 = vmatprep.subr.mxu0 0.0
    %606 = vmatpush1.msra.mxu0 0.0
    %607 = vmatprep.subr.mxu0 %v529
    %608 = vmatpush1.msra.mxu0 %v528
    %609 = vmatprep.subr.mxu0 %v527
    %610 = vmatpush1.msra.mxu0 %v526
    %611 = vmatprep.subr.mxu0 %v525
    %612 = vmatpush1.msra.mxu0 %v524
    %613 = vmatprep.subr.mxu0 %v523
    %614 = vmatpush1.msra.mxu0 %v522
    %615 = vmatprep.subr.mxu0 %v521
    %616 = vmatpush1.msra.mxu0 %v520
    %617 = vmatprep.subr.mxu0 %v519
    %618 = vmatpush1.msra.mxu0 %v518
    %619 = vmatprep.subr.mxu0 %v517
    %620 = vmatpush1.msra.mxu0 %v516
    %621 = vmatprep.subr.mxu0 %v515
    %622 = vmatpush1.msra.mxu0 %v514
    %623 = vmatprep.subr.mxu0 0.0
    %624 = vmatpush2.msra.mxu0 0.0
    %625 = vmatprep.subr.mxu0 0.0
    %626 = vmatpush2.msra.mxu0 0.0
    %627 = vmatprep.subr.mxu0 0.0
    %628 = vmatpush2.msra.mxu0 0.0
    %629 = vmatprep.subr.mxu0 0.0
    %630 = vmatpush2.msra.mxu0 0.0
    %631 = vmatprep.subr.mxu0 0.0
    %632 = vmatpush2.msra.mxu0 0.0
    %633 = vmatprep.subr.mxu0 0.0
    %634 = vmatpush2.msra.mxu0 0.0
    %635 = vmatprep.subr.mxu0 0.0
    %636 = vmatpush2.msra.mxu0 0.0
    %637 = vmatprep.subr.mxu0 0.0
    %638 = vmatpush2.msra.mxu0 0.0
    %639 = vmatprep.subr.mxu0 0.0
    %640 = vmatpush2.msra.mxu0 0.0
    %641 = vmatprep.subr.mxu0 0.0
    %642 = vmatpush2.msra.mxu0 0.0
    %643 = vmatprep.subr.mxu0 0.0
    %644 = vmatpush2.msra.mxu0 0.0
    %645 = vmatprep.subr.mxu0 0.0
    %646 = vmatpush2.msra.mxu0 0.0
    %647 = vmatprep.subr.mxu0 0.0
    %648 = vmatpush2.msra.mxu0 0.0
    %649 = vmatprep.subr.mxu0 0.0
    %650 = vmatpush2.msra.mxu0 0.0
    %651 = vmatprep.subr.mxu0 0.0
    %652 = vmatpush2.msra.mxu0 0.0
    %653 = vmatprep.subr.mxu0 0.0
    %654 = vmatpush2.msra.mxu0 0.0
    %655 = vmatprep.mubr.f32.mxu0 0.0
    %656 = vmatmul.mubr.f32.gmra.mxu0 %v544
    %v657 = vpop.f32.mrf.mxu0
    %v658 = vadd.f32 %v535, %v657
    %v659 = vpop.f32.mrf.mxu0
    %v660 = vadd.f32 %v539, %v659
    %661 = vmatprep.mubr.f32.mxu0 0.0
    %662 = vmatmul.mubr.f32.gmra.mxu0 %v547
    %v663 = vpop.f32.mrf.mxu0
    %v664 = vadd.f32 %v535, %v663
    %v665 = vpop.f32.mrf.mxu0
    %v666 = vadd.f32 %v539, %v665
    %667 = vmatprep.mubr.f32.mxu0 0.0
    %668 = vmatmul.mubr.f32.gmra.mxu0 %v550
    %v669 = vpop.f32.mrf.mxu0
    %v670 = vadd.f32 %v535, %v669
    %v671 = vpop.f32.mrf.mxu0
    %v672 = vadd.f32 %v539, %v671
    %673 = vmatprep.mubr.f32.mxu0 0.0
    %674 = vmatmul.mubr.f32.gmra.mxu0 %v553
    %v675 = vpop.f32.mrf.mxu0
    %v676 = vadd.f32 %v535, %v675
    %v677 = vpop.f32.mrf.mxu0
    %v678 = vadd.f32 %v539, %v677
    %679 = vmatprep.mubr.f32.mxu0 0.0
    %680 = vmatmul.mubr.f32.gmra.mxu0 %v556
    %v681 = vpop.f32.mrf.mxu0
    %v682 = vadd.f32 %v535, %v681
    %v683 = vpop.f32.mrf.mxu0
    %v684 = vadd.f32 %v539, %v683
    %685 = vmatprep.mubr.f32.mxu0 0.0
    %686 = vmatmul.mubr.f32.gmra.mxu0 %v559
    %v687 = vpop.f32.mrf.mxu0
    %v688 = vadd.f32 %v535, %v687
    %v689 = vpop.f32.mrf.mxu0
    %v690 = vadd.f32 %v539, %v689
    %691 = vmatprep.mubr.f32.mxu0 0.0
    %692 = vmatmul.mubr.f32.gmra.mxu0 %v562
    %v693 = vpop.f32.mrf.mxu0
    %v694 = vadd.f32 %v535, %v693
    %v695 = vpop.f32.mrf.mxu0
    %v696 = vadd.f32 %v539, %v695
    %697 = vmatprep.mubr.f32.mxu0 0.0
    %698 = vmatmul.mubr.f32.gmra.mxu0 %v565
    %v699 = vpop.f32.mrf.mxu0
    %v700 = vadd.f32 %v535, %v699
    %v701 = vpop.f32.mrf.mxu0
    %v702 = vadd.f32 %v539, %v701
    %703 = vmatprep.mubr.f32.mxu0 0.0
    %704 = vmatmul.mubr.f32.gmra.mxu0 %v568
    %v705 = vpop.f32.mrf.mxu0
    %v706 = vadd.f32 %v535, %v705
    %v707 = vpop.f32.mrf.mxu0
    %v708 = vadd.f32 %v539, %v707
    %709 = vmatprep.mubr.f32.mxu0 0.0
    %710 = vmatmul.mubr.f32.gmra.mxu0 %v571
    %v711 = vpop.f32.mrf.mxu0
    %v712 = vadd.f32 %v535, %v711
    %v713 = vpop.f32.mrf.mxu0
    %v714 = vadd.f32 %v539, %v713
    %715 = vmatprep.mubr.f32.mxu0 0.0
    %716 = vmatmul.mubr.f32.gmra.mxu0 %v574
    %v717 = vpop.f32.mrf.mxu0
    %v718 = vadd.f32 %v535, %v717
    %v719 = vpop.f32.mrf.mxu0
    %v720 = vadd.f32 %v539, %v719
    %721 = vmatprep.mubr.f32.mxu0 0.0
    %722 = vmatmul.mubr.f32.gmra.mxu0 %v577
    %v723 = vpop.f32.mrf.mxu0
    %v724 = vadd.f32 %v535, %v723
    %v725 = vpop.f32.mrf.mxu0
    %v726 = vadd.f32 %v539, %v725
    %727 = vmatprep.mubr.f32.mxu0 0.0
    %728 = vmatmul.mubr.f32.gmra.mxu0 %v580
    %v729 = vpop.f32.mrf.mxu0
    %v730 = vadd.f32 %v535, %v729
    %v731 = vpop.f32.mrf.mxu0
    %v732 = vadd.f32 %v539, %v731
    %733 = vmatprep.mubr.f32.mxu0 0.0
    %734 = vmatmul.mubr.f32.gmra.mxu0 %v583
    %v735 = vpop.f32.mrf.mxu0
    %v736 = vadd.f32 %v535, %v735
    %v737 = vpop.f32.mrf.mxu0
    %v738 = vadd.f32 %v539, %v737
    %739 = vmatprep.mubr.f32.mxu0 0.0
    %740 = vmatmul.mubr.f32.gmra.mxu0 %v586
    %v741 = vpop.f32.mrf.mxu0
    %v742 = vadd.f32 %v535, %v741
    %v743 = vpop.f32.mrf.mxu0
    %v744 = vadd.f32 %v539, %v743
    %745 = vmatprep.mubr.f32.mxu0 0.0
    %746 = vmatmul.mubr.f32.gmra.mxu0 %v589
    %v747 = vpop.f32.mrf.mxu0
    %v748 = vadd.f32 %v535, %v747
    %v749 = vpop.f32.mrf.mxu0
    %v750 = vadd.f32 %v539, %v749
    %751 = vdwg.mxu0
    %752 = vst [vmem:[#allocation2] sm:$0xff] %v658
    %753 = vst [vmem:[#allocation2 + $0x8] sm:$0xff] %v660
    %754 = vst [vmem:[#allocation2 + $0x10] sm:$0xff] %v664
    %755 = vst [vmem:[#allocation2 + $0x18] sm:$0xff] %v666
    %756 = vst [vmem:[#allocation2 + $0x20] sm:$0xff] %v670
    %757 = vst [vmem:[#allocation2 + $0x28] sm:$0xff] %v672
    %758 = vst [vmem:[#allocation2 + $0x30] sm:$0xff] %v676
    %759 = vst [vmem:[#allocation2 + $0x38] sm:$0xff] %v678
    %760 = vst [vmem:[#allocation2 + $0x40] sm:$0xff] %v682
    %761 = vst [vmem:[#allocation2 + $0x48] sm:$0xff] %v684
    %762 = vst [vmem:[#allocation2 + $0x50] sm:$0xff] %v688
    %763 = vst [vmem:[#allocation2 + $0x58] sm:$0xff] %v690
    %764 = vst [vmem:[#allocation2 + $0x60] sm:$0xff] %v694
    %765 = vst [vmem:[#allocation2 + $0x68] sm:$0xff] %v696
    %766 = vst [vmem:[#allocation2 + $0x70] sm:$0xff] %v700
    %767 = vst [vmem:[#allocation2 + $0x78] sm:$0xff] %v702
    %768 = vst [vmem:[#allocation2 + $0x80] sm:$0xff] %v706
    %769 = vst [vmem:[#allocation2 + $0x88] sm:$0xff] %v708
    %770 = vst [vmem:[#allocation2 + $0x90] sm:$0xff] %v712
    %771 = vst [vmem:[#allocation2 + $0x98] sm:$0xff] %v714
    %772 = vst [vmem:[#allocation2 + $0xa0] sm:$0xff] %v718
    %773 = vst [vmem:[#allocation2 + $0xa8] sm:$0xff] %v720
    %774 = vst [vmem:[#allocation2 + $0xb0] sm:$0xff] %v724
    %775 = vst [vmem:[#allocation2 + $0xb8] sm:$0xff] %v726
    %776 = vst [vmem:[#allocation2 + $0xc0] sm:$0xff] %v730
    %777 = vst [vmem:[#allocation2 + $0xc8] sm:$0xff] %v732
    %778 = vst [vmem:[#allocation2 + $0xd0] sm:$0xff] %v736
    %779 = vst [vmem:[#allocation2 + $0xd8] sm:$0xff] %v738
    %780 = vst [vmem:[#allocation2 + $0xe0] sm:$0xff] %v742
    %781 = vst [vmem:[#allocation2 + $0xe8] sm:$0xff] %v744
    %782 = vst [vmem:[#allocation2 + $0xf0] sm:$0xff] %v748
    %783 = vst [vmem:[#allocation2 + $0xf8] sm:$0xff] %v750
    %v784 = vld [vmem:[#allocation2] sm:$0xff]
    %v785 = vld [vmem:[#allocation2 + $0x8] sm:$0xff]
    %v786 = vld [vmem:[#allocation2 + $0x10] sm:$0xff]
    %v787 = vld [vmem:[#allocation2 + $0x18] sm:$0xff]
    %v788 = vld [vmem:[%s8] sm:$0xff]
    %v789 = vld [vmem:[%s8 + $0x8] sm:$0xff]
    %v790 = vld [vmem:[%s8 + $0x10] sm:$0xff]
    %v791 = vld [vmem:[%s8 + $0x18] sm:$0xff]
    %vm792 = vcmask 261120
    %v794 = vsel %vm792, 0.0, 0
    %796 = vmatprep.subr.mxu0 0.0
    %797 = vmatpush1.msra.mxu0 0.0
    %798 = vmatprep.subr.mxu0 0.0
    %799 = vmatpush1.msra.mxu0 0.0
    %800 = vmatprep.subr.mxu0 0.0
    %801 = vmatpush1.msra.mxu0 0.0
    %802 = vmatprep.subr.mxu0 0.0
    %803 = vmatpush1.msra.mxu0 0.0
    %804 = vmatprep.subr.mxu0 0.0
    %805 = vmatpush1.msra.mxu0 0.0
    %806 = vmatprep.subr.mxu0 0.0
    %807 = vmatpush1.msra.mxu0 0.0
    %808 = vmatprep.subr.mxu0 0.0
    %809 = vmatpush1.msra.mxu0 0.0
    %810 = vmatprep.subr.mxu0 0.0
    %811 = vmatpush1.msra.mxu0 0.0
    %812 = vmatprep.subr.mxu0 0.0
    %813 = vmatpush1.msra.mxu0 0.0
    %814 = vmatprep.subr.mxu0 0.0
    %815 = vmatpush1.msra.mxu0 0.0
    %816 = vmatprep.subr.mxu0 0.0
    %817 = vmatpush1.msra.mxu0 0.0
    %818 = vmatprep.subr.mxu0 0.0
    %819 = vmatpush1.msra.mxu0 0.0
    %820 = vmatprep.subr.mxu0 0.0
    %821 = vmatpush1.msra.mxu0 %v791
    %822 = vmatprep.subr.mxu0 0.0
    %823 = vmatpush1.msra.mxu0 %v790
    %824 = vmatprep.subr.mxu0 0.0
    %825 = vmatpush1.msra.mxu0 %v789
    %826 = vmatprep.subr.mxu0 0.0
    %827 = vmatpush1.msra.mxu0 %v788
    %828 = vmatprep.subr.mxu0 0.0
    %829 = vmatpush2.msra.mxu0 0.0
    %830 = vmatprep.subr.mxu0 0.0
    %831 = vmatpush2.msra.mxu0 0.0
    %832 = vmatprep.subr.mxu0 0.0
    %833 = vmatpush2.msra.mxu0 0.0
    %834 = vmatprep.subr.mxu0 0.0
    %835 = vmatpush2.msra.mxu0 0.0
    %836 = vmatprep.subr.mxu0 0.0
    %837 = vmatpush2.msra.mxu0 0.0
    %838 = vmatprep.subr.mxu0 0.0
    %839 = vmatpush2.msra.mxu0 0.0
    %840 = vmatprep.subr.mxu0 0.0
    %841 = vmatpush2.msra.mxu0 0.0
    %842 = vmatprep.subr.mxu0 0.0
    %843 = vmatpush2.msra.mxu0 0.0
    %844 = vmatprep.subr.mxu0 0.0
    %845 = vmatpush2.msra.mxu0 0.0
    %846 = vmatprep.subr.mxu0 0.0
    %847 = vmatpush2.msra.mxu0 0.0
    %848 = vmatprep.subr.mxu0 0.0
    %849 = vmatpush2.msra.mxu0 0.0
    %850 = vmatprep.subr.mxu0 0.0
    %851 = vmatpush2.msra.mxu0 0.0
    %852 = vmatprep.subr.mxu0 0.0
    %853 = vmatpush2.msra.mxu0 0.0
    %854 = vmatprep.subr.mxu0 0.0
    %855 = vmatpush2.msra.mxu0 0.0
    %856 = vmatprep.subr.mxu0 0.0
    %857 = vmatpush2.msra.mxu0 0.0
    %858 = vmatprep.subr.mxu0 0.0
    %859 = vmatpush2.msra.mxu0 0.0
    %860 = vmatprep.mubr.f32.mxu0 0.0
    %861 = vmatmul.mubr.f32.gmra.mxu0 %v794
    %v862 = vpop.f32.mrf.mxu0
    %v863 = vadd.f32 0.0, %v862
    %v864 = vpop.f32.mrf.mxu0
    %865 = vmatprep.mubr.f32.mxu0 0.0
    %866 = vmatmul.mubr.f32.gmra.mxu0 %v794
    %v867 = vpop.f32.mrf.mxu0
    %v868 = vadd.f32 0.0, %v867
    %v869 = vpop.f32.mrf.mxu0
    %870 = vdwg.mxu0
    %v871 = vadd.f32 %v784, %v863
    %v872 = vadd.f32 %v786, %v868
    %v873 = vld [vmem:[%s9] sm:$0xff]
    %v874 = vld [vmem:[%s9 + $0x8] sm:$0xff]
    %v875 = vld [vmem:[%s9 + $0x10] sm:$0xff]
    %v876 = vld [vmem:[%s9 + $0x18] sm:$0xff]
    %877 = vmatprep.subr.mxu0 0.0
    %878 = vmatpush1.msra.mxu0 0.0
    %879 = vmatprep.subr.mxu0 0.0
    %880 = vmatpush1.msra.mxu0 0.0
    %881 = vmatprep.subr.mxu0 0.0
    %882 = vmatpush1.msra.mxu0 0.0
    %883 = vmatprep.subr.mxu0 0.0
    %884 = vmatpush1.msra.mxu0 0.0
    %885 = vmatprep.subr.mxu0 0.0
    %886 = vmatpush1.msra.mxu0 0.0
    %887 = vmatprep.subr.mxu0 0.0
    %888 = vmatpush1.msra.mxu0 0.0
    %889 = vmatprep.subr.mxu0 0.0
    %890 = vmatpush1.msra.mxu0 0.0
    %891 = vmatprep.subr.mxu0 0.0
    %892 = vmatpush1.msra.mxu0 0.0
    %893 = vmatprep.subr.mxu0 0.0
    %894 = vmatpush1.msra.mxu0 0.0
    %895 = vmatprep.subr.mxu0 0.0
    %896 = vmatpush1.msra.mxu0 0.0
    %897 = vmatprep.subr.mxu0 0.0
    %898 = vmatpush1.msra.mxu0 0.0
    %899 = vmatprep.subr.mxu0 0.0
    %900 = vmatpush1.msra.mxu0 0.0
    %901 = vmatprep.subr.mxu0 0.0
    %902 = vmatpush1.msra.mxu0 %v876
    %903 = vmatprep.subr.mxu0 0.0
    %904 = vmatpush1.msra.mxu0 %v875
    %905 = vmatprep.subr.mxu0 0.0
    %906 = vmatpush1.msra.mxu0 %v874
    %907 = vmatprep.subr.mxu0 0.0
    %908 = vmatpush1.msra.mxu0 %v873
    %909 = vmatprep.subr.mxu0 0.0
    %910 = vmatpush2.msra.mxu0 0.0
    %911 = vmatprep.subr.mxu0 0.0
    %912 = vmatpush2.msra.mxu0 0.0
    %913 = vmatprep.subr.mxu0 0.0
    %914 = vmatpush2.msra.mxu0 0.0
    %915 = vmatprep.subr.mxu0 0.0
    %916 = vmatpush2.msra.mxu0 0.0
    %917 = vmatprep.subr.mxu0 0.0
    %918 = vmatpush2.msra.mxu0 0.0
    %919 = vmatprep.subr.mxu0 0.0
    %920 = vmatpush2.msra.mxu0 0.0
    %921 = vmatprep.subr.mxu0 0.0
    %922 = vmatpush2.msra.mxu0 0.0
    %923 = vmatprep.subr.mxu0 0.0
    %924 = vmatpush2.msra.mxu0 0.0
    %925 = vmatprep.subr.mxu0 0.0
    %926 = vmatpush2.msra.mxu0 0.0
    %927 = vmatprep.subr.mxu0 0.0
    %928 = vmatpush2.msra.mxu0 0.0
    %929 = vmatprep.subr.mxu0 0.0
    %930 = vmatpush2.msra.mxu0 0.0
    %931 = vmatprep.subr.mxu0 0.0
    %932 = vmatpush2.msra.mxu0 0.0
    %933 = vmatprep.subr.mxu0 0.0
    %934 = vmatpush2.msra.mxu0 0.0
    %935 = vmatprep.subr.mxu0 0.0
    %936 = vmatpush2.msra.mxu0 0.0
    %937 = vmatprep.subr.mxu0 0.0
    %938 = vmatpush2.msra.mxu0 0.0
    %939 = vmatprep.subr.mxu0 0.0
    %940 = vmatpush2.msra.mxu0 0.0
    %941 = vmatprep.mubr.f32.mxu0 0.0
    %942 = vmatmul.mubr.f32.gmra.mxu0 %v794
    %v943 = vpop.f32.mrf.mxu0
    %v944 = vadd.f32 0.0, %v943
    %v945 = vpop.f32.mrf.mxu0
    %946 = vmatprep.mubr.f32.mxu0 0.0
    %947 = vmatmul.mubr.f32.gmra.mxu0 %v794
    %v948 = vpop.f32.mrf.mxu0
    %v949 = vadd.f32 0.0, %v948
    %v950 = vpop.f32.mrf.mxu0
    %951 = vdwg.mxu0
    %v952 = vadd.f32 %v785, %v944
    %v953 = vadd.f32 %v787, %v949
    %v954 = vxor.u32 %v871, 2147483648
    %v955 = vxor.u32 %v872, 2147483648
    %v956 = vmul.f32 %v954, 1.442695
    %v957 = vpow.pop %v956
    %v958 = vmul.f32 %v955, 1.442695
    %v959 = vpow.pop %v958
    %v960 = vadd.f32 %v957, 1.0
    %v961 = vadd.f32 %v959, 1.0
    %v962 = vrcp.pop %v960
    %v963 = vmul.f32 1.0, %v962
    %v964 = vrcp.pop %v961
    %v965 = vmul.f32 1.0, %v964
    %v966 = vtanh.pop %v871
    %v967 = vtanh.pop %v872
    %v968 = vmul.f32 %v963, 0.0
    %v969 = vmul.f32 %v965, 0.0
    %972 = vrot.lane.b32.xlu0 %v966, 64
    %v973 = vpop.permute.xlu0 %972
    %974 = vrot.lane.b32.xlu0 %v967, 64
    %v975 = vpop.permute.xlu0 %974
    %v978 = vmul.f32 %v963, %v973
    %v979 = vmul.f32 %v965, %v975
    %982 = vrot.lane.b32.xlu0 %v978, 32
    %v983 = vpop.permute.xlu0 %982
    %984 = vrot.lane.b32.xlu0 %v979, 32
    %v985 = vpop.permute.xlu0 %984
    %v988 = vadd.f32 %v968, %v983
    %v989 = vadd.f32 %v969, %v985
    %v990 = vtanh.pop %v988
    %v991 = vtanh.pop %v989
    %994 = vrot.lane.b32.xlu0 %v990, 64
    %v995 = vpop.permute.xlu0 %994
    %996 = vrot.lane.b32.xlu0 %v991, 64
    %v997 = vpop.permute.xlu0 %996
    %v1000 = vmul.f32 %v963, %v995
    %v1001 = vmul.f32 %v965, %v997
    %v1002 = vxor.u32 %v952, 2147483648
    %v1003 = vxor.u32 %v953, 2147483648
    %v1004 = vmul.f32 %v1002, 1.442695
    %v1005 = vpow.pop %v1004
    %v1006 = vmul.f32 %v1003, 1.442695
    %v1007 = vpow.pop %v1006
    %v1008 = vadd.f32 %v1005, 1.0
    %v1009 = vadd.f32 %v1007, 1.0
    %v1010 = vrcp.pop %v1008
    %v1011 = vmul.f32 1.0, %v1010
    %v1012 = vrcp.pop %v1009
    %v1013 = vmul.f32 1.0, %v1012
    %v1014 = vtanh.pop %v952
    %v1015 = vtanh.pop %v953
    %v1016 = vmul.f32 %v1011, 0.0
    %v1017 = vmul.f32 %v1013, 0.0
    %1020 = vrot.lane.b32.xlu0 %v1014, 64
    %v1021 = vpop.permute.xlu0 %1020
    %1022 = vrot.lane.b32.xlu0 %v1015, 64
    %v1023 = vpop.permute.xlu0 %1022
    %v1026 = vmul.f32 %v1011, %v1021
    %v1027 = vmul.f32 %v1013, %v1023
    %1030 = vrot.lane.b32.xlu0 %v1026, 32
    %v1031 = vpop.permute.xlu0 %1030
    %1032 = vrot.lane.b32.xlu0 %v1027, 32
    %v1033 = vpop.permute.xlu0 %1032
    %v1036 = vadd.f32 %v1016, %v1031
    %v1037 = vadd.f32 %v1017, %v1033
    %v1038 = vtanh.pop %v1036
    %v1039 = vtanh.pop %v1037
    %1042 = vrot.lane.b32.xlu0 %v1038, 64
    %v1043 = vpop.permute.xlu0 %1042
    %1044 = vrot.lane.b32.xlu0 %v1039, 64
    %v1045 = vpop.permute.xlu0 %1044
    %v1048 = vmul.f32 %v1011, %v1043
    %v1049 = vmul.f32 %v1013, %v1045
    %1052 = vrot.lane.b32.xlu0 %v1000, 32
    %v1053 = vpop.permute.xlu0 %1052
    %1054 = vrot.lane.b32.xlu0 %v1001, 32
    %v1055 = vpop.permute.xlu0 %1054
    %v1058 = vsel %vm792, %v1053, 0.0
    %v1059 = vsel %vm792, %v1055, 0.0
    %v1060 = vld [vmem:[%s10] sm:$0xff]
    %v1061 = vld [vmem:[%s10 + $0x8] sm:$0xff]
    %v1062 = vld [vmem:[%s10 + $0x10] sm:$0xff]
    %v1063 = vld [vmem:[%s10 + $0x18] sm:$0xff]
    %v1064 = vld [vmem:[%s10 + $0x20] sm:$0xff]
    %v1065 = vld [vmem:[%s10 + $0x28] sm:$0xff]
    %v1066 = vld [vmem:[%s10 + $0x30] sm:$0xff]
    %v1067 = vld [vmem:[%s10 + $0x38] sm:$0xff]
    %v1068 = vld [vmem:[#allocation12] sm:$0x1]
    %v1070 = vlaneseq
    %v1071 = vshrl.u32 %v1070, 7
    %v1072 = vsub.s32 0, %v1071
    %v1073 = vrot.slane %v1068, %v1072
    %v1076 = vsel %vm542, %v1058, 0
    %v1079 = vsel %vm542, %v1059, 0
    %1081 = vmatprep.subr.mxu0 0.0
    %1082 = vmatpush1.msra.mxu0 0.0
    %1083 = vmatprep.subr.mxu0 0.0
    %1084 = vmatpush1.msra.mxu0 0.0
    %1085 = vmatprep.subr.mxu0 0.0
    %1086 = vmatpush1.msra.mxu0 0.0
    %1087 = vmatprep.subr.mxu0 0.0
    %1088 = vmatpush1.msra.mxu0 0.0
    %1089 = vmatprep.subr.mxu0 0.0
    %1090 = vmatpush1.msra.mxu0 0.0
    %1091 = vmatprep.subr.mxu0 0.0
    %1092 = vmatpush1.msra.mxu0 0.0
    %1093 = vmatprep.subr.mxu0 0.0
    %1094 = vmatpush1.msra.mxu0 0.0
    %1095 = vmatprep.subr.mxu0 0.0
    %1096 = vmatpush1.msra.mxu0 0.0
    %1097 = vmatprep.subr.mxu0 0.0
    %1098 = vmatpush1.msra.mxu0 %v1067
    %1099 = vmatprep.subr.mxu0 0.0
    %1100 = vmatpush1.msra.mxu0 %v1066
    %1101 = vmatprep.subr.mxu0 0.0
    %1102 = vmatpush1.msra.mxu0 %v1065
    %1103 = vmatprep.subr.mxu0 0.0
    %1104 = vmatpush1.msra.mxu0 %v1064
    %1105 = vmatprep.subr.mxu0 0.0
    %1106 = vmatpush1.msra.mxu0 %v1063
    %1107 = vmatprep.subr.mxu0 0.0
    %1108 = vmatpush1.msra.mxu0 %v1062
    %1109 = vmatprep.subr.mxu0 0.0
    %1110 = vmatpush1.msra.mxu0 %v1061
    %1111 = vmatprep.subr.mxu0 0.0
    %1112 = vmatpush1.msra.mxu0 %v1060
    %1113 = vmatprep.subr.mxu0 0.0
    %1114 = vmatpush2.msra.mxu0 0.0
    %1115 = vmatprep.subr.mxu0 0.0
    %1116 = vmatpush2.msra.mxu0 0.0
    %1117 = vmatprep.subr.mxu0 0.0
    %1118 = vmatpush2.msra.mxu0 0.0
    %1119 = vmatprep.subr.mxu0 0.0
    %1120 = vmatpush2.msra.mxu0 0.0
    %1121 = vmatprep.subr.mxu0 0.0
    %1122 = vmatpush2.msra.mxu0 0.0
    %1123 = vmatprep.subr.mxu0 0.0
    %1124 = vmatpush2.msra.mxu0 0.0
    %1125 = vmatprep.subr.mxu0 0.0
    %1126 = vmatpush2.msra.mxu0 0.0
    %1127 = vmatprep.subr.mxu0 0.0
    %1128 = vmatpush2.msra.mxu0 0.0
    %1129 = vmatprep.subr.mxu0 0.0
    %1130 = vmatpush2.msra.mxu0 0.0
    %1131 = vmatprep.subr.mxu0 0.0
    %1132 = vmatpush2.msra.mxu0 0.0
    %1133 = vmatprep.subr.mxu0 0.0
    %1134 = vmatpush2.msra.mxu0 0.0
    %1135 = vmatprep.subr.mxu0 0.0
    %1136 = vmatpush2.msra.mxu0 0.0
    %1137 = vmatprep.subr.mxu0 0.0
    %1138 = vmatpush2.msra.mxu0 0.0
    %1139 = vmatprep.subr.mxu0 0.0
    %1140 = vmatpush2.msra.mxu0 0.0
    %1141 = vmatprep.subr.mxu0 0.0
    %1142 = vmatpush2.msra.mxu0 0.0
    %1143 = vmatprep.subr.mxu0 0.0
    %1144 = vmatpush2.msra.mxu0 0.0
    %1145 = vmatprep.mubr.f32.mxu0 0.0
    %1146 = vmatmul.mubr.f32.gmra.mxu0 %v1076
    %v1147 = vpop.f32.mrf.mxu0
    %v1148 = vadd.f32 %v1073, %v1147
    %v1149 = vpop.f32.mrf.mxu0
    %1150 = vmatprep.mubr.f32.mxu0 0.0
    %1151 = vmatmul.mubr.f32.gmra.mxu0 %v1079
    %v1152 = vpop.f32.mrf.mxu0
    %v1153 = vadd.f32 %v1073, %v1152
    %v1154 = vpop.f32.mrf.mxu0
    %1155 = vdwg.mxu0
    %1158 = vrot.lane.b32.xlu0 %v1048, 32
    %v1159 = vpop.permute.xlu0 %1158
    %1160 = vrot.lane.b32.xlu0 %v1049, 32
    %v1161 = vpop.permute.xlu0 %1160
    %v1164 = vsel %vm792, %v1159, 0.0
    %v1165 = vsel %vm792, %v1161, 0.0
    %v1166 = vld [vmem:[%s12] sm:$0xff]
    %v1167 = vld [vmem:[%s12 + $0x8] sm:$0xff]
    %v1168 = vld [vmem:[%s12 + $0x10] sm:$0xff]
    %v1169 = vld [vmem:[%s12 + $0x18] sm:$0xff]
    %v1170 = vld [vmem:[%s12 + $0x20] sm:$0xff]
    %v1171 = vld [vmem:[%s12 + $0x28] sm:$0xff]
    %v1172 = vld [vmem:[%s12 + $0x30] sm:$0xff]
    %v1173 = vld [vmem:[%s12 + $0x38] sm:$0xff]
    %v1174 = vld [vmem:[#allocation13] sm:$0x1]
    %v1176 = vlaneseq
    %v1177 = vshrl.u32 %v1176, 7
    %v1178 = vsub.s32 0, %v1177
    %v1179 = vrot.slane %v1174, %v1178
    %v1182 = vsel %vm542, %v1164, 0
    %v1185 = vsel %vm542, %v1165, 0
    %1187 = vmatprep.subr.mxu0 0.0
    %1188 = vmatpush1.msra.mxu0 0.0
    %1189 = vmatprep.subr.mxu0 0.0
    %1190 = vmatpush1.msra.mxu0 0.0
    %1191 = vmatprep.subr.mxu0 0.0
    %1192 = vmatpush1.msra.mxu0 0.0
    %1193 = vmatprep.subr.mxu0 0.0
    %1194 = vmatpush1.msra.mxu0 0.0
    %1195 = vmatprep.subr.mxu0 0.0
    %1196 = vmatpush1.msra.mxu0 0.0
    %1197 = vmatprep.subr.mxu0 0.0
    %1198 = vmatpush1.msra.mxu0 0.0
    %1199 = vmatprep.subr.mxu0 0.0
    %1200 = vmatpush1.msra.mxu0 0.0
    %1201 = vmatprep.subr.mxu0 0.0
    %1202 = vmatpush1.msra.mxu0 0.0
    %1203 = vmatprep.subr.mxu0 0.0
    %1204 = vmatpush1.msra.mxu0 %v1173
    %1205 = vmatprep.subr.mxu0 0.0
    %1206 = vmatpush1.msra.mxu0 %v1172
    %1207 = vmatprep.subr.mxu0 0.0
    %1208 = vmatpush1.msra.mxu0 %v1171
    %1209 = vmatprep.subr.mxu0 0.0
    %1210 = vmatpush1.msra.mxu0 %v1170
    %1211 = vmatprep.subr.mxu0 0.0
    %1212 = vmatpush1.msra.mxu0 %v1169
    %1213 = vmatprep.subr.mxu0 0.0
    %1214 = vmatpush1.msra.mxu0 %v1168
    %1215 = vmatprep.subr.mxu0 0.0
    %1216 = vmatpush1.msra.mxu0 %v1167
    %1217 = vmatprep.subr.mxu0 0.0
    %1218 = vmatpush1.msra.mxu0 %v1166
    %1219 = vmatprep.subr.mxu0 0.0
    %1220 = vmatpush2.msra.mxu0 0.0
    %1221 = vmatprep.subr.mxu0 0.0
    %1222 = vmatpush2.msra.mxu0 0.0
    %1223 = vmatprep.subr.mxu0 0.0
    %1224 = vmatpush2.msra.mxu0 0.0
    %1225 = vmatprep.subr.mxu0 0.0
    %1226 = vmatpush2.msra.mxu0 0.0
    %1227 = vmatprep.subr.mxu0 0.0
    %1228 = vmatpush2.msra.mxu0 0.0
    %1229 = vmatprep.subr.mxu0 0.0
    %1230 = vmatpush2.msra.mxu0 0.0
    %1231 = vmatprep.subr.mxu0 0.0
    %1232 = vmatpush2.msra.mxu0 0.0
    %1233 = vmatprep.subr.mxu0 0.0
    %1234 = vmatpush2.msra.mxu0 0.0
    %1235 = vmatprep.subr.mxu0 0.0
    %1236 = vmatpush2.msra.mxu0 0.0
    %1237 = vmatprep.subr.mxu0 0.0
    %1238 = vmatpush2.msra.mxu0 0.0
    %1239 = vmatprep.subr.mxu0 0.0
    %1240 = vmatpush2.msra.mxu0 0.0
    %1241 = vmatprep.subr.mxu0 0.0
    %1242 = vmatpush2.msra.mxu0 0.0
    %1243 = vmatprep.subr.mxu0 0.0
    %1244 = vmatpush2.msra.mxu0 0.0
    %1245 = vmatprep.subr.mxu0 0.0
    %1246 = vmatpush2.msra.mxu0 0.0
    %1247 = vmatprep.subr.mxu0 0.0
    %1248 = vmatpush2.msra.mxu0 0.0
    %1249 = vmatprep.subr.mxu0 0.0
    %1250 = vmatpush2.msra.mxu0 0.0
    %1251 = vmatprep.mubr.f32.mxu0 0.0
    %1252 = vmatmul.mubr.f32.gmra.mxu0 %v1182
    %v1253 = vpop.f32.mrf.mxu0
    %v1254 = vadd.f32 %v1179, %v1253
    %v1255 = vpop.f32.mrf.mxu0
    %1256 = vmatprep.mubr.f32.mxu0 0.0
    %1257 = vmatmul.mubr.f32.gmra.mxu0 %v1185
    %v1258 = vpop.f32.mrf.mxu0
    %v1259 = vadd.f32 %v1179, %v1258
    %v1260 = vpop.f32.mrf.mxu0
    %1261 = vdwg.mxu0
    %v1262 = vxor.u32 %v1148, 2147483648
    %v1263 = vxor.u32 %v1153, 2147483648
    %v1264 = vmul.f32 %v1262, 1.442695
    %v1265 = vpow.pop %v1264
    %v1266 = vmul.f32 %v1263, 1.442695
    %v1267 = vpow.pop %v1266
    %v1268 = vadd.f32 %v1265, 1.0
    %v1269 = vadd.f32 %v1267, 1.0
    %v1270 = vrcp.pop %v1268
    %v1271 = vmul.f32 1.0, %v1270
    %v1272 = vrcp.pop %v1269
    %v1273 = vmul.f32 1.0, %v1272
    %v1274 = vtanh.pop %v1148
    %v1275 = vtanh.pop %v1153
    %v1276 = vmul.f32 %v1271, 0.0
    %v1277 = vmul.f32 %v1273, 0.0
    %1280 = vrot.lane.b32.xlu0 %v1274, 64
    %v1281 = vpop.permute.xlu0 %1280
    %1282 = vrot.lane.b32.xlu0 %v1275, 64
    %v1283 = vpop.permute.xlu0 %1282
    %v1286 = vmul.f32 %v1271, %v1281
    %v1287 = vmul.f32 %v1273, %v1283
    %1290 = vrot.lane.b32.xlu0 %v1286, 32
    %v1291 = vpop.permute.xlu0 %1290
    %1292 = vrot.lane.b32.xlu0 %v1287, 32
    %v1293 = vpop.permute.xlu0 %1292
    %v1296 = vadd.f32 %v1276, %v1291
    %v1297 = vadd.f32 %v1277, %v1293
    %v1298 = vtanh.pop %v1296
    %v1299 = vtanh.pop %v1297
    %1302 = vrot.lane.b32.xlu0 %v1298, 64
    %v1303 = vpop.permute.xlu0 %1302
    %1304 = vrot.lane.b32.xlu0 %v1299, 64
    %v1305 = vpop.permute.xlu0 %1304
    %v1308 = vmul.f32 %v1271, %v1303
    %v1309 = vmul.f32 %v1273, %v1305
    %v1310 = vxor.u32 %v1254, 2147483648
    %v1311 = vxor.u32 %v1259, 2147483648
    %v1312 = vmul.f32 %v1310, 1.442695
    %v1313 = vpow.pop %v1312
    %v1314 = vmul.f32 %v1311, 1.442695
    %v1315 = vpow.pop %v1314
    %v1316 = vadd.f32 %v1313, 1.0
    %v1317 = vadd.f32 %v1315, 1.0
    %v1318 = vrcp.pop %v1316
    %v1319 = vmul.f32 1.0, %v1318
    %v1320 = vrcp.pop %v1317
    %v1321 = vmul.f32 1.0, %v1320
    %v1322 = vtanh.pop %v1254
    %v1323 = vtanh.pop %v1259
    %v1324 = vmul.f32 %v1319, 0.0
    %v1325 = vmul.f32 %v1321, 0.0
    %1328 = vrot.lane.b32.xlu0 %v1322, 64
    %v1329 = vpop.permute.xlu0 %1328
    %1330 = vrot.lane.b32.xlu0 %v1323, 64
    %v1331 = vpop.permute.xlu0 %1330
    %v1334 = vmul.f32 %v1319, %v1329
    %v1335 = vmul.f32 %v1321, %v1331
    %1338 = vrot.lane.b32.xlu0 %v1334, 32
    %v1339 = vpop.permute.xlu0 %1338
    %1340 = vrot.lane.b32.xlu0 %v1335, 32
    %v1341 = vpop.permute.xlu0 %1340
    %v1344 = vadd.f32 %v1324, %v1339
    %v1345 = vadd.f32 %v1325, %v1341
    %v1346 = vtanh.pop %v1344
    %v1347 = vtanh.pop %v1345
    %1350 = vrot.lane.b32.xlu0 %v1346, 64
    %v1351 = vpop.permute.xlu0 %1350
    %1352 = vrot.lane.b32.xlu0 %v1347, 64
    %v1353 = vpop.permute.xlu0 %1352
    %v1356 = vmul.f32 %v1319, %v1351
    %v1357 = vmul.f32 %v1321, %v1353
    %v1358 = vld [vmem:[#allocation2 + $0x20] sm:$0xff]
    %v1359 = vld [vmem:[#allocation2 + $0x28] sm:$0xff]
    %v1360 = vld [vmem:[#allocation2 + $0x30] sm:$0xff]
    %v1361 = vld [vmem:[#allocation2 + $0x38] sm:$0xff]
    %v1362 = vsel %vm792, %v1053, 0
    %v1364 = vsel %vm792, %v1055, 0
    %1366 = vmatprep.subr.mxu0 0.0
    %1367 = vmatpush1.msra.mxu0 0.0
    %1368 = vmatprep.subr.mxu0 0.0
    %1369 = vmatpush1.msra.mxu0 0.0
    %1370 = vmatprep.subr.mxu0 0.0
    %1371 = vmatpush1.msra.mxu0 0.0
    %1372 = vmatprep.subr.mxu0 0.0
    %1373 = vmatpush1.msra.mxu0 0.0
    %1374 = vmatprep.subr.mxu0 0.0
    %1375 = vmatpush1.msra.mxu0 0.0
    %1376 = vmatprep.subr.mxu0 0.0
    %1377 = vmatpush1.msra.mxu0 0.0
    %1378 = vmatprep.subr.mxu0 0.0
    %1379 = vmatpush1.msra.mxu0 0.0
    %1380 = vmatprep.subr.mxu0 0.0
    %1381 = vmatpush1.msra.mxu0 0.0
    %1382 = vmatprep.subr.mxu0 0.0
    %1383 = vmatpush1.msra.mxu0 0.0
    %1384 = vmatprep.subr.mxu0 0.0
    %1385 = vmatpush1.msra.mxu0 0.0
    %1386 = vmatprep.subr.mxu0 0.0
    %1387 = vmatpush1.msra.mxu0 0.0
    %1388 = vmatprep.subr.mxu0 0.0
    %1389 = vmatpush1.msra.mxu0 0.0
    %1390 = vmatprep.subr.mxu0 0.0
    %1391 = vmatpush1.msra.mxu0 %v791
    %1392 = vmatprep.subr.mxu0 0.0
    %1393 = vmatpush1.msra.mxu0 %v790
    %1394 = vmatprep.subr.mxu0 0.0
    %1395 = vmatpush1.msra.mxu0 %v789
    %1396 = vmatprep.subr.mxu0 0.0
    %1397 = vmatpush1.msra.mxu0 %v788
    %1398 = vmatprep.subr.mxu0 0.0
    %1399 = vmatpush2.msra.mxu0 0.0
    %1400 = vmatprep.subr.mxu0 0.0
    %1401 = vmatpush2.msra.mxu0 0.0
    %1402 = vmatprep.subr.mxu0 0.0
    %1403 = vmatpush2.msra.mxu0 0.0
    %1404 = vmatprep.subr.mxu0 0.0
    %1405 = vmatpush2.msra.mxu0 0.0
    %1406 = vmatprep.subr.mxu0 0.0
    %1407 = vmatpush2.msra.mxu0 0.0
    %1408 = vmatprep.subr.mxu0 0.0
    %1409 = vmatpush2.msra.mxu0 0.0
    %1410 = vmatprep.subr.mxu0 0.0
    %1411 = vmatpush2.msra.mxu0 0.0
    %1412 = vmatprep.subr.mxu0 0.0
    %1413 = vmatpush2.msra.mxu0 0.0
    %1414 = vmatprep.subr.mxu0 0.0
    %1415 = vmatpush2.msra.mxu0 0.0
    %1416 = vmatprep.subr.mxu0 0.0
    %1417 = vmatpush2.msra.mxu0 0.0
    %1418 = vmatprep.subr.mxu0 0.0
    %1419 = vmatpush2.msra.mxu0 0.0
    %1420 = vmatprep.subr.mxu0 0.0
    %1421 = vmatpush2.msra.mxu0 0.0
    %1422 = vmatprep.subr.mxu0 0.0
    %1423 = vmatpush2.msra.mxu0 0.0
    %1424 = vmatprep.subr.mxu0 0.0
    %1425 = vmatpush2.msra.mxu0 0.0
    %1426 = vmatprep.subr.mxu0 0.0
    %1427 = vmatpush2.msra.mxu0 0.0
    %1428 = vmatprep.subr.mxu0 0.0
    %1429 = vmatpush2.msra.mxu0 0.0
    %1430 = vmatprep.mubr.f32.mxu0 0.0
    %1431 = vmatmul.mubr.f32.gmra.mxu0 %v1362
    %v1432 = vpop.f32.mrf.mxu0
    %v1433 = vadd.f32 0.0, %v1432
    %v1434 = vpop.f32.mrf.mxu0
    %1435 = vmatprep.mubr.f32.mxu0 0.0
    %1436 = vmatmul.mubr.f32.gmra.mxu0 %v1364
    %v1437 = vpop.f32.mrf.mxu0
    %v1438 = vadd.f32 0.0, %v1437
    %v1439 = vpop.f32.mrf.mxu0
    %1440 = vdwg.mxu0
    %v1441 = vadd.f32 %v1358, %v1433
    %v1442 = vadd.f32 %v1360, %v1438
    %v1443 = vsel %vm792, %v1159, 0
    %v1445 = vsel %vm792, %v1161, 0
    %1447 = vmatprep.subr.mxu0 0.0
    %1448 = vmatpush1.msra.mxu0 0.0
    %1449 = vmatprep.subr.mxu0 0.0
    %1450 = vmatpush1.msra.mxu0 0.0
    %1451 = vmatprep.subr.mxu0 0.0
    %1452 = vmatpush1.msra.mxu0 0.0
    %1453 = vmatprep.subr.mxu0 0.0
    %1454 = vmatpush1.msra.mxu0 0.0
    %1455 = vmatprep.subr.mxu0 0.0
    %1456 = vmatpush1.msra.mxu0 0.0
    %1457 = vmatprep.subr.mxu0 0.0
    %1458 = vmatpush1.msra.mxu0 0.0
    %1459 = vmatprep.subr.mxu0 0.0
    %1460 = vmatpush1.msra.mxu0 0.0
    %1461 = vmatprep.subr.mxu0 0.0
    %1462 = vmatpush1.msra.mxu0 0.0
    %1463 = vmatprep.subr.mxu0 0.0
    %1464 = vmatpush1.msra.mxu0 0.0
    %1465 = vmatprep.subr.mxu0 0.0
    %1466 = vmatpush1.msra.mxu0 0.0
    %1467 = vmatprep.subr.mxu0 0.0
    %1468 = vmatpush1.msra.mxu0 0.0
    %1469 = vmatprep.subr.mxu0 0.0
    %1470 = vmatpush1.msra.mxu0 0.0
    %1471 = vmatprep.subr.mxu0 0.0
    %1472 = vmatpush1.msra.mxu0 %v876
    %1473 = vmatprep.subr.mxu0 0.0
    %1474 = vmatpush1.msra.mxu0 %v875
    %1475 = vmatprep.subr.mxu0 0.0
    %1476 = vmatpush1.msra.mxu0 %v874
    %1477 = vmatprep.subr.mxu0 0.0
    %1478 = vmatpush1.msra.mxu0 %v873
    %1479 = vmatprep.subr.mxu0 0.0
    %1480 = vmatpush2.msra.mxu0 0.0
    %1481 = vmatprep.subr.mxu0 0.0
    %1482 = vmatpush2.msra.mxu0 0.0
    %1483 = vmatprep.subr.mxu0 0.0
    %1484 = vmatpush2.msra.mxu0 0.0
    %1485 = vmatprep.subr.mxu0 0.0
    %1486 = vmatpush2.msra.mxu0 0.0
    %1487 = vmatprep.subr.mxu0 0.0
    %1488 = vmatpush2.msra.mxu0 0.0
    %1489 = vmatprep.subr.mxu0 0.0
    %1490 = vmatpush2.msra.mxu0 0.0
    %1491 = vmatprep.subr.mxu0 0.0
    %1492 = vmatpush2.msra.mxu0 0.0
    %1493 = vmatprep.subr.mxu0 0.0
    %1494 = vmatpush2.msra.mxu0 0.0
    %1495 = vmatprep.subr.mxu0 0.0
    %1496 = vmatpush2.msra.mxu0 0.0
    %1497 = vmatprep.subr.mxu0 0.0
    %1498 = vmatpush2.msra.mxu0 0.0
    %1499 = vmatprep.subr.mxu0 0.0
    %1500 = vmatpush2.msra.mxu0 0.0
    %1501 = vmatprep.subr.mxu0 0.0
    %1502 = vmatpush2.msra.mxu0 0.0
    %1503 = vmatprep.subr.mxu0 0.0
    %1504 = vmatpush2.msra.mxu0 0.0
    %1505 = vmatprep.subr.mxu0 0.0
    %1506 = vmatpush2.msra.mxu0 0.0
    %1507 = vmatprep.subr.mxu0 0.0
    %1508 = vmatpush2.msra.mxu0 0.0
    %1509 = vmatprep.subr.mxu0 0.0
    %1510 = vmatpush2.msra.mxu0 0.0
    %1511 = vmatprep.mubr.f32.mxu0 0.0
    %1512 = vmatmul.mubr.f32.gmra.mxu0 %v1443
    %v1513 = vpop.f32.mrf.mxu0
    %v1514 = vadd.f32 0.0, %v1513
    %v1515 = vpop.f32.mrf.mxu0
    %1516 = vmatprep.mubr.f32.mxu0 0.0
    %1517 = vmatmul.mubr.f32.gmra.mxu0 %v1445
    %v1518 = vpop.f32.mrf.mxu0
    %v1519 = vadd.f32 0.0, %v1518
    %v1520 = vpop.f32.mrf.mxu0
    %1521 = vdwg.mxu0
    %v1522 = vadd.f32 %v1359, %v1514
    %v1523 = vadd.f32 %v1361, %v1519
    %v1524 = vxor.u32 %v1441, 2147483648
    %v1525 = vxor.u32 %v1442, 2147483648
    %v1526 = vmul.f32 %v1524, 1.442695
    %v1527 = vpow.pop %v1526
    %v1528 = vmul.f32 %v1525, 1.442695
    %v1529 = vpow.pop %v1528
    %v1530 = vadd.f32 %v1527, 1.0
    %v1531 = vadd.f32 %v1529, 1.0
    %v1532 = vrcp.pop %v1530
    %v1533 = vmul.f32 1.0, %v1532
    %v1534 = vrcp.pop %v1531
    %v1535 = vmul.f32 1.0, %v1534
    %v1536 = vtanh.pop %v1441
    %v1537 = vtanh.pop %v1442
    %v1538 = vmul.f32 %v1533, %v988
    %v1539 = vmul.f32 %v1535, %v989
    %1542 = vrot.lane.b32.xlu0 %v1536, 64
    %v1543 = vpop.permute.xlu0 %1542
    %1544 = vrot.lane.b32.xlu0 %v1537, 64
    %v1545 = vpop.permute.xlu0 %1544
    %v1548 = vmul.f32 %v1533, %v1543
    %v1549 = vmul.f32 %v1535, %v1545
    %1552 = vrot.lane.b32.xlu0 %v1548, 32
    %v1553 = vpop.permute.xlu0 %1552
    %1554 = vrot.lane.b32.xlu0 %v1549, 32
    %v1555 = vpop.permute.xlu0 %1554
    %v1558 = vadd.f32 %v1538, %v1553
    %v1559 = vadd.f32 %v1539, %v1555
    %v1560 = vtanh.pop %v1558
    %v1561 = vtanh.pop %v1559
    %1564 = vrot.lane.b32.xlu0 %v1560, 64
    %v1565 = vpop.permute.xlu0 %1564
    %1566 = vrot.lane.b32.xlu0 %v1561, 64
    %v1567 = vpop.permute.xlu0 %1566
    %v1570 = vmul.f32 %v1533, %v1565
    %v1571 = vmul.f32 %v1535, %v1567
    %v1572 = vxor.u32 %v1522, 2147483648
    %v1573 = vxor.u32 %v1523, 2147483648
    %v1574 = vmul.f32 %v1572, 1.442695
    %v1575 = vpow.pop %v1574
    %v1576 = vmul.f32 %v1573, 1.442695
    %v1577 = vpow.pop %v1576
    %v1578 = vadd.f32 %v1575, 1.0
    %v1579 = vadd.f32 %v1577, 1.0
    %v1580 = vrcp.pop %v1578
    %v1581 = vmul.f32 1.0, %v1580
    %v1582 = vrcp.pop %v1579
    %v1583 = vmul.f32 1.0, %v1582
    %v1584 = vtanh.pop %v1522
    %v1585 = vtanh.pop %v1523
    %v1586 = vmul.f32 %v1581, %v1036
    %v1587 = vmul.f32 %v1583, %v1037
    %1590 = vrot.lane.b32.xlu0 %v1584, 64
    %v1591 = vpop.permute.xlu0 %1590
    %1592 = vrot.lane.b32.xlu0 %v1585, 64
    %v1593 = vpop.permute.xlu0 %1592
    %v1596 = vmul.f32 %v1581, %v1591
    %v1597 = vmul.f32 %v1583, %v1593
    %1600 = vrot.lane.b32.xlu0 %v1596, 32
    %v1601 = vpop.permute.xlu0 %1600
    %1602 = vrot.lane.b32.xlu0 %v1597, 32
    %v1603 = vpop.permute.xlu0 %1602
    %v1606 = vadd.f32 %v1586, %v1601
    %v1607 = vadd.f32 %v1587, %v1603
    %v1608 = vtanh.pop %v1606
    %v1609 = vtanh.pop %v1607
    %1612 = vrot.lane.b32.xlu0 %v1608, 64
    %v1613 = vpop.permute.xlu0 %1612
    %1614 = vrot.lane.b32.xlu0 %v1609, 64
    %v1615 = vpop.permute.xlu0 %1614
    %v1618 = vmul.f32 %v1581, %v1613
    %v1619 = vmul.f32 %v1583, %v1615
    %1622 = vrot.lane.b32.xlu0 %v1570, 32
    %v1623 = vpop.permute.xlu0 %1622
    %1624 = vrot.lane.b32.xlu0 %v1571, 32
    %v1625 = vpop.permute.xlu0 %1624
    %1630 = vrot.lane.b32.xlu0 %v1308, 64
    %v1631 = vpop.permute.xlu0 %1630
    %1632 = vrot.lane.b32.xlu0 %v1309, 64
    %v1633 = vpop.permute.xlu0 %1632
    %v1636 = vsel %vm792, %v1623, %v1631
    %v1637 = vsel %vm792, %v1625, %v1633
    %v1639 = vsel %vm542, %v1636, 0
    %v1642 = vsel %vm542, %v1637, 0
    %1644 = vmatprep.subr.mxu0 0.0
    %1645 = vmatpush1.msra.mxu0 0.0
    %1646 = vmatprep.subr.mxu0 0.0
    %1647 = vmatpush1.msra.mxu0 0.0
    %1648 = vmatprep.subr.mxu0 0.0
    %1649 = vmatpush1.msra.mxu0 0.0
    %1650 = vmatprep.subr.mxu0 0.0
    %1651 = vmatpush1.msra.mxu0 0.0
    %1652 = vmatprep.subr.mxu0 0.0
    %1653 = vmatpush1.msra.mxu0 0.0
    %1654 = vmatprep.subr.mxu0 0.0
    %1655 = vmatpush1.msra.mxu0 0.0
    %1656 = vmatprep.subr.mxu0 0.0
    %1657 = vmatpush1.msra.mxu0 0.0
    %1658 = vmatprep.subr.mxu0 0.0
    %1659 = vmatpush1.msra.mxu0 0.0
    %1660 = vmatprep.subr.mxu0 0.0
    %1661 = vmatpush1.msra.mxu0 %v1067
    %1662 = vmatprep.subr.mxu0 0.0
    %1663 = vmatpush1.msra.mxu0 %v1066
    %1664 = vmatprep.subr.mxu0 0.0
    %1665 = vmatpush1.msra.mxu0 %v1065
    %1666 = vmatprep.subr.mxu0 0.0
    %1667 = vmatpush1.msra.mxu0 %v1064
    %1668 = vmatprep.subr.mxu0 0.0
    %1669 = vmatpush1.msra.mxu0 %v1063
    %1670 = vmatprep.subr.mxu0 0.0
    %1671 = vmatpush1.msra.mxu0 %v1062
    %1672 = vmatprep.subr.mxu0 0.0
    %1673 = vmatpush1.msra.mxu0 %v1061
    %1674 = vmatprep.subr.mxu0 0.0
    %1675 = vmatpush1.msra.mxu0 %v1060
    %1676 = vmatprep.subr.mxu0 0.0
    %1677 = vmatpush2.msra.mxu0 0.0
    %1678 = vmatprep.subr.mxu0 0.0
    %1679 = vmatpush2.msra.mxu0 0.0
    %1680 = vmatprep.subr.mxu0 0.0
    %1681 = vmatpush2.msra.mxu0 0.0
    %1682 = vmatprep.subr.mxu0 0.0
    %1683 = vmatpush2.msra.mxu0 0.0
    %1684 = vmatprep.subr.mxu0 0.0
    %1685 = vmatpush2.msra.mxu0 0.0
    %1686 = vmatprep.subr.mxu0 0.0
    %1687 = vmatpush2.msra.mxu0 0.0
    %1688 = vmatprep.subr.mxu0 0.0
    %1689 = vmatpush2.msra.mxu0 0.0
    %1690 = vmatprep.subr.mxu0 0.0
    %1691 = vmatpush2.msra.mxu0 0.0
    %1692 = vmatprep.subr.mxu0 0.0
    %1693 = vmatpush2.msra.mxu0 0.0
    %1694 = vmatprep.subr.mxu0 0.0
    %1695 = vmatpush2.msra.mxu0 0.0
    %1696 = vmatprep.subr.mxu0 0.0
    %1697 = vmatpush2.msra.mxu0 0.0
    %1698 = vmatprep.subr.mxu0 0.0
    %1699 = vmatpush2.msra.mxu0 0.0
    %1700 = vmatprep.subr.mxu0 0.0
    %1701 = vmatpush2.msra.mxu0 0.0
    %1702 = vmatprep.subr.mxu0 0.0
    %1703 = vmatpush2.msra.mxu0 0.0
    %1704 = vmatprep.subr.mxu0 0.0
    %1705 = vmatpush2.msra.mxu0 0.0
    %1706 = vmatprep.subr.mxu0 0.0
    %1707 = vmatpush2.msra.mxu0 0.0
    %1708 = vmatprep.mubr.f32.mxu0 0.0
    %1709 = vmatmul.mubr.f32.gmra.mxu0 %v1639
    %v1710 = vpop.f32.mrf.mxu0
    %v1711 = vadd.f32 %v1073, %v1710
    %v1712 = vpop.f32.mrf.mxu0
    %1713 = vmatprep.mubr.f32.mxu0 0.0
    %1714 = vmatmul.mubr.f32.gmra.mxu0 %v1642
    %v1715 = vpop.f32.mrf.mxu0
    %v1716 = vadd.f32 %v1073, %v1715
    %v1717 = vpop.f32.mrf.mxu0
    %1718 = vdwg.mxu0
    %1721 = vrot.lane.b32.xlu0 %v1618, 32
    %v1722 = vpop.permute.xlu0 %1721
    %1723 = vrot.lane.b32.xlu0 %v1619, 32
    %v1724 = vpop.permute.xlu0 %1723
    %1729 = vrot.lane.b32.xlu0 %v1356, 64
    %v1730 = vpop.permute.xlu0 %1729
    %1731 = vrot.lane.b32.xlu0 %v1357, 64
    %v1732 = vpop.permute.xlu0 %1731
    %v1735 = vsel %vm792, %v1722, %v1730
    %v1736 = vsel %vm792, %v1724, %v1732
    %v1738 = vsel %vm542, %v1735, 0
    %v1741 = vsel %vm542, %v1736, 0
    %1743 = vmatprep.subr.mxu0 0.0
    %1744 = vmatpush1.msra.mxu0 0.0
    %1745 = vmatprep.subr.mxu0 0.0
    %1746 = vmatpush1.msra.mxu0 0.0
    %1747 = vmatprep.subr.mxu0 0.0
    %1748 = vmatpush1.msra.mxu0 0.0
    %1749 = vmatprep.subr.mxu0 0.0
    %1750 = vmatpush1.msra.mxu0 0.0
    %1751 = vmatprep.subr.mxu0 0.0
    %1752 = vmatpush1.msra.mxu0 0.0
    %1753 = vmatprep.subr.mxu0 0.0
    %1754 = vmatpush1.msra.mxu0 0.0
    %1755 = vmatprep.subr.mxu0 0.0
    %1756 = vmatpush1.msra.mxu0 0.0
    %1757 = vmatprep.subr.mxu0 0.0
    %1758 = vmatpush1.msra.mxu0 0.0
    %1759 = vmatprep.subr.mxu0 0.0
    %1760 = vmatpush1.msra.mxu0 %v1173
    %1761 = vmatprep.subr.mxu0 0.0
    %1762 = vmatpush1.msra.mxu0 %v1172
    %1763 = vmatprep.subr.mxu0 0.0
    %1764 = vmatpush1.msra.mxu0 %v1171
    %1765 = vmatprep.subr.mxu0 0.0
    %1766 = vmatpush1.msra.mxu0 %v1170
    %1767 = vmatprep.subr.mxu0 0.0
    %1768 = vmatpush1.msra.mxu0 %v1169
    %1769 = vmatprep.subr.mxu0 0.0
    %1770 = vmatpush1.msra.mxu0 %v1168
    %1771 = vmatprep.subr.mxu0 0.0
    %1772 = vmatpush1.msra.mxu0 %v1167
    %1773 = vmatprep.subr.mxu0 0.0
    %1774 = vmatpush1.msra.mxu0 %v1166
    %1775 = vmatprep.subr.mxu0 0.0
    %1776 = vmatpush2.msra.mxu0 0.0
    %1777 = vmatprep.subr.mxu0 0.0
    %1778 = vmatpush2.msra.mxu0 0.0
    %1779 = vmatprep.subr.mxu0 0.0
    %1780 = vmatpush2.msra.mxu0 0.0
    %1781 = vmatprep.subr.mxu0 0.0
    %1782 = vmatpush2.msra.mxu0 0.0
    %1783 = vmatprep.subr.mxu0 0.0
    %1784 = vmatpush2.msra.mxu0 0.0
    %1785 = vmatprep.subr.mxu0 0.0
    %1786 = vmatpush2.msra.mxu0 0.0
    %1787 = vmatprep.subr.mxu0 0.0
    %1788 = vmatpush2.msra.mxu0 0.0
    %1789 = vmatprep.subr.mxu0 0.0
    %1790 = vmatpush2.msra.mxu0 0.0
    %1791 = vmatprep.subr.mxu0 0.0
    %1792 = vmatpush2.msra.mxu0 0.0
    %1793 = vmatprep.subr.mxu0 0.0
    %1794 = vmatpush2.msra.mxu0 0.0
    %1795 = vmatprep.subr.mxu0 0.0
    %1796 = vmatpush2.msra.mxu0 0.0
    %1797 = vmatprep.subr.mxu0 0.0
    %1798 = vmatpush2.msra.mxu0 0.0
    %1799 = vmatprep.subr.mxu0 0.0
    %1800 = vmatpush2.msra.mxu0 0.0
    %1801 = vmatprep.subr.mxu0 0.0
    %1802 = vmatpush2.msra.mxu0 0.0
    %1803 = vmatprep.subr.mxu0 0.0
    %1804 = vmatpush2.msra.mxu0 0.0
    %1805 = vmatprep.subr.mxu0 0.0
    %1806 = vmatpush2.msra.mxu0 0.0
    %1807 = vmatprep.mubr.f32.mxu0 0.0
    %1808 = vmatmul.mubr.f32.gmra.mxu0 %v1738
    %v1809 = vpop.f32.mrf.mxu0
    %v1810 = vadd.f32 %v1179, %v1809
    %v1811 = vpop.f32.mrf.mxu0
    %1812 = vmatprep.mubr.f32.mxu0 0.0
    %1813 = vmatmul.mubr.f32.gmra.mxu0 %v1741
    %v1814 = vpop.f32.mrf.mxu0
    %v1815 = vadd.f32 %v1179, %v1814
    %v1816 = vpop.f32.mrf.mxu0
    %1817 = vdwg.mxu0
    %v1818 = vxor.u32 %v1711, 2147483648
    %v1819 = vxor.u32 %v1716, 2147483648
    %v1820 = vmul.f32 %v1818, 1.442695
    %v1821 = vpow.pop %v1820
    %v1822 = vmul.f32 %v1819, 1.442695
    %v1823 = vpow.pop %v1822
    %v1824 = vadd.f32 %v1821, 1.0
    %v1825 = vadd.f32 %v1823, 1.0
    %v1826 = vrcp.pop %v1824
    %v1827 = vmul.f32 1.0, %v1826
    %v1828 = vrcp.pop %v1825
    %v1829 = vmul.f32 1.0, %v1828
    %v1830 = vtanh.pop %v1711
    %v1831 = vtanh.pop %v1716
    %v1832 = vmul.f32 %v1827, %v1296
    %v1833 = vmul.f32 %v1829, %v1297
    %1836 = vrot.lane.b32.xlu0 %v1830, 64
    %v1837 = vpop.permute.xlu0 %1836
    %1838 = vrot.lane.b32.xlu0 %v1831, 64
    %v1839 = vpop.permute.xlu0 %1838
    %v1842 = vmul.f32 %v1827, %v1837
    %v1843 = vmul.f32 %v1829, %v1839
    %1846 = vrot.lane.b32.xlu0 %v1842, 32
    %v1847 = vpop.permute.xlu0 %1846
    %1848 = vrot.lane.b32.xlu0 %v1843, 32
    %v1849 = vpop.permute.xlu0 %1848
    %v1852 = vadd.f32 %v1832, %v1847
    %v1853 = vadd.f32 %v1833, %v1849
    %v1854 = vtanh.pop %v1852
    %v1855 = vtanh.pop %v1853
    %1858 = vrot.lane.b32.xlu0 %v1854, 64
    %v1859 = vpop.permute.xlu0 %1858
    %1860 = vrot.lane.b32.xlu0 %v1855, 64
    %v1861 = vpop.permute.xlu0 %1860
    %v1864 = vmul.f32 %v1827, %v1859
    %v1865 = vmul.f32 %v1829, %v1861
    %v1866 = vxor.u32 %v1810, 2147483648
    %v1867 = vxor.u32 %v1815, 2147483648
    %v1868 = vmul.f32 %v1866, 1.442695
    %v1869 = vpow.pop %v1868
    %v1870 = vmul.f32 %v1867, 1.442695
    %v1871 = vpow.pop %v1870
    %v1872 = vadd.f32 %v1869, 1.0
    %v1873 = vadd.f32 %v1871, 1.0
    %v1874 = vrcp.pop %v1872
    %v1875 = vmul.f32 1.0, %v1874
    %v1876 = vrcp.pop %v1873
    %v1877 = vmul.f32 1.0, %v1876
    %v1878 = vtanh.pop %v1810
    %v1879 = vtanh.pop %v1815
    %v1880 = vmul.f32 %v1875, %v1344
    %v1881 = vmul.f32 %v1877, %v1345
    %1884 = vrot.lane.b32.xlu0 %v1878, 64
    %v1885 = vpop.permute.xlu0 %1884
    %1886 = vrot.lane.b32.xlu0 %v1879, 64
    %v1887 = vpop.permute.xlu0 %1886
    %v1890 = vmul.f32 %v1875, %v1885
    %v1891 = vmul.f32 %v1877, %v1887
    %1894 = vrot.lane.b32.xlu0 %v1890, 32
    %v1895 = vpop.permute.xlu0 %1894
    %1896 = vrot.lane.b32.xlu0 %v1891, 32
    %v1897 = vpop.permute.xlu0 %1896
    %v1900 = vadd.f32 %v1880, %v1895
    %v1901 = vadd.f32 %v1881, %v1897
    %v1902 = vtanh.pop %v1900
    %v1903 = vtanh.pop %v1901
    %1906 = vrot.lane.b32.xlu0 %v1902, 64
    %v1907 = vpop.permute.xlu0 %1906
    %1908 = vrot.lane.b32.xlu0 %v1903, 64
    %v1909 = vpop.permute.xlu0 %1908
    %v1912 = vmul.f32 %v1875, %v1907
    %v1913 = vmul.f32 %v1877, %v1909
    %v1914 = vld [vmem:[#allocation2 + $0x40] sm:$0xff]
    %v1915 = vld [vmem:[#allocation2 + $0x48] sm:$0xff]
    %v1916 = vld [vmem:[#allocation2 + $0x50] sm:$0xff]
    %v1917 = vld [vmem:[#allocation2 + $0x58] sm:$0xff]
    %v1918 = vsel %vm792, %v1623, 0
    %v1920 = vsel %vm792, %v1625, 0
    %1922 = vmatprep.subr.mxu0 0.0
    %1923 = vmatpush1.msra.mxu0 0.0
    %1924 = vmatprep.subr.mxu0 0.0
    %1925 = vmatpush1.msra.mxu0 0.0
    %1926 = vmatprep.subr.mxu0 0.0
    %1927 = vmatpush1.msra.mxu0 0.0
    %1928 = vmatprep.subr.mxu0 0.0
    %1929 = vmatpush1.msra.mxu0 0.0
    %1930 = vmatprep.subr.mxu0 0.0
    %1931 = vmatpush1.msra.mxu0 0.0
    %1932 = vmatprep.subr.mxu0 0.0
    %1933 = vmatpush1.msra.mxu0 0.0
    %1934 = vmatprep.subr.mxu0 0.0
    %1935 = vmatpush1.msra.mxu0 0.0
    %1936 = vmatprep.subr.mxu0 0.0
    %1937 = vmatpush1.msra.mxu0 0.0
    %1938 = vmatprep.subr.mxu0 0.0
    %1939 = vmatpush1.msra.mxu0 0.0
    %1940 = vmatprep.subr.mxu0 0.0
    %1941 = vmatpush1.msra.mxu0 0.0
    %1942 = vmatprep.subr.mxu0 0.0
    %1943 = vmatpush1.msra.mxu0 0.0
    %1944 = vmatprep.subr.mxu0 0.0
    %1945 = vmatpush1.msra.mxu0 0.0
    %1946 = vmatprep.subr.mxu0 0.0
    %1947 = vmatpush1.msra.mxu0 %v791
    %1948 = vmatprep.subr.mxu0 0.0
    %1949 = vmatpush1.msra.mxu0 %v790
    %1950 = vmatprep.subr.mxu0 0.0
    %1951 = vmatpush1.msra.mxu0 %v789
    %1952 = vmatprep.subr.mxu0 0.0
    %1953 = vmatpush1.msra.mxu0 %v788
    %1954 = vmatprep.subr.mxu0 0.0
    %1955 = vmatpush2.msra.mxu0 0.0
    %1956 = vmatprep.subr.mxu0 0.0
    %1957 = vmatpush2.msra.mxu0 0.0
    %1958 = vmatprep.subr.mxu0 0.0
    %1959 = vmatpush2.msra.mxu0 0.0
    %1960 = vmatprep.subr.mxu0 0.0
    %1961 = vmatpush2.msra.mxu0 0.0
    %1962 = vmatprep.subr.mxu0 0.0
    %1963 = vmatpush2.msra.mxu0 0.0
    %1964 = vmatprep.subr.mxu0 0.0
    %1965 = vmatpush2.msra.mxu0 0.0
    %1966 = vmatprep.subr.mxu0 0.0
    %1967 = vmatpush2.msra.mxu0 0.0
    %1968 = vmatprep.subr.mxu0 0.0
    %1969 = vmatpush2.msra.mxu0 0.0
    %1970 = vmatprep.subr.mxu0 0.0
    %1971 = vmatpush2.msra.mxu0 0.0
    %1972 = vmatprep.subr.mxu0 0.0
    %1973 = vmatpush2.msra.mxu0 0.0
    %1974 = vmatprep.subr.mxu0 0.0
    %1975 = vmatpush2.msra.mxu0 0.0
    %1976 = vmatprep.subr.mxu0 0.0
    %1977 = vmatpush2.msra.mxu0 0.0
    %1978 = vmatprep.subr.mxu0 0.0
    %1979 = vmatpush2.msra.mxu0 0.0
    %1980 = vmatprep.subr.mxu0 0.0
    %1981 = vmatpush2.msra.mxu0 0.0
    %1982 = vmatprep.subr.mxu0 0.0
    %1983 = vmatpush2.msra.mxu0 0.0
    %1984 = vmatprep.subr.mxu0 0.0
    %1985 = vmatpush2.msra.mxu0 0.0
    %1986 = vmatprep.mubr.f32.mxu0 0.0
    %1987 = vmatmul.mubr.f32.gmra.mxu0 %v1918
    %v1988 = vpop.f32.mrf.mxu0
    %v1989 = vadd.f32 0.0, %v1988
    %v1990 = vpop.f32.mrf.mxu0
    %1991 = vmatprep.mubr.f32.mxu0 0.0
    %1992 = vmatmul.mubr.f32.gmra.mxu0 %v1920
    %v1993 = vpop.f32.mrf.mxu0
    %v1994 = vadd.f32 0.0, %v1993
    %v1995 = vpop.f32.mrf.mxu0
    %1996 = vdwg.mxu0
    %v1997 = vadd.f32 %v1914, %v1989
    %v1998 = vadd.f32 %v1916, %v1994
    %v1999 = vsel %vm792, %v1722, 0
    %v2001 = vsel %vm792, %v1724, 0
    %2003 = vmatprep.subr.mxu0 0.0
    %2004 = vmatpush1.msra.mxu0 0.0
    %2005 = vmatprep.subr.mxu0 0.0
    %2006 = vmatpush1.msra.mxu0 0.0
    %2007 = vmatprep.subr.mxu0 0.0
    %2008 = vmatpush1.msra.mxu0 0.0
    %2009 = vmatprep.subr.mxu0 0.0
    %2010 = vmatpush1.msra.mxu0 0.0
    %2011 = vmatprep.subr.mxu0 0.0
    %2012 = vmatpush1.msra.mxu0 0.0
    %2013 = vmatprep.subr.mxu0 0.0
    %2014 = vmatpush1.msra.mxu0 0.0
    %2015 = vmatprep.subr.mxu0 0.0
    %2016 = vmatpush1.msra.mxu0 0.0
    %2017 = vmatprep.subr.mxu0 0.0
    %2018 = vmatpush1.msra.mxu0 0.0
    %2019 = vmatprep.subr.mxu0 0.0
    %2020 = vmatpush1.msra.mxu0 0.0
    %2021 = vmatprep.subr.mxu0 0.0
    %2022 = vmatpush1.msra.mxu0 0.0
    %2023 = vmatprep.subr.mxu0 0.0
    %2024 = vmatpush1.msra.mxu0 0.0
    %2025 = vmatprep.subr.mxu0 0.0
    %2026 = vmatpush1.msra.mxu0 0.0
    %2027 = vmatprep.subr.mxu0 0.0
    %2028 = vmatpush1.msra.mxu0 %v876
    %2029 = vmatprep.subr.mxu0 0.0
    %2030 = vmatpush1.msra.mxu0 %v875
    %2031 = vmatprep.subr.mxu0 0.0
    %2032 = vmatpush1.msra.mxu0 %v874
    %2033 = vmatprep.subr.mxu0 0.0
    %2034 = vmatpush1.msra.mxu0 %v873
    %2035 = vmatprep.subr.mxu0 0.0
    %2036 = vmatpush2.msra.mxu0 0.0
    %2037 = vmatprep.subr.mxu0 0.0
    %2038 = vmatpush2.msra.mxu0 0.0
    %2039 = vmatprep.subr.mxu0 0.0
    %2040 = vmatpush2.msra.mxu0 0.0
    %2041 = vmatprep.subr.mxu0 0.0
    %2042 = vmatpush2.msra.mxu0 0.0
    %2043 = vmatprep.subr.mxu0 0.0
    %2044 = vmatpush2.msra.mxu0 0.0
    %2045 = vmatprep.subr.mxu0 0.0
    %2046 = vmatpush2.msra.mxu0 0.0
    %2047 = vmatprep.subr.mxu0 0.0
    %2048 = vmatpush2.msra.mxu0 0.0
    %2049 = vmatprep.subr.mxu0 0.0
    %2050 = vmatpush2.msra.mxu0 0.0
    %2051 = vmatprep.subr.mxu0 0.0
    %2052 = vmatpush2.msra.mxu0 0.0
    %2053 = vmatprep.subr.mxu0 0.0
    %2054 = vmatpush2.msra.mxu0 0.0
    %2055 = vmatprep.subr.mxu0 0.0
    %2056 = vmatpush2.msra.mxu0 0.0
    %2057 = vmatprep.subr.mxu0 0.0
    %2058 = vmatpush2.msra.mxu0 0.0
    %2059 = vmatprep.subr.mxu0 0.0
    %2060 = vmatpush2.msra.mxu0 0.0
    %2061 = vmatprep.subr.mxu0 0.0
    %2062 = vmatpush2.msra.mxu0 0.0
    %2063 = vmatprep.subr.mxu0 0.0
    %2064 = vmatpush2.msra.mxu0 0.0
    %2065 = vmatprep.subr.mxu0 0.0
    %2066 = vmatpush2.msra.mxu0 0.0
    %2067 = vmatprep.mubr.f32.mxu0 0.0
    %2068 = vmatmul.mubr.f32.gmra.mxu0 %v1999
    %v2069 = vpop.f32.mrf.mxu0
    %v2070 = vadd.f32 0.0, %v2069
    %v2071 = vpop.f32.mrf.mxu0
    %2072 = vmatprep.mubr.f32.mxu0 0.0
    %2073 = vmatmul.mubr.f32.gmra.mxu0 %v2001
    %v2074 = vpop.f32.mrf.mxu0
    %v2075 = vadd.f32 0.0, %v2074
    %v2076 = vpop.f32.mrf.mxu0
    %2077 = vdwg.mxu0
    %v2078 = vadd.f32 %v1915, %v2070
    %v2079 = vadd.f32 %v1917, %v2075
    %v2080 = vxor.u32 %v1997, 2147483648
    %v2081 = vxor.u32 %v1998, 2147483648
    %v2082 = vmul.f32 %v2080, 1.442695
    %v2083 = vpow.pop %v2082
    %v2084 = vmul.f32 %v2081, 1.442695
    %v2085 = vpow.pop %v2084
    %v2086 = vadd.f32 %v2083, 1.0
    %v2087 = vadd.f32 %v2085, 1.0
    %v2088 = vrcp.pop %v2086
    %v2089 = vmul.f32 1.0, %v2088
    %v2090 = vrcp.pop %v2087
    %v2091 = vmul.f32 1.0, %v2090
    %v2092 = vtanh.pop %v1997
    %v2093 = vtanh.pop %v1998
    %v2094 = vmul.f32 %v2089, %v1558
    %v2095 = vmul.f32 %v2091, %v1559
    %2098 = vrot.lane.b32.xlu0 %v2092, 64
    %v2099 = vpop.permute.xlu0 %2098
    %2100 = vrot.lane.b32.xlu0 %v2093, 64
    %v2101 = vpop.permute.xlu0 %2100
    %v2104 = vmul.f32 %v2089, %v2099
    %v2105 = vmul.f32 %v2091, %v2101
    %2108 = vrot.lane.b32.xlu0 %v2104, 32
    %v2109 = vpop.permute.xlu0 %2108
    %2110 = vrot.lane.b32.xlu0 %v2105, 32
    %v2111 = vpop.permute.xlu0 %2110
    %v2114 = vadd.f32 %v2094, %v2109
    %v2115 = vadd.f32 %v2095, %v2111
    %v2116 = vtanh.pop %v2114
    %v2117 = vtanh.pop %v2115
    %2120 = vrot.lane.b32.xlu0 %v2116, 64
    %v2121 = vpop.permute.xlu0 %2120
    %2122 = vrot.lane.b32.xlu0 %v2117, 64
    %v2123 = vpop.permute.xlu0 %2122
    %v2126 = vmul.f32 %v2089, %v2121
    %v2127 = vmul.f32 %v2091, %v2123
    %v2128 = vxor.u32 %v2078, 2147483648
    %v2129 = vxor.u32 %v2079, 2147483648
    %v2130 = vmul.f32 %v2128, 1.442695
    %v2131 = vpow.pop %v2130
    %v2132 = vmul.f32 %v2129, 1.442695
    %v2133 = vpow.pop %v2132
    %v2134 = vadd.f32 %v2131, 1.0
    %v2135 = vadd.f32 %v2133, 1.0
    %v2136 = vrcp.pop %v2134
    %v2137 = vmul.f32 1.0, %v2136
    %v2138 = vrcp.pop %v2135
    %v2139 = vmul.f32 1.0, %v2138
    %v2140 = vtanh.pop %v2078
    %v2141 = vtanh.pop %v2079
    %v2142 = vmul.f32 %v2137, %v1606
    %v2143 = vmul.f32 %v2139, %v1607
    %2146 = vrot.lane.b32.xlu0 %v2140, 64
    %v2147 = vpop.permute.xlu0 %2146
    %2148 = vrot.lane.b32.xlu0 %v2141, 64
    %v2149 = vpop.permute.xlu0 %2148
    %v2152 = vmul.f32 %v2137, %v2147
    %v2153 = vmul.f32 %v2139, %v2149
    %2156 = vrot.lane.b32.xlu0 %v2152, 32
    %v2157 = vpop.permute.xlu0 %2156
    %2158 = vrot.lane.b32.xlu0 %v2153, 32
    %v2159 = vpop.permute.xlu0 %2158
    %v2162 = vadd.f32 %v2142, %v2157
    %v2163 = vadd.f32 %v2143, %v2159
    %v2164 = vtanh.pop %v2162
    %v2165 = vtanh.pop %v2163
    %2168 = vrot.lane.b32.xlu0 %v2164, 64
    %v2169 = vpop.permute.xlu0 %2168
    %2170 = vrot.lane.b32.xlu0 %v2165, 64
    %v2171 = vpop.permute.xlu0 %2170
    %v2174 = vmul.f32 %v2137, %v2169
    %v2175 = vmul.f32 %v2139, %v2171
    %2178 = vrot.lane.b32.xlu0 %v2126, 32
    %v2179 = vpop.permute.xlu0 %2178
    %2180 = vrot.lane.b32.xlu0 %v2127, 32
    %v2181 = vpop.permute.xlu0 %2180
    %2186 = vrot.lane.b32.xlu0 %v1864, 64
    %v2187 = vpop.permute.xlu0 %2186
    %2188 = vrot.lane.b32.xlu0 %v1865, 64
    %v2189 = vpop.permute.xlu0 %2188
    %v2192 = vsel %vm792, %v2179, %v2187
    %v2193 = vsel %vm792, %v2181, %v2189
    %v2195 = vsel %vm542, %v2192, 0
    %v2198 = vsel %vm542, %v2193, 0
    %2200 = vmatprep.subr.mxu0 0.0
    %2201 = vmatpush1.msra.mxu0 0.0
    %2202 = vmatprep.subr.mxu0 0.0
    %2203 = vmatpush1.msra.mxu0 0.0
    %2204 = vmatprep.subr.mxu0 0.0
    %2205 = vmatpush1.msra.mxu0 0.0
    %2206 = vmatprep.subr.mxu0 0.0
    %2207 = vmatpush1.msra.mxu0 0.0
    %2208 = vmatprep.subr.mxu0 0.0
    %2209 = vmatpush1.msra.mxu0 0.0
    %2210 = vmatprep.subr.mxu0 0.0
    %2211 = vmatpush1.msra.mxu0 0.0
    %2212 = vmatprep.subr.mxu0 0.0
    %2213 = vmatpush1.msra.mxu0 0.0
    %2214 = vmatprep.subr.mxu0 0.0
    %2215 = vmatpush1.msra.mxu0 0.0
    %2216 = vmatprep.subr.mxu0 0.0
    %2217 = vmatpush1.msra.mxu0 %v1067
    %2218 = vmatprep.subr.mxu0 0.0
    %2219 = vmatpush1.msra.mxu0 %v1066
    %2220 = vmatprep.subr.mxu0 0.0
    %2221 = vmatpush1.msra.mxu0 %v1065
    %2222 = vmatprep.subr.mxu0 0.0
    %2223 = vmatpush1.msra.mxu0 %v1064
    %2224 = vmatprep.subr.mxu0 0.0
    %2225 = vmatpush1.msra.mxu0 %v1063
    %2226 = vmatprep.subr.mxu0 0.0
    %2227 = vmatpush1.msra.mxu0 %v1062
    %2228 = vmatprep.subr.mxu0 0.0
    %2229 = vmatpush1.msra.mxu0 %v1061
    %2230 = vmatprep.subr.mxu0 0.0
    %2231 = vmatpush1.msra.mxu0 %v1060
    %2232 = vmatprep.subr.mxu0 0.0
    %2233 = vmatpush2.msra.mxu0 0.0
    %2234 = vmatprep.subr.mxu0 0.0
    %2235 = vmatpush2.msra.mxu0 0.0
    %2236 = vmatprep.subr.mxu0 0.0
    %2237 = vmatpush2.msra.mxu0 0.0
    %2238 = vmatprep.subr.mxu0 0.0
    %2239 = vmatpush2.msra.mxu0 0.0
    %2240 = vmatprep.subr.mxu0 0.0
    %2241 = vmatpush2.msra.mxu0 0.0
    %2242 = vmatprep.subr.mxu0 0.0
    %2243 = vmatpush2.msra.mxu0 0.0
    %2244 = vmatprep.subr.mxu0 0.0
    %2245 = vmatpush2.msra.mxu0 0.0
    %2246 = vmatprep.subr.mxu0 0.0
    %2247 = vmatpush2.msra.mxu0 0.0
    %2248 = vmatprep.subr.mxu0 0.0
    %2249 = vmatpush2.msra.mxu0 0.0
    %2250 = vmatprep.subr.mxu0 0.0
    %2251 = vmatpush2.msra.mxu0 0.0
    %2252 = vmatprep.subr.mxu0 0.0
    %2253 = vmatpush2.msra.mxu0 0.0
    %2254 = vmatprep.subr.mxu0 0.0
    %2255 = vmatpush2.msra.mxu0 0.0
    %2256 = vmatprep.subr.mxu0 0.0
    %2257 = vmatpush2.msra.mxu0 0.0
    %2258 = vmatprep.subr.mxu0 0.0
    %2259 = vmatpush2.msra.mxu0 0.0
    %2260 = vmatprep.subr.mxu0 0.0
    %2261 = vmatpush2.msra.mxu0 0.0
    %2262 = vmatprep.subr.mxu0 0.0
    %2263 = vmatpush2.msra.mxu0 0.0
    %2264 = vmatprep.mubr.f32.mxu0 0.0
    %2265 = vmatmul.mubr.f32.gmra.mxu0 %v2195
    %v2266 = vpop.f32.mrf.mxu0
    %v2267 = vadd.f32 %v1073, %v2266
    %v2268 = vpop.f32.mrf.mxu0
    %2269 = vmatprep.mubr.f32.mxu0 0.0
    %2270 = vmatmul.mubr.f32.gmra.mxu0 %v2198
    %v2271 = vpop.f32.mrf.mxu0
    %v2272 = vadd.f32 %v1073, %v2271
    %v2273 = vpop.f32.mrf.mxu0
    %2274 = vdwg.mxu0
    %2277 = vrot.lane.b32.xlu0 %v2174, 32
    %v2278 = vpop.permute.xlu0 %2277
    %2279 = vrot.lane.b32.xlu0 %v2175, 32
    %v2280 = vpop.permute.xlu0 %2279
    %2285 = vrot.lane.b32.xlu0 %v1912, 64
    %v2286 = vpop.permute.xlu0 %2285
    %2287 = vrot.lane.b32.xlu0 %v1913, 64
    %v2288 = vpop.permute.xlu0 %2287
    %v2291 = vsel %vm792, %v2278, %v2286
    %v2292 = vsel %vm792, %v2280, %v2288
    %v2294 = vsel %vm542, %v2291, 0
    %v2297 = vsel %vm542, %v2292, 0
    %2299 = vmatprep.subr.mxu0 0.0
    %2300 = vmatpush1.msra.mxu0 0.0
    %2301 = vmatprep.subr.mxu0 0.0
    %2302 = vmatpush1.msra.mxu0 0.0
    %2303 = vmatprep.subr.mxu0 0.0
    %2304 = vmatpush1.msra.mxu0 0.0
    %2305 = vmatprep.subr.mxu0 0.0
    %2306 = vmatpush1.msra.mxu0 0.0
    %2307 = vmatprep.subr.mxu0 0.0
    %2308 = vmatpush1.msra.mxu0 0.0
    %2309 = vmatprep.subr.mxu0 0.0
    %2310 = vmatpush1.msra.mxu0 0.0
    %2311 = vmatprep.subr.mxu0 0.0
    %2312 = vmatpush1.msra.mxu0 0.0
    %2313 = vmatprep.subr.mxu0 0.0
    %2314 = vmatpush1.msra.mxu0 0.0
    %2315 = vmatprep.subr.mxu0 0.0
    %2316 = vmatpush1.msra.mxu0 %v1173
    %2317 = vmatprep.subr.mxu0 0.0
    %2318 = vmatpush1.msra.mxu0 %v1172
    %2319 = vmatprep.subr.mxu0 0.0
    %2320 = vmatpush1.msra.mxu0 %v1171
    %2321 = vmatprep.subr.mxu0 0.0
    %2322 = vmatpush1.msra.mxu0 %v1170
    %2323 = vmatprep.subr.mxu0 0.0
    %2324 = vmatpush1.msra.mxu0 %v1169
    %2325 = vmatprep.subr.mxu0 0.0
    %2326 = vmatpush1.msra.mxu0 %v1168
    %2327 = vmatprep.subr.mxu0 0.0
    %2328 = vmatpush1.msra.mxu0 %v1167
    %2329 = vmatprep.subr.mxu0 0.0
    %2330 = vmatpush1.msra.mxu0 %v1166
    %2331 = vmatprep.subr.mxu0 0.0
    %2332 = vmatpush2.msra.mxu0 0.0
    %2333 = vmatprep.subr.mxu0 0.0
    %2334 = vmatpush2.msra.mxu0 0.0
    %2335 = vmatprep.subr.mxu0 0.0
    %2336 = vmatpush2.msra.mxu0 0.0
    %2337 = vmatprep.subr.mxu0 0.0
    %2338 = vmatpush2.msra.mxu0 0.0
    %2339 = vmatprep.subr.mxu0 0.0
    %2340 = vmatpush2.msra.mxu0 0.0
    %2341 = vmatprep.subr.mxu0 0.0
    %2342 = vmatpush2.msra.mxu0 0.0
    %2343 = vmatprep.subr.mxu0 0.0
    %2344 = vmatpush2.msra.mxu0 0.0
    %2345 = vmatprep.subr.mxu0 0.0
    %2346 = vmatpush2.msra.mxu0 0.0
    %2347 = vmatprep.subr.mxu0 0.0
    %2348 = vmatpush2.msra.mxu0 0.0
    %2349 = vmatprep.subr.mxu0 0.0
    %2350 = vmatpush2.msra.mxu0 0.0
    %2351 = vmatprep.subr.mxu0 0.0
    %2352 = vmatpush2.msra.mxu0 0.0
    %2353 = vmatprep.subr.mxu0 0.0
    %2354 = vmatpush2.msra.mxu0 0.0
    %2355 = vmatprep.subr.mxu0 0.0
    %2356 = vmatpush2.msra.mxu0 0.0
    %2357 = vmatprep.subr.mxu0 0.0
    %2358 = vmatpush2.msra.mxu0 0.0
    %2359 = vmatprep.subr.mxu0 0.0
    %2360 = vmatpush2.msra.mxu0 0.0
    %2361 = vmatprep.subr.mxu0 0.0
    %2362 = vmatpush2.msra.mxu0 0.0
    %2363 = vmatprep.mubr.f32.mxu0 0.0
    %2364 = vmatmul.mubr.f32.gmra.mxu0 %v2294
    %v2365 = vpop.f32.mrf.mxu0
    %v2366 = vadd.f32 %v1179, %v2365
    %v2367 = vpop.f32.mrf.mxu0
    %2368 = vmatprep.mubr.f32.mxu0 0.0
    %2369 = vmatmul.mubr.f32.gmra.mxu0 %v2297
    %v2370 = vpop.f32.mrf.mxu0
    %v2371 = vadd.f32 %v1179, %v2370
    %v2372 = vpop.f32.mrf.mxu0
    %2373 = vdwg.mxu0
    %v2374 = vxor.u32 %v2267, 2147483648
    %v2375 = vxor.u32 %v2272, 2147483648
    %v2376 = vmul.f32 %v2374, 1.442695
    %v2377 = vpow.pop %v2376
    %v2378 = vmul.f32 %v2375, 1.442695
    %v2379 = vpow.pop %v2378
    %v2380 = vadd.f32 %v2377, 1.0
    %v2381 = vadd.f32 %v2379, 1.0
    %v2382 = vrcp.pop %v2380
    %v2383 = vmul.f32 1.0, %v2382
    %v2384 = vrcp.pop %v2381
    %v2385 = vmul.f32 1.0, %v2384
    %v2386 = vtanh.pop %v2267
    %v2387 = vtanh.pop %v2272
    %v2388 = vmul.f32 %v2383, %v1852
    %v2389 = vmul.f32 %v2385, %v1853
    %2392 = vrot.lane.b32.xlu0 %v2386, 64
    %v2393 = vpop.permute.xlu0 %2392
    %2394 = vrot.lane.b32.xlu0 %v2387, 64
    %v2395 = vpop.permute.xlu0 %2394
    %v2398 = vmul.f32 %v2383, %v2393
    %v2399 = vmul.f32 %v2385, %v2395
    %2402 = vrot.lane.b32.xlu0 %v2398, 32
    %v2403 = vpop.permute.xlu0 %2402
    %2404 = vrot.lane.b32.xlu0 %v2399, 32
    %v2405 = vpop.permute.xlu0 %2404
    %v2408 = vadd.f32 %v2388, %v2403
    %v2409 = vadd.f32 %v2389, %v2405
    %v2410 = vtanh.pop %v2408
    %v2411 = vtanh.pop %v2409
    %2414 = vrot.lane.b32.xlu0 %v2410, 64
    %v2415 = vpop.permute.xlu0 %2414
    %2416 = vrot.lane.b32.xlu0 %v2411, 64
    %v2417 = vpop.permute.xlu0 %2416
    %v2420 = vmul.f32 %v2383, %v2415
    %v2421 = vmul.f32 %v2385, %v2417
    %v2422 = vxor.u32 %v2366, 2147483648
    %v2423 = vxor.u32 %v2371, 2147483648
    %v2424 = vmul.f32 %v2422, 1.442695
    %v2425 = vpow.pop %v2424
    %v2426 = vmul.f32 %v2423, 1.442695
    %v2427 = vpow.pop %v2426
    %v2428 = vadd.f32 %v2425, 1.0
    %v2429 = vadd.f32 %v2427, 1.0
    %v2430 = vrcp.pop %v2428
    %v2431 = vmul.f32 1.0, %v2430
    %v2432 = vrcp.pop %v2429
    %v2433 = vmul.f32 1.0, %v2432
    %v2434 = vtanh.pop %v2366
    %v2435 = vtanh.pop %v2371
    %v2436 = vmul.f32 %v2431, %v1900
    %v2437 = vmul.f32 %v2433, %v1901
    %2440 = vrot.lane.b32.xlu0 %v2434, 64
    %v2441 = vpop.permute.xlu0 %2440
    %2442 = vrot.lane.b32.xlu0 %v2435, 64
    %v2443 = vpop.permute.xlu0 %2442
    %v2446 = vmul.f32 %v2431, %v2441
    %v2447 = vmul.f32 %v2433, %v2443
    %2450 = vrot.lane.b32.xlu0 %v2446, 32
    %v2451 = vpop.permute.xlu0 %2450
    %2452 = vrot.lane.b32.xlu0 %v2447, 32
    %v2453 = vpop.permute.xlu0 %2452
    %v2456 = vadd.f32 %v2436, %v2451
    %v2457 = vadd.f32 %v2437, %v2453
    %v2458 = vtanh.pop %v2456
    %v2459 = vtanh.pop %v2457
    %2462 = vrot.lane.b32.xlu0 %v2458, 64
    %v2463 = vpop.permute.xlu0 %2462
    %2464 = vrot.lane.b32.xlu0 %v2459, 64
    %v2465 = vpop.permute.xlu0 %2464
    %v2468 = vmul.f32 %v2431, %v2463
    %v2469 = vmul.f32 %v2433, %v2465
    %v2470 = vld [vmem:[#allocation2 + $0x60] sm:$0xff]
    %v2471 = vld [vmem:[#allocation2 + $0x68] sm:$0xff]
    %v2472 = vld [vmem:[#allocation2 + $0x70] sm:$0xff]
    %v2473 = vld [vmem:[#allocation2 + $0x78] sm:$0xff]
    %v2474 = vsel %vm792, %v2179, 0
    %v2476 = vsel %vm792, %v2181, 0
    %2478 = vmatprep.subr.mxu0 0.0
    %2479 = vmatpush1.msra.mxu0 0.0
    %2480 = vmatprep.subr.mxu0 0.0
    %2481 = vmatpush1.msra.mxu0 0.0
    %2482 = vmatprep.subr.mxu0 0.0
    %2483 = vmatpush1.msra.mxu0 0.0
    %2484 = vmatprep.subr.mxu0 0.0
    %2485 = vmatpush1.msra.mxu0 0.0
    %2486 = vmatprep.subr.mxu0 0.0
    %2487 = vmatpush1.msra.mxu0 0.0
    %2488 = vmatprep.subr.mxu0 0.0
    %2489 = vmatpush1.msra.mxu0 0.0
    %2490 = vmatprep.subr.mxu0 0.0
    %2491 = vmatpush1.msra.mxu0 0.0
    %2492 = vmatprep.subr.mxu0 0.0
    %2493 = vmatpush1.msra.mxu0 0.0
    %2494 = vmatprep.subr.mxu0 0.0
    %2495 = vmatpush1.msra.mxu0 0.0
    %2496 = vmatprep.subr.mxu0 0.0
    %2497 = vmatpush1.msra.mxu0 0.0
    %2498 = vmatprep.subr.mxu0 0.0
    %2499 = vmatpush1.msra.mxu0 0.0
    %2500 = vmatprep.subr.mxu0 0.0
    %2501 = vmatpush1.msra.mxu0 0.0
    %2502 = vmatprep.subr.mxu0 0.0
    %2503 = vmatpush1.msra.mxu0 %v791
    %2504 = vmatprep.subr.mxu0 0.0
    %2505 = vmatpush1.msra.mxu0 %v790
    %2506 = vmatprep.subr.mxu0 0.0
    %2507 = vmatpush1.msra.mxu0 %v789
    %2508 = vmatprep.subr.mxu0 0.0
    %2509 = vmatpush1.msra.mxu0 %v788
    %2510 = vmatprep.subr.mxu0 0.0
    %2511 = vmatpush2.msra.mxu0 0.0
    %2512 = vmatprep.subr.mxu0 0.0
    %2513 = vmatpush2.msra.mxu0 0.0
    %2514 = vmatprep.subr.mxu0 0.0
    %2515 = vmatpush2.msra.mxu0 0.0
    %2516 = vmatprep.subr.mxu0 0.0
    %2517 = vmatpush2.msra.mxu0 0.0
    %2518 = vmatprep.subr.mxu0 0.0
    %2519 = vmatpush2.msra.mxu0 0.0
    %2520 = vmatprep.subr.mxu0 0.0
    %2521 = vmatpush2.msra.mxu0 0.0
    %2522 = vmatprep.subr.mxu0 0.0
    %2523 = vmatpush2.msra.mxu0 0.0
    %2524 = vmatprep.subr.mxu0 0.0
    %2525 = vmatpush2.msra.mxu0 0.0
    %2526 = vmatprep.subr.mxu0 0.0
    %2527 = vmatpush2.msra.mxu0 0.0
    %2528 = vmatprep.subr.mxu0 0.0
    %2529 = vmatpush2.msra.mxu0 0.0
    %2530 = vmatprep.subr.mxu0 0.0
    %2531 = vmatpush2.msra.mxu0 0.0
    %2532 = vmatprep.subr.mxu0 0.0
    %2533 = vmatpush2.msra.mxu0 0.0
    %2534 = vmatprep.subr.mxu0 0.0
    %2535 = vmatpush2.msra.mxu0 0.0
    %2536 = vmatprep.subr.mxu0 0.0
    %2537 = vmatpush2.msra.mxu0 0.0
    %2538 = vmatprep.subr.mxu0 0.0
    %2539 = vmatpush2.msra.mxu0 0.0
    %2540 = vmatprep.subr.mxu0 0.0
    %2541 = vmatpush2.msra.mxu0 0.0
    %2542 = vmatprep.mubr.f32.mxu0 0.0
    %2543 = vmatmul.mubr.f32.gmra.mxu0 %v2474
    %v2544 = vpop.f32.mrf.mxu0
    %v2545 = vadd.f32 0.0, %v2544
    %v2546 = vpop.f32.mrf.mxu0
    %2547 = vmatprep.mubr.f32.mxu0 0.0
    %2548 = vmatmul.mubr.f32.gmra.mxu0 %v2476
    %v2549 = vpop.f32.mrf.mxu0
    %v2550 = vadd.f32 0.0, %v2549
    %v2551 = vpop.f32.mrf.mxu0
    %2552 = vdwg.mxu0
    %v2553 = vadd.f32 %v2470, %v2545
    %v2554 = vadd.f32 %v2472, %v2550
    %v2555 = vsel %vm792, %v2278, 0
    %v2557 = vsel %vm792, %v2280, 0
    %2559 = vmatprep.subr.mxu0 0.0
    %2560 = vmatpush1.msra.mxu0 0.0
    %2561 = vmatprep.subr.mxu0 0.0
    %2562 = vmatpush1.msra.mxu0 0.0
    %2563 = vmatprep.subr.mxu0 0.0
    %2564 = vmatpush1.msra.mxu0 0.0
    %2565 = vmatprep.subr.mxu0 0.0
    %2566 = vmatpush1.msra.mxu0 0.0
    %2567 = vmatprep.subr.mxu0 0.0
    %2568 = vmatpush1.msra.mxu0 0.0
    %2569 = vmatprep.subr.mxu0 0.0
    %2570 = vmatpush1.msra.mxu0 0.0
    %2571 = vmatprep.subr.mxu0 0.0
    %2572 = vmatpush1.msra.mxu0 0.0
    %2573 = vmatprep.subr.mxu0 0.0
    %2574 = vmatpush1.msra.mxu0 0.0
    %2575 = vmatprep.subr.mxu0 0.0
    %2576 = vmatpush1.msra.mxu0 0.0
    %2577 = vmatprep.subr.mxu0 0.0
    %2578 = vmatpush1.msra.mxu0 0.0
    %2579 = vmatprep.subr.mxu0 0.0
    %2580 = vmatpush1.msra.mxu0 0.0
    %2581 = vmatprep.subr.mxu0 0.0
    %2582 = vmatpush1.msra.mxu0 0.0
    %2583 = vmatprep.subr.mxu0 0.0
    %2584 = vmatpush1.msra.mxu0 %v876
    %2585 = vmatprep.subr.mxu0 0.0
    %2586 = vmatpush1.msra.mxu0 %v875
    %2587 = vmatprep.subr.mxu0 0.0
    %2588 = vmatpush1.msra.mxu0 %v874
    %2589 = vmatprep.subr.mxu0 0.0
    %2590 = vmatpush1.msra.mxu0 %v873
    %2591 = vmatprep.subr.mxu0 0.0
    %2592 = vmatpush2.msra.mxu0 0.0
    %2593 = vmatprep.subr.mxu0 0.0
    %2594 = vmatpush2.msra.mxu0 0.0
    %2595 = vmatprep.subr.mxu0 0.0
    %2596 = vmatpush2.msra.mxu0 0.0
    %2597 = vmatprep.subr.mxu0 0.0
    %2598 = vmatpush2.msra.mxu0 0.0
    %2599 = vmatprep.subr.mxu0 0.0
    %2600 = vmatpush2.msra.mxu0 0.0
    %2601 = vmatprep.subr.mxu0 0.0
    %2602 = vmatpush2.msra.mxu0 0.0
    %2603 = vmatprep.subr.mxu0 0.0
    %2604 = vmatpush2.msra.mxu0 0.0
    %2605 = vmatprep.subr.mxu0 0.0
    %2606 = vmatpush2.msra.mxu0 0.0
    %2607 = vmatprep.subr.mxu0 0.0
    %2608 = vmatpush2.msra.mxu0 0.0
    %2609 = vmatprep.subr.mxu0 0.0
    %2610 = vmatpush2.msra.mxu0 0.0
    %2611 = vmatprep.subr.mxu0 0.0
    %2612 = vmatpush2.msra.mxu0 0.0
    %2613 = vmatprep.subr.mxu0 0.0
    %2614 = vmatpush2.msra.mxu0 0.0
    %2615 = vmatprep.subr.mxu0 0.0
    %2616 = vmatpush2.msra.mxu0 0.0
    %2617 = vmatprep.subr.mxu0 0.0
    %2618 = vmatpush2.msra.mxu0 0.0
    %2619 = vmatprep.subr.mxu0 0.0
    %2620 = vmatpush2.msra.mxu0 0.0
    %2621 = vmatprep.subr.mxu0 0.0
    %2622 = vmatpush2.msra.mxu0 0.0
    %2623 = vmatprep.mubr.f32.mxu0 0.0
    %2624 = vmatmul.mubr.f32.gmra.mxu0 %v2555
    %v2625 = vpop.f32.mrf.mxu0
    %v2626 = vadd.f32 0.0, %v2625
    %v2627 = vpop.f32.mrf.mxu0
    %2628 = vmatprep.mubr.f32.mxu0 0.0
    %2629 = vmatmul.mubr.f32.gmra.mxu0 %v2557
    %v2630 = vpop.f32.mrf.mxu0
    %v2631 = vadd.f32 0.0, %v2630
    %v2632 = vpop.f32.mrf.mxu0
    %2633 = vdwg.mxu0
    %v2634 = vadd.f32 %v2471, %v2626
    %v2635 = vadd.f32 %v2473, %v2631
    %v2636 = vxor.u32 %v2553, 2147483648
    %v2637 = vxor.u32 %v2554, 2147483648
    %v2638 = vmul.f32 %v2636, 1.442695
    %v2639 = vpow.pop %v2638
    %v2640 = vmul.f32 %v2637, 1.442695
    %v2641 = vpow.pop %v2640
    %v2642 = vadd.f32 %v2639, 1.0
    %v2643 = vadd.f32 %v2641, 1.0
    %v2644 = vrcp.pop %v2642
    %v2645 = vmul.f32 1.0, %v2644
    %v2646 = vrcp.pop %v2643
    %v2647 = vmul.f32 1.0, %v2646
    %v2648 = vtanh.pop %v2553
    %v2649 = vtanh.pop %v2554
    %v2650 = vmul.f32 %v2645, %v2114
    %v2651 = vmul.f32 %v2647, %v2115
    %2654 = vrot.lane.b32.xlu0 %v2648, 64
    %v2655 = vpop.permute.xlu0 %2654
    %2656 = vrot.lane.b32.xlu0 %v2649, 64
    %v2657 = vpop.permute.xlu0 %2656
    %v2660 = vmul.f32 %v2645, %v2655
    %v2661 = vmul.f32 %v2647, %v2657
    %2664 = vrot.lane.b32.xlu0 %v2660, 32
    %v2665 = vpop.permute.xlu0 %2664
    %2666 = vrot.lane.b32.xlu0 %v2661, 32
    %v2667 = vpop.permute.xlu0 %2666
    %v2670 = vadd.f32 %v2650, %v2665
    %v2671 = vadd.f32 %v2651, %v2667
    %v2672 = vtanh.pop %v2670
    %v2673 = vtanh.pop %v2671
    %2676 = vrot.lane.b32.xlu0 %v2672, 64
    %v2677 = vpop.permute.xlu0 %2676
    %2678 = vrot.lane.b32.xlu0 %v2673, 64
    %v2679 = vpop.permute.xlu0 %2678
    %v2682 = vmul.f32 %v2645, %v2677
    %v2683 = vmul.f32 %v2647, %v2679
    %v2684 = vxor.u32 %v2634, 2147483648
    %v2685 = vxor.u32 %v2635, 2147483648
    %v2686 = vmul.f32 %v2684, 1.442695
    %v2687 = vpow.pop %v2686
    %v2688 = vmul.f32 %v2685, 1.442695
    %v2689 = vpow.pop %v2688
    %v2690 = vadd.f32 %v2687, 1.0
    %v2691 = vadd.f32 %v2689, 1.0
    %v2692 = vrcp.pop %v2690
    %v2693 = vmul.f32 1.0, %v2692
    %v2694 = vrcp.pop %v2691
    %v2695 = vmul.f32 1.0, %v2694
    %v2696 = vtanh.pop %v2634
    %v2697 = vtanh.pop %v2635
    %v2698 = vmul.f32 %v2693, %v2162
    %v2699 = vmul.f32 %v2695, %v2163
    %2702 = vrot.lane.b32.xlu0 %v2696, 64
    %v2703 = vpop.permute.xlu0 %2702
    %2704 = vrot.lane.b32.xlu0 %v2697, 64
    %v2705 = vpop.permute.xlu0 %2704
    %v2708 = vmul.f32 %v2693, %v2703
    %v2709 = vmul.f32 %v2695, %v2705
    %2712 = vrot.lane.b32.xlu0 %v2708, 32
    %v2713 = vpop.permute.xlu0 %2712
    %2714 = vrot.lane.b32.xlu0 %v2709, 32
    %v2715 = vpop.permute.xlu0 %2714
    %v2718 = vadd.f32 %v2698, %v2713
    %v2719 = vadd.f32 %v2699, %v2715
    %v2720 = vtanh.pop %v2718
    %v2721 = vtanh.pop %v2719
    %2724 = vrot.lane.b32.xlu0 %v2720, 64
    %v2725 = vpop.permute.xlu0 %2724
    %2726 = vrot.lane.b32.xlu0 %v2721, 64
    %v2727 = vpop.permute.xlu0 %2726
    %v2730 = vmul.f32 %v2693, %v2725
    %v2731 = vmul.f32 %v2695, %v2727
    %2734 = vrot.lane.b32.xlu0 %v2682, 32
    %v2735 = vpop.permute.xlu0 %2734
    %2736 = vrot.lane.b32.xlu0 %v2683, 32
    %v2737 = vpop.permute.xlu0 %2736
    %2742 = vrot.lane.b32.xlu0 %v2420, 64
    %v2743 = vpop.permute.xlu0 %2742
    %2744 = vrot.lane.b32.xlu0 %v2421, 64
    %v2745 = vpop.permute.xlu0 %2744
    %v2748 = vsel %vm792, %v2735, %v2743
    %v2749 = vsel %vm792, %v2737, %v2745
    %v2751 = vsel %vm542, %v2748, 0
    %v2754 = vsel %vm542, %v2749, 0
    %2756 = vmatprep.subr.mxu0 0.0
    %2757 = vmatpush1.msra.mxu0 0.0
    %2758 = vmatprep.subr.mxu0 0.0
    %2759 = vmatpush1.msra.mxu0 0.0
    %2760 = vmatprep.subr.mxu0 0.0
    %2761 = vmatpush1.msra.mxu0 0.0
    %2762 = vmatprep.subr.mxu0 0.0
    %2763 = vmatpush1.msra.mxu0 0.0
    %2764 = vmatprep.subr.mxu0 0.0
    %2765 = vmatpush1.msra.mxu0 0.0
    %2766 = vmatprep.subr.mxu0 0.0
    %2767 = vmatpush1.msra.mxu0 0.0
    %2768 = vmatprep.subr.mxu0 0.0
    %2769 = vmatpush1.msra.mxu0 0.0
    %2770 = vmatprep.subr.mxu0 0.0
    %2771 = vmatpush1.msra.mxu0 0.0
    %2772 = vmatprep.subr.mxu0 0.0
    %2773 = vmatpush1.msra.mxu0 %v1067
    %2774 = vmatprep.subr.mxu0 0.0
    %2775 = vmatpush1.msra.mxu0 %v1066
    %2776 = vmatprep.subr.mxu0 0.0
    %2777 = vmatpush1.msra.mxu0 %v1065
    %2778 = vmatprep.subr.mxu0 0.0
    %2779 = vmatpush1.msra.mxu0 %v1064
    %2780 = vmatprep.subr.mxu0 0.0
    %2781 = vmatpush1.msra.mxu0 %v1063
    %2782 = vmatprep.subr.mxu0 0.0
    %2783 = vmatpush1.msra.mxu0 %v1062
    %2784 = vmatprep.subr.mxu0 0.0
    %2785 = vmatpush1.msra.mxu0 %v1061
    %2786 = vmatprep.subr.mxu0 0.0
    %2787 = vmatpush1.msra.mxu0 %v1060
    %2788 = vmatprep.subr.mxu0 0.0
    %2789 = vmatpush2.msra.mxu0 0.0
    %2790 = vmatprep.subr.mxu0 0.0
    %2791 = vmatpush2.msra.mxu0 0.0
    %2792 = vmatprep.subr.mxu0 0.0
    %2793 = vmatpush2.msra.mxu0 0.0
    %2794 = vmatprep.subr.mxu0 0.0
    %2795 = vmatpush2.msra.mxu0 0.0
    %2796 = vmatprep.subr.mxu0 0.0
    %2797 = vmatpush2.msra.mxu0 0.0
    %2798 = vmatprep.subr.mxu0 0.0
    %2799 = vmatpush2.msra.mxu0 0.0
    %2800 = vmatprep.subr.mxu0 0.0
    %2801 = vmatpush2.msra.mxu0 0.0
    %2802 = vmatprep.subr.mxu0 0.0
    %2803 = vmatpush2.msra.mxu0 0.0
    %2804 = vmatprep.subr.mxu0 0.0
    %2805 = vmatpush2.msra.mxu0 0.0
    %2806 = vmatprep.subr.mxu0 0.0
    %2807 = vmatpush2.msra.mxu0 0.0
    %2808 = vmatprep.subr.mxu0 0.0
    %2809 = vmatpush2.msra.mxu0 0.0
    %2810 = vmatprep.subr.mxu0 0.0
    %2811 = vmatpush2.msra.mxu0 0.0
    %2812 = vmatprep.subr.mxu0 0.0
    %2813 = vmatpush2.msra.mxu0 0.0
    %2814 = vmatprep.subr.mxu0 0.0
    %2815 = vmatpush2.msra.mxu0 0.0
    %2816 = vmatprep.subr.mxu0 0.0
    %2817 = vmatpush2.msra.mxu0 0.0
    %2818 = vmatprep.subr.mxu0 0.0
    %2819 = vmatpush2.msra.mxu0 0.0
    %2820 = vmatprep.mubr.f32.mxu0 0.0
    %2821 = vmatmul.mubr.f32.gmra.mxu0 %v2751
    %v2822 = vpop.f32.mrf.mxu0
    %v2823 = vadd.f32 %v1073, %v2822
    %v2824 = vpop.f32.mrf.mxu0
    %2825 = vmatprep.mubr.f32.mxu0 0.0
    %2826 = vmatmul.mubr.f32.gmra.mxu0 %v2754
    %v2827 = vpop.f32.mrf.mxu0
    %v2828 = vadd.f32 %v1073, %v2827
    %v2829 = vpop.f32.mrf.mxu0
    %2830 = vdwg.mxu0
    %2833 = vrot.lane.b32.xlu0 %v2730, 32
    %v2834 = vpop.permute.xlu0 %2833
    %2835 = vrot.lane.b32.xlu0 %v2731, 32
    %v2836 = vpop.permute.xlu0 %2835
    %2841 = vrot.lane.b32.xlu0 %v2468, 64
    %v2842 = vpop.permute.xlu0 %2841
    %2843 = vrot.lane.b32.xlu0 %v2469, 64
    %v2844 = vpop.permute.xlu0 %2843
    %v2847 = vsel %vm792, %v2834, %v2842
    %v2848 = vsel %vm792, %v2836, %v2844
    %v2850 = vsel %vm542, %v2847, 0
    %v2853 = vsel %vm542, %v2848, 0
    %2855 = vmatprep.subr.mxu0 0.0
    %2856 = vmatpush1.msra.mxu0 0.0
    %2857 = vmatprep.subr.mxu0 0.0
    %2858 = vmatpush1.msra.mxu0 0.0
    %2859 = vmatprep.subr.mxu0 0.0
    %2860 = vmatpush1.msra.mxu0 0.0
    %2861 = vmatprep.subr.mxu0 0.0
    %2862 = vmatpush1.msra.mxu0 0.0
    %2863 = vmatprep.subr.mxu0 0.0
    %2864 = vmatpush1.msra.mxu0 0.0
    %2865 = vmatprep.subr.mxu0 0.0
    %2866 = vmatpush1.msra.mxu0 0.0
    %2867 = vmatprep.subr.mxu0 0.0
    %2868 = vmatpush1.msra.mxu0 0.0
    %2869 = vmatprep.subr.mxu0 0.0
    %2870 = vmatpush1.msra.mxu0 0.0
    %2871 = vmatprep.subr.mxu0 0.0
    %2872 = vmatpush1.msra.mxu0 %v1173
    %2873 = vmatprep.subr.mxu0 0.0
    %2874 = vmatpush1.msra.mxu0 %v1172
    %2875 = vmatprep.subr.mxu0 0.0
    %2876 = vmatpush1.msra.mxu0 %v1171
    %2877 = vmatprep.subr.mxu0 0.0
    %2878 = vmatpush1.msra.mxu0 %v1170
    %2879 = vmatprep.subr.mxu0 0.0
    %2880 = vmatpush1.msra.mxu0 %v1169
    %2881 = vmatprep.subr.mxu0 0.0
    %2882 = vmatpush1.msra.mxu0 %v1168
    %2883 = vmatprep.subr.mxu0 0.0
    %2884 = vmatpush1.msra.mxu0 %v1167
    %2885 = vmatprep.subr.mxu0 0.0
    %2886 = vmatpush1.msra.mxu0 %v1166
    %2887 = vmatprep.subr.mxu0 0.0
    %2888 = vmatpush2.msra.mxu0 0.0
    %2889 = vmatprep.subr.mxu0 0.0
    %2890 = vmatpush2.msra.mxu0 0.0
    %2891 = vmatprep.subr.mxu0 0.0
    %2892 = vmatpush2.msra.mxu0 0.0
    %2893 = vmatprep.subr.mxu0 0.0
    %2894 = vmatpush2.msra.mxu0 0.0
    %2895 = vmatprep.subr.mxu0 0.0
    %2896 = vmatpush2.msra.mxu0 0.0
    %2897 = vmatprep.subr.mxu0 0.0
    %2898 = vmatpush2.msra.mxu0 0.0
    %2899 = vmatprep.subr.mxu0 0.0
    %2900 = vmatpush2.msra.mxu0 0.0
    %2901 = vmatprep.subr.mxu0 0.0
    %2902 = vmatpush2.msra.mxu0 0.0
    %2903 = vmatprep.subr.mxu0 0.0
    %2904 = vmatpush2.msra.mxu0 0.0
    %2905 = vmatprep.subr.mxu0 0.0
    %2906 = vmatpush2.msra.mxu0 0.0
    %2907 = vmatprep.subr.mxu0 0.0
    %2908 = vmatpush2.msra.mxu0 0.0
    %2909 = vmatprep.subr.mxu0 0.0
    %2910 = vmatpush2.msra.mxu0 0.0
    %2911 = vmatprep.subr.mxu0 0.0
    %2912 = vmatpush2.msra.mxu0 0.0
    %2913 = vmatprep.subr.mxu0 0.0
    %2914 = vmatpush2.msra.mxu0 0.0
    %2915 = vmatprep.subr.mxu0 0.0
    %2916 = vmatpush2.msra.mxu0 0.0
    %2917 = vmatprep.subr.mxu0 0.0
    %2918 = vmatpush2.msra.mxu0 0.0
    %2919 = vmatprep.mubr.f32.mxu0 0.0
    %2920 = vmatmul.mubr.f32.gmra.mxu0 %v2850
    %v2921 = vpop.f32.mrf.mxu0
    %v2922 = vadd.f32 %v1179, %v2921
    %v2923 = vpop.f32.mrf.mxu0
    %2924 = vmatprep.mubr.f32.mxu0 0.0
    %2925 = vmatmul.mubr.f32.gmra.mxu0 %v2853
    %v2926 = vpop.f32.mrf.mxu0
    %v2927 = vadd.f32 %v1179, %v2926
    %v2928 = vpop.f32.mrf.mxu0
    %2929 = vdwg.mxu0
    %v2930 = vxor.u32 %v2823, 2147483648
    %v2931 = vxor.u32 %v2828, 2147483648
    %v2932 = vmul.f32 %v2930, 1.442695
    %v2933 = vpow.pop %v2932
    %v2934 = vmul.f32 %v2931, 1.442695
    %v2935 = vpow.pop %v2934
    %v2936 = vadd.f32 %v2933, 1.0
    %v2937 = vadd.f32 %v2935, 1.0
    %v2938 = vrcp.pop %v2936
    %v2939 = vmul.f32 1.0, %v2938
    %v2940 = vrcp.pop %v2937
    %v2941 = vmul.f32 1.0, %v2940
    %v2942 = vtanh.pop %v2823
    %v2943 = vtanh.pop %v2828
    %v2944 = vmul.f32 %v2939, %v2408
    %v2945 = vmul.f32 %v2941, %v2409
    %2948 = vrot.lane.b32.xlu0 %v2942, 64
    %v2949 = vpop.permute.xlu0 %2948
    %2950 = vrot.lane.b32.xlu0 %v2943, 64
    %v2951 = vpop.permute.xlu0 %2950
    %v2954 = vmul.f32 %v2939, %v2949
    %v2955 = vmul.f32 %v2941, %v2951
    %2958 = vrot.lane.b32.xlu0 %v2954, 32
    %v2959 = vpop.permute.xlu0 %2958
    %2960 = vrot.lane.b32.xlu0 %v2955, 32
    %v2961 = vpop.permute.xlu0 %2960
    %v2964 = vadd.f32 %v2944, %v2959
    %v2965 = vadd.f32 %v2945, %v2961
    %v2966 = vtanh.pop %v2964
    %v2967 = vtanh.pop %v2965
    %2970 = vrot.lane.b32.xlu0 %v2966, 64
    %v2971 = vpop.permute.xlu0 %2970
    %2972 = vrot.lane.b32.xlu0 %v2967, 64
    %v2973 = vpop.permute.xlu0 %2972
    %v2976 = vmul.f32 %v2939, %v2971
    %v2977 = vmul.f32 %v2941, %v2973
    %v2978 = vxor.u32 %v2922, 2147483648
    %v2979 = vxor.u32 %v2927, 2147483648
    %v2980 = vmul.f32 %v2978, 1.442695
    %v2981 = vpow.pop %v2980
    %v2982 = vmul.f32 %v2979, 1.442695
    %v2983 = vpow.pop %v2982
    %v2984 = vadd.f32 %v2981, 1.0
    %v2985 = vadd.f32 %v2983, 1.0
    %v2986 = vrcp.pop %v2984
    %v2987 = vmul.f32 1.0, %v2986
    %v2988 = vrcp.pop %v2985
    %v2989 = vmul.f32 1.0, %v2988
    %v2990 = vtanh.pop %v2922
    %v2991 = vtanh.pop %v2927
    %v2992 = vmul.f32 %v2987, %v2456
    %v2993 = vmul.f32 %v2989, %v2457
    %2996 = vrot.lane.b32.xlu0 %v2990, 64
    %v2997 = vpop.permute.xlu0 %2996
    %2998 = vrot.lane.b32.xlu0 %v2991, 64
    %v2999 = vpop.permute.xlu0 %2998
    %v3002 = vmul.f32 %v2987, %v2997
    %v3003 = vmul.f32 %v2989, %v2999
    %3006 = vrot.lane.b32.xlu0 %v3002, 32
    %v3007 = vpop.permute.xlu0 %3006
    %3008 = vrot.lane.b32.xlu0 %v3003, 32
    %v3009 = vpop.permute.xlu0 %3008
    %v3012 = vadd.f32 %v2992, %v3007
    %v3013 = vadd.f32 %v2993, %v3009
    %v3014 = vtanh.pop %v3012
    %v3015 = vtanh.pop %v3013
    %3018 = vrot.lane.b32.xlu0 %v3014, 64
    %v3019 = vpop.permute.xlu0 %3018
    %3020 = vrot.lane.b32.xlu0 %v3015, 64
    %v3021 = vpop.permute.xlu0 %3020
    %v3024 = vmul.f32 %v2987, %v3019
    %v3025 = vmul.f32 %v2989, %v3021
    %v3026 = vld [vmem:[#allocation2 + $0x80] sm:$0xff]
    %v3027 = vld [vmem:[#allocation2 + $0x88] sm:$0xff]
    %v3028 = vld [vmem:[#allocation2 + $0x90] sm:$0xff]
    %v3029 = vld [vmem:[#allocation2 + $0x98] sm:$0xff]
    %v3030 = vsel %vm792, %v2735, 0
    %v3032 = vsel %vm792, %v2737, 0
    %3034 = vmatprep.subr.mxu0 0.0
    %3035 = vmatpush1.msra.mxu0 0.0
    %3036 = vmatprep.subr.mxu0 0.0
    %3037 = vmatpush1.msra.mxu0 0.0
    %3038 = vmatprep.subr.mxu0 0.0
    %3039 = vmatpush1.msra.mxu0 0.0
    %3040 = vmatprep.subr.mxu0 0.0
    %3041 = vmatpush1.msra.mxu0 0.0
    %3042 = vmatprep.subr.mxu0 0.0
    %3043 = vmatpush1.msra.mxu0 0.0
    %3044 = vmatprep.subr.mxu0 0.0
    %3045 = vmatpush1.msra.mxu0 0.0
    %3046 = vmatprep.subr.mxu0 0.0
    %3047 = vmatpush1.msra.mxu0 0.0
    %3048 = vmatprep.subr.mxu0 0.0
    %3049 = vmatpush1.msra.mxu0 0.0
    %3050 = vmatprep.subr.mxu0 0.0
    %3051 = vmatpush1.msra.mxu0 0.0
    %3052 = vmatprep.subr.mxu0 0.0
    %3053 = vmatpush1.msra.mxu0 0.0
    %3054 = vmatprep.subr.mxu0 0.0
    %3055 = vmatpush1.msra.mxu0 0.0
    %3056 = vmatprep.subr.mxu0 0.0
    %3057 = vmatpush1.msra.mxu0 0.0
    %3058 = vmatprep.subr.mxu0 0.0
    %3059 = vmatpush1.msra.mxu0 %v791
    %3060 = vmatprep.subr.mxu0 0.0
    %3061 = vmatpush1.msra.mxu0 %v790
    %3062 = vmatprep.subr.mxu0 0.0
    %3063 = vmatpush1.msra.mxu0 %v789
    %3064 = vmatprep.subr.mxu0 0.0
    %3065 = vmatpush1.msra.mxu0 %v788
    %3066 = vmatprep.subr.mxu0 0.0
    %3067 = vmatpush2.msra.mxu0 0.0
    %3068 = vmatprep.subr.mxu0 0.0
    %3069 = vmatpush2.msra.mxu0 0.0
    %3070 = vmatprep.subr.mxu0 0.0
    %3071 = vmatpush2.msra.mxu0 0.0
    %3072 = vmatprep.subr.mxu0 0.0
    %3073 = vmatpush2.msra.mxu0 0.0
    %3074 = vmatprep.subr.mxu0 0.0
    %3075 = vmatpush2.msra.mxu0 0.0
    %3076 = vmatprep.subr.mxu0 0.0
    %3077 = vmatpush2.msra.mxu0 0.0
    %3078 = vmatprep.subr.mxu0 0.0
    %3079 = vmatpush2.msra.mxu0 0.0
    %3080 = vmatprep.subr.mxu0 0.0
    %3081 = vmatpush2.msra.mxu0 0.0
    %3082 = vmatprep.subr.mxu0 0.0
    %3083 = vmatpush2.msra.mxu0 0.0
    %3084 = vmatprep.subr.mxu0 0.0
    %3085 = vmatpush2.msra.mxu0 0.0
    %3086 = vmatprep.subr.mxu0 0.0
    %3087 = vmatpush2.msra.mxu0 0.0
    %3088 = vmatprep.subr.mxu0 0.0
    %3089 = vmatpush2.msra.mxu0 0.0
    %3090 = vmatprep.subr.mxu0 0.0
    %3091 = vmatpush2.msra.mxu0 0.0
    %3092 = vmatprep.subr.mxu0 0.0
    %3093 = vmatpush2.msra.mxu0 0.0
    %3094 = vmatprep.subr.mxu0 0.0
    %3095 = vmatpush2.msra.mxu0 0.0
    %3096 = vmatprep.subr.mxu0 0.0
    %3097 = vmatpush2.msra.mxu0 0.0
    %3098 = vmatprep.mubr.f32.mxu0 0.0
    %3099 = vmatmul.mubr.f32.gmra.mxu0 %v3030
    %v3100 = vpop.f32.mrf.mxu0
    %v3101 = vadd.f32 0.0, %v3100
    %v3102 = vpop.f32.mrf.mxu0
    %3103 = vmatprep.mubr.f32.mxu0 0.0
    %3104 = vmatmul.mubr.f32.gmra.mxu0 %v3032
    %v3105 = vpop.f32.mrf.mxu0
    %v3106 = vadd.f32 0.0, %v3105
    %v3107 = vpop.f32.mrf.mxu0
    %3108 = vdwg.mxu0
    %v3109 = vadd.f32 %v3026, %v3101
    %v3110 = vadd.f32 %v3028, %v3106
    %v3111 = vsel %vm792, %v2834, 0
    %v3113 = vsel %vm792, %v2836, 0
    %3115 = vmatprep.subr.mxu0 0.0
    %3116 = vmatpush1.msra.mxu0 0.0
    %3117 = vmatprep.subr.mxu0 0.0
    %3118 = vmatpush1.msra.mxu0 0.0
    %3119 = vmatprep.subr.mxu0 0.0
    %3120 = vmatpush1.msra.mxu0 0.0
    %3121 = vmatprep.subr.mxu0 0.0
    %3122 = vmatpush1.msra.mxu0 0.0
    %3123 = vmatprep.subr.mxu0 0.0
    %3124 = vmatpush1.msra.mxu0 0.0
    %3125 = vmatprep.subr.mxu0 0.0
    %3126 = vmatpush1.msra.mxu0 0.0
    %3127 = vmatprep.subr.mxu0 0.0
    %3128 = vmatpush1.msra.mxu0 0.0
    %3129 = vmatprep.subr.mxu0 0.0
    %3130 = vmatpush1.msra.mxu0 0.0
    %3131 = vmatprep.subr.mxu0 0.0
    %3132 = vmatpush1.msra.mxu0 0.0
    %3133 = vmatprep.subr.mxu0 0.0
    %3134 = vmatpush1.msra.mxu0 0.0
    %3135 = vmatprep.subr.mxu0 0.0
    %3136 = vmatpush1.msra.mxu0 0.0
    %3137 = vmatprep.subr.mxu0 0.0
    %3138 = vmatpush1.msra.mxu0 0.0
    %3139 = vmatprep.subr.mxu0 0.0
    %3140 = vmatpush1.msra.mxu0 %v876
    %3141 = vmatprep.subr.mxu0 0.0
    %3142 = vmatpush1.msra.mxu0 %v875
    %3143 = vmatprep.subr.mxu0 0.0
    %3144 = vmatpush1.msra.mxu0 %v874
    %3145 = vmatprep.subr.mxu0 0.0
    %3146 = vmatpush1.msra.mxu0 %v873
    %3147 = vmatprep.subr.mxu0 0.0
    %3148 = vmatpush2.msra.mxu0 0.0
    %3149 = vmatprep.subr.mxu0 0.0
    %3150 = vmatpush2.msra.mxu0 0.0
    %3151 = vmatprep.subr.mxu0 0.0
    %3152 = vmatpush2.msra.mxu0 0.0
    %3153 = vmatprep.subr.mxu0 0.0
    %3154 = vmatpush2.msra.mxu0 0.0
    %3155 = vmatprep.subr.mxu0 0.0
    %3156 = vmatpush2.msra.mxu0 0.0
    %3157 = vmatprep.subr.mxu0 0.0
    %3158 = vmatpush2.msra.mxu0 0.0
    %3159 = vmatprep.subr.mxu0 0.0
    %3160 = vmatpush2.msra.mxu0 0.0
    %3161 = vmatprep.subr.mxu0 0.0
    %3162 = vmatpush2.msra.mxu0 0.0
    %3163 = vmatprep.subr.mxu0 0.0
    %3164 = vmatpush2.msra.mxu0 0.0
    %3165 = vmatprep.subr.mxu0 0.0
    %3166 = vmatpush2.msra.mxu0 0.0
    %3167 = vmatprep.subr.mxu0 0.0
    %3168 = vmatpush2.msra.mxu0 0.0
    %3169 = vmatprep.subr.mxu0 0.0
    %3170 = vmatpush2.msra.mxu0 0.0
    %3171 = vmatprep.subr.mxu0 0.0
    %3172 = vmatpush2.msra.mxu0 0.0
    %3173 = vmatprep.subr.mxu0 0.0
    %3174 = vmatpush2.msra.mxu0 0.0
    %3175 = vmatprep.subr.mxu0 0.0
    %3176 = vmatpush2.msra.mxu0 0.0
    %3177 = vmatprep.subr.mxu0 0.0
    %3178 = vmatpush2.msra.mxu0 0.0
    %3179 = vmatprep.mubr.f32.mxu0 0.0
    %3180 = vmatmul.mubr.f32.gmra.mxu0 %v3111
    %v3181 = vpop.f32.mrf.mxu0
    %v3182 = vadd.f32 0.0, %v3181
    %v3183 = vpop.f32.mrf.mxu0
    %3184 = vmatprep.mubr.f32.mxu0 0.0
    %3185 = vmatmul.mubr.f32.gmra.mxu0 %v3113
    %v3186 = vpop.f32.mrf.mxu0
    %v3187 = vadd.f32 0.0, %v3186
    %v3188 = vpop.f32.mrf.mxu0
    %3189 = vdwg.mxu0
    %v3190 = vadd.f32 %v3027, %v3182
    %v3191 = vadd.f32 %v3029, %v3187
    %v3192 = vxor.u32 %v3109, 2147483648
    %v3193 = vxor.u32 %v3110, 2147483648
    %v3194 = vmul.f32 %v3192, 1.442695
    %v3195 = vpow.pop %v3194
    %v3196 = vmul.f32 %v3193, 1.442695
    %v3197 = vpow.pop %v3196
    %v3198 = vadd.f32 %v3195, 1.0
    %v3199 = vadd.f32 %v3197, 1.0
    %v3200 = vrcp.pop %v3198
    %v3201 = vmul.f32 1.0, %v3200
    %v3202 = vrcp.pop %v3199
    %v3203 = vmul.f32 1.0, %v3202
    %v3204 = vtanh.pop %v3109
    %v3205 = vtanh.pop %v3110
    %v3206 = vmul.f32 %v3201, %v2670
    %v3207 = vmul.f32 %v3203, %v2671
    %3210 = vrot.lane.b32.xlu0 %v3204, 64
    %v3211 = vpop.permute.xlu0 %3210
    %3212 = vrot.lane.b32.xlu0 %v3205, 64
    %v3213 = vpop.permute.xlu0 %3212
    %v3216 = vmul.f32 %v3201, %v3211
    %v3217 = vmul.f32 %v3203, %v3213
    %3220 = vrot.lane.b32.xlu0 %v3216, 32
    %v3221 = vpop.permute.xlu0 %3220
    %3222 = vrot.lane.b32.xlu0 %v3217, 32
    %v3223 = vpop.permute.xlu0 %3222
    %v3226 = vadd.f32 %v3206, %v3221
    %v3227 = vadd.f32 %v3207, %v3223
    %v3228 = vtanh.pop %v3226
    %v3229 = vtanh.pop %v3227
    %3232 = vrot.lane.b32.xlu0 %v3228, 64
    %v3233 = vpop.permute.xlu0 %3232
    %3234 = vrot.lane.b32.xlu0 %v3229, 64
    %v3235 = vpop.permute.xlu0 %3234
    %v3238 = vmul.f32 %v3201, %v3233
    %v3239 = vmul.f32 %v3203, %v3235
    %v3240 = vxor.u32 %v3190, 2147483648
    %v3241 = vxor.u32 %v3191, 2147483648
    %v3242 = vmul.f32 %v3240, 1.442695
    %v3243 = vpow.pop %v3242
    %v3244 = vmul.f32 %v3241, 1.442695
    %v3245 = vpow.pop %v3244
    %v3246 = vadd.f32 %v3243, 1.0
    %v3247 = vadd.f32 %v3245, 1.0
    %v3248 = vrcp.pop %v3246
    %v3249 = vmul.f32 1.0, %v3248
    %v3250 = vrcp.pop %v3247
    %v3251 = vmul.f32 1.0, %v3250
    %v3252 = vtanh.pop %v3190
    %v3253 = vtanh.pop %v3191
    %v3254 = vmul.f32 %v3249, %v2718
    %v3255 = vmul.f32 %v3251, %v2719
    %3258 = vrot.lane.b32.xlu0 %v3252, 64
    %v3259 = vpop.permute.xlu0 %3258
    %3260 = vrot.lane.b32.xlu0 %v3253, 64
    %v3261 = vpop.permute.xlu0 %3260
    %v3264 = vmul.f32 %v3249, %v3259
    %v3265 = vmul.f32 %v3251, %v3261
    %3268 = vrot.lane.b32.xlu0 %v3264, 32
    %v3269 = vpop.permute.xlu0 %3268
    %3270 = vrot.lane.b32.xlu0 %v3265, 32
    %v3271 = vpop.permute.xlu0 %3270
    %v3274 = vadd.f32 %v3254, %v3269
    %v3275 = vadd.f32 %v3255, %v3271
    %v3276 = vtanh.pop %v3274
    %v3277 = vtanh.pop %v3275
    %3280 = vrot.lane.b32.xlu0 %v3276, 64
    %v3281 = vpop.permute.xlu0 %3280
    %3282 = vrot.lane.b32.xlu0 %v3277, 64
    %v3283 = vpop.permute.xlu0 %3282
    %v3286 = vmul.f32 %v3249, %v3281
    %v3287 = vmul.f32 %v3251, %v3283
    %3290 = vrot.lane.b32.xlu0 %v3238, 32
    %v3291 = vpop.permute.xlu0 %3290
    %3292 = vrot.lane.b32.xlu0 %v3239, 32
    %v3293 = vpop.permute.xlu0 %3292
    %3298 = vrot.lane.b32.xlu0 %v2976, 64
    %v3299 = vpop.permute.xlu0 %3298
    %3300 = vrot.lane.b32.xlu0 %v2977, 64
    %v3301 = vpop.permute.xlu0 %3300
    %v3304 = vsel %vm792, %v3291, %v3299
    %v3305 = vsel %vm792, %v3293, %v3301
    %v3307 = vsel %vm542, %v3304, 0
    %v3310 = vsel %vm542, %v3305, 0
    %3312 = vmatprep.subr.mxu0 0.0
    %3313 = vmatpush1.msra.mxu0 0.0
    %3314 = vmatprep.subr.mxu0 0.0
    %3315 = vmatpush1.msra.mxu0 0.0
    %3316 = vmatprep.subr.mxu0 0.0
    %3317 = vmatpush1.msra.mxu0 0.0
    %3318 = vmatprep.subr.mxu0 0.0
    %3319 = vmatpush1.msra.mxu0 0.0
    %3320 = vmatprep.subr.mxu0 0.0
    %3321 = vmatpush1.msra.mxu0 0.0
    %3322 = vmatprep.subr.mxu0 0.0
    %3323 = vmatpush1.msra.mxu0 0.0
    %3324 = vmatprep.subr.mxu0 0.0
    %3325 = vmatpush1.msra.mxu0 0.0
    %3326 = vmatprep.subr.mxu0 0.0
    %3327 = vmatpush1.msra.mxu0 0.0
    %3328 = vmatprep.subr.mxu0 0.0
    %3329 = vmatpush1.msra.mxu0 %v1067
    %3330 = vmatprep.subr.mxu0 0.0
    %3331 = vmatpush1.msra.mxu0 %v1066
    %3332 = vmatprep.subr.mxu0 0.0
    %3333 = vmatpush1.msra.mxu0 %v1065
    %3334 = vmatprep.subr.mxu0 0.0
    %3335 = vmatpush1.msra.mxu0 %v1064
    %3336 = vmatprep.subr.mxu0 0.0
    %3337 = vmatpush1.msra.mxu0 %v1063
    %3338 = vmatprep.subr.mxu0 0.0
    %3339 = vmatpush1.msra.mxu0 %v1062
    %3340 = vmatprep.subr.mxu0 0.0
    %3341 = vmatpush1.msra.mxu0 %v1061
    %3342 = vmatprep.subr.mxu0 0.0
    %3343 = vmatpush1.msra.mxu0 %v1060
    %3344 = vmatprep.subr.mxu0 0.0
    %3345 = vmatpush2.msra.mxu0 0.0
    %3346 = vmatprep.subr.mxu0 0.0
    %3347 = vmatpush2.msra.mxu0 0.0
    %3348 = vmatprep.subr.mxu0 0.0
    %3349 = vmatpush2.msra.mxu0 0.0
    %3350 = vmatprep.subr.mxu0 0.0
    %3351 = vmatpush2.msra.mxu0 0.0
    %3352 = vmatprep.subr.mxu0 0.0
    %3353 = vmatpush2.msra.mxu0 0.0
    %3354 = vmatprep.subr.mxu0 0.0
    %3355 = vmatpush2.msra.mxu0 0.0
    %3356 = vmatprep.subr.mxu0 0.0
    %3357 = vmatpush2.msra.mxu0 0.0
    %3358 = vmatprep.subr.mxu0 0.0
    %3359 = vmatpush2.msra.mxu0 0.0
    %3360 = vmatprep.subr.mxu0 0.0
    %3361 = vmatpush2.msra.mxu0 0.0
    %3362 = vmatprep.subr.mxu0 0.0
    %3363 = vmatpush2.msra.mxu0 0.0
    %3364 = vmatprep.subr.mxu0 0.0
    %3365 = vmatpush2.msra.mxu0 0.0
    %3366 = vmatprep.subr.mxu0 0.0
    %3367 = vmatpush2.msra.mxu0 0.0
    %3368 = vmatprep.subr.mxu0 0.0
    %3369 = vmatpush2.msra.mxu0 0.0
    %3370 = vmatprep.subr.mxu0 0.0
    %3371 = vmatpush2.msra.mxu0 0.0
    %3372 = vmatprep.subr.mxu0 0.0
    %3373 = vmatpush2.msra.mxu0 0.0
    %3374 = vmatprep.subr.mxu0 0.0
    %3375 = vmatpush2.msra.mxu0 0.0
    %3376 = vmatprep.mubr.f32.mxu0 0.0
    %3377 = vmatmul.mubr.f32.gmra.mxu0 %v3307
    %v3378 = vpop.f32.mrf.mxu0
    %v3379 = vadd.f32 %v1073, %v3378
    %v3380 = vpop.f32.mrf.mxu0
    %3381 = vmatprep.mubr.f32.mxu0 0.0
    %3382 = vmatmul.mubr.f32.gmra.mxu0 %v3310
    %v3383 = vpop.f32.mrf.mxu0
    %v3384 = vadd.f32 %v1073, %v3383
    %v3385 = vpop.f32.mrf.mxu0
    %3386 = vdwg.mxu0
    %3389 = vrot.lane.b32.xlu0 %v3286, 32
    %v3390 = vpop.permute.xlu0 %3389
    %3391 = vrot.lane.b32.xlu0 %v3287, 32
    %v3392 = vpop.permute.xlu0 %3391
    %3397 = vrot.lane.b32.xlu0 %v3024, 64
    %v3398 = vpop.permute.xlu0 %3397
    %3399 = vrot.lane.b32.xlu0 %v3025, 64
    %v3400 = vpop.permute.xlu0 %3399
    %v3403 = vsel %vm792, %v3390, %v3398
    %v3404 = vsel %vm792, %v3392, %v3400
    %v3406 = vsel %vm542, %v3403, 0
    %v3409 = vsel %vm542, %v3404, 0
    %3411 = vmatprep.subr.mxu0 0.0
    %3412 = vmatpush1.msra.mxu0 0.0
    %3413 = vmatprep.subr.mxu0 0.0
    %3414 = vmatpush1.msra.mxu0 0.0
    %3415 = vmatprep.subr.mxu0 0.0
    %3416 = vmatpush1.msra.mxu0 0.0
    %3417 = vmatprep.subr.mxu0 0.0
    %3418 = vmatpush1.msra.mxu0 0.0
    %3419 = vmatprep.subr.mxu0 0.0
    %3420 = vmatpush1.msra.mxu0 0.0
    %3421 = vmatprep.subr.mxu0 0.0
    %3422 = vmatpush1.msra.mxu0 0.0
    %3423 = vmatprep.subr.mxu0 0.0
    %3424 = vmatpush1.msra.mxu0 0.0
    %3425 = vmatprep.subr.mxu0 0.0
    %3426 = vmatpush1.msra.mxu0 0.0
    %3427 = vmatprep.subr.mxu0 0.0
    %3428 = vmatpush1.msra.mxu0 %v1173
    %3429 = vmatprep.subr.mxu0 0.0
    %3430 = vmatpush1.msra.mxu0 %v1172
    %3431 = vmatprep.subr.mxu0 0.0
    %3432 = vmatpush1.msra.mxu0 %v1171
    %3433 = vmatprep.subr.mxu0 0.0
    %3434 = vmatpush1.msra.mxu0 %v1170
    %3435 = vmatprep.subr.mxu0 0.0
    %3436 = vmatpush1.msra.mxu0 %v1169
    %3437 = vmatprep.subr.mxu0 0.0
    %3438 = vmatpush1.msra.mxu0 %v1168
    %3439 = vmatprep.subr.mxu0 0.0
    %3440 = vmatpush1.msra.mxu0 %v1167
    %3441 = vmatprep.subr.mxu0 0.0
    %3442 = vmatpush1.msra.mxu0 %v1166
    %3443 = vmatprep.subr.mxu0 0.0
    %3444 = vmatpush2.msra.mxu0 0.0
    %3445 = vmatprep.subr.mxu0 0.0
    %3446 = vmatpush2.msra.mxu0 0.0
    %3447 = vmatprep.subr.mxu0 0.0
    %3448 = vmatpush2.msra.mxu0 0.0
    %3449 = vmatprep.subr.mxu0 0.0
    %3450 = vmatpush2.msra.mxu0 0.0
    %3451 = vmatprep.subr.mxu0 0.0
    %3452 = vmatpush2.msra.mxu0 0.0
    %3453 = vmatprep.subr.mxu0 0.0
    %3454 = vmatpush2.msra.mxu0 0.0
    %3455 = vmatprep.subr.mxu0 0.0
    %3456 = vmatpush2.msra.mxu0 0.0
    %3457 = vmatprep.subr.mxu0 0.0
    %3458 = vmatpush2.msra.mxu0 0.0
    %3459 = vmatprep.subr.mxu0 0.0
    %3460 = vmatpush2.msra.mxu0 0.0
    %3461 = vmatprep.subr.mxu0 0.0
    %3462 = vmatpush2.msra.mxu0 0.0
    %3463 = vmatprep.subr.mxu0 0.0
    %3464 = vmatpush2.msra.mxu0 0.0
    %3465 = vmatprep.subr.mxu0 0.0
    %3466 = vmatpush2.msra.mxu0 0.0
    %3467 = vmatprep.subr.mxu0 0.0
    %3468 = vmatpush2.msra.mxu0 0.0
    %3469 = vmatprep.subr.mxu0 0.0
    %3470 = vmatpush2.msra.mxu0 0.0
    %3471 = vmatprep.subr.mxu0 0.0
    %3472 = vmatpush2.msra.mxu0 0.0
    %3473 = vmatprep.subr.mxu0 0.0
    %3474 = vmatpush2.msra.mxu0 0.0
    %3475 = vmatprep.mubr.f32.mxu0 0.0
    %3476 = vmatmul.mubr.f32.gmra.mxu0 %v3406
    %v3477 = vpop.f32.mrf.mxu0
    %v3478 = vadd.f32 %v1179, %v3477
    %v3479 = vpop.f32.mrf.mxu0
    %3480 = vmatprep.mubr.f32.mxu0 0.0
    %3481 = vmatmul.mubr.f32.gmra.mxu0 %v3409
    %v3482 = vpop.f32.mrf.mxu0
    %v3483 = vadd.f32 %v1179, %v3482
    %v3484 = vpop.f32.mrf.mxu0
    %3485 = vdwg.mxu0
    %v3486 = vxor.u32 %v3379, 2147483648
    %v3487 = vxor.u32 %v3384, 2147483648
    %v3488 = vmul.f32 %v3486, 1.442695
    %v3489 = vpow.pop %v3488
    %v3490 = vmul.f32 %v3487, 1.442695
    %v3491 = vpow.pop %v3490
    %v3492 = vadd.f32 %v3489, 1.0
    %v3493 = vadd.f32 %v3491, 1.0
    %v3494 = vrcp.pop %v3492
    %v3495 = vmul.f32 1.0, %v3494
    %v3496 = vrcp.pop %v3493
    %v3497 = vmul.f32 1.0, %v3496
    %v3498 = vtanh.pop %v3379
    %v3499 = vtanh.pop %v3384
    %v3500 = vmul.f32 %v3495, %v2964
    %v3501 = vmul.f32 %v3497, %v2965
    %3504 = vrot.lane.b32.xlu0 %v3498, 64
    %v3505 = vpop.permute.xlu0 %3504
    %3506 = vrot.lane.b32.xlu0 %v3499, 64
    %v3507 = vpop.permute.xlu0 %3506
    %v3510 = vmul.f32 %v3495, %v3505
    %v3511 = vmul.f32 %v3497, %v3507
    %3514 = vrot.lane.b32.xlu0 %v3510, 32
    %v3515 = vpop.permute.xlu0 %3514
    %3516 = vrot.lane.b32.xlu0 %v3511, 32
    %v3517 = vpop.permute.xlu0 %3516
    %v3520 = vadd.f32 %v3500, %v3515
    %v3521 = vadd.f32 %v3501, %v3517
    %v3522 = vtanh.pop %v3520
    %v3523 = vtanh.pop %v3521
    %3526 = vrot.lane.b32.xlu0 %v3522, 64
    %v3527 = vpop.permute.xlu0 %3526
    %3528 = vrot.lane.b32.xlu0 %v3523, 64
    %v3529 = vpop.permute.xlu0 %3528
    %v3532 = vmul.f32 %v3495, %v3527
    %v3533 = vmul.f32 %v3497, %v3529
    %v3534 = vxor.u32 %v3478, 2147483648
    %v3535 = vxor.u32 %v3483, 2147483648
    %v3536 = vmul.f32 %v3534, 1.442695
    %v3537 = vpow.pop %v3536
    %v3538 = vmul.f32 %v3535, 1.442695
    %v3539 = vpow.pop %v3538
    %v3540 = vadd.f32 %v3537, 1.0
    %v3541 = vadd.f32 %v3539, 1.0
    %v3542 = vrcp.pop %v3540
    %v3543 = vmul.f32 1.0, %v3542
    %v3544 = vrcp.pop %v3541
    %v3545 = vmul.f32 1.0, %v3544
    %v3546 = vtanh.pop %v3478
    %v3547 = vtanh.pop %v3483
    %v3548 = vmul.f32 %v3543, %v3012
    %v3549 = vmul.f32 %v3545, %v3013
    %3552 = vrot.lane.b32.xlu0 %v3546, 64
    %v3553 = vpop.permute.xlu0 %3552
    %3554 = vrot.lane.b32.xlu0 %v3547, 64
    %v3555 = vpop.permute.xlu0 %3554
    %v3558 = vmul.f32 %v3543, %v3553
    %v3559 = vmul.f32 %v3545, %v3555
    %3562 = vrot.lane.b32.xlu0 %v3558, 32
    %v3563 = vpop.permute.xlu0 %3562
    %3564 = vrot.lane.b32.xlu0 %v3559, 32
    %v3565 = vpop.permute.xlu0 %3564
    %v3568 = vadd.f32 %v3548, %v3563
    %v3569 = vadd.f32 %v3549, %v3565
    %v3570 = vtanh.pop %v3568
    %v3571 = vtanh.pop %v3569
    %3574 = vrot.lane.b32.xlu0 %v3570, 64
    %v3575 = vpop.permute.xlu0 %3574
    %3576 = vrot.lane.b32.xlu0 %v3571, 64
    %v3577 = vpop.permute.xlu0 %3576
    %v3580 = vmul.f32 %v3543, %v3575
    %v3581 = vmul.f32 %v3545, %v3577
    %v3582 = vld [vmem:[#allocation2 + $0xa0] sm:$0xff]
    %v3583 = vld [vmem:[#allocation2 + $0xa8] sm:$0xff]
    %v3584 = vld [vmem:[#allocation2 + $0xb0] sm:$0xff]
    %v3585 = vld [vmem:[#allocation2 + $0xb8] sm:$0xff]
    %v3586 = vsel %vm792, %v3291, 0
    %v3588 = vsel %vm792, %v3293, 0
    %3590 = vmatprep.subr.mxu0 0.0
    %3591 = vmatpush1.msra.mxu0 0.0
    %3592 = vmatprep.subr.mxu0 0.0
    %3593 = vmatpush1.msra.mxu0 0.0
    %3594 = vmatprep.subr.mxu0 0.0
    %3595 = vmatpush1.msra.mxu0 0.0
    %3596 = vmatprep.subr.mxu0 0.0
    %3597 = vmatpush1.msra.mxu0 0.0
    %3598 = vmatprep.subr.mxu0 0.0
    %3599 = vmatpush1.msra.mxu0 0.0
    %3600 = vmatprep.subr.mxu0 0.0
    %3601 = vmatpush1.msra.mxu0 0.0
    %3602 = vmatprep.subr.mxu0 0.0
    %3603 = vmatpush1.msra.mxu0 0.0
    %3604 = vmatprep.subr.mxu0 0.0
    %3605 = vmatpush1.msra.mxu0 0.0
    %3606 = vmatprep.subr.mxu0 0.0
    %3607 = vmatpush1.msra.mxu0 0.0
    %3608 = vmatprep.subr.mxu0 0.0
    %3609 = vmatpush1.msra.mxu0 0.0
    %3610 = vmatprep.subr.mxu0 0.0
    %3611 = vmatpush1.msra.mxu0 0.0
    %3612 = vmatprep.subr.mxu0 0.0
    %3613 = vmatpush1.msra.mxu0 0.0
    %3614 = vmatprep.subr.mxu0 0.0
    %3615 = vmatpush1.msra.mxu0 %v791
    %3616 = vmatprep.subr.mxu0 0.0
    %3617 = vmatpush1.msra.mxu0 %v790
    %3618 = vmatprep.subr.mxu0 0.0
    %3619 = vmatpush1.msra.mxu0 %v789
    %3620 = vmatprep.subr.mxu0 0.0
    %3621 = vmatpush1.msra.mxu0 %v788
    %3622 = vmatprep.subr.mxu0 0.0
    %3623 = vmatpush2.msra.mxu0 0.0
    %3624 = vmatprep.subr.mxu0 0.0
    %3625 = vmatpush2.msra.mxu0 0.0
    %3626 = vmatprep.subr.mxu0 0.0
    %3627 = vmatpush2.msra.mxu0 0.0
    %3628 = vmatprep.subr.mxu0 0.0
    %3629 = vmatpush2.msra.mxu0 0.0
    %3630 = vmatprep.subr.mxu0 0.0
    %3631 = vmatpush2.msra.mxu0 0.0
    %3632 = vmatprep.subr.mxu0 0.0
    %3633 = vmatpush2.msra.mxu0 0.0
    %3634 = vmatprep.subr.mxu0 0.0
    %3635 = vmatpush2.msra.mxu0 0.0
    %3636 = vmatprep.subr.mxu0 0.0
    %3637 = vmatpush2.msra.mxu0 0.0
    %3638 = vmatprep.subr.mxu0 0.0
    %3639 = vmatpush2.msra.mxu0 0.0
    %3640 = vmatprep.subr.mxu0 0.0
    %3641 = vmatpush2.msra.mxu0 0.0
    %3642 = vmatprep.subr.mxu0 0.0
    %3643 = vmatpush2.msra.mxu0 0.0
    %3644 = vmatprep.subr.mxu0 0.0
    %3645 = vmatpush2.msra.mxu0 0.0
    %3646 = vmatprep.subr.mxu0 0.0
    %3647 = vmatpush2.msra.mxu0 0.0
    %3648 = vmatprep.subr.mxu0 0.0
    %3649 = vmatpush2.msra.mxu0 0.0
    %3650 = vmatprep.subr.mxu0 0.0
    %3651 = vmatpush2.msra.mxu0 0.0
    %3652 = vmatprep.subr.mxu0 0.0
    %3653 = vmatpush2.msra.mxu0 0.0
    %3654 = vmatprep.mubr.f32.mxu0 0.0
    %3655 = vmatmul.mubr.f32.gmra.mxu0 %v3586
    %v3656 = vpop.f32.mrf.mxu0
    %v3657 = vadd.f32 0.0, %v3656
    %v3658 = vpop.f32.mrf.mxu0
    %3659 = vmatprep.mubr.f32.mxu0 0.0
    %3660 = vmatmul.mubr.f32.gmra.mxu0 %v3588
    %v3661 = vpop.f32.mrf.mxu0
    %v3662 = vadd.f32 0.0, %v3661
    %v3663 = vpop.f32.mrf.mxu0
    %3664 = vdwg.mxu0
    %v3665 = vadd.f32 %v3582, %v3657
    %v3666 = vadd.f32 %v3584, %v3662
    %v3667 = vsel %vm792, %v3390, 0
    %v3669 = vsel %vm792, %v3392, 0
    %3671 = vmatprep.subr.mxu0 0.0
    %3672 = vmatpush1.msra.mxu0 0.0
    %3673 = vmatprep.subr.mxu0 0.0
    %3674 = vmatpush1.msra.mxu0 0.0
    %3675 = vmatprep.subr.mxu0 0.0
    %3676 = vmatpush1.msra.mxu0 0.0
    %3677 = vmatprep.subr.mxu0 0.0
    %3678 = vmatpush1.msra.mxu0 0.0
    %3679 = vmatprep.subr.mxu0 0.0
    %3680 = vmatpush1.msra.mxu0 0.0
    %3681 = vmatprep.subr.mxu0 0.0
    %3682 = vmatpush1.msra.mxu0 0.0
    %3683 = vmatprep.subr.mxu0 0.0
    %3684 = vmatpush1.msra.mxu0 0.0
    %3685 = vmatprep.subr.mxu0 0.0
    %3686 = vmatpush1.msra.mxu0 0.0
    %3687 = vmatprep.subr.mxu0 0.0
    %3688 = vmatpush1.msra.mxu0 0.0
    %3689 = vmatprep.subr.mxu0 0.0
    %3690 = vmatpush1.msra.mxu0 0.0
    %3691 = vmatprep.subr.mxu0 0.0
    %3692 = vmatpush1.msra.mxu0 0.0
    %3693 = vmatprep.subr.mxu0 0.0
    %3694 = vmatpush1.msra.mxu0 0.0
    %3695 = vmatprep.subr.mxu0 0.0
    %3696 = vmatpush1.msra.mxu0 %v876
    %3697 = vmatprep.subr.mxu0 0.0
    %3698 = vmatpush1.msra.mxu0 %v875
    %3699 = vmatprep.subr.mxu0 0.0
    %3700 = vmatpush1.msra.mxu0 %v874
    %3701 = vmatprep.subr.mxu0 0.0
    %3702 = vmatpush1.msra.mxu0 %v873
    %3703 = vmatprep.subr.mxu0 0.0
    %3704 = vmatpush2.msra.mxu0 0.0
    %3705 = vmatprep.subr.mxu0 0.0
    %3706 = vmatpush2.msra.mxu0 0.0
    %3707 = vmatprep.subr.mxu0 0.0
    %3708 = vmatpush2.msra.mxu0 0.0
    %3709 = vmatprep.subr.mxu0 0.0
    %3710 = vmatpush2.msra.mxu0 0.0
    %3711 = vmatprep.subr.mxu0 0.0
    %3712 = vmatpush2.msra.mxu0 0.0
    %3713 = vmatprep.subr.mxu0 0.0
    %3714 = vmatpush2.msra.mxu0 0.0
    %3715 = vmatprep.subr.mxu0 0.0
    %3716 = vmatpush2.msra.mxu0 0.0
    %3717 = vmatprep.subr.mxu0 0.0
    %3718 = vmatpush2.msra.mxu0 0.0
    %3719 = vmatprep.subr.mxu0 0.0
    %3720 = vmatpush2.msra.mxu0 0.0
    %3721 = vmatprep.subr.mxu0 0.0
    %3722 = vmatpush2.msra.mxu0 0.0
    %3723 = vmatprep.subr.mxu0 0.0
    %3724 = vmatpush2.msra.mxu0 0.0
    %3725 = vmatprep.subr.mxu0 0.0
    %3726 = vmatpush2.msra.mxu0 0.0
    %3727 = vmatprep.subr.mxu0 0.0
    %3728 = vmatpush2.msra.mxu0 0.0
    %3729 = vmatprep.subr.mxu0 0.0
    %3730 = vmatpush2.msra.mxu0 0.0
    %3731 = vmatprep.subr.mxu0 0.0
    %3732 = vmatpush2.msra.mxu0 0.0
    %3733 = vmatprep.subr.mxu0 0.0
    %3734 = vmatpush2.msra.mxu0 0.0
    %3735 = vmatprep.mubr.f32.mxu0 0.0
    %3736 = vmatmul.mubr.f32.gmra.mxu0 %v3667
    %v3737 = vpop.f32.mrf.mxu0
    %v3738 = vadd.f32 0.0, %v3737
    %v3739 = vpop.f32.mrf.mxu0
    %3740 = vmatprep.mubr.f32.mxu0 0.0
    %3741 = vmatmul.mubr.f32.gmra.mxu0 %v3669
    %v3742 = vpop.f32.mrf.mxu0
    %v3743 = vadd.f32 0.0, %v3742
    %v3744 = vpop.f32.mrf.mxu0
    %3745 = vdwg.mxu0
    %v3746 = vadd.f32 %v3583, %v3738
    %v3747 = vadd.f32 %v3585, %v3743
    %v3748 = vxor.u32 %v3665, 2147483648
    %v3749 = vxor.u32 %v3666, 2147483648
    %v3750 = vmul.f32 %v3748, 1.442695
    %v3751 = vpow.pop %v3750
    %v3752 = vmul.f32 %v3749, 1.442695
    %v3753 = vpow.pop %v3752
    %v3754 = vadd.f32 %v3751, 1.0
    %v3755 = vadd.f32 %v3753, 1.0
    %v3756 = vrcp.pop %v3754
    %v3757 = vmul.f32 1.0, %v3756
    %v3758 = vrcp.pop %v3755
    %v3759 = vmul.f32 1.0, %v3758
    %v3760 = vtanh.pop %v3665
    %v3761 = vtanh.pop %v3666
    %v3762 = vmul.f32 %v3757, %v3226
    %v3763 = vmul.f32 %v3759, %v3227
    %3766 = vrot.lane.b32.xlu0 %v3760, 64
    %v3767 = vpop.permute.xlu0 %3766
    %3768 = vrot.lane.b32.xlu0 %v3761, 64
    %v3769 = vpop.permute.xlu0 %3768
    %v3772 = vmul.f32 %v3757, %v3767
    %v3773 = vmul.f32 %v3759, %v3769
    %3776 = vrot.lane.b32.xlu0 %v3772, 32
    %v3777 = vpop.permute.xlu0 %3776
    %3778 = vrot.lane.b32.xlu0 %v3773, 32
    %v3779 = vpop.permute.xlu0 %3778
    %v3782 = vadd.f32 %v3762, %v3777
    %v3783 = vadd.f32 %v3763, %v3779
    %v3784 = vtanh.pop %v3782
    %v3785 = vtanh.pop %v3783
    %3788 = vrot.lane.b32.xlu0 %v3784, 64
    %v3789 = vpop.permute.xlu0 %3788
    %3790 = vrot.lane.b32.xlu0 %v3785, 64
    %v3791 = vpop.permute.xlu0 %3790
    %v3794 = vmul.f32 %v3757, %v3789
    %v3795 = vmul.f32 %v3759, %v3791
    %v3796 = vxor.u32 %v3746, 2147483648
    %v3797 = vxor.u32 %v3747, 2147483648
    %v3798 = vmul.f32 %v3796, 1.442695
    %v3799 = vpow.pop %v3798
    %v3800 = vmul.f32 %v3797, 1.442695
    %v3801 = vpow.pop %v3800
    %v3802 = vadd.f32 %v3799, 1.0
    %v3803 = vadd.f32 %v3801, 1.0
    %v3804 = vrcp.pop %v3802
    %v3805 = vmul.f32 1.0, %v3804
    %v3806 = vrcp.pop %v3803
    %v3807 = vmul.f32 1.0, %v3806
    %v3808 = vtanh.pop %v3746
    %v3809 = vtanh.pop %v3747
    %v3810 = vmul.f32 %v3805, %v3274
    %v3811 = vmul.f32 %v3807, %v3275
    %3814 = vrot.lane.b32.xlu0 %v3808, 64
    %v3815 = vpop.permute.xlu0 %3814
    %3816 = vrot.lane.b32.xlu0 %v3809, 64
    %v3817 = vpop.permute.xlu0 %3816
    %v3820 = vmul.f32 %v3805, %v3815
    %v3821 = vmul.f32 %v3807, %v3817
    %3824 = vrot.lane.b32.xlu0 %v3820, 32
    %v3825 = vpop.permute.xlu0 %3824
    %3826 = vrot.lane.b32.xlu0 %v3821, 32
    %v3827 = vpop.permute.xlu0 %3826
    %v3830 = vadd.f32 %v3810, %v3825
    %v3831 = vadd.f32 %v3811, %v3827
    %v3832 = vtanh.pop %v3830
    %v3833 = vtanh.pop %v3831
    %3836 = vrot.lane.b32.xlu0 %v3832, 64
    %v3837 = vpop.permute.xlu0 %3836
    %3838 = vrot.lane.b32.xlu0 %v3833, 64
    %v3839 = vpop.permute.xlu0 %3838
    %v3842 = vmul.f32 %v3805, %v3837
    %v3843 = vmul.f32 %v3807, %v3839
    %3846 = vrot.lane.b32.xlu0 %v3794, 32
    %v3847 = vpop.permute.xlu0 %3846
    %3848 = vrot.lane.b32.xlu0 %v3795, 32
    %v3849 = vpop.permute.xlu0 %3848
    %3854 = vrot.lane.b32.xlu0 %v3532, 64
    %v3855 = vpop.permute.xlu0 %3854
    %3856 = vrot.lane.b32.xlu0 %v3533, 64
    %v3857 = vpop.permute.xlu0 %3856
    %v3860 = vsel %vm792, %v3847, %v3855
    %v3861 = vsel %vm792, %v3849, %v3857
    %v3863 = vsel %vm542, %v3860, 0
    %v3866 = vsel %vm542, %v3861, 0
    %3868 = vmatprep.subr.mxu0 0.0
    %3869 = vmatpush1.msra.mxu0 0.0
    %3870 = vmatprep.subr.mxu0 0.0
    %3871 = vmatpush1.msra.mxu0 0.0
    %3872 = vmatprep.subr.mxu0 0.0
    %3873 = vmatpush1.msra.mxu0 0.0
    %3874 = vmatprep.subr.mxu0 0.0
    %3875 = vmatpush1.msra.mxu0 0.0
    %3876 = vmatprep.subr.mxu0 0.0
    %3877 = vmatpush1.msra.mxu0 0.0
    %3878 = vmatprep.subr.mxu0 0.0
    %3879 = vmatpush1.msra.mxu0 0.0
    %3880 = vmatprep.subr.mxu0 0.0
    %3881 = vmatpush1.msra.mxu0 0.0
    %3882 = vmatprep.subr.mxu0 0.0
    %3883 = vmatpush1.msra.mxu0 0.0
    %3884 = vmatprep.subr.mxu0 0.0
    %3885 = vmatpush1.msra.mxu0 %v1067
    %3886 = vmatprep.subr.mxu0 0.0
    %3887 = vmatpush1.msra.mxu0 %v1066
    %3888 = vmatprep.subr.mxu0 0.0
    %3889 = vmatpush1.msra.mxu0 %v1065
    %3890 = vmatprep.subr.mxu0 0.0
    %3891 = vmatpush1.msra.mxu0 %v1064
    %3892 = vmatprep.subr.mxu0 0.0
    %3893 = vmatpush1.msra.mxu0 %v1063
    %3894 = vmatprep.subr.mxu0 0.0
    %3895 = vmatpush1.msra.mxu0 %v1062
    %3896 = vmatprep.subr.mxu0 0.0
    %3897 = vmatpush1.msra.mxu0 %v1061
    %3898 = vmatprep.subr.mxu0 0.0
    %3899 = vmatpush1.msra.mxu0 %v1060
    %3900 = vmatprep.subr.mxu0 0.0
    %3901 = vmatpush2.msra.mxu0 0.0
    %3902 = vmatprep.subr.mxu0 0.0
    %3903 = vmatpush2.msra.mxu0 0.0
    %3904 = vmatprep.subr.mxu0 0.0
    %3905 = vmatpush2.msra.mxu0 0.0
    %3906 = vmatprep.subr.mxu0 0.0
    %3907 = vmatpush2.msra.mxu0 0.0
    %3908 = vmatprep.subr.mxu0 0.0
    %3909 = vmatpush2.msra.mxu0 0.0
    %3910 = vmatprep.subr.mxu0 0.0
    %3911 = vmatpush2.msra.mxu0 0.0
    %3912 = vmatprep.subr.mxu0 0.0
    %3913 = vmatpush2.msra.mxu0 0.0
    %3914 = vmatprep.subr.mxu0 0.0
    %3915 = vmatpush2.msra.mxu0 0.0
    %3916 = vmatprep.subr.mxu0 0.0
    %3917 = vmatpush2.msra.mxu0 0.0
    %3918 = vmatprep.subr.mxu0 0.0
    %3919 = vmatpush2.msra.mxu0 0.0
    %3920 = vmatprep.subr.mxu0 0.0
    %3921 = vmatpush2.msra.mxu0 0.0
    %3922 = vmatprep.subr.mxu0 0.0
    %3923 = vmatpush2.msra.mxu0 0.0
    %3924 = vmatprep.subr.mxu0 0.0
    %3925 = vmatpush2.msra.mxu0 0.0
    %3926 = vmatprep.subr.mxu0 0.0
    %3927 = vmatpush2.msra.mxu0 0.0
    %3928 = vmatprep.subr.mxu0 0.0
    %3929 = vmatpush2.msra.mxu0 0.0
    %3930 = vmatprep.subr.mxu0 0.0
    %3931 = vmatpush2.msra.mxu0 0.0
    %3932 = vmatprep.mubr.f32.mxu0 0.0
    %3933 = vmatmul.mubr.f32.gmra.mxu0 %v3863
    %v3934 = vpop.f32.mrf.mxu0
    %v3935 = vadd.f32 %v1073, %v3934
    %v3936 = vpop.f32.mrf.mxu0
    %3937 = vmatprep.mubr.f32.mxu0 0.0
    %3938 = vmatmul.mubr.f32.gmra.mxu0 %v3866
    %v3939 = vpop.f32.mrf.mxu0
    %v3940 = vadd.f32 %v1073, %v3939
    %v3941 = vpop.f32.mrf.mxu0
    %3942 = vdwg.mxu0
    %3945 = vrot.lane.b32.xlu0 %v3842, 32
    %v3946 = vpop.permute.xlu0 %3945
    %3947 = vrot.lane.b32.xlu0 %v3843, 32
    %v3948 = vpop.permute.xlu0 %3947
    %3953 = vrot.lane.b32.xlu0 %v3580, 64
    %v3954 = vpop.permute.xlu0 %3953
    %3955 = vrot.lane.b32.xlu0 %v3581, 64
    %v3956 = vpop.permute.xlu0 %3955
    %v3959 = vsel %vm792, %v3946, %v3954
    %v3960 = vsel %vm792, %v3948, %v3956
    %v3962 = vsel %vm542, %v3959, 0
    %v3965 = vsel %vm542, %v3960, 0
    %3967 = vmatprep.subr.mxu0 0.0
    %3968 = vmatpush1.msra.mxu0 0.0
    %3969 = vmatprep.subr.mxu0 0.0
    %3970 = vmatpush1.msra.mxu0 0.0
    %3971 = vmatprep.subr.mxu0 0.0
    %3972 = vmatpush1.msra.mxu0 0.0
    %3973 = vmatprep.subr.mxu0 0.0
    %3974 = vmatpush1.msra.mxu0 0.0
    %3975 = vmatprep.subr.mxu0 0.0
    %3976 = vmatpush1.msra.mxu0 0.0
    %3977 = vmatprep.subr.mxu0 0.0
    %3978 = vmatpush1.msra.mxu0 0.0
    %3979 = vmatprep.subr.mxu0 0.0
    %3980 = vmatpush1.msra.mxu0 0.0
    %3981 = vmatprep.subr.mxu0 0.0
    %3982 = vmatpush1.msra.mxu0 0.0
    %3983 = vmatprep.subr.mxu0 0.0
    %3984 = vmatpush1.msra.mxu0 %v1173
    %3985 = vmatprep.subr.mxu0 0.0
    %3986 = vmatpush1.msra.mxu0 %v1172
    %3987 = vmatprep.subr.mxu0 0.0
    %3988 = vmatpush1.msra.mxu0 %v1171
    %3989 = vmatprep.subr.mxu0 0.0
    %3990 = vmatpush1.msra.mxu0 %v1170
    %3991 = vmatprep.subr.mxu0 0.0
    %3992 = vmatpush1.msra.mxu0 %v1169
    %3993 = vmatprep.subr.mxu0 0.0
    %3994 = vmatpush1.msra.mxu0 %v1168
    %3995 = vmatprep.subr.mxu0 0.0
    %3996 = vmatpush1.msra.mxu0 %v1167
    %3997 = vmatprep.subr.mxu0 0.0
    %3998 = vmatpush1.msra.mxu0 %v1166
    %3999 = vmatprep.subr.mxu0 0.0
    %4000 = vmatpush2.msra.mxu0 0.0
    %4001 = vmatprep.subr.mxu0 0.0
    %4002 = vmatpush2.msra.mxu0 0.0
    %4003 = vmatprep.subr.mxu0 0.0
    %4004 = vmatpush2.msra.mxu0 0.0
    %4005 = vmatprep.subr.mxu0 0.0
    %4006 = vmatpush2.msra.mxu0 0.0
    %4007 = vmatprep.subr.mxu0 0.0
    %4008 = vmatpush2.msra.mxu0 0.0
    %4009 = vmatprep.subr.mxu0 0.0
    %4010 = vmatpush2.msra.mxu0 0.0
    %4011 = vmatprep.subr.mxu0 0.0
    %4012 = vmatpush2.msra.mxu0 0.0
    %4013 = vmatprep.subr.mxu0 0.0
    %4014 = vmatpush2.msra.mxu0 0.0
    %4015 = vmatprep.subr.mxu0 0.0
    %4016 = vmatpush2.msra.mxu0 0.0
    %4017 = vmatprep.subr.mxu0 0.0
    %4018 = vmatpush2.msra.mxu0 0.0
    %4019 = vmatprep.subr.mxu0 0.0
    %4020 = vmatpush2.msra.mxu0 0.0
    %4021 = vmatprep.subr.mxu0 0.0
    %4022 = vmatpush2.msra.mxu0 0.0
    %4023 = vmatprep.subr.mxu0 0.0
    %4024 = vmatpush2.msra.mxu0 0.0
    %4025 = vmatprep.subr.mxu0 0.0
    %4026 = vmatpush2.msra.mxu0 0.0
    %4027 = vmatprep.subr.mxu0 0.0
    %4028 = vmatpush2.msra.mxu0 0.0
    %4029 = vmatprep.subr.mxu0 0.0
    %4030 = vmatpush2.msra.mxu0 0.0
    %4031 = vmatprep.mubr.f32.mxu0 0.0
    %4032 = vmatmul.mubr.f32.gmra.mxu0 %v3962
    %v4033 = vpop.f32.mrf.mxu0
    %v4034 = vadd.f32 %v1179, %v4033
    %v4035 = vpop.f32.mrf.mxu0
    %4036 = vmatprep.mubr.f32.mxu0 0.0
    %4037 = vmatmul.mubr.f32.gmra.mxu0 %v3965
    %v4038 = vpop.f32.mrf.mxu0
    %v4039 = vadd.f32 %v1179, %v4038
    %v4040 = vpop.f32.mrf.mxu0
    %4041 = vdwg.mxu0
    %v4042 = vxor.u32 %v3935, 2147483648
    %v4043 = vxor.u32 %v3940, 2147483648
    %v4044 = vmul.f32 %v4042, 1.442695
    %v4045 = vpow.pop %v4044
    %v4046 = vmul.f32 %v4043, 1.442695
    %v4047 = vpow.pop %v4046
    %v4048 = vadd.f32 %v4045, 1.0
    %v4049 = vadd.f32 %v4047, 1.0
    %v4050 = vrcp.pop %v4048
    %v4051 = vmul.f32 1.0, %v4050
    %v4052 = vrcp.pop %v4049
    %v4053 = vmul.f32 1.0, %v4052
    %v4054 = vtanh.pop %v3935
    %v4055 = vtanh.pop %v3940
    %v4056 = vmul.f32 %v4051, %v3520
    %v4057 = vmul.f32 %v4053, %v3521
    %4060 = vrot.lane.b32.xlu0 %v4054, 64
    %v4061 = vpop.permute.xlu0 %4060
    %4062 = vrot.lane.b32.xlu0 %v4055, 64
    %v4063 = vpop.permute.xlu0 %4062
    %v4066 = vmul.f32 %v4051, %v4061
    %v4067 = vmul.f32 %v4053, %v4063
    %4070 = vrot.lane.b32.xlu0 %v4066, 32
    %v4071 = vpop.permute.xlu0 %4070
    %4072 = vrot.lane.b32.xlu0 %v4067, 32
    %v4073 = vpop.permute.xlu0 %4072
    %v4076 = vadd.f32 %v4056, %v4071
    %v4077 = vadd.f32 %v4057, %v4073
    %v4078 = vtanh.pop %v4076
    %v4079 = vtanh.pop %v4077
    %4082 = vrot.lane.b32.xlu0 %v4078, 64
    %v4083 = vpop.permute.xlu0 %4082
    %4084 = vrot.lane.b32.xlu0 %v4079, 64
    %v4085 = vpop.permute.xlu0 %4084
    %v4088 = vmul.f32 %v4051, %v4083
    %v4089 = vmul.f32 %v4053, %v4085
    %v4090 = vxor.u32 %v4034, 2147483648
    %v4091 = vxor.u32 %v4039, 2147483648
    %v4092 = vmul.f32 %v4090, 1.442695
    %v4093 = vpow.pop %v4092
    %v4094 = vmul.f32 %v4091, 1.442695
    %v4095 = vpow.pop %v4094
    %v4096 = vadd.f32 %v4093, 1.0
    %v4097 = vadd.f32 %v4095, 1.0
    %v4098 = vrcp.pop %v4096
    %v4099 = vmul.f32 1.0, %v4098
    %v4100 = vrcp.pop %v4097
    %v4101 = vmul.f32 1.0, %v4100
    %v4102 = vtanh.pop %v4034
    %v4103 = vtanh.pop %v4039
    %v4104 = vmul.f32 %v4099, %v3568
    %v4105 = vmul.f32 %v4101, %v3569
    %4108 = vrot.lane.b32.xlu0 %v4102, 64
    %v4109 = vpop.permute.xlu0 %4108
    %4110 = vrot.lane.b32.xlu0 %v4103, 64
    %v4111 = vpop.permute.xlu0 %4110
    %v4114 = vmul.f32 %v4099, %v4109
    %v4115 = vmul.f32 %v4101, %v4111
    %4118 = vrot.lane.b32.xlu0 %v4114, 32
    %v4119 = vpop.permute.xlu0 %4118
    %4120 = vrot.lane.b32.xlu0 %v4115, 32
    %v4121 = vpop.permute.xlu0 %4120
    %v4124 = vadd.f32 %v4104, %v4119
    %v4125 = vadd.f32 %v4105, %v4121
    %v4126 = vtanh.pop %v4124
    %v4127 = vtanh.pop %v4125
    %4130 = vrot.lane.b32.xlu0 %v4126, 64
    %v4131 = vpop.permute.xlu0 %4130
    %4132 = vrot.lane.b32.xlu0 %v4127, 64
    %v4133 = vpop.permute.xlu0 %4132
    %v4136 = vmul.f32 %v4099, %v4131
    %v4137 = vmul.f32 %v4101, %v4133
    %v4138 = vld [vmem:[#allocation2 + $0xc0] sm:$0xff]
    %v4139 = vld [vmem:[#allocation2 + $0xc8] sm:$0xff]
    %v4140 = vld [vmem:[#allocation2 + $0xd0] sm:$0xff]
    %v4141 = vld [vmem:[#allocation2 + $0xd8] sm:$0xff]
    %v4142 = vsel %vm792, %v3847, 0
    %v4144 = vsel %vm792, %v3849, 0
    %4146 = vmatprep.subr.mxu0 0.0
    %4147 = vmatpush1.msra.mxu0 0.0
    %4148 = vmatprep.subr.mxu0 0.0
    %4149 = vmatpush1.msra.mxu0 0.0
    %4150 = vmatprep.subr.mxu0 0.0
    %4151 = vmatpush1.msra.mxu0 0.0
    %4152 = vmatprep.subr.mxu0 0.0
    %4153 = vmatpush1.msra.mxu0 0.0
    %4154 = vmatprep.subr.mxu0 0.0
    %4155 = vmatpush1.msra.mxu0 0.0
    %4156 = vmatprep.subr.mxu0 0.0
    %4157 = vmatpush1.msra.mxu0 0.0
    %4158 = vmatprep.subr.mxu0 0.0
    %4159 = vmatpush1.msra.mxu0 0.0
    %4160 = vmatprep.subr.mxu0 0.0
    %4161 = vmatpush1.msra.mxu0 0.0
    %4162 = vmatprep.subr.mxu0 0.0
    %4163 = vmatpush1.msra.mxu0 0.0
    %4164 = vmatprep.subr.mxu0 0.0
    %4165 = vmatpush1.msra.mxu0 0.0
    %4166 = vmatprep.subr.mxu0 0.0
    %4167 = vmatpush1.msra.mxu0 0.0
    %4168 = vmatprep.subr.mxu0 0.0
    %4169 = vmatpush1.msra.mxu0 0.0
    %4170 = vmatprep.subr.mxu0 0.0
    %4171 = vmatpush1.msra.mxu0 %v791
    %4172 = vmatprep.subr.mxu0 0.0
    %4173 = vmatpush1.msra.mxu0 %v790
    %4174 = vmatprep.subr.mxu0 0.0
    %4175 = vmatpush1.msra.mxu0 %v789
    %4176 = vmatprep.subr.mxu0 0.0
    %4177 = vmatpush1.msra.mxu0 %v788
    %4178 = vmatprep.subr.mxu0 0.0
    %4179 = vmatpush2.msra.mxu0 0.0
    %4180 = vmatprep.subr.mxu0 0.0
    %4181 = vmatpush2.msra.mxu0 0.0
    %4182 = vmatprep.subr.mxu0 0.0
    %4183 = vmatpush2.msra.mxu0 0.0
    %4184 = vmatprep.subr.mxu0 0.0
    %4185 = vmatpush2.msra.mxu0 0.0
    %4186 = vmatprep.subr.mxu0 0.0
    %4187 = vmatpush2.msra.mxu0 0.0
    %4188 = vmatprep.subr.mxu0 0.0
    %4189 = vmatpush2.msra.mxu0 0.0
    %4190 = vmatprep.subr.mxu0 0.0
    %4191 = vmatpush2.msra.mxu0 0.0
    %4192 = vmatprep.subr.mxu0 0.0
    %4193 = vmatpush2.msra.mxu0 0.0
    %4194 = vmatprep.subr.mxu0 0.0
    %4195 = vmatpush2.msra.mxu0 0.0
    %4196 = vmatprep.subr.mxu0 0.0
    %4197 = vmatpush2.msra.mxu0 0.0
    %4198 = vmatprep.subr.mxu0 0.0
    %4199 = vmatpush2.msra.mxu0 0.0
    %4200 = vmatprep.subr.mxu0 0.0
    %4201 = vmatpush2.msra.mxu0 0.0
    %4202 = vmatprep.subr.mxu0 0.0
    %4203 = vmatpush2.msra.mxu0 0.0
    %4204 = vmatprep.subr.mxu0 0.0
    %4205 = vmatpush2.msra.mxu0 0.0
    %4206 = vmatprep.subr.mxu0 0.0
    %4207 = vmatpush2.msra.mxu0 0.0
    %4208 = vmatprep.subr.mxu0 0.0
    %4209 = vmatpush2.msra.mxu0 0.0
    %4210 = vmatprep.mubr.f32.mxu0 0.0
    %4211 = vmatmul.mubr.f32.gmra.mxu0 %v4142
    %v4212 = vpop.f32.mrf.mxu0
    %v4213 = vadd.f32 0.0, %v4212
    %v4214 = vpop.f32.mrf.mxu0
    %4215 = vmatprep.mubr.f32.mxu0 0.0
    %4216 = vmatmul.mubr.f32.gmra.mxu0 %v4144
    %v4217 = vpop.f32.mrf.mxu0
    %v4218 = vadd.f32 0.0, %v4217
    %v4219 = vpop.f32.mrf.mxu0
    %4220 = vdwg.mxu0
    %v4221 = vadd.f32 %v4138, %v4213
    %v4222 = vadd.f32 %v4140, %v4218
    %v4223 = vsel %vm792, %v3946, 0
    %v4225 = vsel %vm792, %v3948, 0
    %4227 = vmatprep.subr.mxu0 0.0
    %4228 = vmatpush1.msra.mxu0 0.0
    %4229 = vmatprep.subr.mxu0 0.0
    %4230 = vmatpush1.msra.mxu0 0.0
    %4231 = vmatprep.subr.mxu0 0.0
    %4232 = vmatpush1.msra.mxu0 0.0
    %4233 = vmatprep.subr.mxu0 0.0
    %4234 = vmatpush1.msra.mxu0 0.0
    %4235 = vmatprep.subr.mxu0 0.0
    %4236 = vmatpush1.msra.mxu0 0.0
    %4237 = vmatprep.subr.mxu0 0.0
    %4238 = vmatpush1.msra.mxu0 0.0
    %4239 = vmatprep.subr.mxu0 0.0
    %4240 = vmatpush1.msra.mxu0 0.0
    %4241 = vmatprep.subr.mxu0 0.0
    %4242 = vmatpush1.msra.mxu0 0.0
    %4243 = vmatprep.subr.mxu0 0.0
    %4244 = vmatpush1.msra.mxu0 0.0
    %4245 = vmatprep.subr.mxu0 0.0
    %4246 = vmatpush1.msra.mxu0 0.0
    %4247 = vmatprep.subr.mxu0 0.0
    %4248 = vmatpush1.msra.mxu0 0.0
    %4249 = vmatprep.subr.mxu0 0.0
    %4250 = vmatpush1.msra.mxu0 0.0
    %4251 = vmatprep.subr.mxu0 0.0
    %4252 = vmatpush1.msra.mxu0 %v876
    %4253 = vmatprep.subr.mxu0 0.0
    %4254 = vmatpush1.msra.mxu0 %v875
    %4255 = vmatprep.subr.mxu0 0.0
    %4256 = vmatpush1.msra.mxu0 %v874
    %4257 = vmatprep.subr.mxu0 0.0
    %4258 = vmatpush1.msra.mxu0 %v873
    %4259 = vmatprep.subr.mxu0 0.0
    %4260 = vmatpush2.msra.mxu0 0.0
    %4261 = vmatprep.subr.mxu0 0.0
    %4262 = vmatpush2.msra.mxu0 0.0
    %4263 = vmatprep.subr.mxu0 0.0
    %4264 = vmatpush2.msra.mxu0 0.0
    %4265 = vmatprep.subr.mxu0 0.0
    %4266 = vmatpush2.msra.mxu0 0.0
    %4267 = vmatprep.subr.mxu0 0.0
    %4268 = vmatpush2.msra.mxu0 0.0
    %4269 = vmatprep.subr.mxu0 0.0
    %4270 = vmatpush2.msra.mxu0 0.0
    %4271 = vmatprep.subr.mxu0 0.0
    %4272 = vmatpush2.msra.mxu0 0.0
    %4273 = vmatprep.subr.mxu0 0.0
    %4274 = vmatpush2.msra.mxu0 0.0
    %4275 = vmatprep.subr.mxu0 0.0
    %4276 = vmatpush2.msra.mxu0 0.0
    %4277 = vmatprep.subr.mxu0 0.0
    %4278 = vmatpush2.msra.mxu0 0.0
    %4279 = vmatprep.subr.mxu0 0.0
    %4280 = vmatpush2.msra.mxu0 0.0
    %4281 = vmatprep.subr.mxu0 0.0
    %4282 = vmatpush2.msra.mxu0 0.0
    %4283 = vmatprep.subr.mxu0 0.0
    %4284 = vmatpush2.msra.mxu0 0.0
    %4285 = vmatprep.subr.mxu0 0.0
    %4286 = vmatpush2.msra.mxu0 0.0
    %4287 = vmatprep.subr.mxu0 0.0
    %4288 = vmatpush2.msra.mxu0 0.0
    %4289 = vmatprep.subr.mxu0 0.0
    %4290 = vmatpush2.msra.mxu0 0.0
    %4291 = vmatprep.mubr.f32.mxu0 0.0
    %4292 = vmatmul.mubr.f32.gmra.mxu0 %v4223
    %v4293 = vpop.f32.mrf.mxu0
    %v4294 = vadd.f32 0.0, %v4293
    %v4295 = vpop.f32.mrf.mxu0
    %4296 = vmatprep.mubr.f32.mxu0 0.0
    %4297 = vmatmul.mubr.f32.gmra.mxu0 %v4225
    %v4298 = vpop.f32.mrf.mxu0
    %v4299 = vadd.f32 0.0, %v4298
    %v4300 = vpop.f32.mrf.mxu0
    %4301 = vdwg.mxu0
    %v4302 = vadd.f32 %v4139, %v4294
    %v4303 = vadd.f32 %v4141, %v4299
    %v4304 = vxor.u32 %v4221, 2147483648
    %v4305 = vxor.u32 %v4222, 2147483648
    %v4306 = vmul.f32 %v4304, 1.442695
    %v4307 = vpow.pop %v4306
    %v4308 = vmul.f32 %v4305, 1.442695
    %v4309 = vpow.pop %v4308
    %v4310 = vadd.f32 %v4307, 1.0
    %v4311 = vadd.f32 %v4309, 1.0
    %v4312 = vrcp.pop %v4310
    %v4313 = vmul.f32 1.0, %v4312
    %v4314 = vrcp.pop %v4311
    %v4315 = vmul.f32 1.0, %v4314
    %v4316 = vtanh.pop %v4221
    %v4317 = vtanh.pop %v4222
    %v4318 = vmul.f32 %v4313, %v3782
    %v4319 = vmul.f32 %v4315, %v3783
    %4322 = vrot.lane.b32.xlu0 %v4316, 64
    %v4323 = vpop.permute.xlu0 %4322
    %4324 = vrot.lane.b32.xlu0 %v4317, 64
    %v4325 = vpop.permute.xlu0 %4324
    %v4328 = vmul.f32 %v4313, %v4323
    %v4329 = vmul.f32 %v4315, %v4325
    %4332 = vrot.lane.b32.xlu0 %v4328, 32
    %v4333 = vpop.permute.xlu0 %4332
    %4334 = vrot.lane.b32.xlu0 %v4329, 32
    %v4335 = vpop.permute.xlu0 %4334
    %v4338 = vadd.f32 %v4318, %v4333
    %v4339 = vadd.f32 %v4319, %v4335
    %v4340 = vtanh.pop %v4338
    %v4341 = vtanh.pop %v4339
    %4344 = vrot.lane.b32.xlu0 %v4340, 64
    %v4345 = vpop.permute.xlu0 %4344
    %4346 = vrot.lane.b32.xlu0 %v4341, 64
    %v4347 = vpop.permute.xlu0 %4346
    %v4350 = vmul.f32 %v4313, %v4345
    %v4351 = vmul.f32 %v4315, %v4347
    %v4352 = vxor.u32 %v4302, 2147483648
    %v4353 = vxor.u32 %v4303, 2147483648
    %v4354 = vmul.f32 %v4352, 1.442695
    %v4355 = vpow.pop %v4354
    %v4356 = vmul.f32 %v4353, 1.442695
    %v4357 = vpow.pop %v4356
    %v4358 = vadd.f32 %v4355, 1.0
    %v4359 = vadd.f32 %v4357, 1.0
    %v4360 = vrcp.pop %v4358
    %v4361 = vmul.f32 1.0, %v4360
    %v4362 = vrcp.pop %v4359
    %v4363 = vmul.f32 1.0, %v4362
    %v4364 = vtanh.pop %v4302
    %v4365 = vtanh.pop %v4303
    %v4366 = vmul.f32 %v4361, %v3830
    %v4367 = vmul.f32 %v4363, %v3831
    %4370 = vrot.lane.b32.xlu0 %v4364, 64
    %v4371 = vpop.permute.xlu0 %4370
    %4372 = vrot.lane.b32.xlu0 %v4365, 64
    %v4373 = vpop.permute.xlu0 %4372
    %v4376 = vmul.f32 %v4361, %v4371
    %v4377 = vmul.f32 %v4363, %v4373
    %4380 = vrot.lane.b32.xlu0 %v4376, 32
    %v4381 = vpop.permute.xlu0 %4380
    %4382 = vrot.lane.b32.xlu0 %v4377, 32
    %v4383 = vpop.permute.xlu0 %4382
    %v4386 = vadd.f32 %v4366, %v4381
    %v4387 = vadd.f32 %v4367, %v4383
    %v4388 = vtanh.pop %v4386
    %v4389 = vtanh.pop %v4387
    %4392 = vrot.lane.b32.xlu0 %v4388, 64
    %v4393 = vpop.permute.xlu0 %4392
    %4394 = vrot.lane.b32.xlu0 %v4389, 64
    %v4395 = vpop.permute.xlu0 %4394
    %v4398 = vmul.f32 %v4361, %v4393
    %v4399 = vmul.f32 %v4363, %v4395
    %4402 = vrot.lane.b32.xlu0 %v4350, 32
    %v4403 = vpop.permute.xlu0 %4402
    %4404 = vrot.lane.b32.xlu0 %v4351, 32
    %v4405 = vpop.permute.xlu0 %4404
    %4410 = vrot.lane.b32.xlu0 %v4088, 64
    %v4411 = vpop.permute.xlu0 %4410
    %4412 = vrot.lane.b32.xlu0 %v4089, 64
    %v4413 = vpop.permute.xlu0 %4412
    %v4416 = vsel %vm792, %v4403, %v4411
    %v4417 = vsel %vm792, %v4405, %v4413
    %v4419 = vsel %vm542, %v4416, 0
    %v4422 = vsel %vm542, %v4417, 0
    %4424 = vmatprep.subr.mxu0 0.0
    %4425 = vmatpush1.msra.mxu0 0.0
    %4426 = vmatprep.subr.mxu0 0.0
    %4427 = vmatpush1.msra.mxu0 0.0
    %4428 = vmatprep.subr.mxu0 0.0
    %4429 = vmatpush1.msra.mxu0 0.0
    %4430 = vmatprep.subr.mxu0 0.0
    %4431 = vmatpush1.msra.mxu0 0.0
    %4432 = vmatprep.subr.mxu0 0.0
    %4433 = vmatpush1.msra.mxu0 0.0
    %4434 = vmatprep.subr.mxu0 0.0
    %4435 = vmatpush1.msra.mxu0 0.0
    %4436 = vmatprep.subr.mxu0 0.0
    %4437 = vmatpush1.msra.mxu0 0.0
    %4438 = vmatprep.subr.mxu0 0.0
    %4439 = vmatpush1.msra.mxu0 0.0
    %4440 = vmatprep.subr.mxu0 0.0
    %4441 = vmatpush1.msra.mxu0 %v1067
    %4442 = vmatprep.subr.mxu0 0.0
    %4443 = vmatpush1.msra.mxu0 %v1066
    %4444 = vmatprep.subr.mxu0 0.0
    %4445 = vmatpush1.msra.mxu0 %v1065
    %4446 = vmatprep.subr.mxu0 0.0
    %4447 = vmatpush1.msra.mxu0 %v1064
    %4448 = vmatprep.subr.mxu0 0.0
    %4449 = vmatpush1.msra.mxu0 %v1063
    %4450 = vmatprep.subr.mxu0 0.0
    %4451 = vmatpush1.msra.mxu0 %v1062
    %4452 = vmatprep.subr.mxu0 0.0
    %4453 = vmatpush1.msra.mxu0 %v1061
    %4454 = vmatprep.subr.mxu0 0.0
    %4455 = vmatpush1.msra.mxu0 %v1060
    %4456 = vmatprep.subr.mxu0 0.0
    %4457 = vmatpush2.msra.mxu0 0.0
    %4458 = vmatprep.subr.mxu0 0.0
    %4459 = vmatpush2.msra.mxu0 0.0
    %4460 = vmatprep.subr.mxu0 0.0
    %4461 = vmatpush2.msra.mxu0 0.0
    %4462 = vmatprep.subr.mxu0 0.0
    %4463 = vmatpush2.msra.mxu0 0.0
    %4464 = vmatprep.subr.mxu0 0.0
    %4465 = vmatpush2.msra.mxu0 0.0
    %4466 = vmatprep.subr.mxu0 0.0
    %4467 = vmatpush2.msra.mxu0 0.0
    %4468 = vmatprep.subr.mxu0 0.0
    %4469 = vmatpush2.msra.mxu0 0.0
    %4470 = vmatprep.subr.mxu0 0.0
    %4471 = vmatpush2.msra.mxu0 0.0
    %4472 = vmatprep.subr.mxu0 0.0
    %4473 = vmatpush2.msra.mxu0 0.0
    %4474 = vmatprep.subr.mxu0 0.0
    %4475 = vmatpush2.msra.mxu0 0.0
    %4476 = vmatprep.subr.mxu0 0.0
    %4477 = vmatpush2.msra.mxu0 0.0
    %4478 = vmatprep.subr.mxu0 0.0
    %4479 = vmatpush2.msra.mxu0 0.0
    %4480 = vmatprep.subr.mxu0 0.0
    %4481 = vmatpush2.msra.mxu0 0.0
    %4482 = vmatprep.subr.mxu0 0.0
    %4483 = vmatpush2.msra.mxu0 0.0
    %4484 = vmatprep.subr.mxu0 0.0
    %4485 = vmatpush2.msra.mxu0 0.0
    %4486 = vmatprep.subr.mxu0 0.0
    %4487 = vmatpush2.msra.mxu0 0.0
    %4488 = vmatprep.mubr.f32.mxu0 0.0
    %4489 = vmatmul.mubr.f32.gmra.mxu0 %v4419
    %v4490 = vpop.f32.mrf.mxu0
    %v4491 = vadd.f32 %v1073, %v4490
    %v4492 = vpop.f32.mrf.mxu0
    %4493 = vmatprep.mubr.f32.mxu0 0.0
    %4494 = vmatmul.mubr.f32.gmra.mxu0 %v4422
    %v4495 = vpop.f32.mrf.mxu0
    %v4496 = vadd.f32 %v1073, %v4495
    %v4497 = vpop.f32.mrf.mxu0
    %4498 = vdwg.mxu0
    %4501 = vrot.lane.b32.xlu0 %v4398, 32
    %v4502 = vpop.permute.xlu0 %4501
    %4503 = vrot.lane.b32.xlu0 %v4399, 32
    %v4504 = vpop.permute.xlu0 %4503
    %4509 = vrot.lane.b32.xlu0 %v4136, 64
    %v4510 = vpop.permute.xlu0 %4509
    %4511 = vrot.lane.b32.xlu0 %v4137, 64
    %v4512 = vpop.permute.xlu0 %4511
    %v4515 = vsel %vm792, %v4502, %v4510
    %v4516 = vsel %vm792, %v4504, %v4512
    %v4518 = vsel %vm542, %v4515, 0
    %v4521 = vsel %vm542, %v4516, 0
    %4523 = vmatprep.subr.mxu0 0.0
    %4524 = vmatpush1.msra.mxu0 0.0
    %4525 = vmatprep.subr.mxu0 0.0
    %4526 = vmatpush1.msra.mxu0 0.0
    %4527 = vmatprep.subr.mxu0 0.0
    %4528 = vmatpush1.msra.mxu0 0.0
    %4529 = vmatprep.subr.mxu0 0.0
    %4530 = vmatpush1.msra.mxu0 0.0
    %4531 = vmatprep.subr.mxu0 0.0
    %4532 = vmatpush1.msra.mxu0 0.0
    %4533 = vmatprep.subr.mxu0 0.0
    %4534 = vmatpush1.msra.mxu0 0.0
    %4535 = vmatprep.subr.mxu0 0.0
    %4536 = vmatpush1.msra.mxu0 0.0
    %4537 = vmatprep.subr.mxu0 0.0
    %4538 = vmatpush1.msra.mxu0 0.0
    %4539 = vmatprep.subr.mxu0 0.0
    %4540 = vmatpush1.msra.mxu0 %v1173
    %4541 = vmatprep.subr.mxu0 0.0
    %4542 = vmatpush1.msra.mxu0 %v1172
    %4543 = vmatprep.subr.mxu0 0.0
    %4544 = vmatpush1.msra.mxu0 %v1171
    %4545 = vmatprep.subr.mxu0 0.0
    %4546 = vmatpush1.msra.mxu0 %v1170
    %4547 = vmatprep.subr.mxu0 0.0
    %4548 = vmatpush1.msra.mxu0 %v1169
    %4549 = vmatprep.subr.mxu0 0.0
    %4550 = vmatpush1.msra.mxu0 %v1168
    %4551 = vmatprep.subr.mxu0 0.0
    %4552 = vmatpush1.msra.mxu0 %v1167
    %4553 = vmatprep.subr.mxu0 0.0
    %4554 = vmatpush1.msra.mxu0 %v1166
    %4555 = vmatprep.subr.mxu0 0.0
    %4556 = vmatpush2.msra.mxu0 0.0
    %4557 = vmatprep.subr.mxu0 0.0
    %4558 = vmatpush2.msra.mxu0 0.0
    %4559 = vmatprep.subr.mxu0 0.0
    %4560 = vmatpush2.msra.mxu0 0.0
    %4561 = vmatprep.subr.mxu0 0.0
    %4562 = vmatpush2.msra.mxu0 0.0
    %4563 = vmatprep.subr.mxu0 0.0
    %4564 = vmatpush2.msra.mxu0 0.0
    %4565 = vmatprep.subr.mxu0 0.0
    %4566 = vmatpush2.msra.mxu0 0.0
    %4567 = vmatprep.subr.mxu0 0.0
    %4568 = vmatpush2.msra.mxu0 0.0
    %4569 = vmatprep.subr.mxu0 0.0
    %4570 = vmatpush2.msra.mxu0 0.0
    %4571 = vmatprep.subr.mxu0 0.0
    %4572 = vmatpush2.msra.mxu0 0.0
    %4573 = vmatprep.subr.mxu0 0.0
    %4574 = vmatpush2.msra.mxu0 0.0
    %4575 = vmatprep.subr.mxu0 0.0
    %4576 = vmatpush2.msra.mxu0 0.0
    %4577 = vmatprep.subr.mxu0 0.0
    %4578 = vmatpush2.msra.mxu0 0.0
    %4579 = vmatprep.subr.mxu0 0.0
    %4580 = vmatpush2.msra.mxu0 0.0
    %4581 = vmatprep.subr.mxu0 0.0
    %4582 = vmatpush2.msra.mxu0 0.0
    %4583 = vmatprep.subr.mxu0 0.0
    %4584 = vmatpush2.msra.mxu0 0.0
    %4585 = vmatprep.subr.mxu0 0.0
    %4586 = vmatpush2.msra.mxu0 0.0
    %4587 = vmatprep.mubr.f32.mxu0 0.0
    %4588 = vmatmul.mubr.f32.gmra.mxu0 %v4518
    %v4589 = vpop.f32.mrf.mxu0
    %v4590 = vadd.f32 %v1179, %v4589
    %v4591 = vpop.f32.mrf.mxu0
    %4592 = vmatprep.mubr.f32.mxu0 0.0
    %4593 = vmatmul.mubr.f32.gmra.mxu0 %v4521
    %v4594 = vpop.f32.mrf.mxu0
    %v4595 = vadd.f32 %v1179, %v4594
    %v4596 = vpop.f32.mrf.mxu0
    %4597 = vdwg.mxu0
    %v4598 = vxor.u32 %v4491, 2147483648
    %v4599 = vxor.u32 %v4496, 2147483648
    %v4600 = vmul.f32 %v4598, 1.442695
    %v4601 = vpow.pop %v4600
    %v4602 = vmul.f32 %v4599, 1.442695
    %v4603 = vpow.pop %v4602
    %v4604 = vadd.f32 %v4601, 1.0
    %v4605 = vadd.f32 %v4603, 1.0
    %v4606 = vrcp.pop %v4604
    %v4607 = vmul.f32 1.0, %v4606
    %v4608 = vrcp.pop %v4605
    %v4609 = vmul.f32 1.0, %v4608
    %v4610 = vtanh.pop %v4491
    %v4611 = vtanh.pop %v4496
    %v4612 = vmul.f32 %v4607, %v4076
    %v4613 = vmul.f32 %v4609, %v4077
    %4616 = vrot.lane.b32.xlu0 %v4610, 64
    %v4617 = vpop.permute.xlu0 %4616
    %4618 = vrot.lane.b32.xlu0 %v4611, 64
    %v4619 = vpop.permute.xlu0 %4618
    %v4622 = vmul.f32 %v4607, %v4617
    %v4623 = vmul.f32 %v4609, %v4619
    %4626 = vrot.lane.b32.xlu0 %v4622, 32
    %v4627 = vpop.permute.xlu0 %4626
    %4628 = vrot.lane.b32.xlu0 %v4623, 32
    %v4629 = vpop.permute.xlu0 %4628
    %v4632 = vadd.f32 %v4612, %v4627
    %v4633 = vadd.f32 %v4613, %v4629
    %v4634 = vtanh.pop %v4632
    %v4635 = vtanh.pop %v4633
    %4638 = vrot.lane.b32.xlu0 %v4634, 64
    %v4639 = vpop.permute.xlu0 %4638
    %4640 = vrot.lane.b32.xlu0 %v4635, 64
    %v4641 = vpop.permute.xlu0 %4640
    %v4644 = vmul.f32 %v4607, %v4639
    %v4645 = vmul.f32 %v4609, %v4641
    %v4646 = vxor.u32 %v4590, 2147483648
    %v4647 = vxor.u32 %v4595, 2147483648
    %v4648 = vmul.f32 %v4646, 1.442695
    %v4649 = vpow.pop %v4648
    %v4650 = vmul.f32 %v4647, 1.442695
    %v4651 = vpow.pop %v4650
    %v4652 = vadd.f32 %v4649, 1.0
    %v4653 = vadd.f32 %v4651, 1.0
    %v4654 = vrcp.pop %v4652
    %v4655 = vmul.f32 1.0, %v4654
    %v4656 = vrcp.pop %v4653
    %v4657 = vmul.f32 1.0, %v4656
    %v4658 = vtanh.pop %v4590
    %v4659 = vtanh.pop %v4595
    %v4660 = vmul.f32 %v4655, %v4124
    %v4661 = vmul.f32 %v4657, %v4125
    %4664 = vrot.lane.b32.xlu0 %v4658, 64
    %v4665 = vpop.permute.xlu0 %4664
    %4666 = vrot.lane.b32.xlu0 %v4659, 64
    %v4667 = vpop.permute.xlu0 %4666
    %v4670 = vmul.f32 %v4655, %v4665
    %v4671 = vmul.f32 %v4657, %v4667
    %4674 = vrot.lane.b32.xlu0 %v4670, 32
    %v4675 = vpop.permute.xlu0 %4674
    %4676 = vrot.lane.b32.xlu0 %v4671, 32
    %v4677 = vpop.permute.xlu0 %4676
    %v4680 = vadd.f32 %v4660, %v4675
    %v4681 = vadd.f32 %v4661, %v4677
    %v4682 = vtanh.pop %v4680
    %v4683 = vtanh.pop %v4681
    %4686 = vrot.lane.b32.xlu0 %v4682, 64
    %v4687 = vpop.permute.xlu0 %4686
    %4688 = vrot.lane.b32.xlu0 %v4683, 64
    %v4689 = vpop.permute.xlu0 %4688
    %v4692 = vmul.f32 %v4655, %v4687
    %v4693 = vmul.f32 %v4657, %v4689
    %v4694 = vld [vmem:[#allocation2 + $0xe0] sm:$0xff]
    %v4695 = vld [vmem:[#allocation2 + $0xe8] sm:$0xff]
    %v4696 = vld [vmem:[#allocation2 + $0xf0] sm:$0xff]
    %v4697 = vld [vmem:[#allocation2 + $0xf8] sm:$0xff]
    %v4698 = vsel %vm792, %v4403, 0
    %v4700 = vsel %vm792, %v4405, 0
    %4702 = vmatprep.subr.mxu0 0.0
    %4703 = vmatpush1.msra.mxu0 0.0
    %4704 = vmatprep.subr.mxu0 0.0
    %4705 = vmatpush1.msra.mxu0 0.0
    %4706 = vmatprep.subr.mxu0 0.0
    %4707 = vmatpush1.msra.mxu0 0.0
    %4708 = vmatprep.subr.mxu0 0.0
    %4709 = vmatpush1.msra.mxu0 0.0
    %4710 = vmatprep.subr.mxu0 0.0
    %4711 = vmatpush1.msra.mxu0 0.0
    %4712 = vmatprep.subr.mxu0 0.0
    %4713 = vmatpush1.msra.mxu0 0.0
    %4714 = vmatprep.subr.mxu0 0.0
    %4715 = vmatpush1.msra.mxu0 0.0
    %4716 = vmatprep.subr.mxu0 0.0
    %4717 = vmatpush1.msra.mxu0 0.0
    %4718 = vmatprep.subr.mxu0 0.0
    %4719 = vmatpush1.msra.mxu0 0.0
    %4720 = vmatprep.subr.mxu0 0.0
    %4721 = vmatpush1.msra.mxu0 0.0
    %4722 = vmatprep.subr.mxu0 0.0
    %4723 = vmatpush1.msra.mxu0 0.0
    %4724 = vmatprep.subr.mxu0 0.0
    %4725 = vmatpush1.msra.mxu0 0.0
    %4726 = vmatprep.subr.mxu0 0.0
    %4727 = vmatpush1.msra.mxu0 %v791
    %4728 = vmatprep.subr.mxu0 0.0
    %4729 = vmatpush1.msra.mxu0 %v790
    %4730 = vmatprep.subr.mxu0 0.0
    %4731 = vmatpush1.msra.mxu0 %v789
    %4732 = vmatprep.subr.mxu0 0.0
    %4733 = vmatpush1.msra.mxu0 %v788
    %4734 = vmatprep.subr.mxu0 0.0
    %4735 = vmatpush2.msra.mxu0 0.0
    %4736 = vmatprep.subr.mxu0 0.0
    %4737 = vmatpush2.msra.mxu0 0.0
    %4738 = vmatprep.subr.mxu0 0.0
    %4739 = vmatpush2.msra.mxu0 0.0
    %4740 = vmatprep.subr.mxu0 0.0
    %4741 = vmatpush2.msra.mxu0 0.0
    %4742 = vmatprep.subr.mxu0 0.0
    %4743 = vmatpush2.msra.mxu0 0.0
    %4744 = vmatprep.subr.mxu0 0.0
    %4745 = vmatpush2.msra.mxu0 0.0
    %4746 = vmatprep.subr.mxu0 0.0
    %4747 = vmatpush2.msra.mxu0 0.0
    %4748 = vmatprep.subr.mxu0 0.0
    %4749 = vmatpush2.msra.mxu0 0.0
    %4750 = vmatprep.subr.mxu0 0.0
    %4751 = vmatpush2.msra.mxu0 0.0
    %4752 = vmatprep.subr.mxu0 0.0
    %4753 = vmatpush2.msra.mxu0 0.0
    %4754 = vmatprep.subr.mxu0 0.0
    %4755 = vmatpush2.msra.mxu0 0.0
    %4756 = vmatprep.subr.mxu0 0.0
    %4757 = vmatpush2.msra.mxu0 0.0
    %4758 = vmatprep.subr.mxu0 0.0
    %4759 = vmatpush2.msra.mxu0 0.0
    %4760 = vmatprep.subr.mxu0 0.0
    %4761 = vmatpush2.msra.mxu0 0.0
    %4762 = vmatprep.subr.mxu0 0.0
    %4763 = vmatpush2.msra.mxu0 0.0
    %4764 = vmatprep.subr.mxu0 0.0
    %4765 = vmatpush2.msra.mxu0 0.0
    %4766 = vmatprep.mubr.f32.mxu0 0.0
    %4767 = vmatmul.mubr.f32.gmra.mxu0 %v4698
    %v4768 = vpop.f32.mrf.mxu0
    %v4769 = vadd.f32 0.0, %v4768
    %v4770 = vpop.f32.mrf.mxu0
    %4771 = vmatprep.mubr.f32.mxu0 0.0
    %4772 = vmatmul.mubr.f32.gmra.mxu0 %v4700
    %v4773 = vpop.f32.mrf.mxu0
    %v4774 = vadd.f32 0.0, %v4773
    %v4775 = vpop.f32.mrf.mxu0
    %4776 = vdwg.mxu0
    %v4777 = vadd.f32 %v4694, %v4769
    %v4778 = vadd.f32 %v4696, %v4774
    %v4779 = vsel %vm792, %v4502, 0
    %v4781 = vsel %vm792, %v4504, 0
    %4783 = vmatprep.subr.mxu0 0.0
    %4784 = vmatpush1.msra.mxu0 0.0
    %4785 = vmatprep.subr.mxu0 0.0
    %4786 = vmatpush1.msra.mxu0 0.0
    %4787 = vmatprep.subr.mxu0 0.0
    %4788 = vmatpush1.msra.mxu0 0.0
    %4789 = vmatprep.subr.mxu0 0.0
    %4790 = vmatpush1.msra.mxu0 0.0
    %4791 = vmatprep.subr.mxu0 0.0
    %4792 = vmatpush1.msra.mxu0 0.0
    %4793 = vmatprep.subr.mxu0 0.0
    %4794 = vmatpush1.msra.mxu0 0.0
    %4795 = vmatprep.subr.mxu0 0.0
    %4796 = vmatpush1.msra.mxu0 0.0
    %4797 = vmatprep.subr.mxu0 0.0
    %4798 = vmatpush1.msra.mxu0 0.0
    %4799 = vmatprep.subr.mxu0 0.0
    %4800 = vmatpush1.msra.mxu0 0.0
    %4801 = vmatprep.subr.mxu0 0.0
    %4802 = vmatpush1.msra.mxu0 0.0
    %4803 = vmatprep.subr.mxu0 0.0
    %4804 = vmatpush1.msra.mxu0 0.0
    %4805 = vmatprep.subr.mxu0 0.0
    %4806 = vmatpush1.msra.mxu0 0.0
    %4807 = vmatprep.subr.mxu0 0.0
    %4808 = vmatpush1.msra.mxu0 %v876
    %4809 = vmatprep.subr.mxu0 0.0
    %4810 = vmatpush1.msra.mxu0 %v875
    %4811 = vmatprep.subr.mxu0 0.0
    %4812 = vmatpush1.msra.mxu0 %v874
    %4813 = vmatprep.subr.mxu0 0.0
    %4814 = vmatpush1.msra.mxu0 %v873
    %4815 = vmatprep.subr.mxu0 0.0
    %4816 = vmatpush2.msra.mxu0 0.0
    %4817 = vmatprep.subr.mxu0 0.0
    %4818 = vmatpush2.msra.mxu0 0.0
    %4819 = vmatprep.subr.mxu0 0.0
    %4820 = vmatpush2.msra.mxu0 0.0
    %4821 = vmatprep.subr.mxu0 0.0
    %4822 = vmatpush2.msra.mxu0 0.0
    %4823 = vmatprep.subr.mxu0 0.0
    %4824 = vmatpush2.msra.mxu0 0.0
    %4825 = vmatprep.subr.mxu0 0.0
    %4826 = vmatpush2.msra.mxu0 0.0
    %4827 = vmatprep.subr.mxu0 0.0
    %4828 = vmatpush2.msra.mxu0 0.0
    %4829 = vmatprep.subr.mxu0 0.0
    %4830 = vmatpush2.msra.mxu0 0.0
    %4831 = vmatprep.subr.mxu0 0.0
    %4832 = vmatpush2.msra.mxu0 0.0
    %4833 = vmatprep.subr.mxu0 0.0
    %4834 = vmatpush2.msra.mxu0 0.0
    %4835 = vmatprep.subr.mxu0 0.0
    %4836 = vmatpush2.msra.mxu0 0.0
    %4837 = vmatprep.subr.mxu0 0.0
    %4838 = vmatpush2.msra.mxu0 0.0
    %4839 = vmatprep.subr.mxu0 0.0
    %4840 = vmatpush2.msra.mxu0 0.0
    %4841 = vmatprep.subr.mxu0 0.0
    %4842 = vmatpush2.msra.mxu0 0.0
    %4843 = vmatprep.subr.mxu0 0.0
    %4844 = vmatpush2.msra.mxu0 0.0
    %4845 = vmatprep.subr.mxu0 0.0
    %4846 = vmatpush2.msra.mxu0 0.0
    %4847 = vmatprep.mubr.f32.mxu0 0.0
    %4848 = vmatmul.mubr.f32.gmra.mxu0 %v4779
    %v4849 = vpop.f32.mrf.mxu0
    %v4850 = vadd.f32 0.0, %v4849
    %v4851 = vpop.f32.mrf.mxu0
    %4852 = vmatprep.mubr.f32.mxu0 0.0
    %4853 = vmatmul.mubr.f32.gmra.mxu0 %v4781
    %v4854 = vpop.f32.mrf.mxu0
    %v4855 = vadd.f32 0.0, %v4854
    %v4856 = vpop.f32.mrf.mxu0
    %4857 = vdwg.mxu0
    %v4858 = vadd.f32 %v4695, %v4850
    %v4859 = vadd.f32 %v4697, %v4855
    %v4860 = vxor.u32 %v4777, 2147483648
    %v4861 = vxor.u32 %v4778, 2147483648
    %v4862 = vmul.f32 %v4860, 1.442695
    %v4863 = vpow.pop %v4862
    %v4864 = vmul.f32 %v4861, 1.442695
    %v4865 = vpow.pop %v4864
    %v4866 = vadd.f32 %v4863, 1.0
    %v4867 = vadd.f32 %v4865, 1.0
    %v4868 = vrcp.pop %v4866
    %v4869 = vmul.f32 1.0, %v4868
    %v4870 = vrcp.pop %v4867
    %v4871 = vmul.f32 1.0, %v4870
    %v4872 = vtanh.pop %v4777
    %v4873 = vtanh.pop %v4778
    %v4874 = vmul.f32 %v4869, %v4338
    %v4875 = vmul.f32 %v4871, %v4339
    %4878 = vrot.lane.b32.xlu0 %v4872, 64
    %v4879 = vpop.permute.xlu0 %4878
    %4880 = vrot.lane.b32.xlu0 %v4873, 64
    %v4881 = vpop.permute.xlu0 %4880
    %v4884 = vmul.f32 %v4869, %v4879
    %v4885 = vmul.f32 %v4871, %v4881
    %4888 = vrot.lane.b32.xlu0 %v4884, 32
    %v4889 = vpop.permute.xlu0 %4888
    %4890 = vrot.lane.b32.xlu0 %v4885, 32
    %v4891 = vpop.permute.xlu0 %4890
    %v4894 = vadd.f32 %v4874, %v4889
    %v4895 = vadd.f32 %v4875, %v4891
    %v4896 = vtanh.pop %v4894
    %v4897 = vtanh.pop %v4895
    %4900 = vrot.lane.b32.xlu0 %v4896, 64
    %v4901 = vpop.permute.xlu0 %4900
    %4902 = vrot.lane.b32.xlu0 %v4897, 64
    %v4903 = vpop.permute.xlu0 %4902
    %v4906 = vmul.f32 %v4869, %v4901
    %v4907 = vmul.f32 %v4871, %v4903
    %v4908 = vxor.u32 %v4858, 2147483648
    %v4909 = vxor.u32 %v4859, 2147483648
    %v4910 = vmul.f32 %v4908, 1.442695
    %v4911 = vpow.pop %v4910
    %v4912 = vmul.f32 %v4909, 1.442695
    %v4913 = vpow.pop %v4912
    %v4914 = vadd.f32 %v4911, 1.0
    %v4915 = vadd.f32 %v4913, 1.0
    %v4916 = vrcp.pop %v4914
    %v4917 = vmul.f32 1.0, %v4916
    %v4918 = vrcp.pop %v4915
    %v4919 = vmul.f32 1.0, %v4918
    %v4920 = vtanh.pop %v4858
    %v4921 = vtanh.pop %v4859
    %v4922 = vmul.f32 %v4917, %v4386
    %v4923 = vmul.f32 %v4919, %v4387
    %4926 = vrot.lane.b32.xlu0 %v4920, 64
    %v4927 = vpop.permute.xlu0 %4926
    %4928 = vrot.lane.b32.xlu0 %v4921, 64
    %v4929 = vpop.permute.xlu0 %4928
    %v4932 = vmul.f32 %v4917, %v4927
    %v4933 = vmul.f32 %v4919, %v4929
    %4936 = vrot.lane.b32.xlu0 %v4932, 32
    %v4937 = vpop.permute.xlu0 %4936
    %4938 = vrot.lane.b32.xlu0 %v4933, 32
    %v4939 = vpop.permute.xlu0 %4938
    %v4942 = vadd.f32 %v4922, %v4937
    %v4943 = vadd.f32 %v4923, %v4939
    %v4944 = vtanh.pop %v4942
    %v4945 = vtanh.pop %v4943
    %4948 = vrot.lane.b32.xlu0 %v4944, 64
    %v4949 = vpop.permute.xlu0 %4948
    %4950 = vrot.lane.b32.xlu0 %v4945, 64
    %v4951 = vpop.permute.xlu0 %4950
    %v4954 = vmul.f32 %v4917, %v4949
    %v4955 = vmul.f32 %v4919, %v4951
    %4958 = vrot.lane.b32.xlu0 %v4906, 32
    %v4959 = vpop.permute.xlu0 %4958
    %4960 = vrot.lane.b32.xlu0 %v4907, 32
    %v4961 = vpop.permute.xlu0 %4960
    %4966 = vrot.lane.b32.xlu0 %v4644, 64
    %v4967 = vpop.permute.xlu0 %4966
    %4968 = vrot.lane.b32.xlu0 %v4645, 64
    %v4969 = vpop.permute.xlu0 %4968
    %v4972 = vsel %vm792, %v4959, %v4967
    %v4973 = vsel %vm792, %v4961, %v4969
    %v4975 = vsel %vm542, %v4972, 0
    %v4978 = vsel %vm542, %v4973, 0
    %4980 = vmatprep.subr.mxu0 0.0
    %4981 = vmatpush1.msra.mxu0 0.0
    %4982 = vmatprep.subr.mxu0 0.0
    %4983 = vmatpush1.msra.mxu0 0.0
    %4984 = vmatprep.subr.mxu0 0.0
    %4985 = vmatpush1.msra.mxu0 0.0
    %4986 = vmatprep.subr.mxu0 0.0
    %4987 = vmatpush1.msra.mxu0 0.0
    %4988 = vmatprep.subr.mxu0 0.0
    %4989 = vmatpush1.msra.mxu0 0.0
    %4990 = vmatprep.subr.mxu0 0.0
    %4991 = vmatpush1.msra.mxu0 0.0
    %4992 = vmatprep.subr.mxu0 0.0
    %4993 = vmatpush1.msra.mxu0 0.0
    %4994 = vmatprep.subr.mxu0 0.0
    %4995 = vmatpush1.msra.mxu0 0.0
    %4996 = vmatprep.subr.mxu0 0.0
    %4997 = vmatpush1.msra.mxu0 %v1067
    %4998 = vmatprep.subr.mxu0 0.0
    %4999 = vmatpush1.msra.mxu0 %v1066
    %5000 = vmatprep.subr.mxu0 0.0
    %5001 = vmatpush1.msra.mxu0 %v1065
    %5002 = vmatprep.subr.mxu0 0.0
    %5003 = vmatpush1.msra.mxu0 %v1064
    %5004 = vmatprep.subr.mxu0 0.0
    %5005 = vmatpush1.msra.mxu0 %v1063
    %5006 = vmatprep.subr.mxu0 0.0
    %5007 = vmatpush1.msra.mxu0 %v1062
    %5008 = vmatprep.subr.mxu0 0.0
    %5009 = vmatpush1.msra.mxu0 %v1061
    %5010 = vmatprep.subr.mxu0 0.0
    %5011 = vmatpush1.msra.mxu0 %v1060
    %5012 = vmatprep.subr.mxu0 0.0
    %5013 = vmatpush2.msra.mxu0 0.0
    %5014 = vmatprep.subr.mxu0 0.0
    %5015 = vmatpush2.msra.mxu0 0.0
    %5016 = vmatprep.subr.mxu0 0.0
    %5017 = vmatpush2.msra.mxu0 0.0
    %5018 = vmatprep.subr.mxu0 0.0
    %5019 = vmatpush2.msra.mxu0 0.0
    %5020 = vmatprep.subr.mxu0 0.0
    %5021 = vmatpush2.msra.mxu0 0.0
    %5022 = vmatprep.subr.mxu0 0.0
    %5023 = vmatpush2.msra.mxu0 0.0
    %5024 = vmatprep.subr.mxu0 0.0
    %5025 = vmatpush2.msra.mxu0 0.0
    %5026 = vmatprep.subr.mxu0 0.0
    %5027 = vmatpush2.msra.mxu0 0.0
    %5028 = vmatprep.subr.mxu0 0.0
    %5029 = vmatpush2.msra.mxu0 0.0
    %5030 = vmatprep.subr.mxu0 0.0
    %5031 = vmatpush2.msra.mxu0 0.0
    %5032 = vmatprep.subr.mxu0 0.0
    %5033 = vmatpush2.msra.mxu0 0.0
    %5034 = vmatprep.subr.mxu0 0.0
    %5035 = vmatpush2.msra.mxu0 0.0
    %5036 = vmatprep.subr.mxu0 0.0
    %5037 = vmatpush2.msra.mxu0 0.0
    %5038 = vmatprep.subr.mxu0 0.0
    %5039 = vmatpush2.msra.mxu0 0.0
    %5040 = vmatprep.subr.mxu0 0.0
    %5041 = vmatpush2.msra.mxu0 0.0
    %5042 = vmatprep.subr.mxu0 0.0
    %5043 = vmatpush2.msra.mxu0 0.0
    %5044 = vmatprep.mubr.f32.mxu0 0.0
    %5045 = vmatmul.mubr.f32.gmra.mxu0 %v4975
    %v5046 = vpop.f32.mrf.mxu0
    %v5047 = vadd.f32 %v1073, %v5046
    %v5048 = vpop.f32.mrf.mxu0
    %5049 = vmatprep.mubr.f32.mxu0 0.0
    %5050 = vmatmul.mubr.f32.gmra.mxu0 %v4978
    %v5051 = vpop.f32.mrf.mxu0
    %v5052 = vadd.f32 %v1073, %v5051
    %v5053 = vpop.f32.mrf.mxu0
    %5054 = vdwg.mxu0
    %5057 = vrot.lane.b32.xlu0 %v4954, 32
    %v5058 = vpop.permute.xlu0 %5057
    %5059 = vrot.lane.b32.xlu0 %v4955, 32
    %v5060 = vpop.permute.xlu0 %5059
    %5065 = vrot.lane.b32.xlu0 %v4692, 64
    %v5066 = vpop.permute.xlu0 %5065
    %5067 = vrot.lane.b32.xlu0 %v4693, 64
    %v5068 = vpop.permute.xlu0 %5067
    %v5071 = vsel %vm792, %v5058, %v5066
    %v5072 = vsel %vm792, %v5060, %v5068
    %v5074 = vsel %vm542, %v5071, 0
    %v5077 = vsel %vm542, %v5072, 0
    %5079 = vmatprep.subr.mxu0 0.0
    %5080 = vmatpush1.msra.mxu0 0.0
    %5081 = vmatprep.subr.mxu0 0.0
    %5082 = vmatpush1.msra.mxu0 0.0
    %5083 = vmatprep.subr.mxu0 0.0
    %5084 = vmatpush1.msra.mxu0 0.0
    %5085 = vmatprep.subr.mxu0 0.0
    %5086 = vmatpush1.msra.mxu0 0.0
    %5087 = vmatprep.subr.mxu0 0.0
    %5088 = vmatpush1.msra.mxu0 0.0
    %5089 = vmatprep.subr.mxu0 0.0
    %5090 = vmatpush1.msra.mxu0 0.0
    %5091 = vmatprep.subr.mxu0 0.0
    %5092 = vmatpush1.msra.mxu0 0.0
    %5093 = vmatprep.subr.mxu0 0.0
    %5094 = vmatpush1.msra.mxu0 0.0
    %5095 = vmatprep.subr.mxu0 0.0
    %5096 = vmatpush1.msra.mxu0 %v1173
    %5097 = vmatprep.subr.mxu0 0.0
    %5098 = vmatpush1.msra.mxu0 %v1172
    %5099 = vmatprep.subr.mxu0 0.0
    %5100 = vmatpush1.msra.mxu0 %v1171
    %5101 = vmatprep.subr.mxu0 0.0
    %5102 = vmatpush1.msra.mxu0 %v1170
    %5103 = vmatprep.subr.mxu0 0.0
    %5104 = vmatpush1.msra.mxu0 %v1169
    %5105 = vmatprep.subr.mxu0 0.0
    %5106 = vmatpush1.msra.mxu0 %v1168
    %5107 = vmatprep.subr.mxu0 0.0
    %5108 = vmatpush1.msra.mxu0 %v1167
    %5109 = vmatprep.subr.mxu0 0.0
    %5110 = vmatpush1.msra.mxu0 %v1166
    %5111 = vmatprep.subr.mxu0 0.0
    %5112 = vmatpush2.msra.mxu0 0.0
    %5113 = vmatprep.subr.mxu0 0.0
    %5114 = vmatpush2.msra.mxu0 0.0
    %5115 = vmatprep.subr.mxu0 0.0
    %5116 = vmatpush2.msra.mxu0 0.0
    %5117 = vmatprep.subr.mxu0 0.0
    %5118 = vmatpush2.msra.mxu0 0.0
    %5119 = vmatprep.subr.mxu0 0.0
    %5120 = vmatpush2.msra.mxu0 0.0
    %5121 = vmatprep.subr.mxu0 0.0
    %5122 = vmatpush2.msra.mxu0 0.0
    %5123 = vmatprep.subr.mxu0 0.0
    %5124 = vmatpush2.msra.mxu0 0.0
    %5125 = vmatprep.subr.mxu0 0.0
    %5126 = vmatpush2.msra.mxu0 0.0
    %5127 = vmatprep.subr.mxu0 0.0
    %5128 = vmatpush2.msra.mxu0 0.0
    %5129 = vmatprep.subr.mxu0 0.0
    %5130 = vmatpush2.msra.mxu0 0.0
    %5131 = vmatprep.subr.mxu0 0.0
    %5132 = vmatpush2.msra.mxu0 0.0
    %5133 = vmatprep.subr.mxu0 0.0
    %5134 = vmatpush2.msra.mxu0 0.0
    %5135 = vmatprep.subr.mxu0 0.0
    %5136 = vmatpush2.msra.mxu0 0.0
    %5137 = vmatprep.subr.mxu0 0.0
    %5138 = vmatpush2.msra.mxu0 0.0
    %5139 = vmatprep.subr.mxu0 0.0
    %5140 = vmatpush2.msra.mxu0 0.0
    %5141 = vmatprep.subr.mxu0 0.0
    %5142 = vmatpush2.msra.mxu0 0.0
    %5143 = vmatprep.mubr.f32.mxu0 0.0
    %5144 = vmatmul.mubr.f32.gmra.mxu0 %v5074
    %v5145 = vpop.f32.mrf.mxu0
    %v5146 = vadd.f32 %v1179, %v5145
    %v5147 = vpop.f32.mrf.mxu0
    %5148 = vmatprep.mubr.f32.mxu0 0.0
    %5149 = vmatmul.mubr.f32.gmra.mxu0 %v5077
    %v5150 = vpop.f32.mrf.mxu0
    %v5151 = vadd.f32 %v1179, %v5150
    %v5152 = vpop.f32.mrf.mxu0
    %5153 = vdwg.mxu0
    %v5154 = vxor.u32 %v5047, 2147483648
    %v5155 = vxor.u32 %v5052, 2147483648
    %v5156 = vmul.f32 %v5154, 1.442695
    %v5157 = vpow.pop %v5156
    %v5158 = vmul.f32 %v5155, 1.442695
    %v5159 = vpow.pop %v5158
    %v5160 = vadd.f32 %v5157, 1.0
    %v5161 = vadd.f32 %v5159, 1.0
    %v5162 = vrcp.pop %v5160
    %v5163 = vmul.f32 1.0, %v5162
    %v5164 = vrcp.pop %v5161
    %v5165 = vmul.f32 1.0, %v5164
    %v5166 = vtanh.pop %v5047
    %v5167 = vtanh.pop %v5052
    %v5168 = vmul.f32 %v5163, %v4632
    %v5169 = vmul.f32 %v5165, %v4633
    %5172 = vrot.lane.b32.xlu0 %v5166, 64
    %v5173 = vpop.permute.xlu0 %5172
    %5174 = vrot.lane.b32.xlu0 %v5167, 64
    %v5175 = vpop.permute.xlu0 %5174
    %v5178 = vmul.f32 %v5163, %v5173
    %v5179 = vmul.f32 %v5165, %v5175
    %5182 = vrot.lane.b32.xlu0 %v5178, 32
    %v5183 = vpop.permute.xlu0 %5182
    %5184 = vrot.lane.b32.xlu0 %v5179, 32
    %v5185 = vpop.permute.xlu0 %5184
    %v5188 = vadd.f32 %v5168, %v5183
    %v5189 = vadd.f32 %v5169, %v5185
    %v5190 = vtanh.pop %v5188
    %v5191 = vtanh.pop %v5189
    %5194 = vrot.lane.b32.xlu0 %v5190, 64
    %v5195 = vpop.permute.xlu0 %5194
    %5196 = vrot.lane.b32.xlu0 %v5191, 64
    %v5197 = vpop.permute.xlu0 %5196
    %v5200 = vmul.f32 %v5163, %v5195
    %v5201 = vmul.f32 %v5165, %v5197
    %v5202 = vxor.u32 %v5146, 2147483648
    %v5203 = vxor.u32 %v5151, 2147483648
    %v5204 = vmul.f32 %v5202, 1.442695
    %v5205 = vpow.pop %v5204
    %v5206 = vmul.f32 %v5203, 1.442695
    %v5207 = vpow.pop %v5206
    %v5208 = vadd.f32 %v5205, 1.0
    %v5209 = vadd.f32 %v5207, 1.0
    %v5210 = vrcp.pop %v5208
    %v5211 = vmul.f32 1.0, %v5210
    %v5212 = vrcp.pop %v5209
    %v5213 = vmul.f32 1.0, %v5212
    %v5214 = vtanh.pop %v5146
    %v5215 = vtanh.pop %v5151
    %v5216 = vmul.f32 %v5211, %v4680
    %v5217 = vmul.f32 %v5213, %v4681
    %5220 = vrot.lane.b32.xlu0 %v5214, 64
    %v5221 = vpop.permute.xlu0 %5220
    %5222 = vrot.lane.b32.xlu0 %v5215, 64
    %v5223 = vpop.permute.xlu0 %5222
    %v5226 = vmul.f32 %v5211, %v5221
    %v5227 = vmul.f32 %v5213, %v5223
    %5230 = vrot.lane.b32.xlu0 %v5226, 32
    %v5231 = vpop.permute.xlu0 %5230
    %5232 = vrot.lane.b32.xlu0 %v5227, 32
    %v5233 = vpop.permute.xlu0 %5232
    %v5236 = vadd.f32 %v5216, %v5231
    %v5237 = vadd.f32 %v5217, %v5233
    %v5238 = vtanh.pop %v5236
    %v5239 = vtanh.pop %v5237
    %5242 = vrot.lane.b32.xlu0 %v5238, 64
    %v5243 = vpop.permute.xlu0 %5242
    %5244 = vrot.lane.b32.xlu0 %v5239, 64
    %v5245 = vpop.permute.xlu0 %5244
    %v5248 = vmul.f32 %v5211, %v5243
    %v5249 = vmul.f32 %v5213, %v5245
    %v5250 = vld [vmem:[%s0] sm:$0xff]
    %v5251 = vld [vmem:[%s0 + $0x8] sm:$0xff]
    %v5252 = vld [vmem:[#allocation7] sm:$0xff]
    %v5253 = vld [vmem:[#allocation9] sm:$0x1]
    %v5255 = vlaneseq
    %v5256 = vshrl.u32 %v5255, 7
    %v5257 = vsub.s32 0, %v5256
    %v5258 = vrot.slane %v5253, %v5257
    %v5261 = vsel %vm304, %v5250, 0
    %v5264 = vsel %vm304, %v5251, 0
    %5266 = vmatprep.subr.mxu0 0.0
    %5267 = vmatpush1.msra.mxu0 0.0
    %5268 = vmatprep.subr.mxu0 0.0
    %5269 = vmatpush1.msra.mxu0 0.0
    %5270 = vmatprep.subr.mxu0 0.0
    %5271 = vmatpush1.msra.mxu0 0.0
    %5272 = vmatprep.subr.mxu0 0.0
    %5273 = vmatpush1.msra.mxu0 0.0
    %5274 = vmatprep.subr.mxu0 0.0
    %5275 = vmatpush1.msra.mxu0 0.0
    %5276 = vmatprep.subr.mxu0 0.0
    %5277 = vmatpush1.msra.mxu0 0.0
    %5278 = vmatprep.subr.mxu0 0.0
    %5279 = vmatpush1.msra.mxu0 0.0
    %5280 = vmatprep.subr.mxu0 0.0
    %5281 = vmatpush1.msra.mxu0 0.0
    %5282 = vmatprep.subr.mxu0 0.0
    %5283 = vmatpush1.msra.mxu0 0.0
    %5284 = vmatprep.subr.mxu0 0.0
    %5285 = vmatpush1.msra.mxu0 0.0
    %5286 = vmatprep.subr.mxu0 0.0
    %5287 = vmatpush1.msra.mxu0 0.0
    %5288 = vmatprep.subr.mxu0 0.0
    %5289 = vmatpush1.msra.mxu0 0.0
    %5290 = vmatprep.subr.mxu0 0.0
    %5291 = vmatpush1.msra.mxu0 0.0
    %5292 = vmatprep.subr.mxu0 0.0
    %5293 = vmatpush1.msra.mxu0 0.0
    %5294 = vmatprep.subr.mxu0 0.0
    %5295 = vmatpush1.msra.mxu0 0.0
    %5296 = vmatprep.subr.mxu0 0.0
    %5297 = vmatpush1.msra.mxu0 %v5252
    %5298 = vmatprep.subr.mxu0 0.0
    %5299 = vmatpush2.msra.mxu0 0.0
    %5300 = vmatprep.subr.mxu0 0.0
    %5301 = vmatpush2.msra.mxu0 0.0
    %5302 = vmatprep.subr.mxu0 0.0
    %5303 = vmatpush2.msra.mxu0 0.0
    %5304 = vmatprep.subr.mxu0 0.0
    %5305 = vmatpush2.msra.mxu0 0.0
    %5306 = vmatprep.subr.mxu0 0.0
    %5307 = vmatpush2.msra.mxu0 0.0
    %5308 = vmatprep.subr.mxu0 0.0
    %5309 = vmatpush2.msra.mxu0 0.0
    %5310 = vmatprep.subr.mxu0 0.0
    %5311 = vmatpush2.msra.mxu0 0.0
    %5312 = vmatprep.subr.mxu0 0.0
    %5313 = vmatpush2.msra.mxu0 0.0
    %5314 = vmatprep.subr.mxu0 0.0
    %5315 = vmatpush2.msra.mxu0 0.0
    %5316 = vmatprep.subr.mxu0 0.0
    %5317 = vmatpush2.msra.mxu0 0.0
    %5318 = vmatprep.subr.mxu0 0.0
    %5319 = vmatpush2.msra.mxu0 0.0
    %5320 = vmatprep.subr.mxu0 0.0
    %5321 = vmatpush2.msra.mxu0 0.0
    %5322 = vmatprep.subr.mxu0 0.0
    %5323 = vmatpush2.msra.mxu0 0.0
    %5324 = vmatprep.subr.mxu0 0.0
    %5325 = vmatpush2.msra.mxu0 0.0
    %5326 = vmatprep.subr.mxu0 0.0
    %5327 = vmatpush2.msra.mxu0 0.0
    %5328 = vmatprep.subr.mxu0 0.0
    %5329 = vmatpush2.msra.mxu0 0.0
    %5330 = vmatprep.mubr.f32.mxu0 0.0
    %5331 = vmatmul.mubr.f32.gmra.mxu0 %v5261
    %v5332 = vpop.f32.mrf.mxu0
    %v5333 = vadd.f32 %v5258, %v5332
    %v5334 = vpop.f32.mrf.mxu0
    %5335 = vmatprep.mubr.f32.mxu0 0.0
    %5336 = vmatmul.mubr.f32.gmra.mxu0 %v5264
    %v5337 = vpop.f32.mrf.mxu0
    %v5338 = vadd.f32 %v5258, %v5337
    %v5339 = vpop.f32.mrf.mxu0
    %5340 = vdwg.mxu0
    %v5341 = vtanh.pop %v5333
    %v5342 = vtanh.pop %v5338
    %5345 = vrot.lane.b32.xlu0 %v5248, 64
    %v5346 = vpop.permute.xlu0 %5345
    %5347 = vrot.lane.b32.xlu0 %v5249, 64
    %v5348 = vpop.permute.xlu0 %5347
    %v5351 = vadd.f32 %v5341, %v5346
    %v5352 = vadd.f32 %v5342, %v5348
    %5353 = vrot.lane.b32.xlu0 %v5248, 32
    %v5354 = vpop.permute.xlu0 %5353
    %5355 = vrot.lane.b32.xlu0 %v5249, 32
    %v5356 = vpop.permute.xlu0 %5355
    %v5359 = vadd.f32 %v5341, %v5354
    %v5360 = vadd.f32 %v5342, %v5356
    %5363 = vrot.lane.b32.xlu0 %v5351, 96
    %v5364 = vpop.permute.xlu0 %5363
    %5365 = vrot.lane.b32.xlu0 %v5352, 96
    %v5366 = vpop.permute.xlu0 %5365
    %5371 = vrot.lane.b32.xlu0 %v5359, 32
    %v5372 = vpop.permute.xlu0 %5371
    %5373 = vrot.lane.b32.xlu0 %v5360, 32
    %v5374 = vpop.permute.xlu0 %5373
    %v5377 = vsel %vm792, %v5364, %v5372
    %v5378 = vsel %vm792, %v5366, %v5374
    %v5379 = vld [vmem:[#allocation15] sm:$0xff]
    %v5380 = vld [vmem:[#allocation15 + $0x8] sm:$0xff]
    %v5381 = vld [vmem:[#allocation15 + $0x10] sm:$0xff]
    %v5382 = vld [vmem:[#allocation15 + $0x18] sm:$0xff]
    %v5383 = vld [vmem:[#allocation15 + $0x20] sm:$0xff]
    %v5384 = vld [vmem:[#allocation15 + $0x28] sm:$0xff]
    %v5385 = vld [vmem:[#allocation15 + $0x30] sm:$0xff]
    %v5386 = vld [vmem:[#allocation15 + $0x38] sm:$0xff]
    %v5387 = vld [vmem:[#allocation16] sm:$0x1]
    %v5389 = vlaneseq
    %v5390 = vshrl.u32 %v5389, 7
    %v5391 = vsub.s32 0, %v5390
    %v5392 = vrot.slane %v5387, %v5391
    %v5395 = vsel %vm542, %v5377, 0
    %v5398 = vsel %vm542, %v5378, 0
    %5400 = vmatprep.subr.mxu0 0.0
    %5401 = vmatpush1.msra.mxu0 0.0
    %5402 = vmatprep.subr.mxu0 0.0
    %5403 = vmatpush1.msra.mxu0 0.0
    %5404 = vmatprep.subr.mxu0 0.0
    %5405 = vmatpush1.msra.mxu0 0.0
    %5406 = vmatprep.subr.mxu0 0.0
    %5407 = vmatpush1.msra.mxu0 0.0
    %5408 = vmatprep.subr.mxu0 0.0
    %5409 = vmatpush1.msra.mxu0 0.0
    %5410 = vmatprep.subr.mxu0 0.0
    %5411 = vmatpush1.msra.mxu0 0.0
    %5412 = vmatprep.subr.mxu0 0.0
    %5413 = vmatpush1.msra.mxu0 0.0
    %5414 = vmatprep.subr.mxu0 0.0
    %5415 = vmatpush1.msra.mxu0 0.0
    %5416 = vmatprep.subr.mxu0 0.0
    %5417 = vmatpush1.msra.mxu0 %v5386
    %5418 = vmatprep.subr.mxu0 0.0
    %5419 = vmatpush1.msra.mxu0 %v5385
    %5420 = vmatprep.subr.mxu0 0.0
    %5421 = vmatpush1.msra.mxu0 %v5384
    %5422 = vmatprep.subr.mxu0 0.0
    %5423 = vmatpush1.msra.mxu0 %v5383
    %5424 = vmatprep.subr.mxu0 0.0
    %5425 = vmatpush1.msra.mxu0 %v5382
    %5426 = vmatprep.subr.mxu0 0.0
    %5427 = vmatpush1.msra.mxu0 %v5381
    %5428 = vmatprep.subr.mxu0 0.0
    %5429 = vmatpush1.msra.mxu0 %v5380
    %5430 = vmatprep.subr.mxu0 0.0
    %5431 = vmatpush1.msra.mxu0 %v5379
    %5432 = vmatprep.subr.mxu0 0.0
    %5433 = vmatpush2.msra.mxu0 0.0
    %5434 = vmatprep.subr.mxu0 0.0
    %5435 = vmatpush2.msra.mxu0 0.0
    %5436 = vmatprep.subr.mxu0 0.0
    %5437 = vmatpush2.msra.mxu0 0.0
    %5438 = vmatprep.subr.mxu0 0.0
    %5439 = vmatpush2.msra.mxu0 0.0
    %5440 = vmatprep.subr.mxu0 0.0
    %5441 = vmatpush2.msra.mxu0 0.0
    %5442 = vmatprep.subr.mxu0 0.0
    %5443 = vmatpush2.msra.mxu0 0.0
    %5444 = vmatprep.subr.mxu0 0.0
    %5445 = vmatpush2.msra.mxu0 0.0
    %5446 = vmatprep.subr.mxu0 0.0
    %5447 = vmatpush2.msra.mxu0 0.0
    %5448 = vmatprep.subr.mxu0 0.0
    %5449 = vmatpush2.msra.mxu0 0.0
    %5450 = vmatprep.subr.mxu0 0.0
    %5451 = vmatpush2.msra.mxu0 0.0
    %5452 = vmatprep.subr.mxu0 0.0
    %5453 = vmatpush2.msra.mxu0 0.0
    %5454 = vmatprep.subr.mxu0 0.0
    %5455 = vmatpush2.msra.mxu0 0.0
    %5456 = vmatprep.subr.mxu0 0.0
    %5457 = vmatpush2.msra.mxu0 0.0
    %5458 = vmatprep.subr.mxu0 0.0
    %5459 = vmatpush2.msra.mxu0 0.0
    %5460 = vmatprep.subr.mxu0 0.0
    %5461 = vmatpush2.msra.mxu0 0.0
    %5462 = vmatprep.subr.mxu0 0.0
    %5463 = vmatpush2.msra.mxu0 0.0
    %5464 = vmatprep.mubr.f32.mxu0 0.0
    %5465 = vmatmul.mubr.f32.gmra.mxu0 %v5395
    %v5466 = vpop.f32.mrf.mxu0
    %v5467 = vadd.f32 %v5392, %v5466
    %v5468 = vpop.f32.mrf.mxu0
    %5469 = vmatprep.mubr.f32.mxu0 0.0
    %5470 = vmatmul.mubr.f32.gmra.mxu0 %v5398
    %v5471 = vpop.f32.mrf.mxu0
    %v5472 = vadd.f32 %v5392, %v5471
    %v5473 = vpop.f32.mrf.mxu0
    %5474 = vdwg.mxu0
    %v5475 = vld [vmem:[#allocation18] sm:$0xff]
    %v5476 = vld [vmem:[#allocation18 + $0x8] sm:$0xff]
    %v5477 = vld [vmem:[#allocation18 + $0x10] sm:$0xff]
    %v5478 = vld [vmem:[#allocation18 + $0x18] sm:$0xff]
    %5479 = vmatprep.subr.mxu0 0.0
    %5480 = vmatpush1.msra.mxu0 0.0
    %5481 = vmatprep.subr.mxu0 0.0
    %5482 = vmatpush1.msra.mxu0 0.0
    %5483 = vmatprep.subr.mxu0 0.0
    %5484 = vmatpush1.msra.mxu0 0.0
    %5485 = vmatprep.subr.mxu0 0.0
    %5486 = vmatpush1.msra.mxu0 0.0
    %5487 = vmatprep.subr.mxu0 0.0
    %5488 = vmatpush1.msra.mxu0 0.0
    %5489 = vmatprep.subr.mxu0 0.0
    %5490 = vmatpush1.msra.mxu0 0.0
    %5491 = vmatprep.subr.mxu0 0.0
    %5492 = vmatpush1.msra.mxu0 0.0
    %5493 = vmatprep.subr.mxu0 0.0
    %5494 = vmatpush1.msra.mxu0 0.0
    %5495 = vmatprep.subr.mxu0 0.0
    %5496 = vmatpush1.msra.mxu0 0.0
    %5497 = vmatprep.subr.mxu0 0.0
    %5498 = vmatpush1.msra.mxu0 0.0
    %5499 = vmatprep.subr.mxu0 0.0
    %5500 = vmatpush1.msra.mxu0 0.0
    %5501 = vmatprep.subr.mxu0 0.0
    %5502 = vmatpush1.msra.mxu0 0.0
    %5503 = vmatprep.subr.mxu0 0.0
    %5504 = vmatpush1.msra.mxu0 %v5478
    %5505 = vmatprep.subr.mxu0 0.0
    %5506 = vmatpush1.msra.mxu0 %v5477
    %5507 = vmatprep.subr.mxu0 0.0
    %5508 = vmatpush1.msra.mxu0 %v5476
    %5509 = vmatprep.subr.mxu0 0.0
    %5510 = vmatpush1.msra.mxu0 %v5475
    %5511 = vmatprep.subr.mxu0 0.0
    %5512 = vmatpush2.msra.mxu0 0.0
    %5513 = vmatprep.subr.mxu0 0.0
    %5514 = vmatpush2.msra.mxu0 0.0
    %5515 = vmatprep.subr.mxu0 0.0
    %5516 = vmatpush2.msra.mxu0 0.0
    %5517 = vmatprep.subr.mxu0 0.0
    %5518 = vmatpush2.msra.mxu0 0.0
    %5519 = vmatprep.subr.mxu0 0.0
    %5520 = vmatpush2.msra.mxu0 0.0
    %5521 = vmatprep.subr.mxu0 0.0
    %5522 = vmatpush2.msra.mxu0 0.0
    %5523 = vmatprep.subr.mxu0 0.0
    %5524 = vmatpush2.msra.mxu0 0.0
    %5525 = vmatprep.subr.mxu0 0.0
    %5526 = vmatpush2.msra.mxu0 0.0
    %5527 = vmatprep.subr.mxu0 0.0
    %5528 = vmatpush2.msra.mxu0 0.0
    %5529 = vmatprep.subr.mxu0 0.0
    %5530 = vmatpush2.msra.mxu0 0.0
    %5531 = vmatprep.subr.mxu0 0.0
    %5532 = vmatpush2.msra.mxu0 0.0
    %5533 = vmatprep.subr.mxu0 0.0
    %5534 = vmatpush2.msra.mxu0 0.0
    %5535 = vmatprep.subr.mxu0 0.0
    %5536 = vmatpush2.msra.mxu0 0.0
    %5537 = vmatprep.subr.mxu0 0.0
    %5538 = vmatpush2.msra.mxu0 0.0
    %5539 = vmatprep.subr.mxu0 0.0
    %5540 = vmatpush2.msra.mxu0 0.0
    %5541 = vmatprep.subr.mxu0 0.0
    %5542 = vmatpush2.msra.mxu0 0.0
    %5543 = vmatprep.mubr.f32.mxu0 0.0
    %5544 = vmatmul.mubr.f32.gmra.mxu0 %v794
    %v5545 = vpop.f32.mrf.mxu0
    %v5546 = vadd.f32 0.0, %v5545
    %v5547 = vpop.f32.mrf.mxu0
    %5548 = vdwg.mxu0
    %v5549 = vadd.f32 %v5467, %v5546
    %v5550 = vxor.u32 %v5549, 2147483648
    %v5551 = vmul.f32 %v5550, 1.442695
    %v5552 = vpow.pop %v5551
    %v5553 = vadd.f32 %v5552, 1.0
    %v5554 = vrcp.pop %v5553
    %v5555 = vmul.f32 1.0, %v5554
    %v5556 = vtanh.pop %v5549
    %v5557 = vmul.f32 %v5555, 0.0
    %5559 = vrot.lane.b32.xlu0 %v5556, 64
    %v5560 = vpop.permute.xlu0 %5559
    %v5562 = vmul.f32 %v5555, %v5560
    %5564 = vrot.lane.b32.xlu0 %v5562, 32
    %v5565 = vpop.permute.xlu0 %5564
    %v5567 = vadd.f32 %v5557, %v5565
    %v5568 = vtanh.pop %v5567
    %5570 = vrot.lane.b32.xlu0 %v5568, 64
    %v5571 = vpop.permute.xlu0 %5570
    %v5573 = vmul.f32 %v5555, %v5571
    %5575 = vrot.lane.b32.xlu0 %v5573, 32
    %v5576 = vpop.permute.xlu0 %5575
    %v5578 = vsel %vm792, %v5576, 0.0
    %v5579 = vld [vmem:[#allocation19] sm:$0xff]
    %v5580 = vld [vmem:[#allocation19 + $0x8] sm:$0xff]
    %v5581 = vld [vmem:[#allocation19 + $0x10] sm:$0xff]
    %v5582 = vld [vmem:[#allocation19 + $0x18] sm:$0xff]
    %v5583 = vld [vmem:[#allocation19 + $0x20] sm:$0xff]
    %v5584 = vld [vmem:[#allocation19 + $0x28] sm:$0xff]
    %v5585 = vld [vmem:[#allocation19 + $0x30] sm:$0xff]
    %v5586 = vld [vmem:[#allocation19 + $0x38] sm:$0xff]
    %v5587 = vld [vmem:[#allocation21] sm:$0x1]
    %v5589 = vlaneseq
    %v5590 = vshrl.u32 %v5589, 7
    %v5591 = vsub.s32 0, %v5590
    %v5592 = vrot.slane %v5587, %v5591
    %v5595 = vsel %vm542, %v5578, 0
    %5597 = vmatprep.subr.mxu0 0.0
    %5598 = vmatpush1.msra.mxu0 0.0
    %5599 = vmatprep.subr.mxu0 0.0
    %5600 = vmatpush1.msra.mxu0 0.0
    %5601 = vmatprep.subr.mxu0 0.0
    %5602 = vmatpush1.msra.mxu0 0.0
    %5603 = vmatprep.subr.mxu0 0.0
    %5604 = vmatpush1.msra.mxu0 0.0
    %5605 = vmatprep.subr.mxu0 0.0
    %5606 = vmatpush1.msra.mxu0 0.0
    %5607 = vmatprep.subr.mxu0 0.0
    %5608 = vmatpush1.msra.mxu0 0.0
    %5609 = vmatprep.subr.mxu0 0.0
    %5610 = vmatpush1.msra.mxu0 0.0
    %5611 = vmatprep.subr.mxu0 0.0
    %5612 = vmatpush1.msra.mxu0 0.0
    %5613 = vmatprep.subr.mxu0 0.0
    %5614 = vmatpush1.msra.mxu0 %v5586
    %5615 = vmatprep.subr.mxu0 0.0
    %5616 = vmatpush1.msra.mxu0 %v5585
    %5617 = vmatprep.subr.mxu0 0.0
    %5618 = vmatpush1.msra.mxu0 %v5584
    %5619 = vmatprep.subr.mxu0 0.0
    %5620 = vmatpush1.msra.mxu0 %v5583
    %5621 = vmatprep.subr.mxu0 0.0
    %5622 = vmatpush1.msra.mxu0 %v5582
    %5623 = vmatprep.subr.mxu0 0.0
    %5624 = vmatpush1.msra.mxu0 %v5581
    %5625 = vmatprep.subr.mxu0 0.0
    %5626 = vmatpush1.msra.mxu0 %v5580
    %5627 = vmatprep.subr.mxu0 0.0
    %5628 = vmatpush1.msra.mxu0 %v5579
    %5629 = vmatprep.subr.mxu0 0.0
    %5630 = vmatpush2.msra.mxu0 0.0
    %5631 = vmatprep.subr.mxu0 0.0
    %5632 = vmatpush2.msra.mxu0 0.0
    %5633 = vmatprep.subr.mxu0 0.0
    %5634 = vmatpush2.msra.mxu0 0.0
    %5635 = vmatprep.subr.mxu0 0.0
    %5636 = vmatpush2.msra.mxu0 0.0
    %5637 = vmatprep.subr.mxu0 0.0
    %5638 = vmatpush2.msra.mxu0 0.0
    %5639 = vmatprep.subr.mxu0 0.0
    %5640 = vmatpush2.msra.mxu0 0.0
    %5641 = vmatprep.subr.mxu0 0.0
    %5642 = vmatpush2.msra.mxu0 0.0
    %5643 = vmatprep.subr.mxu0 0.0
    %5644 = vmatpush2.msra.mxu0 0.0
    %5645 = vmatprep.subr.mxu0 0.0
    %5646 = vmatpush2.msra.mxu0 0.0
    %5647 = vmatprep.subr.mxu0 0.0
    %5648 = vmatpush2.msra.mxu0 0.0
    %5649 = vmatprep.subr.mxu0 0.0
    %5650 = vmatpush2.msra.mxu0 0.0
    %5651 = vmatprep.subr.mxu0 0.0
    %5652 = vmatpush2.msra.mxu0 0.0
    %5653 = vmatprep.subr.mxu0 0.0
    %5654 = vmatpush2.msra.mxu0 0.0
    %5655 = vmatprep.subr.mxu0 0.0
    %5656 = vmatpush2.msra.mxu0 0.0
    %5657 = vmatprep.subr.mxu0 0.0
    %5658 = vmatpush2.msra.mxu0 0.0
    %5659 = vmatprep.subr.mxu0 0.0
    %5660 = vmatpush2.msra.mxu0 0.0
    %5661 = vmatprep.mubr.f32.mxu0 0.0
    %5662 = vmatmul.mubr.f32.gmra.mxu0 %v5595
    %v5663 = vpop.f32.mrf.mxu0
    %v5664 = vadd.f32 %v5592, %v5663
    %v5665 = vpop.f32.mrf.mxu0
    %5666 = vdwg.mxu0
    %v5667 = vxor.u32 %v5664, 2147483648
    %v5668 = vmul.f32 %v5667, 1.442695
    %v5669 = vpow.pop %v5668
    %v5670 = vadd.f32 %v5669, 1.0
    %v5671 = vrcp.pop %v5670
    %v5672 = vmul.f32 1.0, %v5671
    %v5673 = vtanh.pop %v5664
    %v5674 = vmul.f32 %v5672, 0.0
    %5676 = vrot.lane.b32.xlu0 %v5673, 64
    %v5677 = vpop.permute.xlu0 %5676
    %v5679 = vmul.f32 %v5672, %v5677
    %5681 = vrot.lane.b32.xlu0 %v5679, 32
    %v5682 = vpop.permute.xlu0 %5681
    %v5684 = vadd.f32 %v5674, %v5682
    %v5685 = vtanh.pop %v5684
    %5687 = vrot.lane.b32.xlu0 %v5685, 64
    %v5688 = vpop.permute.xlu0 %5687
    %v5690 = vmul.f32 %v5672, %v5688
    %v5691 = vsel %vm792, %v5576, 0
    %5693 = vmatprep.subr.mxu0 0.0
    %5694 = vmatpush1.msra.mxu0 0.0
    %5695 = vmatprep.subr.mxu0 0.0
    %5696 = vmatpush1.msra.mxu0 0.0
    %5697 = vmatprep.subr.mxu0 0.0
    %5698 = vmatpush1.msra.mxu0 0.0
    %5699 = vmatprep.subr.mxu0 0.0
    %5700 = vmatpush1.msra.mxu0 0.0
    %5701 = vmatprep.subr.mxu0 0.0
    %5702 = vmatpush1.msra.mxu0 0.0
    %5703 = vmatprep.subr.mxu0 0.0
    %5704 = vmatpush1.msra.mxu0 0.0
    %5705 = vmatprep.subr.mxu0 0.0
    %5706 = vmatpush1.msra.mxu0 0.0
    %5707 = vmatprep.subr.mxu0 0.0
    %5708 = vmatpush1.msra.mxu0 0.0
    %5709 = vmatprep.subr.mxu0 0.0
    %5710 = vmatpush1.msra.mxu0 0.0
    %5711 = vmatprep.subr.mxu0 0.0
    %5712 = vmatpush1.msra.mxu0 0.0
    %5713 = vmatprep.subr.mxu0 0.0
    %5714 = vmatpush1.msra.mxu0 0.0
    %5715 = vmatprep.subr.mxu0 0.0
    %5716 = vmatpush1.msra.mxu0 0.0
    %5717 = vmatprep.subr.mxu0 0.0
    %5718 = vmatpush1.msra.mxu0 %v5478
    %5719 = vmatprep.subr.mxu0 0.0
    %5720 = vmatpush1.msra.mxu0 %v5477
    %5721 = vmatprep.subr.mxu0 0.0
    %5722 = vmatpush1.msra.mxu0 %v5476
    %5723 = vmatprep.subr.mxu0 0.0
    %5724 = vmatpush1.msra.mxu0 %v5475
    %5725 = vmatprep.subr.mxu0 0.0
    %5726 = vmatpush2.msra.mxu0 0.0
    %5727 = vmatprep.subr.mxu0 0.0
    %5728 = vmatpush2.msra.mxu0 0.0
    %5729 = vmatprep.subr.mxu0 0.0
    %5730 = vmatpush2.msra.mxu0 0.0
    %5731 = vmatprep.subr.mxu0 0.0
    %5732 = vmatpush2.msra.mxu0 0.0
    %5733 = vmatprep.subr.mxu0 0.0
    %5734 = vmatpush2.msra.mxu0 0.0
    %5735 = vmatprep.subr.mxu0 0.0
    %5736 = vmatpush2.msra.mxu0 0.0
    %5737 = vmatprep.subr.mxu0 0.0
    %5738 = vmatpush2.msra.mxu0 0.0
    %5739 = vmatprep.subr.mxu0 0.0
    %5740 = vmatpush2.msra.mxu0 0.0
    %5741 = vmatprep.subr.mxu0 0.0
    %5742 = vmatpush2.msra.mxu0 0.0
    %5743 = vmatprep.subr.mxu0 0.0
    %5744 = vmatpush2.msra.mxu0 0.0
    %5745 = vmatprep.subr.mxu0 0.0
    %5746 = vmatpush2.msra.mxu0 0.0
    %5747 = vmatprep.subr.mxu0 0.0
    %5748 = vmatpush2.msra.mxu0 0.0
    %5749 = vmatprep.subr.mxu0 0.0
    %5750 = vmatpush2.msra.mxu0 0.0
    %5751 = vmatprep.subr.mxu0 0.0
    %5752 = vmatpush2.msra.mxu0 0.0
    %5753 = vmatprep.subr.mxu0 0.0
    %5754 = vmatpush2.msra.mxu0 0.0
    %5755 = vmatprep.subr.mxu0 0.0
    %5756 = vmatpush2.msra.mxu0 0.0
    %5757 = vmatprep.mubr.f32.mxu0 0.0
    %5758 = vmatmul.mubr.f32.gmra.mxu0 %v5691
    %v5759 = vpop.f32.mrf.mxu0
    %v5760 = vadd.f32 0.0, %v5759
    %v5761 = vpop.f32.mrf.mxu0
    %5762 = vdwg.mxu0
    %v5764 = vrot.slane %v5760, 4
    %v5766 = vadd.f32 %v5467, %v5764
    %v5767 = vxor.u32 %v5766, 2147483648
    %v5768 = vmul.f32 %v5767, 1.442695
    %v5769 = vpow.pop %v5768
    %v5770 = vadd.f32 %v5769, 1.0
    %v5771 = vrcp.pop %v5770
    %v5772 = vmul.f32 1.0, %v5771
    %v5773 = vtanh.pop %v5766
    %v5775 = vrot.slane %v5567, 4
    %v5777 = vmul.f32 %v5772, %v5775
    %5779 = vrot.lane.b32.xlu0 %v5773, 64
    %v5780 = vpop.permute.xlu0 %5779
    %v5782 = vmul.f32 %v5772, %v5780
    %5784 = vrot.lane.b32.xlu0 %v5782, 32
    %v5785 = vpop.permute.xlu0 %5784
    %v5787 = vadd.f32 %v5777, %v5785
    %v5788 = vtanh.pop %v5787
    %5790 = vrot.lane.b32.xlu0 %v5788, 64
    %v5791 = vpop.permute.xlu0 %5790
    %v5793 = vmul.f32 %v5772, %v5791
    %5795 = vrot.lane.b32.xlu0 %v5793, 32
    %v5796 = vpop.permute.xlu0 %5795
    %v5799 = vrot.slane %v5690, 4
    %5800 = vrot.lane.b32.xlu0 %v5799, 64
    %v5801 = vpop.permute.xlu0 %5800
    %v5803 = vsel %vm792, %v5796, %v5801
    %v5805 = vrot.slane %v5803, 4
    %v5806 = vsel %vm542, %v5805, 0
    %5808 = vmatprep.subr.mxu0 0.0
    %5809 = vmatpush1.msra.mxu0 0.0
    %5810 = vmatprep.subr.mxu0 0.0
    %5811 = vmatpush1.msra.mxu0 0.0
    %5812 = vmatprep.subr.mxu0 0.0
    %5813 = vmatpush1.msra.mxu0 0.0
    %5814 = vmatprep.subr.mxu0 0.0
    %5815 = vmatpush1.msra.mxu0 0.0
    %5816 = vmatprep.subr.mxu0 0.0
    %5817 = vmatpush1.msra.mxu0 0.0
    %5818 = vmatprep.subr.mxu0 0.0
    %5819 = vmatpush1.msra.mxu0 0.0
    %5820 = vmatprep.subr.mxu0 0.0
    %5821 = vmatpush1.msra.mxu0 0.0
    %5822 = vmatprep.subr.mxu0 0.0
    %5823 = vmatpush1.msra.mxu0 0.0
    %5824 = vmatprep.subr.mxu0 0.0
    %5825 = vmatpush1.msra.mxu0 %v5586
    %5826 = vmatprep.subr.mxu0 0.0
    %5827 = vmatpush1.msra.mxu0 %v5585
    %5828 = vmatprep.subr.mxu0 0.0
    %5829 = vmatpush1.msra.mxu0 %v5584
    %5830 = vmatprep.subr.mxu0 0.0
    %5831 = vmatpush1.msra.mxu0 %v5583
    %5832 = vmatprep.subr.mxu0 0.0
    %5833 = vmatpush1.msra.mxu0 %v5582
    %5834 = vmatprep.subr.mxu0 0.0
    %5835 = vmatpush1.msra.mxu0 %v5581
    %5836 = vmatprep.subr.mxu0 0.0
    %5837 = vmatpush1.msra.mxu0 %v5580
    %5838 = vmatprep.subr.mxu0 0.0
    %5839 = vmatpush1.msra.mxu0 %v5579
    %5840 = vmatprep.subr.mxu0 0.0
    %5841 = vmatpush2.msra.mxu0 0.0
    %5842 = vmatprep.subr.mxu0 0.0
    %5843 = vmatpush2.msra.mxu0 0.0
    %5844 = vmatprep.subr.mxu0 0.0
    %5845 = vmatpush2.msra.mxu0 0.0
    %5846 = vmatprep.subr.mxu0 0.0
    %5847 = vmatpush2.msra.mxu0 0.0
    %5848 = vmatprep.subr.mxu0 0.0
    %5849 = vmatpush2.msra.mxu0 0.0
    %5850 = vmatprep.subr.mxu0 0.0
    %5851 = vmatpush2.msra.mxu0 0.0
    %5852 = vmatprep.subr.mxu0 0.0
    %5853 = vmatpush2.msra.mxu0 0.0
    %5854 = vmatprep.subr.mxu0 0.0
    %5855 = vmatpush2.msra.mxu0 0.0
    %5856 = vmatprep.subr.mxu0 0.0
    %5857 = vmatpush2.msra.mxu0 0.0
    %5858 = vmatprep.subr.mxu0 0.0
    %5859 = vmatpush2.msra.mxu0 0.0
    %5860 = vmatprep.subr.mxu0 0.0
    %5861 = vmatpush2.msra.mxu0 0.0
    %5862 = vmatprep.subr.mxu0 0.0
    %5863 = vmatpush2.msra.mxu0 0.0
    %5864 = vmatprep.subr.mxu0 0.0
    %5865 = vmatpush2.msra.mxu0 0.0
    %5866 = vmatprep.subr.mxu0 0.0
    %5867 = vmatpush2.msra.mxu0 0.0
    %5868 = vmatprep.subr.mxu0 0.0
    %5869 = vmatpush2.msra.mxu0 0.0
    %5870 = vmatprep.subr.mxu0 0.0
    %5871 = vmatpush2.msra.mxu0 0.0
    %5872 = vmatprep.mubr.f32.mxu0 0.0
    %5873 = vmatmul.mubr.f32.gmra.mxu0 %v5806
    %v5874 = vpop.f32.mrf.mxu0
    %v5875 = vadd.f32 %v5592, %v5874
    %v5876 = vpop.f32.mrf.mxu0
    %5877 = vdwg.mxu0
    %v5878 = vxor.u32 %v5875, 2147483648
    %v5879 = vmul.f32 %v5878, 1.442695
    %v5880 = vpow.pop %v5879
    %v5881 = vadd.f32 %v5880, 1.0
    %v5882 = vrcp.pop %v5881
    %v5883 = vmul.f32 1.0, %v5882
    %v5884 = vtanh.pop %v5875
    %v5885 = vmul.f32 %v5883, %v5684
    %5887 = vrot.lane.b32.xlu0 %v5884, 64
    %v5888 = vpop.permute.xlu0 %5887
    %v5890 = vmul.f32 %v5883, %v5888
    %5892 = vrot.lane.b32.xlu0 %v5890, 32
    %v5893 = vpop.permute.xlu0 %5892
    %v5895 = vadd.f32 %v5885, %v5893
    %v5896 = vtanh.pop %v5895
    %5898 = vrot.lane.b32.xlu0 %v5896, 64
    %v5899 = vpop.permute.xlu0 %5898
    %v5901 = vmul.f32 %v5883, %v5899
    %v5902 = vrot.slane %v5793, 4
    %5903 = vrot.lane.b32.xlu0 %v5902, 32
    %v5904 = vpop.permute.xlu0 %5903
    %v5905 = vsel %vm792, %v5904, 0
    %5907 = vmatprep.subr.mxu0 0.0
    %5908 = vmatpush1.msra.mxu0 0.0
    %5909 = vmatprep.subr.mxu0 0.0
    %5910 = vmatpush1.msra.mxu0 0.0
    %5911 = vmatprep.subr.mxu0 0.0
    %5912 = vmatpush1.msra.mxu0 0.0
    %5913 = vmatprep.subr.mxu0 0.0
    %5914 = vmatpush1.msra.mxu0 0.0
    %5915 = vmatprep.subr.mxu0 0.0
    %5916 = vmatpush1.msra.mxu0 0.0
    %5917 = vmatprep.subr.mxu0 0.0
    %5918 = vmatpush1.msra.mxu0 0.0
    %5919 = vmatprep.subr.mxu0 0.0
    %5920 = vmatpush1.msra.mxu0 0.0
    %5921 = vmatprep.subr.mxu0 0.0
    %5922 = vmatpush1.msra.mxu0 0.0
    %5923 = vmatprep.subr.mxu0 0.0
    %5924 = vmatpush1.msra.mxu0 0.0
    %5925 = vmatprep.subr.mxu0 0.0
    %5926 = vmatpush1.msra.mxu0 0.0
    %5927 = vmatprep.subr.mxu0 0.0
    %5928 = vmatpush1.msra.mxu0 0.0
    %5929 = vmatprep.subr.mxu0 0.0
    %5930 = vmatpush1.msra.mxu0 0.0
    %5931 = vmatprep.subr.mxu0 0.0
    %5932 = vmatpush1.msra.mxu0 %v5478
    %5933 = vmatprep.subr.mxu0 0.0
    %5934 = vmatpush1.msra.mxu0 %v5477
    %5935 = vmatprep.subr.mxu0 0.0
    %5936 = vmatpush1.msra.mxu0 %v5476
    %5937 = vmatprep.subr.mxu0 0.0
    %5938 = vmatpush1.msra.mxu0 %v5475
    %5939 = vmatprep.subr.mxu0 0.0
    %5940 = vmatpush2.msra.mxu0 0.0
    %5941 = vmatprep.subr.mxu0 0.0
    %5942 = vmatpush2.msra.mxu0 0.0
    %5943 = vmatprep.subr.mxu0 0.0
    %5944 = vmatpush2.msra.mxu0 0.0
    %5945 = vmatprep.subr.mxu0 0.0
    %5946 = vmatpush2.msra.mxu0 0.0
    %5947 = vmatprep.subr.mxu0 0.0
    %5948 = vmatpush2.msra.mxu0 0.0
    %5949 = vmatprep.subr.mxu0 0.0
    %5950 = vmatpush2.msra.mxu0 0.0
    %5951 = vmatprep.subr.mxu0 0.0
    %5952 = vmatpush2.msra.mxu0 0.0
    %5953 = vmatprep.subr.mxu0 0.0
    %5954 = vmatpush2.msra.mxu0 0.0
    %5955 = vmatprep.subr.mxu0 0.0
    %5956 = vmatpush2.msra.mxu0 0.0
    %5957 = vmatprep.subr.mxu0 0.0
    %5958 = vmatpush2.msra.mxu0 0.0
    %5959 = vmatprep.subr.mxu0 0.0
    %5960 = vmatpush2.msra.mxu0 0.0
    %5961 = vmatprep.subr.mxu0 0.0
    %5962 = vmatpush2.msra.mxu0 0.0
    %5963 = vmatprep.subr.mxu0 0.0
    %5964 = vmatpush2.msra.mxu0 0.0
    %5965 = vmatprep.subr.mxu0 0.0
    %5966 = vmatpush2.msra.mxu0 0.0
    %5967 = vmatprep.subr.mxu0 0.0
    %5968 = vmatpush2.msra.mxu0 0.0
    %5969 = vmatprep.subr.mxu0 0.0
    %5970 = vmatpush2.msra.mxu0 0.0
    %5971 = vmatprep.mubr.f32.mxu0 0.0
    %5972 = vmatmul.mubr.f32.gmra.mxu0 %v5905
    %v5973 = vpop.f32.mrf.mxu0
    %v5974 = vadd.f32 0.0, %v5973
    %v5975 = vpop.f32.mrf.mxu0
    %5976 = vdwg.mxu0
    %v5977 = vadd.f32 %v5472, %v5974
    %v5978 = vxor.u32 %v5977, 2147483648
    %v5979 = vmul.f32 %v5978, 1.442695
    %v5980 = vpow.pop %v5979
    %v5981 = vadd.f32 %v5980, 1.0
    %v5982 = vrcp.pop %v5981
    %v5983 = vmul.f32 1.0, %v5982
    %v5984 = vtanh.pop %v5977
    %v5986 = vrot.slane %v5787, 4
    %v5988 = vmul.f32 %v5983, %v5986
    %5990 = vrot.lane.b32.xlu0 %v5984, 64
    %v5991 = vpop.permute.xlu0 %5990
    %v5993 = vmul.f32 %v5983, %v5991
    %5995 = vrot.lane.b32.xlu0 %v5993, 32
    %v5996 = vpop.permute.xlu0 %5995
    %v5998 = vadd.f32 %v5988, %v5996
    %v5999 = vtanh.pop %v5998
    %6001 = vrot.lane.b32.xlu0 %v5999, 64
    %v6002 = vpop.permute.xlu0 %6001
    %v6004 = vmul.f32 %v5983, %v6002
    %6006 = vrot.lane.b32.xlu0 %v6004, 32
    %v6007 = vpop.permute.xlu0 %6006
    %6010 = vrot.lane.b32.xlu0 %v5901, 64
    %v6011 = vpop.permute.xlu0 %6010
    %v6013 = vsel %vm792, %v6007, %v6011
    %v6015 = vsel %vm542, %v6013, 0
    %6017 = vmatprep.subr.mxu0 0.0
    %6018 = vmatpush1.msra.mxu0 0.0
    %6019 = vmatprep.subr.mxu0 0.0
    %6020 = vmatpush1.msra.mxu0 0.0
    %6021 = vmatprep.subr.mxu0 0.0
    %6022 = vmatpush1.msra.mxu0 0.0
    %6023 = vmatprep.subr.mxu0 0.0
    %6024 = vmatpush1.msra.mxu0 0.0
    %6025 = vmatprep.subr.mxu0 0.0
    %6026 = vmatpush1.msra.mxu0 0.0
    %6027 = vmatprep.subr.mxu0 0.0
    %6028 = vmatpush1.msra.mxu0 0.0
    %6029 = vmatprep.subr.mxu0 0.0
    %6030 = vmatpush1.msra.mxu0 0.0
    %6031 = vmatprep.subr.mxu0 0.0
    %6032 = vmatpush1.msra.mxu0 0.0
    %6033 = vmatprep.subr.mxu0 0.0
    %6034 = vmatpush1.msra.mxu0 %v5586
    %6035 = vmatprep.subr.mxu0 0.0
    %6036 = vmatpush1.msra.mxu0 %v5585
    %6037 = vmatprep.subr.mxu0 0.0
    %6038 = vmatpush1.msra.mxu0 %v5584
    %6039 = vmatprep.subr.mxu0 0.0
    %6040 = vmatpush1.msra.mxu0 %v5583
    %6041 = vmatprep.subr.mxu0 0.0
    %6042 = vmatpush1.msra.mxu0 %v5582
    %6043 = vmatprep.subr.mxu0 0.0
    %6044 = vmatpush1.msra.mxu0 %v5581
    %6045 = vmatprep.subr.mxu0 0.0
    %6046 = vmatpush1.msra.mxu0 %v5580
    %6047 = vmatprep.subr.mxu0 0.0
    %6048 = vmatpush1.msra.mxu0 %v5579
    %6049 = vmatprep.subr.mxu0 0.0
    %6050 = vmatpush2.msra.mxu0 0.0
    %6051 = vmatprep.subr.mxu0 0.0
    %6052 = vmatpush2.msra.mxu0 0.0
    %6053 = vmatprep.subr.mxu0 0.0
    %6054 = vmatpush2.msra.mxu0 0.0
    %6055 = vmatprep.subr.mxu0 0.0
    %6056 = vmatpush2.msra.mxu0 0.0
    %6057 = vmatprep.subr.mxu0 0.0
    %6058 = vmatpush2.msra.mxu0 0.0
    %6059 = vmatprep.subr.mxu0 0.0
    %6060 = vmatpush2.msra.mxu0 0.0
    %6061 = vmatprep.subr.mxu0 0.0
    %6062 = vmatpush2.msra.mxu0 0.0
    %6063 = vmatprep.subr.mxu0 0.0
    %6064 = vmatpush2.msra.mxu0 0.0
    %6065 = vmatprep.subr.mxu0 0.0
    %6066 = vmatpush2.msra.mxu0 0.0
    %6067 = vmatprep.subr.mxu0 0.0
    %6068 = vmatpush2.msra.mxu0 0.0
    %6069 = vmatprep.subr.mxu0 0.0
    %6070 = vmatpush2.msra.mxu0 0.0
    %6071 = vmatprep.subr.mxu0 0.0
    %6072 = vmatpush2.msra.mxu0 0.0
    %6073 = vmatprep.subr.mxu0 0.0
    %6074 = vmatpush2.msra.mxu0 0.0
    %6075 = vmatprep.subr.mxu0 0.0
    %6076 = vmatpush2.msra.mxu0 0.0
    %6077 = vmatprep.subr.mxu0 0.0
    %6078 = vmatpush2.msra.mxu0 0.0
    %6079 = vmatprep.subr.mxu0 0.0
    %6080 = vmatpush2.msra.mxu0 0.0
    %6081 = vmatprep.mubr.f32.mxu0 0.0
    %6082 = vmatmul.mubr.f32.gmra.mxu0 %v6015
    %v6083 = vpop.f32.mrf.mxu0
    %v6084 = vadd.f32 %v5592, %v6083
    %v6085 = vpop.f32.mrf.mxu0
    %6086 = vdwg.mxu0
    %v6087 = vxor.u32 %v6084, 2147483648
    %v6088 = vmul.f32 %v6087, 1.442695
    %v6089 = vpow.pop %v6088
    %v6090 = vadd.f32 %v6089, 1.0
    %v6091 = vrcp.pop %v6090
    %v6092 = vmul.f32 1.0, %v6091
    %v6093 = vtanh.pop %v6084
    %v6094 = vmul.f32 %v6092, %v5895
    %6096 = vrot.lane.b32.xlu0 %v6093, 64
    %v6097 = vpop.permute.xlu0 %6096
    %v6099 = vmul.f32 %v6092, %v6097
    %6101 = vrot.lane.b32.xlu0 %v6099, 32
    %v6102 = vpop.permute.xlu0 %6101
    %v6104 = vadd.f32 %v6094, %v6102
    %v6105 = vtanh.pop %v6104
    %6107 = vrot.lane.b32.xlu0 %v6105, 64
    %v6108 = vpop.permute.xlu0 %6107
    %v6110 = vmul.f32 %v6092, %v6108
    %v6111 = vsel %vm792, %v6007, 0
    %6113 = vmatprep.subr.mxu0 0.0
    %6114 = vmatpush1.msra.mxu0 0.0
    %6115 = vmatprep.subr.mxu0 0.0
    %6116 = vmatpush1.msra.mxu0 0.0
    %6117 = vmatprep.subr.mxu0 0.0
    %6118 = vmatpush1.msra.mxu0 0.0
    %6119 = vmatprep.subr.mxu0 0.0
    %6120 = vmatpush1.msra.mxu0 0.0
    %6121 = vmatprep.subr.mxu0 0.0
    %6122 = vmatpush1.msra.mxu0 0.0
    %6123 = vmatprep.subr.mxu0 0.0
    %6124 = vmatpush1.msra.mxu0 0.0
    %6125 = vmatprep.subr.mxu0 0.0
    %6126 = vmatpush1.msra.mxu0 0.0
    %6127 = vmatprep.subr.mxu0 0.0
    %6128 = vmatpush1.msra.mxu0 0.0
    %6129 = vmatprep.subr.mxu0 0.0
    %6130 = vmatpush1.msra.mxu0 0.0
    %6131 = vmatprep.subr.mxu0 0.0
    %6132 = vmatpush1.msra.mxu0 0.0
    %6133 = vmatprep.subr.mxu0 0.0
    %6134 = vmatpush1.msra.mxu0 0.0
    %6135 = vmatprep.subr.mxu0 0.0
    %6136 = vmatpush1.msra.mxu0 0.0
    %6137 = vmatprep.subr.mxu0 0.0
    %6138 = vmatpush1.msra.mxu0 %v5478
    %6139 = vmatprep.subr.mxu0 0.0
    %6140 = vmatpush1.msra.mxu0 %v5477
    %6141 = vmatprep.subr.mxu0 0.0
    %6142 = vmatpush1.msra.mxu0 %v5476
    %6143 = vmatprep.subr.mxu0 0.0
    %6144 = vmatpush1.msra.mxu0 %v5475
    %6145 = vmatprep.subr.mxu0 0.0
    %6146 = vmatpush2.msra.mxu0 0.0
    %6147 = vmatprep.subr.mxu0 0.0
    %6148 = vmatpush2.msra.mxu0 0.0
    %6149 = vmatprep.subr.mxu0 0.0
    %6150 = vmatpush2.msra.mxu0 0.0
    %6151 = vmatprep.subr.mxu0 0.0
    %6152 = vmatpush2.msra.mxu0 0.0
    %6153 = vmatprep.subr.mxu0 0.0
    %6154 = vmatpush2.msra.mxu0 0.0
    %6155 = vmatprep.subr.mxu0 0.0
    %6156 = vmatpush2.msra.mxu0 0.0
    %6157 = vmatprep.subr.mxu0 0.0
    %6158 = vmatpush2.msra.mxu0 0.0
    %6159 = vmatprep.subr.mxu0 0.0
    %6160 = vmatpush2.msra.mxu0 0.0
    %6161 = vmatprep.subr.mxu0 0.0
    %6162 = vmatpush2.msra.mxu0 0.0
    %6163 = vmatprep.subr.mxu0 0.0
    %6164 = vmatpush2.msra.mxu0 0.0
    %6165 = vmatprep.subr.mxu0 0.0
    %6166 = vmatpush2.msra.mxu0 0.0
    %6167 = vmatprep.subr.mxu0 0.0
    %6168 = vmatpush2.msra.mxu0 0.0
    %6169 = vmatprep.subr.mxu0 0.0
    %6170 = vmatpush2.msra.mxu0 0.0
    %6171 = vmatprep.subr.mxu0 0.0
    %6172 = vmatpush2.msra.mxu0 0.0
    %6173 = vmatprep.subr.mxu0 0.0
    %6174 = vmatpush2.msra.mxu0 0.0
    %6175 = vmatprep.subr.mxu0 0.0
    %6176 = vmatpush2.msra.mxu0 0.0
    %6177 = vmatprep.mubr.f32.mxu0 0.0
    %6178 = vmatmul.mubr.f32.gmra.mxu0 %v6111
    %v6179 = vpop.f32.mrf.mxu0
    %v6180 = vadd.f32 0.0, %v6179
    %v6181 = vpop.f32.mrf.mxu0
    %6182 = vdwg.mxu0
    %v6184 = vrot.slane %v6180, 4
    %v6186 = vadd.f32 %v5472, %v6184
    %v6187 = vxor.u32 %v6186, 2147483648
    %v6188 = vmul.f32 %v6187, 1.442695
    %v6189 = vpow.pop %v6188
    %v6190 = vadd.f32 %v6189, 1.0
    %v6191 = vrcp.pop %v6190
    %v6192 = vmul.f32 1.0, %v6191
    %v6193 = vtanh.pop %v6186
    %v6195 = vrot.slane %v5998, 4
    %v6197 = vmul.f32 %v6192, %v6195
    %6199 = vrot.lane.b32.xlu0 %v6193, 64
    %v6200 = vpop.permute.xlu0 %6199
    %v6202 = vmul.f32 %v6192, %v6200
    %6204 = vrot.lane.b32.xlu0 %v6202, 32
    %v6205 = vpop.permute.xlu0 %6204
    %v6207 = vadd.f32 %v6197, %v6205
    %v6208 = vtanh.pop %v6207
    %6210 = vrot.lane.b32.xlu0 %v6208, 64
    %v6211 = vpop.permute.xlu0 %6210
    %v6213 = vmul.f32 %v6192, %v6211
    %6215 = vrot.lane.b32.xlu0 %v6213, 32
    %v6216 = vpop.permute.xlu0 %6215
    %v6219 = vrot.slane %v6110, 4
    %6220 = vrot.lane.b32.xlu0 %v6219, 64
    %v6221 = vpop.permute.xlu0 %6220
    %v6223 = vsel %vm792, %v6216, %v6221
    %v6225 = vrot.slane %v6223, 4
    %v6226 = vsel %vm542, %v6225, 0
    %6228 = vmatprep.subr.mxu0 0.0
    %6229 = vmatpush1.msra.mxu0 0.0
    %6230 = vmatprep.subr.mxu0 0.0
    %6231 = vmatpush1.msra.mxu0 0.0
    %6232 = vmatprep.subr.mxu0 0.0
    %6233 = vmatpush1.msra.mxu0 0.0
    %6234 = vmatprep.subr.mxu0 0.0
    %6235 = vmatpush1.msra.mxu0 0.0
    %6236 = vmatprep.subr.mxu0 0.0
    %6237 = vmatpush1.msra.mxu0 0.0
    %6238 = vmatprep.subr.mxu0 0.0
    %6239 = vmatpush1.msra.mxu0 0.0
    %6240 = vmatprep.subr.mxu0 0.0
    %6241 = vmatpush1.msra.mxu0 0.0
    %6242 = vmatprep.subr.mxu0 0.0
    %6243 = vmatpush1.msra.mxu0 0.0
    %6244 = vmatprep.subr.mxu0 0.0
    %6245 = vmatpush1.msra.mxu0 %v5586
    %6246 = vmatprep.subr.mxu0 0.0
    %6247 = vmatpush1.msra.mxu0 %v5585
    %6248 = vmatprep.subr.mxu0 0.0
    %6249 = vmatpush1.msra.mxu0 %v5584
    %6250 = vmatprep.subr.mxu0 0.0
    %6251 = vmatpush1.msra.mxu0 %v5583
    %6252 = vmatprep.subr.mxu0 0.0
    %6253 = vmatpush1.msra.mxu0 %v5582
    %6254 = vmatprep.subr.mxu0 0.0
    %6255 = vmatpush1.msra.mxu0 %v5581
    %6256 = vmatprep.subr.mxu0 0.0
    %6257 = vmatpush1.msra.mxu0 %v5580
    %6258 = vmatprep.subr.mxu0 0.0
    %6259 = vmatpush1.msra.mxu0 %v5579
    %6260 = vmatprep.subr.mxu0 0.0
    %6261 = vmatpush2.msra.mxu0 0.0
    %6262 = vmatprep.subr.mxu0 0.0
    %6263 = vmatpush2.msra.mxu0 0.0
    %6264 = vmatprep.subr.mxu0 0.0
    %6265 = vmatpush2.msra.mxu0 0.0
    %6266 = vmatprep.subr.mxu0 0.0
    %6267 = vmatpush2.msra.mxu0 0.0
    %6268 = vmatprep.subr.mxu0 0.0
    %6269 = vmatpush2.msra.mxu0 0.0
    %6270 = vmatprep.subr.mxu0 0.0
    %6271 = vmatpush2.msra.mxu0 0.0
    %6272 = vmatprep.subr.mxu0 0.0
    %6273 = vmatpush2.msra.mxu0 0.0
    %6274 = vmatprep.subr.mxu0 0.0
    %6275 = vmatpush2.msra.mxu0 0.0
    %6276 = vmatprep.subr.mxu0 0.0
    %6277 = vmatpush2.msra.mxu0 0.0
    %6278 = vmatprep.subr.mxu0 0.0
    %6279 = vmatpush2.msra.mxu0 0.0
    %6280 = vmatprep.subr.mxu0 0.0
    %6281 = vmatpush2.msra.mxu0 0.0
    %6282 = vmatprep.subr.mxu0 0.0
    %6283 = vmatpush2.msra.mxu0 0.0
    %6284 = vmatprep.subr.mxu0 0.0
    %6285 = vmatpush2.msra.mxu0 0.0
    %6286 = vmatprep.subr.mxu0 0.0
    %6287 = vmatpush2.msra.mxu0 0.0
    %6288 = vmatprep.subr.mxu0 0.0
    %6289 = vmatpush2.msra.mxu0 0.0
    %6290 = vmatprep.subr.mxu0 0.0
    %6291 = vmatpush2.msra.mxu0 0.0
    %6292 = vmatprep.mubr.f32.mxu0 0.0
    %6293 = vmatmul.mubr.f32.gmra.mxu0 %v6226
    %v6294 = vpop.f32.mrf.mxu0
    %v6295 = vadd.f32 %v5592, %v6294
    %v6296 = vpop.f32.mrf.mxu0
    %6297 = vdwg.mxu0
    %v6298 = vxor.u32 %v6295, 2147483648
    %v6299 = vmul.f32 %v6298, 1.442695
    %v6300 = vpow.pop %v6299
    %v6301 = vadd.f32 %v6300, 1.0
    %v6302 = vrcp.pop %v6301
    %v6303 = vmul.f32 1.0, %v6302
    %v6304 = vtanh.pop %v6295
    %v6305 = vmul.f32 %v6303, %v6104
    %6307 = vrot.lane.b32.xlu0 %v6304, 64
    %v6308 = vpop.permute.xlu0 %6307
    %v6310 = vmul.f32 %v6303, %v6308
    %6312 = vrot.lane.b32.xlu0 %v6310, 32
    %v6313 = vpop.permute.xlu0 %6312
    %v6315 = vadd.f32 %v6305, %v6313
    %v6316 = vtanh.pop %v6315
    %6318 = vrot.lane.b32.xlu0 %v6316, 64
    %v6319 = vpop.permute.xlu0 %6318
    %v6321 = vmul.f32 %v6303, %v6319
    %v6322 = vld [vmem:[#allocation22] sm:$0x1]
    %v6324 = vlaneseq
    %v6325 = vshrl.u32 %v6324, 7
    %v6326 = vsub.s32 0, %v6325
    %v6327 = vrot.slane %v6322, %v6326
    %6328 = vrot.lane.b32.xlu0 %v6327, 96
    %v6329 = vpop.permute.xlu0 %6328
    %v6331 = vmul.f32 %v6321, %v6329
    %6333 = vrot.lane.b32.xlu0 %v6331, 32
    %v6334 = vpop.permute.xlu0 %6333
    %vm6336 = vcmask 257024
    %v6337 = vsel %vm6336, %v6334, 0.0
    %6338 = vadd.xlane.f32.xlu0 %v6337
    %v6339 = vpop.xlane.xlu0 %6338
    %v6340 = vld [vmem:[#allocation3] sm:$0x1]
    %v6342 = vlaneseq
    %v6343 = vshrl.u32 %v6342, 7
    %v6344 = vsub.s32 0, %v6343
    %v6345 = vrot.slane %v6340, %v6344
    %v6347 = vadd.f32 %v6339, %v6345
    %vm6348 = vcmask 3072
    %6349 = vst.msk [vmem:[%s26] sm:$0xf] %vm6348, %v6347
    %v6350 = vld [vmem:[#allocation24] sm:$0xff]
    %v6351 = vld [vmem:[#allocation24 + $0x8] sm:$0xff]
    %v6352 = vld [vmem:[#allocation24 + $0x10] sm:$0xff]
    %v6353 = vld [vmem:[#allocation24 + $0x18] sm:$0xff]
    %v6354 = vld [vmem:[#allocation25] sm:$0x1]
    %v6356 = vlaneseq
    %v6357 = vshrl.u32 %v6356, 7
    %v6358 = vsub.s32 0, %v6357
    %v6359 = vrot.slane %v6354, %v6358
    %v6362 = vsel %vm792, %v5341, 0
    %v6365 = vsel %vm792, %v5342, 0
    %6367 = vmatprep.subr.mxu0 0.0
    %6368 = vmatpush1.msra.mxu0 0.0
    %6369 = vmatprep.subr.mxu0 0.0
    %6370 = vmatpush1.msra.mxu0 0.0
    %6371 = vmatprep.subr.mxu0 0.0
    %6372 = vmatpush1.msra.mxu0 0.0
    %6373 = vmatprep.subr.mxu0 0.0
    %6374 = vmatpush1.msra.mxu0 0.0
    %6375 = vmatprep.subr.mxu0 0.0
    %6376 = vmatpush1.msra.mxu0 0.0
    %6377 = vmatprep.subr.mxu0 0.0
    %6378 = vmatpush1.msra.mxu0 0.0
    %6379 = vmatprep.subr.mxu0 0.0
    %6380 = vmatpush1.msra.mxu0 0.0
    %6381 = vmatprep.subr.mxu0 0.0
    %6382 = vmatpush1.msra.mxu0 0.0
    %6383 = vmatprep.subr.mxu0 0.0
    %6384 = vmatpush1.msra.mxu0 0.0
    %6385 = vmatprep.subr.mxu0 0.0
    %6386 = vmatpush1.msra.mxu0 0.0
    %6387 = vmatprep.subr.mxu0 0.0
    %6388 = vmatpush1.msra.mxu0 0.0
    %6389 = vmatprep.subr.mxu0 0.0
    %6390 = vmatpush1.msra.mxu0 0.0
    %6391 = vmatprep.subr.mxu0 0.0
    %6392 = vmatpush1.msra.mxu0 %v6353
    %6393 = vmatprep.subr.mxu0 0.0
    %6394 = vmatpush1.msra.mxu0 %v6352
    %6395 = vmatprep.subr.mxu0 0.0
    %6396 = vmatpush1.msra.mxu0 %v6351
    %6397 = vmatprep.subr.mxu0 0.0
    %6398 = vmatpush1.msra.mxu0 %v6350
    %6399 = vmatprep.subr.mxu0 0.0
    %6400 = vmatpush2.msra.mxu0 0.0
    %6401 = vmatprep.subr.mxu0 0.0
    %6402 = vmatpush2.msra.mxu0 0.0
    %6403 = vmatprep.subr.mxu0 0.0
    %6404 = vmatpush2.msra.mxu0 0.0
    %6405 = vmatprep.subr.mxu0 0.0
    %6406 = vmatpush2.msra.mxu0 0.0
    %6407 = vmatprep.subr.mxu0 0.0
    %6408 = vmatpush2.msra.mxu0 0.0
    %6409 = vmatprep.subr.mxu0 0.0
    %6410 = vmatpush2.msra.mxu0 0.0
    %6411 = vmatprep.subr.mxu0 0.0
    %6412 = vmatpush2.msra.mxu0 0.0
    %6413 = vmatprep.subr.mxu0 0.0
    %6414 = vmatpush2.msra.mxu0 0.0
    %6415 = vmatprep.subr.mxu0 0.0
    %6416 = vmatpush2.msra.mxu0 0.0
    %6417 = vmatprep.subr.mxu0 0.0
    %6418 = vmatpush2.msra.mxu0 0.0
    %6419 = vmatprep.subr.mxu0 0.0
    %6420 = vmatpush2.msra.mxu0 0.0
    %6421 = vmatprep.subr.mxu0 0.0
    %6422 = vmatpush2.msra.mxu0 0.0
    %6423 = vmatprep.subr.mxu0 0.0
    %6424 = vmatpush2.msra.mxu0 0.0
    %6425 = vmatprep.subr.mxu0 0.0
    %6426 = vmatpush2.msra.mxu0 0.0
    %6427 = vmatprep.subr.mxu0 0.0
    %6428 = vmatpush2.msra.mxu0 0.0
    %6429 = vmatprep.subr.mxu0 0.0
    %6430 = vmatpush2.msra.mxu0 0.0
    %6431 = vmatprep.mubr.f32.mxu0 0.0
    %6432 = vmatmul.mubr.f32.gmra.mxu0 %v6362
    %v6433 = vpop.f32.mrf.mxu0
    %v6434 = vadd.f32 %v6359, %v6433
    %v6435 = vpop.f32.mrf.mxu0
    %6436 = vmatprep.mubr.f32.mxu0 0.0
    %6437 = vmatmul.mubr.f32.gmra.mxu0 %v6365
    %v6438 = vpop.f32.mrf.mxu0
    %v6439 = vadd.f32 %v6359, %v6438
    %v6440 = vpop.f32.mrf.mxu0
    %6441 = vdwg.mxu0
    %v6443 = vrot.slane %v5200, 1
    %v6445 = vrot.slane %v5200, 5
    %vm6447 = vcmask 1042432
    %v6448 = vsel %vm6447, %v6443, %v6445
    %v6449 = vsel %vm6447, %v6445, %v6443
    %v6451 = vrot.slane %v5201, 1
    %v6453 = vrot.slane %v5201, 5
    %v6455 = vsel %vm6447, %v6451, %v6453
    %v6456 = vsel %vm6447, %v6453, %v6451
    %v6458 = vrot.slane %v6449, 4
    %v6461 = vrot.slane %v6456, 4
    %vm6463 = vcmask 1043456
    %v6464 = vsel %vm6463, %v6448, %v6458
    %v6465 = vsel %vm6463, %v6455, %v6461
    %v6466 = vrot.slane %v5200, 2
    %v6468 = vrot.slane %v5200, 6
    %vm6470 = vcmask 1041408
    %v6471 = vsel %vm6470, %v6466, %v6468
    %v6472 = vsel %vm6470, %v6468, %v6466
    %v6473 = vrot.slane %v5201, 2
    %v6475 = vrot.slane %v5201, 6
    %v6477 = vsel %vm6470, %v6473, %v6475
    %v6478 = vsel %vm6470, %v6475, %v6473
    %v6480 = vrot.slane %v6472, 4
    %v6483 = vrot.slane %v6478, 4
    %v6485 = vsel %vm6463, %v6471, %v6480
    %v6486 = vsel %vm6463, %v6477, %v6483
    %v6487 = vrot.slane %v5200, 3
    %v6489 = vrot.slane %v5200, 7
    %vm6491 = vcmask 1040384
    %v6492 = vsel %vm6491, %v6487, %v6489
    %v6493 = vsel %vm6491, %v6489, %v6487
    %v6494 = vrot.slane %v5201, 3
    %v6496 = vrot.slane %v5201, 7
    %v6498 = vsel %vm6491, %v6494, %v6496
    %v6499 = vsel %vm6491, %v6496, %v6494
    %v6501 = vrot.slane %v6493, 4
    %v6504 = vrot.slane %v6499, 4
    %v6506 = vsel %vm6463, %v6492, %v6501
    %v6507 = vsel %vm6463, %v6498, %v6504
    %6510 = vrot.lane.b32.xlu0 %v6434, 96
    %v6511 = vpop.permute.xlu0 %6510
    %6512 = vrot.lane.b32.xlu0 %v6439, 96
    %v6513 = vpop.permute.xlu0 %6512
    %v6516 = vmul.f32 %v5200, %v6511
    %v6517 = vmul.f32 %v5201, %v6513
    %6520 = vrot.lane.b32.xlu0 %v6516, 32
    %v6521 = vpop.permute.xlu0 %6520
    %6522 = vrot.lane.b32.xlu0 %v6517, 32
    %v6523 = vpop.permute.xlu0 %6522
    %v6526 = vsel %vm792, %v6521, 0.0
    %6527 = vadd.xlane.f32.xlu0 %v6526
    %v6528 = vpop.xlane.xlu0 %6527
    %v6529 = vsel %vm792, %v6523, 0.0
    %6530 = vadd.xlane.f32.xlu0 %v6529
    %v6531 = vpop.xlane.xlu0 %6530
    %v6532 = vrcp.pop 32.0
    %v6533 = vmul.f32 %v6528, %v6532
    %v6534 = vmul.f32 %v6531, %v6532
    %v6535 = vmul.f32 %v6464, %v6511
    %v6536 = vmul.f32 %v6465, %v6513
    %6539 = vrot.lane.b32.xlu0 %v6535, 32
    %v6540 = vpop.permute.xlu0 %6539
    %6541 = vrot.lane.b32.xlu0 %v6536, 32
    %v6542 = vpop.permute.xlu0 %6541
    %v6545 = vsel %vm792, %v6540, 0.0
    %6546 = vadd.xlane.f32.xlu0 %v6545
    %v6547 = vpop.xlane.xlu0 %6546
    %v6548 = vsel %vm792, %v6542, 0.0
    %6549 = vadd.xlane.f32.xlu0 %v6548
    %v6550 = vpop.xlane.xlu0 %6549
    %v6551 = vmul.f32 %v6547, %v6532
    %v6552 = vmul.f32 %v6550, %v6532
    %v6553 = vmul.f32 %v6485, %v6511
    %v6554 = vmul.f32 %v6486, %v6513
    %6557 = vrot.lane.b32.xlu0 %v6553, 32
    %v6558 = vpop.permute.xlu0 %6557
    %6559 = vrot.lane.b32.xlu0 %v6554, 32
    %v6560 = vpop.permute.xlu0 %6559
    %v6563 = vsel %vm792, %v6558, 0.0
    %6564 = vadd.xlane.f32.xlu0 %v6563
    %v6565 = vpop.xlane.xlu0 %6564
    %v6566 = vsel %vm792, %v6560, 0.0
    %6567 = vadd.xlane.f32.xlu0 %v6566
    %v6568 = vpop.xlane.xlu0 %6567
    %v6569 = vmul.f32 %v6565, %v6532
    %v6570 = vmul.f32 %v6568, %v6532
    %v6571 = vmul.f32 %v6506, %v6511
    %v6572 = vmul.f32 %v6507, %v6513
    %6575 = vrot.lane.b32.xlu0 %v6571, 32
    %v6576 = vpop.permute.xlu0 %6575
    %6577 = vrot.lane.b32.xlu0 %v6572, 32
    %v6578 = vpop.permute.xlu0 %6577
    %v6581 = vsel %vm792, %v6576, 0.0
    %6582 = vadd.xlane.f32.xlu0 %v6581
    %v6583 = vpop.xlane.xlu0 %6582
    %v6584 = vsel %vm792, %v6578, 0.0
    %6585 = vadd.xlane.f32.xlu0 %v6584
    %v6586 = vpop.xlane.xlu0 %6585
    %v6587 = vmul.f32 %v6583, %v6532
    %v6588 = vmul.f32 %v6586, %v6532
    %vm6589 = vcmask 7168
    %v6590 = vsel %vm6589, %v6533, %v6551
    %v6591 = vsel %vm6589, %v6534, %v6552
    %vm6592 = vcmask 15360
    %v6593 = vsel %vm6592, %v6590, %v6569
    %v6594 = vsel %vm6592, %v6591, %v6570
    %vm6595 = vcmask 23552
    %v6596 = vsel %vm6595, %v6593, %v6587
    %v6597 = vsel %vm6595, %v6594, %v6588
    %vm6598 = vcmask 31744
    %v6599 = vsel %vm6598, %v6596, %v6551
    %v6600 = vsel %vm6598, %v6597, %v6552
    %vm6601 = vcmask 39936
    %v6602 = vsel %vm6601, %v6599, %v6569
    %v6603 = vsel %vm6601, %v6600, %v6570
    %vm6604 = vcmask 48128
    %v6605 = vsel %vm6604, %v6602, -inf
    %6606 = vmax.xlane.f32.xlu0 %v6605
    %v6607 = vpop.xlane.xlu0 %6606
    %v6608 = vsel %vm6604, %v6603, -inf
    %6609 = vmax.xlane.f32.xlu0 %v6608
    %v6610 = vpop.xlane.xlu0 %6609
    %v6611 = vsub.f32 %v6602, %v6607
    %v6612 = vsub.f32 %v6603, %v6610
    %v6613 = vmul.f32 %v6611, 1.442695
    %v6614 = vpow.pop %v6613
    %v6615 = vmul.f32 %v6612, 1.442695
    %v6616 = vpow.pop %v6615
    %v6617 = vsel %vm6604, %v6614, 0.0
    %6618 = vadd.xlane.f32.xlu0 %v6617
    %v6619 = vpop.xlane.xlu0 %6618
    %v6620 = vsel %vm6604, %v6616, 0.0
    %6621 = vadd.xlane.f32.xlu0 %v6620
    %v6622 = vpop.xlane.xlu0 %6621
    %v6623 = vlog2.pop %v6619
    %v6624 = vmul.f32 %v6623, 0.6931472
    %v6625 = vlog2.pop %v6622
    %v6626 = vmul.f32 %v6625, 0.6931472
    %v6627 = vadd.f32 %v6624, %v6607
    %v6628 = vadd.f32 %v6626, %v6610
    %v6629 = vsub.f32 %v6602, %v6627
    %v6630 = vsub.f32 %v6603, %v6628
    %v6631 = vrot.slane %v5378, 5
    %v6633 = vrot.slane %v5378, 1
    %v6635 = vsel %vm6447, %v6631, %v6633
    %v6636 = vrot.slane %v5378, 6
    %v6638 = vrot.slane %v5378, 2
    %v6640 = vsel %vm6470, %v6636, %v6638
    %v6641 = vrot.slane %v5378, 7
    %v6643 = vrot.slane %v5378, 3
    %v6645 = vsel %vm6491, %v6641, %v6643
    %v6646 = vld [vmem:[#allocation27] sm:$0xff]
    %v6647 = vld [vmem:[#allocation27 + $0x8] sm:$0xff]
    %v6648 = vld [vmem:[#allocation27 + $0x10] sm:$0xff]
    %v6649 = vld [vmem:[#allocation27 + $0x18] sm:$0xff]
    %v6650 = vld [vmem:[#allocation28] sm:$0x1]
    %v6652 = vlaneseq
    %v6653 = vshrl.u32 %v6652, 7
    %v6654 = vsub.s32 0, %v6653
    %v6655 = vrot.slane %v6650, %v6654
    %6657 = vrot.lane.b32.xlu0 %v6110, 32
    %v6658 = vpop.permute.xlu0 %6657
    %v6659 = vsel %vm792, %v6658, 0
    %6661 = vmatprep.subr.mxu0 0.0
    %6662 = vmatpush1.msra.mxu0 0.0
    %6663 = vmatprep.subr.mxu0 0.0
    %6664 = vmatpush1.msra.mxu0 0.0
    %6665 = vmatprep.subr.mxu0 0.0
    %6666 = vmatpush1.msra.mxu0 0.0
    %6667 = vmatprep.subr.mxu0 0.0
    %6668 = vmatpush1.msra.mxu0 0.0
    %6669 = vmatprep.subr.mxu0 0.0
    %6670 = vmatpush1.msra.mxu0 0.0
    %6671 = vmatprep.subr.mxu0 0.0
    %6672 = vmatpush1.msra.mxu0 0.0
    %6673 = vmatprep.subr.mxu0 0.0
    %6674 = vmatpush1.msra.mxu0 0.0
    %6675 = vmatprep.subr.mxu0 0.0
    %6676 = vmatpush1.msra.mxu0 0.0
    %6677 = vmatprep.subr.mxu0 0.0
    %6678 = vmatpush1.msra.mxu0 0.0
    %6679 = vmatprep.subr.mxu0 0.0
    %6680 = vmatpush1.msra.mxu0 0.0
    %6681 = vmatprep.subr.mxu0 0.0
    %6682 = vmatpush1.msra.mxu0 0.0
    %6683 = vmatprep.subr.mxu0 0.0
    %6684 = vmatpush1.msra.mxu0 0.0
    %6685 = vmatprep.subr.mxu0 0.0
    %6686 = vmatpush1.msra.mxu0 %v6649
    %6687 = vmatprep.subr.mxu0 0.0
    %6688 = vmatpush1.msra.mxu0 %v6648
    %6689 = vmatprep.subr.mxu0 0.0
    %6690 = vmatpush1.msra.mxu0 %v6647
    %6691 = vmatprep.subr.mxu0 0.0
    %6692 = vmatpush1.msra.mxu0 %v6646
    %6693 = vmatprep.subr.mxu0 0.0
    %6694 = vmatpush2.msra.mxu0 0.0
    %6695 = vmatprep.subr.mxu0 0.0
    %6696 = vmatpush2.msra.mxu0 0.0
    %6697 = vmatprep.subr.mxu0 0.0
    %6698 = vmatpush2.msra.mxu0 0.0
    %6699 = vmatprep.subr.mxu0 0.0
    %6700 = vmatpush2.msra.mxu0 0.0
    %6701 = vmatprep.subr.mxu0 0.0
    %6702 = vmatpush2.msra.mxu0 0.0
    %6703 = vmatprep.subr.mxu0 0.0
    %6704 = vmatpush2.msra.mxu0 0.0
    %6705 = vmatprep.subr.mxu0 0.0
    %6706 = vmatpush2.msra.mxu0 0.0
    %6707 = vmatprep.subr.mxu0 0.0
    %6708 = vmatpush2.msra.mxu0 0.0
    %6709 = vmatprep.subr.mxu0 0.0
    %6710 = vmatpush2.msra.mxu0 0.0
    %6711 = vmatprep.subr.mxu0 0.0
    %6712 = vmatpush2.msra.mxu0 0.0
    %6713 = vmatprep.subr.mxu0 0.0
    %6714 = vmatpush2.msra.mxu0 0.0
    %6715 = vmatprep.subr.mxu0 0.0
    %6716 = vmatpush2.msra.mxu0 0.0
    %6717 = vmatprep.subr.mxu0 0.0
    %6718 = vmatpush2.msra.mxu0 0.0
    %6719 = vmatprep.subr.mxu0 0.0
    %6720 = vmatpush2.msra.mxu0 0.0
    %6721 = vmatprep.subr.mxu0 0.0
    %6722 = vmatpush2.msra.mxu0 0.0
    %6723 = vmatprep.subr.mxu0 0.0
    %6724 = vmatpush2.msra.mxu0 0.0
    %6725 = vmatprep.mubr.f32.mxu0 0.0
    %6726 = vmatmul.mubr.f32.gmra.mxu0 %v6659
    %v6727 = vpop.f32.mrf.mxu0
    %v6728 = vadd.f32 %v6655, %v6727
    %v6729 = vpop.f32.mrf.mxu0
    %6730 = vdwg.mxu0
    %v6732 = vrot.slane %v6728, 4
    %v6734 = vmul.f32 %v5378, %v6732
    %vm6735 = vcmask 523268
    %v6736 = vsel %vm6735, %v6734, 0.0
    %6737 = vadd.xlane.f32.xlu0 %v6736
    %v6738 = vpop.xlane.xlu0 %6737
    %v6739 = vrcp.pop 64.0
    %v6740 = vmul.f32 %v6738, %v6739
    %v6741 = vmul.f32 %v6635, %v6728
    %vm6742 = vcmask 519168
    %v6743 = vsel %vm6742, %v6741, 0.0
    %6744 = vadd.xlane.f32.xlu0 %v6743
    %v6745 = vpop.xlane.xlu0 %6744
    %v6746 = vmul.f32 %v6745, %v6739
    %v6747 = vmul.f32 %v6640, %v6728
    %v6748 = vsel %vm6742, %v6747, 0.0
    %6749 = vadd.xlane.f32.xlu0 %v6748
    %v6750 = vpop.xlane.xlu0 %6749
    %v6751 = vmul.f32 %v6750, %v6739
    %v6752 = vmul.f32 %v6645, %v6728
    %v6753 = vsel %vm6742, %v6752, 0.0
    %6754 = vadd.xlane.f32.xlu0 %v6753
    %v6755 = vpop.xlane.xlu0 %6754
    %v6756 = vmul.f32 %v6755, %v6739
    %v6758 = vrot.slane %v6746, 4
    %v6761 = vrot.slane %v6751, 4
    %v6764 = vrot.slane %v6756, 4
    %v6766 = vsel %vm6589, %v6740, %v6758
    %v6767 = vsel %vm6592, %v6766, %v6761
    %v6768 = vsel %vm6595, %v6767, %v6764
    %v6769 = vsel %vm6598, %v6768, %v6758
    %v6770 = vsel %vm6601, %v6769, %v6761
    %vm6771 = vcmask 48132
    %v6772 = vsel %vm6771, %v6770, -inf
    %6773 = vmax.xlane.f32.xlu0 %v6772
    %v6774 = vpop.xlane.xlu0 %6773
    %v6775 = vsub.f32 %v6770, %v6774
    %v6776 = vmul.f32 %v6775, 1.442695
    %v6777 = vpow.pop %v6776
    %v6778 = vsel %vm6771, %v6777, 0.0
    %6779 = vadd.xlane.f32.xlu0 %v6778
    %v6780 = vpop.xlane.xlu0 %6779
    %v6781 = vlog2.pop %v6780
    %v6782 = vmul.f32 %v6781, 0.6931472
    %v6783 = vadd.f32 %v6782, %v6774
    %v6784 = vsub.f32 %v6770, %v6783
    %v6785 = vsel %vm6589, %v6629, 0.0
    %v6786 = vsel %vm6589, %v6630, 0.0
    %v6787 = vadd.f32 %v6785, %v6786
    %v6788 = vrot.slane %v6787, 4
    %v6789 = vadd.f32 %v6787, %v6788
    %v6790 = vrot.slane %v6789, 2
    %v6791 = vadd.f32 %v6789, %v6790
    %v6792 = vrot.slane %v6791, 1
    %v6793 = vadd.f32 %v6791, %v6792
    %v6795 = vrot.slane %v6784, 4
    %v6797 = vsel %vm6348, %v6795, 0.0
    %v6798 = vrot.slane %v6797, 4
    %v6799 = vadd.f32 %v6797, %v6798
    %v6800 = vrot.slane %v6799, 2
    %v6801 = vadd.f32 %v6799, %v6800
    %v6802 = vrot.slane %v6801, 1
    %v6803 = vadd.f32 %v6801, %v6802
    %v6804 = vmul.f32 %v6793, 0.05
    %v6805 = vadd.f32 %v6804, %v6803
    %v6806 = vsub.f32 0.0, %v6805
    %v6807 = vrcp.pop 4.0
    %v6808 = vmul.f32 %v6806, %v6807
    %vm6809 = vcmask 0
    %6810 = vst.msk [vmem:[#allocation30] sm:$0x1] %vm6809, %v6808
    // Predicated region
    $region166: #{cm_model_forward.1} parent=1 // pred_check
      _
    $region167: #{cm_model_forward.1} parent=1 // pred_check_branch
      %6812 = sbr.rel (0) target = $region169
    $region168: #{cm_model_forward.1} parent=1 // pred_region
      %s6814 = ssub.s32 16, 16
      %6815 = vsyncadd [#allocation6], %s6814
      %s6817 = sshll.u32 [#allocation30], 4
      %s6818 = int_to_ptr.vmem [resolvable:$true] %s6817
      %6820 = dma.vmem_to_hbm [thread:$0]  %s6818, 16, %s25, [#allocation6]
    $region169: #{cm_model_forward.1} parent=1 // pred_fallthru
      _
    // Predicated region
    $region170: #{cm_model_forward.1} parent=1 // pred_check
      _
    $region171: #{cm_model_forward.1} parent=1 // pred_check_branch
      %6822 = sbr.rel (0) target = $region173
    $region172: #{cm_model_forward.1} parent=1 // pred_region
      _
    $region173: #{cm_model_forward.1} parent=1 // pred_fallthru
      _
    // Predicated region
    $region174: #{cm_model_forward.1} parent=1 // pred_check
      _
    $region175: #{cm_model_forward.1} parent=1 // pred_check_branch
      %6824 = sbr.rel (0) target = $region177
    $region176: #{cm_model_forward.1} parent=1 // pred_region
      %6825 = dma.done [#allocation6], 16
    $region177: #{cm_model_forward.1} parent=1 // pred_fallthru
      _
    // Predicated region
    $region178: #{cm_model_forward.1} parent=1 // pred_check
      _
    $region179: #{cm_model_forward.1} parent=1 // pred_check_branch
      %6827 = sbr.rel (0) target = $region181
    $region180: #{cm_model_forward.1} parent=1 // pred_region
      _
    $region181: #{cm_model_forward.1} parent=1 // pred_fallthru
      _
    %6828 = vsyncpa [#allocation5], 1
    %6829 = vsyncpa [#allocation8], 1
    %6830 = vsyncpa [#allocation11], 1
    %6831 = vsyncpa [#allocation14], 1
    %6832 = vsyncpa [#allocation17], 1
    %6833 = vsyncpa [#allocation20], 1
    %6834 = vsyncpa [#allocation23], 1
    %6835 = vsyncpa [#allocation26], 1
    %6836 = vsyncpa [#allocation29], 1
    %6837 = vsyncpa [#allocation6], 1

</llo_original>
